<compile_context>
chip_gen: v6e
topology: v6e:2x2x1
jax: 0.10.0
libtpu: 0.0.40
codegen_flags: <defaults>
</compile_context>

<pallas_src>
import jax
import jax.numpy as jnp
from jax.experimental import pallas as pl
from jax.experimental.pallas import tpu as pltpu

EPS = 1e-5
NUM_OUTPUTS = 4      # TODO(synk): MODEL_CONFIG['num_outputs'] not provided; fixed to 4.
NUM_BANDS = 7        # SpectralAttention(num_bands=7)
VIT_DIM = 768
VIT_PATCH = 4        # stand-in patch size for small inputs


# ---------------------------------------------------------------------------
# Kernel 1: fused CNN trunk.  Bt batch elements per grid step ("parallel").
# ---------------------------------------------------------------------------
def cnn_kernel(xslab_ref, w1_ref, s1_ref, t1_ref, w2_ref, s2_ref, t2_ref,
               o_ref, mid_ref):
    # xslab_ref: (Bt, H*W, 27) bf16   pre-im2col'd conv1 input
    # w1_ref   : (27, 64)      bf16
    # w2_ref   : (9, 64, 128)  bf16   conv2 weights, one (64,128) block per tap
    # s*/t*    : (1, C)        f32    folded conv-bias + BatchNorm
    # o_ref    : (Bt, H/4, W/4, 128) bf16
    # mid_ref  : (Bt, H/2+2, W/2+2, 64) bf16 VMEM scratch (padded conv2 input)
    Bt, H4, W4, _ = o_ref.shape
    H2, W2 = 2 * H4, 2 * W4
    H, W = 4 * H4, 4 * W4

    # conv1: one MXU matmul over all Bt*H*W pixels, K=27, f32 accumulation.
    acc1 = jnp.dot(xslab_ref[...].reshape(Bt * H * W, 27), w1_ref[...],
                   preferred_element_type=jnp.float32)
    y1 = jnp.maximum(acc1 * s1_ref[...] + t1_ref[...], 0.0)   # (Bt*H*W, 64)

    # 2x2 max pool; cast once to bf16 before staging into the conv2 scratch.
    p1 = jnp.max(y1.reshape(Bt * H2, 2, W2, 2, 64), axis=(1, 3))
    p1 = p1.reshape(Bt, H2, W2, 64).astype(jnp.bfloat16)

    # Zero only the 1-pixel halo (the interior is fully overwritten below).
    # Done every step so it stays correct when the "parallel" batch axis is
    # split across TensorCores (each core has its own scratch instance).
    mid_ref[:, 0:1, :, :] = jnp.zeros((Bt, 1, W2 + 2, 64), jnp.bfloat16)
    mid_ref[:, H2 + 1:H2 + 2, :, :] = jnp.zeros((Bt, 1, W2 + 2, 64), jnp.bfloat16)
    mid_ref[:, :, 0:1, :] = jnp.zeros((Bt, H2 + 2, 1, 64), jnp.bfloat16)
    mid_ref[:, :, W2 + 1:W2 + 2, :] = jnp.zeros((Bt, H2 + 2, 1, 64), jnp.bfloat16)
    mid_ref[:, 1:1 + H2, 1:1 + W2, :] = p1

    # conv2: 9 accumulated K=64 matmuls straight from the shifted VMEM views
    # (no materialized (H2*W2, 576) im2col slab, no lane-axis concat).
    acc2 = None
    for t in range(9):
        dy, dx = t // 3, t % 3
        tap = mid_ref[:, dy:dy + H2, dx:dx + W2, :].reshape(Bt * H2 * W2, 64)
        part = jnp.dot(tap, w2_ref[t], preferred_element_type=jnp.float32)
        acc2 = part if acc2 is None else acc2 + part
    y2 = jnp.maximum(acc2 * s2_ref[...] + t2_ref[...], 0.0)   # (Bt*H2*W2, 128)

    p2 = jnp.max(y2.reshape(Bt * H4, 2, W4, 2, 128), axis=(1, 3))
    o_ref[...] = p2.reshape(Bt, H4, W4, 128).astype(o_ref.dtype)


def _pick_bt(B, H, W):
    # Target M >= ~1024 rows per conv matmul, but keep >= 2 grid steps so a
    # v7x dual-TensorCore chip can split the batch axis.
    bt = max(1, 1024 // (H * W))
    if B >= 2:
        bt = min(bt, B // 2)
    bt = max(1, min(bt, B))
    while B % bt:
        bt -= 1
    return bt


def cnn_block(xslab, p, H, W):
    B = xslab.shape[0]
    H2, W2, H4, W4 = H // 2, W // 2, H // 4, W // 4
    Bt = _pick_bt(B, H, W)
    cost = pl.CostEstimate(
        flops=2 * B * H * W * 27 * 64 + 2 * B * H2 * W2 * (9 * 64) * 128,
        transcendentals=0,
        bytes_accessed=xslab.size * 2 + (27 * 64 + 9 * 64 * 128) * 2
                       + B * H4 * W4 * 128 * 2)
    # TODO(synk): at 224x224 add a spatial row-tile grid axis (tile sized per
    # generation; v7x has only 64 MiB VMEM) and set vmem_limit_bytes per chip.
    return pl.pallas_call(
        cnn_kernel,
        out_shape=jax.ShapeDtypeStruct((B, H4, W4, 128), jnp.bfloat16),
        grid=(B // Bt,),
        in_specs=[
            pl.BlockSpec((Bt, H * W, 27), lambda b: (b, 0, 0)),
            pl.BlockSpec((27, 64), lambda b: (0, 0)),
            pl.BlockSpec((1, 64), lambda b: (0, 0)),
            pl.BlockSpec((1, 64), lambda b: (0, 0)),
            pl.BlockSpec((9, 64, 128), lambda b: (0, 0, 0)),
            pl.BlockSpec((1, 128), lambda b: (0, 0)),
            pl.BlockSpec((1, 128), lambda b: (0, 0)),
        ],
        out_specs=pl.BlockSpec((Bt, H4, W4, 128), lambda b: (b, 0, 0, 0)),
        scratch_shapes=[pltpu.VMEM((Bt, H2 + 2, W2 + 2, 64), jnp.bfloat16)],
        compiler_params=pltpu.CompilerParams(
            dimension_semantics=("parallel",)),   # v7x: shard batch over 2 TCs
        cost_estimate=cost,
    )(xslab, p['w_c1r'], p['s_c1'], p['t_c1'],
      p['w_c2r'], p['s_c2'], p['t_c2'])


# ---------------------------------------------------------------------------
# Kernel 2: fused head.  The fusion GEMM's CNN branch is streamed over K
# tiles (accumulator in VMEM); everything else runs in the finalize step.
# ---------------------------------------------------------------------------
def head_kernel(cnn_ref, w1c_ref, pooled_ref, xcp_ref, we_ref, be_ref,
                wsa1_ref, bsa1_ref, wsa2_ref, bsa2_ref,
                wvit_ref, bvit_ref,
                w1v_ref, w1e_ref, s1_ref, t1_ref,
                w2_ref, s2_ref, t2_ref, w3_ref, b3_ref,
                o_ref, acc_ref):
    k = pl.program_id(0)
    nk = pl.num_programs(0)

    @pl.when(k == 0)
    def _():
        acc_ref[...] = jnp.zeros_like(acc_ref)

    # fusion GEMM, CNN branch: K-tiled weight streaming (w1_cnn cannot be
    # VMEM-resident at the real 128*56*56 width on any generation).
    acc_ref[...] += jnp.dot(cnn_ref[...], w1c_ref[...],
                            preferred_element_type=jnp.float32)

    @pl.when(k == nk - 1)
    def _():
        # EnhancedFeatures (1x1 conv 3->7 + ReLU), pixels on the lane axis:
        # 21 scalar-broadcast VPU FMAs (weights in SMEM), then a lane-reduce
        # mean per band.
        x = xcp_ref[...]                                   # (B, 3, HW) f32
        gaps = []
        for band in range(NUM_BANDS):
            a = (x[:, 0, :] * we_ref[0, band]
                 + x[:, 1, :] * we_ref[1, band]
                 + x[:, 2, :] * we_ref[2, band]
                 + be_ref[0, band])
            gaps.append(jnp.mean(jnp.maximum(a, 0.0), axis=-1, keepdims=True))
        gap = jnp.concatenate(gaps, axis=1)                # (B, 7)

        # SpectralAttention (squeeze-excite).  Per-band scaling commutes with
        # the spatial mean, so enhanced.mean(dim=[2,3]) == gap * attn.
        hid = jnp.maximum(
            jnp.dot(gap, wsa1_ref[...], preferred_element_type=jnp.float32)
            + bsa1_ref[...], 0.0)
        attn = jax.nn.sigmoid(
            jnp.dot(hid, wsa2_ref[...], preferred_element_type=jnp.float32)
            + bsa2_ref[...])
        enhanced = gap * attn                              # (B, 7)

        # ViT stand-in: token mean folded before the patch-embed matmul.
        vit = (jnp.dot(pooled_ref[...], wvit_ref[...],
                       preferred_element_type=jnp.float32) + bvit_ref[...])

        # fusion Linear over the virtual concat [cnn, vit, enhanced] + BN+ReLU
        h = acc_ref[...]
        h = h + jnp.dot(vit.astype(jnp.bfloat16), w1v_ref[...],
                        preferred_element_type=jnp.float32)
        h = h + jnp.dot(enhanced.astype(jnp.bfloat16), w1e_ref[...],
                        preferred_element_type=jnp.float32)
        h = jnp.maximum(h * s1_ref[...] + t1_ref[...], 0.0)

        # regressor: Linear+BN+ReLU -> Linear
        h2 = jnp.dot(h.astype(jnp.bfloat16), w2_ref[...],
                     preferred_element_type=jnp.float32)
        h2 = jnp.maximum(h2 * s2_ref[...] + t2_ref[...], 0.0)
        out = (jnp.dot(h2.astype(jnp.bfloat16), w3_ref[...],
                       preferred_element_type=jnp.float32) + b3_ref[...])
        o_ref[...] = out.astype(o_ref.dtype)


def head(cnn_flat, pooled, x_cp, p, num_outputs):
    B, d_cnn = cnn_flat.shape
    HW = x_cp.shape[-1]
    # K tile for the streamed fusion GEMM.  kt=512 suffices at demo size;
    # at 224-scale bump to 2048-4096 (per generation) so each weight block is
    # >= 2-4 MB and the DMA pipeline stays full.
    kt = 512
    while kt > 1 and d_cnn % kt:
        kt //= 2
    nk = d_cnn // kt

    def fs(a):  # full-array VMEM block, constant index map
        nd = a.ndim
        return pl.BlockSpec(a.shape, lambda k, nd=nd: (0,) * nd)

    smem = pl.BlockSpec(memory_space=pltpu.MemorySpace.SMEM)

    cost = pl.CostEstimate(
        flops=2 * B * (d_cnn * 512 + VIT_DIM * 512 + 48 * VIT_DIM
                       + NUM_BANDS * 512 + 512 * 256 + 256 * num_outputs)
              + 2 * B * HW * 3 * NUM_BANDS,
        transcendentals=B * NUM_BANDS,
        bytes_accessed=(d_cnn * 512 + VIT_DIM * 512 + 512 * 256) * 2
                       + cnn_flat.size * 2 + x_cp.size * 4)

    # TODO(synk): on v7x add a "parallel" leading axis (split the K tiles or
    # the N=512 halves) so the weight-streaming GEMM uses both TensorCores;
    # at toy sizes the head could also be folded into the CNN kernel's last
    # grid step to save a launch.
    return pl.pallas_call(
        head_kernel,
        out_shape=jax.ShapeDtypeStruct((B, num_outputs), jnp.float32),
        grid=(nk,),
        in_specs=[
            pl.BlockSpec((B, kt), lambda k: (0, k)),
            pl.BlockSpec((kt, 512), lambda k: (k, 0)),
            fs(pooled), fs(x_cp),
            smem, smem,
            fs(p['w_sa1']), fs(p['b_sa1']), fs(p['w_sa2']), fs(p['b_sa2']),
            fs(p['w_vit']), fs(p['b_vit']),
            fs(p['w1_vit']), fs(p['w1_enh']), fs(p['s1']), fs(p['t1']),
            fs(p['w2']), fs(p['s2']), fs(p['t2']), fs(p['w3']), fs(p['b3']),
        ],
        out_specs=pl.BlockSpec((B, num_outputs), lambda k: (0, 0)),
        scratch_shapes=[pltpu.VMEM((B, 512), jnp.float32)],
        compiler_params=pltpu.CompilerParams(
            dimension_semantics=("arbitrary",)),
        cost_estimate=cost,
    )(cnn_flat, p['w1_cnn'], pooled, x_cp,
      p['w_enh'], p['b_enh'], p['w_sa1'], p['b_sa1'], p['w_sa2'], p['b_sa2'],
      p['w_vit'], p['b_vit'],
      p['w1_vit'], p['w1_enh'], p['s1'], p['t1'],
      p['w2'], p['s2'], p['t2'], p['w3'], p['b3'])


# ---------------------------------------------------------------------------
# Parameters (deterministic, synthetic) and forward glue.
# ---------------------------------------------------------------------------
def fold_bn(gamma, beta, mean, var, lin_bias):
    scale = gamma / jnp.sqrt(var + EPS)
    shift = beta + (lin_bias - mean) * scale
    return (scale.reshape(1, -1).astype(jnp.float32),
            shift.reshape(1, -1).astype(jnp.float32))


def init_params(key, H, W, num_outputs):
    H4, W4 = H // 4, W // 4
    d_cnn = 128 * H4 * W4
    combined_dim = d_cnn + VIT_DIM + NUM_BANDS
    ks = jax.random.split(key, 40)

    def nrm(k, shape, s=0.05):
        return jax.random.normal(k, shape, jnp.float32) * s

    p = {}
    # CNN block 1: Conv2d(3,64,3,pad=1)+BN(64); weight reshaped for im2col.
    w_c1 = nrm(ks[0], (3, 3, 3, 64))                       # (ky, kx, cin, cout)
    p['w_c1r'] = w_c1.reshape(27, 64).astype(jnp.bfloat16)
    p['s_c1'], p['t_c1'] = fold_bn(
        nrm(ks[1], (64,), 0.1) + 1.0, nrm(ks[2], (64,), 0.1),
        nrm(ks[3], (64,), 0.1), jnp.abs(nrm(ks[4], (64,), 0.1)) + 1.0,
        nrm(ks[5], (64,), 0.1))
    # CNN block 2: Conv2d(64,128,3,pad=1)+BN(128); one (64,128) block per tap.
    w_c2 = nrm(ks[6], (3, 3, 64, 128), 0.02)
    p['w_c2r'] = w_c2.reshape(9, 64, 128).astype(jnp.bfloat16)
    p['s_c2'], p['t_c2'] = fold_bn(
        nrm(ks[7], (128,), 0.1) + 1.0, nrm(ks[8], (128,), 0.1),
        nrm(ks[9], (128,), 0.1), jnp.abs(nrm(ks[10], (128,), 0.1)) + 1.0,
        nrm(ks[11], (128,), 0.1))
    # ViT stand-in patch embedding (48 -> 768)
    p['w_vit'] = nrm(ks[12], (VIT_PATCH * VIT_PATCH * 3, VIT_DIM), 0.02).astype(jnp.bfloat16)
    p['b_vit'] = nrm(ks[13], (1, VIT_DIM), 0.02)
    # EnhancedFeatures (3->7) + SpectralAttention MLP (7->16->7)
    p['w_enh'] = nrm(ks[14], (3, NUM_BANDS), 0.1)           # SMEM (scalar reads)
    p['b_enh'] = nrm(ks[15], (1, NUM_BANDS), 0.1)           # SMEM
    p['w_sa1'] = nrm(ks[16], (NUM_BANDS, 16), 0.1)
    p['b_sa1'] = nrm(ks[17], (1, 16), 0.1)
    p['w_sa2'] = nrm(ks[18], (16, NUM_BANDS), 0.1)
    p['b_sa2'] = nrm(ks[19], (1, NUM_BANDS), 0.1)
    # fusion Linear(combined_dim, 512)+BN1d(512).  Built on the torch concat
    # order [cnn_flat(NCHW .view), vit(768), enhanced(7)], then split into
    # per-branch blocks; the cnn block's rows are permuted CHW->HWC so the
    # kernel can consume the NHWC conv output directly (mathematically
    # identical to concat @ w1).  (Original hard-codes 768 + 128*56*56 for
    # 224x224 inputs; sized here to the actual concatenated width.)
    w1 = nrm(ks[20], (combined_dim, 512), 0.02)
    w1_cnn = (w1[:d_cnn].reshape(128, H4, W4, 512)
              .transpose(1, 2, 0, 3).reshape(d_cnn, 512))
    p['w1_cnn'] = w1_cnn.astype(jnp.bfloat16)
    p['w1_vit'] = w1[d_cnn:d_cnn + VIT_DIM].astype(jnp.bfloat16)
    p['w1_enh'] = w1[d_cnn + VIT_DIM:].astype(jnp.bfloat16)
    p['s1'], p['t1'] = fold_bn(
        nrm(ks[22], (512,), 0.1) + 1.0, nrm(ks[23], (512,), 0.1),
        nrm(ks[24], (512,), 0.1), jnp.abs(nrm(ks[25], (512,), 0.1)) + 1.0,
        nrm(ks[21], (512,), 0.02))
    # regressor: Linear(512,256)+BN1d(256), Linear(256,num_outputs)
    p['w2'] = nrm(ks[26], (512, 256), 0.05).astype(jnp.bfloat16)
    p['s2'], p['t2'] = fold_bn(
        nrm(ks[28], (256,), 0.1) + 1.0, nrm(ks[29], (256,), 0.1),
        nrm(ks[30], (256,), 0.1), jnp.abs(nrm(ks[31], (256,), 0.1)) + 1.0,
        nrm(ks[27], (256,), 0.05))
    p['w3'] = nrm(ks[32], (256, num_outputs), 0.05).astype(jnp.bfloat16)
    p['b3'] = nrm(ks[33], (1, num_outputs), 0.05)
    return p


def hybrid_forest_forward(x_nchw, p):
    B, C, H, W = x_nchw.shape
    x_nhwc = jnp.transpose(x_nchw, (0, 2, 3, 1)).astype(jnp.float32)
    H4, W4 = H // 4, W // 4

    # conv1 im2col slab built in the wrapper (cheap at 16x16).
    # TODO(synk): at 224x224, DMA raw NHWC row-tiles (+1-px halo) and build the
    # conv1 taps in-kernel to cut the 9x-duplicated HBM input traffic.
    xp = jnp.pad(x_nhwc, ((0, 0), (1, 1), (1, 1), (0, 0)))
    taps = [xp[:, dy:dy + H, dx:dx + W, :] for dy in range(3) for dx in range(3)]
    xslab = jnp.concatenate(taps, axis=-1).reshape(B, H * W, 9 * C)
    xslab = xslab.astype(jnp.bfloat16)

    cnn = cnn_block(xslab, p, H, W)                  # (B, H/4, W/4, 128) bf16
    cnn_flat = cnn.reshape(B, H4 * W4 * 128)         # NHWC flatten; w1_cnn rows
                                                     # are pre-permuted to match
                                                     # torch's NCHW .view order.

    # ViT stand-in: mean over tokens commutes with the patch embedding, so
    # pool the patches first (B, 48) and matmul inside the head kernel.
    pooled = x_nhwc.reshape(B, H // VIT_PATCH, VIT_PATCH,
                            W // VIT_PATCH, VIT_PATCH, C)
    pooled = pooled.transpose(0, 1, 3, 2, 4, 5).reshape(B, -1, VIT_PATCH * VIT_PATCH * C)
    pooled = pooled.mean(axis=1).astype(jnp.bfloat16)

    # EnhancedFeatures input: channels-planar (B, 3, H*W) so pixels sit on the
    # lane axis (the old (B*H*W, 3) layout lane-padded 3 -> 128, ~42x waste).
    x_cp = x_nchw.astype(jnp.float32).reshape(B, C, H * W)

    return head(cnn_flat, pooled, x_cp, p, p['w3'].shape[1])


if __name__ == "__main__":
    key = jax.random.PRNGKey(0)
    k_in, k_par = jax.random.split(key)
    B, C, H, W = 2, 3, 16, 16
    x = jax.random.normal(k_in, (B, C, H, W), jnp.float32)   # NCHW like PyTorch

    params = init_params(k_par, H, W, NUM_OUTPUTS)

    out = jax.jit(hybrid_forest_forward)(x, params)
    out = jax.block_until_ready(out)
    assert out.shape == (B, NUM_OUTPUTS) and out.dtype == jnp.float32
    print("KERNEL_OK")
</pallas_src>

<mosaic_0001>
module attributes {stable_mosaic.version = 11 : i64} {
  func.func @cnn_kernel(%arg0: i32, %arg1: memref<1x256x27xbf16, #tpu.memory_space<vmem>>, %arg2: memref<27x64xbf16, #tpu.memory_space<vmem>>, %arg3: memref<1x64xf32, #tpu.memory_space<vmem>>, %arg4: memref<1x64xf32, #tpu.memory_space<vmem>>, %arg5: memref<9x64x128xbf16, #tpu.memory_space<vmem>>, %arg6: memref<1x128xf32, #tpu.memory_space<vmem>>, %arg7: memref<1x128xf32, #tpu.memory_space<vmem>>, %arg8: memref<1x4x4x128xbf16, #tpu.memory_space<vmem>>, %arg9: memref<1x10x10x64xbf16, #tpu.memory_space<vmem>>) attributes {dimension_semantics = [#tpu.dimension_semantics<parallel>], iteration_bounds = array<i64: 2>, scalar_prefetch = 0 : i64, scratch_operands = 1 : i64, tpu.core_type = #tpu.core_type<tc>, window_params = [{transform_indices = @transform_0, window_bounds = array<i64: 1, 256, 27>}, {pipeline_mode = #tpu.pipeline_mode<synchronous>, transform_indices = @transform_1, window_bounds = array<i64: 27, 64>}, {pipeline_mode = #tpu.pipeline_mode<synchronous>, transform_indices = @transform_2, window_bounds = array<i64: 1, 64>}, {pipeline_mode = #tpu.pipeline_mode<synchronous>, transform_indices = @transform_3, window_bounds = array<i64: 1, 64>}, {pipeline_mode = #tpu.pipeline_mode<synchronous>, transform_indices = @transform_4, window_bounds = array<i64: 9, 64, 128>}, {pipeline_mode = #tpu.pipeline_mode<synchronous>, transform_indices = @transform_5, window_bounds = array<i64: 1, 128>}, {pipeline_mode = #tpu.pipeline_mode<synchronous>, transform_indices = @transform_6, window_bounds = array<i64: 1, 128>}, {transform_indices = @transform_7, window_bounds = array<i64: 1, 4, 4, 128>}]} {
    %c0 = arith.constant 0 : index
    %c0_0 = arith.constant 0 : index
    %c0_1 = arith.constant 0 : index
    %0 = vector.load %arg1[%c0, %c0_0, %c0_1] : memref<1x256x27xbf16, #tpu.memory_space<vmem>>, vector<1x256x27xbf16>
    %1 = vector.shape_cast %0 : vector<1x256x27xbf16> to vector<256x27xbf16>
    %c0_2 = arith.constant 0 : index
    %c0_3 = arith.constant 0 : index
    %2 = vector.load %arg2[%c0_2, %c0_3] : memref<27x64xbf16, #tpu.memory_space<vmem>>, vector<27x64xbf16>
    %cst = arith.constant dense<0.000000e+00> : vector<256x64xf32>
    %3 = tpu.matmul %1, %2, %cst {dimension_numbers = #tpu.dot_dimension_numbers<[1], [0], [0], [1], [0, 0, 1, 1], [], []>} : vector<256x27xbf16>, vector<27x64xbf16>, vector<256x64xf32> -> vector<256x64xf32>
    %c0_4 = arith.constant 0 : index
    %c0_5 = arith.constant 0 : index
    %4 = vector.load %arg3[%c0_4, %c0_5] : memref<1x64xf32, #tpu.memory_space<vmem>>, vector<1x64xf32>
    %5 = vector.broadcast %4 : vector<1x64xf32> to vector<256x64xf32>
    %6 = arith.mulf %3, %5 : vector<256x64xf32>
    %c0_6 = arith.constant 0 : index
    %c0_7 = arith.constant 0 : index
    %7 = vector.load %arg4[%c0_6, %c0_7] : memref<1x64xf32, #tpu.memory_space<vmem>>, vector<1x64xf32>
    %8 = vector.broadcast %7 : vector<1x64xf32> to vector<256x64xf32>
    %9 = arith.addf %6, %8 : vector<256x64xf32>
    %cst_8 = arith.constant 0.000000e+00 : f32
    %10 = vector.broadcast %cst_8 : f32 to vector<256x64xf32>
    %11 = arith.maximumf %9, %10 : vector<256x64xf32>
    %12 = vector.shape_cast %11 : vector<256x64xf32> to vector<8x2x8x2x64xf32>
    %cst_9 = arith.constant dense<0xFF800000> : vector<8x8x64xf32>
    %13 = vector.multi_reduction <maximumf>, %12, %cst_9 [1, 3] : vector<8x2x8x2x64xf32> to vector<8x8x64xf32>
    %14 = vector.shape_cast %13 : vector<8x8x64xf32> to vector<1x8x8x64xf32>
    %15 = arith.truncf %14 : vector<1x8x8x64xf32> to vector<1x8x8x64xbf16>
    %cst_10 = arith.constant 0.000000e+00 : bf16
    %16 = vector.broadcast %cst_10 : bf16 to vector<1x1x10x64xbf16>
    %c0_11 = arith.constant 0 : index
    %c0_12 = arith.constant 0 : index
    %c0_13 = arith.constant 0 : index
    %c0_14 = arith.constant 0 : index
    %17 = vector.load %arg9[%c0_11, %c0_12, %c0_13, %c0_14] : memref<1x10x10x64xbf16, #tpu.memory_space<vmem>>, vector<1x1x10x64xbf16>
    tpu.vector_store %arg9[%c0_11, %c0_12, %c0_13, %c0_14], %16 {strides = array<i32>} : memref<1x10x10x64xbf16, #tpu.memory_space<vmem>>, vector<1x1x10x64xbf16>,
    %cst_15 = arith.constant 0.000000e+00 : bf16
    %18 = vector.broadcast %cst_15 : bf16 to vector<1x1x10x64xbf16>
    %c0_16 = arith.constant 0 : index
    %c9 = arith.constant 9 : index
    %c0_17 = arith.constant 0 : index
    %c0_18 = arith.constant 0 : index
    %19 = vector.load %arg9[%c0_16, %c9, %c0_17, %c0_18] : memref<1x10x10x64xbf16, #tpu.memory_space<vmem>>, vector<1x1x10x64xbf16>
    tpu.vector_store %arg9[%c0_16, %c9, %c0_17, %c0_18], %18 {strides = array<i32>} : memref<1x10x10x64xbf16, #tpu.memory_space<vmem>>, vector<1x1x10x64xbf16>,
    %cst_19 = arith.constant 0.000000e+00 : bf16
    %20 = vector.broadcast %cst_19 : bf16 to vector<1x10x1x64xbf16>
    %c0_20 = arith.constant 0 : index
    %c0_21 = arith.constant 0 : index
    %c0_22 = arith.constant 0 : index
    %c0_23 = arith.constant 0 : index
    %21 = vector.load %arg9[%c0_20, %c0_21, %c0_22, %c0_23] : memref<1x10x10x64xbf16, #tpu.memory_space<vmem>>, vector<1x10x1x64xbf16>
    tpu.vector_store %arg9[%c0_20, %c0_21, %c0_22, %c0_23], %20 {strides = array<i32>} : memref<1x10x10x64xbf16, #tpu.memory_space<vmem>>, vector<1x10x1x64xbf16>,
    %cst_24 = arith.constant 0.000000e+00 : bf16
    %22 = vector.broadcast %cst_24 : bf16 to vector<1x10x1x64xbf16>
    %c0_25 = arith.constant 0 : index
    %c0_26 = arith.constant 0 : index
    %c9_27 = arith.constant 9 : index
    %c0_28 = arith.constant 0 : index
    %23 = vector.load %arg9[%c0_25, %c0_26, %c9_27, %c0_28] : memref<1x10x10x64xbf16, #tpu.memory_space<vmem>>, vector<1x10x1x64xbf16>
    tpu.vector_store %arg9[%c0_25, %c0_26, %c9_27, %c0_28], %22 {strides = array<i32>} : memref<1x10x10x64xbf16, #tpu.memory_space<vmem>>, vector<1x10x1x64xbf16>,
    %c0_29 = arith.constant 0 : index
    %c1 = arith.constant 1 : index
    %c1_30 = arith.constant 1 : index
    %c0_31 = arith.constant 0 : index
    %24 = vector.load %arg9[%c0_29, %c1, %c1_30, %c0_31] : memref<1x10x10x64xbf16, #tpu.memory_space<vmem>>, vector<1x8x8x64xbf16>
    tpu.vector_store %arg9[%c0_29, %c1, %c1_30, %c0_31], %15 {strides = array<i32>} : memref<1x10x10x64xbf16, #tpu.memory_space<vmem>>, vector<1x8x8x64xbf16>,
    %c0_32 = arith.constant 0 : index
    %c0_33 = arith.constant 0 : index
    %c0_34 = arith.constant 0 : index
    %c0_35 = arith.constant 0 : index
    %25 = vector.load %arg9[%c0_32, %c0_33, %c0_34, %c0_35] : memref<1x10x10x64xbf16, #tpu.memory_space<vmem>>, vector<1x8x8x64xbf16>
    %26 = vector.shape_cast %25 : vector<1x8x8x64xbf16> to vector<64x64xbf16>
    %c0_36 = arith.constant 0 : index
    %c0_37 = arith.constant 0 : index
    %c0_38 = arith.constant 0 : index
    %27 = vector.load %arg5[%c0_36, %c0_37, %c0_38] : memref<9x64x128xbf16, #tpu.memory_space<vmem>>, vector<1x64x128xbf16>
    %28 = vector.shape_cast %27 : vector<1x64x128xbf16> to vector<64x128xbf16>
    %cst_39 = arith.constant dense<0.000000e+00> : vector<64x128xf32>
    %29 = tpu.matmul %26, %28, %cst_39 {dimension_numbers = #tpu.dot_dimension_numbers<[1], [0], [0], [1], [0, 0, 1, 1], [], []>} : vector<64x64xbf16>, vector<64x128xbf16>, vector<64x128xf32> -> vector<64x128xf32>
    %c0_40 = arith.constant 0 : index
    %c0_41 = arith.constant 0 : index
    %c1_42 = arith.constant 1 : index
    %c0_43 = arith.constant 0 : index
    %30 = vector.load %arg9[%c0_40, %c0_41, %c1_42, %c0_43] : memref<1x10x10x64xbf16, #tpu.memory_space<vmem>>, vector<1x8x8x64xbf16>
    %31 = vector.shape_cast %30 : vector<1x8x8x64xbf16> to vector<64x64xbf16>
    %c1_44 = arith.constant 1 : index
    %c0_45 = arith.constant 0 : index
    %c0_46 = arith.constant 0 : index
    %32 = vector.load %arg5[%c1_44, %c0_45, %c0_46] : memref<9x64x128xbf16, #tpu.memory_space<vmem>>, vector<1x64x128xbf16>
    %33 = vector.shape_cast %32 : vector<1x64x128xbf16> to vector<64x128xbf16>
    %cst_47 = arith.constant dense<0.000000e+00> : vector<64x128xf32>
    %34 = tpu.matmul %31, %33, %cst_47 {dimension_numbers = #tpu.dot_dimension_numbers<[1], [0], [0], [1], [0, 0, 1, 1], [], []>} : vector<64x64xbf16>, vector<64x128xbf16>, vector<64x128xf32> -> vector<64x128xf32>
    %35 = arith.addf %29, %34 : vector<64x128xf32>
    %c0_48 = arith.constant 0 : index
    %c0_49 = arith.constant 0 : index
    %c2 = arith.constant 2 : index
    %c0_50 = arith.constant 0 : index
    %36 = vector.load %arg9[%c0_48, %c0_49, %c2, %c0_50] : memref<1x10x10x64xbf16, #tpu.memory_space<vmem>>, vector<1x8x8x64xbf16>
    %37 = vector.shape_cast %36 : vector<1x8x8x64xbf16> to vector<64x64xbf16>
    %c2_51 = arith.constant 2 : index
    %c0_52 = arith.constant 0 : index
    %c0_53 = arith.constant 0 : index
    %38 = vector.load %arg5[%c2_51, %c0_52, %c0_53] : memref<9x64x128xbf16, #tpu.memory_space<vmem>>, vector<1x64x128xbf16>
    %39 = vector.shape_cast %38 : vector<1x64x128xbf16> to vector<64x128xbf16>
    %cst_54 = arith.constant dense<0.000000e+00> : vector<64x128xf32>
    %40 = tpu.matmul %37, %39, %cst_54 {dimension_numbers = #tpu.dot_dimension_numbers<[1], [0], [0], [1], [0, 0, 1, 1], [], []>} : vector<64x64xbf16>, vector<64x128xbf16>, vector<64x128xf32> -> vector<64x128xf32>
    %41 = arith.addf %35, %40 : vector<64x128xf32>
    %c0_55 = arith.constant 0 : index
    %c1_56 = arith.constant 1 : index
    %c0_57 = arith.constant 0 : index
    %c0_58 = arith.constant 0 : index
    %42 = vector.load %arg9[%c0_55, %c1_56, %c0_57, %c0_58] : memref<1x10x10x64xbf16, #tpu.memory_space<vmem>>, vector<1x8x8x64xbf16>
    %43 = vector.shape_cast %42 : vector<1x8x8x64xbf16> to vector<64x64xbf16>
    %c3 = arith.constant 3 : index
    %c0_59 = arith.constant 0 : index
    %c0_60 = arith.constant 0 : index
    %44 = vector.load %arg5[%c3, %c0_59, %c0_60] : memref<9x64x128xbf16, #tpu.memory_space<vmem>>, vector<1x64x128xbf16>
    %45 = vector.shape_cast %44 : vector<1x64x128xbf16> to vector<64x128xbf16>
    %cst_61 = arith.constant dense<0.000000e+00> : vector<64x128xf32>
    %46 = tpu.matmul %43, %45, %cst_61 {dimension_numbers = #tpu.dot_dimension_numbers<[1], [0], [0], [1], [0, 0, 1, 1], [], []>} : vector<64x64xbf16>, vector<64x128xbf16>, vector<64x128xf32> -> vector<64x128xf32>
    %47 = arith.addf %41, %46 : vector<64x128xf32>
    %c0_62 = arith.constant 0 : index
    %c1_63 = arith.constant 1 : index
    %c1_64 = arith.constant 1 : index
    %c0_65 = arith.constant 0 : index
    %48 = vector.load %arg9[%c0_62, %c1_63, %c1_64, %c0_65] : memref<1x10x10x64xbf16, #tpu.memory_space<vmem>>, vector<1x8x8x64xbf16>
    %49 = vector.shape_cast %48 : vector<1x8x8x64xbf16> to vector<64x64xbf16>
    %c4 = arith.constant 4 : index
    %c0_66 = arith.constant 0 : index
    %c0_67 = arith.constant 0 : index
    %50 = vector.load %arg5[%c4, %c0_66, %c0_67] : memref<9x64x128xbf16, #tpu.memory_space<vmem>>, vector<1x64x128xbf16>
    %51 = vector.shape_cast %50 : vector<1x64x128xbf16> to vector<64x128xbf16>
    %cst_68 = arith.constant dense<0.000000e+00> : vector<64x128xf32>
    %52 = tpu.matmul %49, %51, %cst_68 {dimension_numbers = #tpu.dot_dimension_numbers<[1], [0], [0], [1], [0, 0, 1, 1], [], []>} : vector<64x64xbf16>, vector<64x128xbf16>, vector<64x128xf32> -> vector<64x128xf32>
    %53 = arith.addf %47, %52 : vector<64x128xf32>
    %c0_69 = arith.constant 0 : index
    %c1_70 = arith.constant 1 : index
    %c2_71 = arith.constant 2 : index
    %c0_72 = arith.constant 0 : index
    %54 = vector.load %arg9[%c0_69, %c1_70, %c2_71, %c0_72] : memref<1x10x10x64xbf16, #tpu.memory_space<vmem>>, vector<1x8x8x64xbf16>
    %55 = vector.shape_cast %54 : vector<1x8x8x64xbf16> to vector<64x64xbf16>
    %c5 = arith.constant 5 : index
    %c0_73 = arith.constant 0 : index
    %c0_74 = arith.constant 0 : index
    %56 = vector.load %arg5[%c5, %c0_73, %c0_74] : memref<9x64x128xbf16, #tpu.memory_space<vmem>>, vector<1x64x128xbf16>
    %57 = vector.shape_cast %56 : vector<1x64x128xbf16> to vector<64x128xbf16>
    %cst_75 = arith.constant dense<0.000000e+00> : vector<64x128xf32>
    %58 = tpu.matmul %55, %57, %cst_75 {dimension_numbers = #tpu.dot_dimension_numbers<[1], [0], [0], [1], [0, 0, 1, 1], [], []>} : vector<64x64xbf16>, vector<64x128xbf16>, vector<64x128xf32> -> vector<64x128xf32>
    %59 = arith.addf %53, %58 : vector<64x128xf32>
    %c0_76 = arith.constant 0 : index
    %c2_77 = arith.constant 2 : index
    %c0_78 = arith.constant 0 : index
    %c0_79 = arith.constant 0 : index
    %60 = vector.load %arg9[%c0_76, %c2_77, %c0_78, %c0_79] : memref<1x10x10x64xbf16, #tpu.memory_space<vmem>>, vector<1x8x8x64xbf16>
    %61 = vector.shape_cast %60 : vector<1x8x8x64xbf16> to vector<64x64xbf16>
    %c6 = arith.constant 6 : index
    %c0_80 = arith.constant 0 : index
    %c0_81 = arith.constant 0 : index
    %62 = vector.load %arg5[%c6, %c0_80, %c0_81] : memref<9x64x128xbf16, #tpu.memory_space<vmem>>, vector<1x64x128xbf16>
    %63 = vector.shape_cast %62 : vector<1x64x128xbf16> to vector<64x128xbf16>
    %cst_82 = arith.constant dense<0.000000e+00> : vector<64x128xf32>
    %64 = tpu.matmul %61, %63, %cst_82 {dimension_numbers = #tpu.dot_dimension_numbers<[1], [0], [0], [1], [0, 0, 1, 1], [], []>} : vector<64x64xbf16>, vector<64x128xbf16>, vector<64x128xf32> -> vector<64x128xf32>
    %65 = arith.addf %59, %64 : vector<64x128xf32>
    %c0_83 = arith.constant 0 : index
    %c2_84 = arith.constant 2 : index
    %c1_85 = arith.constant 1 : index
    %c0_86 = arith.constant 0 : index
    %66 = vector.load %arg9[%c0_83, %c2_84, %c1_85, %c0_86] : memref<1x10x10x64xbf16, #tpu.memory_space<vmem>>, vector<1x8x8x64xbf16>
    %67 = vector.shape_cast %66 : vector<1x8x8x64xbf16> to vector<64x64xbf16>
    %c7 = arith.constant 7 : index
    %c0_87 = arith.constant 0 : index
    %c0_88 = arith.constant 0 : index
    %68 = vector.load %arg5[%c7, %c0_87, %c0_88] : memref<9x64x128xbf16, #tpu.memory_space<vmem>>, vector<1x64x128xbf16>
    %69 = vector.shape_cast %68 : vector<1x64x128xbf16> to vector<64x128xbf16>
    %cst_89 = arith.constant dense<0.000000e+00> : vector<64x128xf32>
    %70 = tpu.matmul %67, %69, %cst_89 {dimension_numbers = #tpu.dot_dimension_numbers<[1], [0], [0], [1], [0, 0, 1, 1], [], []>} : vector<64x64xbf16>, vector<64x128xbf16>, vector<64x128xf32> -> vector<64x128xf32>
    %71 = arith.addf %65, %70 : vector<64x128xf32>
    %c0_90 = arith.constant 0 : index
    %c2_91 = arith.constant 2 : index
    %c2_92 = arith.constant 2 : index
    %c0_93 = arith.constant 0 : index
    %72 = vector.load %arg9[%c0_90, %c2_91, %c2_92, %c0_93] : memref<1x10x10x64xbf16, #tpu.memory_space<vmem>>, vector<1x8x8x64xbf16>
    %73 = vector.shape_cast %72 : vector<1x8x8x64xbf16> to vector<64x64xbf16>
    %c8 = arith.constant 8 : index
    %c0_94 = arith.constant 0 : index
    %c0_95 = arith.constant 0 : index
    %74 = vector.load %arg5[%c8, %c0_94, %c0_95] : memref<9x64x128xbf16, #tpu.memory_space<vmem>>, vector<1x64x128xbf16>
    %75 = vector.shape_cast %74 : vector<1x64x128xbf16> to vector<64x128xbf16>
    %cst_96 = arith.constant dense<0.000000e+00> : vector<64x128xf32>
    %76 = tpu.matmul %73, %75, %cst_96 {dimension_numbers = #tpu.dot_dimension_numbers<[1], [0], [0], [1], [0, 0, 1, 1], [], []>} : vector<64x64xbf16>, vector<64x128xbf16>, vector<64x128xf32> -> vector<64x128xf32>
    %77 = arith.addf %71, %76 : vector<64x128xf32>
    %c0_97 = arith.constant 0 : index
    %c0_98 = arith.constant 0 : index
    %78 = vector.load %arg6[%c0_97, %c0_98] : memref<1x128xf32, #tpu.memory_space<vmem>>, vector<1x128xf32>
    %79 = vector.broadcast %78 : vector<1x128xf32> to vector<64x128xf32>
    %80 = arith.mulf %77, %79 : vector<64x128xf32>
    %c0_99 = arith.constant 0 : index
    %c0_100 = arith.constant 0 : index
    %81 = vector.load %arg7[%c0_99, %c0_100] : memref<1x128xf32, #tpu.memory_space<vmem>>, vector<1x128xf32>
    %82 = vector.broadcast %81 : vector<1x128xf32> to vector<64x128xf32>
    %83 = arith.addf %80, %82 : vector<64x128xf32>
    %cst_101 = arith.constant 0.000000e+00 : f32
    %84 = vector.broadcast %cst_101 : f32 to vector<64x128xf32>
    %85 = arith.maximumf %83, %84 : vector<64x128xf32>
    %86 = vector.shape_cast %85 : vector<64x128xf32> to vector<4x2x4x2x128xf32>
    %cst_102 = arith.constant dense<0xFF800000> : vector<4x4x128xf32>
    %87 = vector.multi_reduction <maximumf>, %86, %cst_102 [1, 3] : vector<4x2x4x2x128xf32> to vector<4x4x128xf32>
    %88 = vector.shape_cast %87 : vector<4x4x128xf32> to vector<1x4x4x128xf32>
    %89 = arith.truncf %88 : vector<1x4x4x128xf32> to vector<1x4x4x128xbf16>
    %c0_103 = arith.constant 0 : index
    %c0_104 = arith.constant 0 : index
    %c0_105 = arith.constant 0 : index
    %c0_106 = arith.constant 0 : index
    %90 = vector.load %arg8[%c0_103, %c0_104, %c0_105, %c0_106] : memref<1x4x4x128xbf16, #tpu.memory_space<vmem>>, vector<1x4x4x128xbf16>
    tpu.vector_store %arg8[%c0_103, %c0_104, %c0_105, %c0_106], %89 {strides = array<i32>} : memref<1x4x4x128xbf16, #tpu.memory_space<vmem>>, vector<1x4x4x128xbf16>,
    return
  }
  func.func @transform_0(%arg0: i32) -> (i32, i32, i32) {
    %c0_i32 = arith.constant 0 : i32
    %c0_i32_0 = arith.constant 0 : i32
    %c0_i32_1 = arith.constant 0 : i32
    return %arg0, %c0_i32, %c0_i32_0 : i32, i32, i32
  }
  func.func @transform_1(%arg0: i32) -> (i32, i32) {
    %c0_i32 = arith.constant 0 : i32
    %c0_i32_0 = arith.constant 0 : i32
    %c0_i32_1 = arith.constant 0 : i32
    return %c0_i32, %c0_i32_0 : i32, i32
  }
  func.func @transform_2(%arg0: i32) -> (i32, i32) {
    %c0_i32 = arith.constant 0 : i32
    %c0_i32_0 = arith.constant 0 : i32
    %c0_i32_1 = arith.constant 0 : i32
    return %c0_i32, %c0_i32_0 : i32, i32
  }
  func.func @transform_3(%arg0: i32) -> (i32, i32) {
    %c0_i32 = arith.constant 0 : i32
    %c0_i32_0 = arith.constant 0 : i32
    %c0_i32_1 = arith.constant 0 : i32
    return %c0_i32, %c0_i32_0 : i32, i32
  }
  func.func @transform_4(%arg0: i32) -> (i32, i32, i32) {
    %c0_i32 = arith.constant 0 : i32
    %c0_i32_0 = arith.constant 0 : i32
    %c0_i32_1 = arith.constant 0 : i32
    %c0_i32_2 = arith.constant 0 : i32
    return %c0_i32, %c0_i32_0, %c0_i32_1 : i32, i32, i32
  }
  func.func @transform_5(%arg0: i32) -> (i32, i32) {
    %c0_i32 = arith.constant 0 : i32
    %c0_i32_0 = arith.constant 0 : i32
    %c0_i32_1 = arith.constant 0 : i32
    return %c0_i32, %c0_i32_0 : i32, i32
  }
  func.func @transform_6(%arg0: i32) -> (i32, i32) {
    %c0_i32 = arith.constant 0 : i32
    %c0_i32_0 = arith.constant 0 : i32
    %c0_i32_1 = arith.constant 0 : i32
    return %c0_i32, %c0_i32_0 : i32, i32
  }
  func.func @transform_7(%arg0: i32) -> (i32, i32, i32, i32) {
    %c0_i32 = arith.constant 0 : i32
    %c0_i32_0 = arith.constant 0 : i32
    %c0_i32_1 = arith.constant 0 : i32
    %c0_i32_2 = arith.constant 0 : i32
    return %arg0, %c0_i32, %c0_i32_0, %c0_i32_1 : i32, i32, i32, i32
  }
}

module attributes {stable_mosaic.version = 11 : i64} {
  func.func @head_kernel(%arg0: i32, %arg1: memref<2x512xbf16, #tpu.memory_space<vmem>>, %arg2: memref<512x512xbf16, #tpu.memory_space<vmem>>, %arg3: memref<2x48xbf16, #tpu.memory_space<vmem>>, %arg4: memref<2x3x256xf32, #tpu.memory_space<vmem>>, %arg5: memref<3x7xf32, #tpu.memory_space<smem>>, %arg6: memref<1x7xf32, #tpu.memory_space<smem>>, %arg7: memref<7x16xf32, #tpu.memory_space<vmem>>, %arg8: memref<1x16xf32, #tpu.memory_space<vmem>>, %arg9: memref<16x7xf32, #tpu.memory_space<vmem>>, %arg10: memref<1x7xf32, #tpu.memory_space<vmem>>, %arg11: memref<48x768xbf16, #tpu.memory_space<vmem>>, %arg12: memref<1x768xf32, #tpu.memory_space<vmem>>, %arg13: memref<768x512xbf16, #tpu.memory_space<vmem>>, %arg14: memref<7x512xbf16, #tpu.memory_space<vmem>>, %arg15: memref<1x512xf32, #tpu.memory_space<vmem>>, %arg16: memref<1x512xf32, #tpu.memory_space<vmem>>, %arg17: memref<512x256xbf16, #tpu.memory_space<vmem>>, %arg18: memref<1x256xf32, #tpu.memory_space<vmem>>, %arg19: memref<1x256xf32, #tpu.memory_space<vmem>>, %arg20: memref<256x4xbf16, #tpu.memory_space<vmem>>, %arg21: memref<1x4xf32, #tpu.memory_space<vmem>>, %arg22: memref<2x4xf32, #tpu.memory_space<vmem>>, %arg23: memref<2x512xf32, #tpu.memory_space<vmem>>) attributes {dimension_semantics = [#tpu.dimension_semantics<arbitrary>], iteration_bounds = array<i64: 4>, scalar_prefetch = 0 : i64, scratch_operands = 1 : i64, tpu.core_type = #tpu.core_type<tc>, window_params = [{transform_indices = @transform_0, window_bounds = array<i64: 2, 512>}, {transform_indices = @transform_1, window_bounds = array<i64: 512, 512>}, {pipeline_mode = #tpu.pipeline_mode<synchronous>, transform_indices = @transform_2, window_bounds = array<i64: 2, 48>}, {pipeline_mode = #tpu.pipeline_mode<synchronous>, transform_indices = @transform_3, window_bounds = array<i64: 2, 3, 256>}, {transform_indices = @transform_4, window_bounds = array<i64: 3, 7>}, {transform_indices = @transform_5, window_bounds = array<i64: 1, 7>}, {pipeline_mode = #tpu.pipeline_mode<synchronous>, transform_indices = @transform_6, window_bounds = array<i64: 7, 16>}, {pipeline_mode = #tpu.pipeline_mode<synchronous>, transform_indices = @transform_7, window_bounds = array<i64: 1, 16>}, {pipeline_mode = #tpu.pipeline_mode<synchronous>, transform_indices = @transform_8, window_bounds = array<i64: 16, 7>}, {pipeline_mode = #tpu.pipeline_mode<synchronous>, transform_indices = @transform_9, window_bounds = array<i64: 1, 7>}, {pipeline_mode = #tpu.pipeline_mode<synchronous>, transform_indices = @transform_10, window_bounds = array<i64: 48, 768>}, {pipeline_mode = #tpu.pipeline_mode<synchronous>, transform_indices = @transform_11, window_bounds = array<i64: 1, 768>}, {pipeline_mode = #tpu.pipeline_mode<synchronous>, transform_indices = @transform_12, window_bounds = array<i64: 768, 512>}, {pipeline_mode = #tpu.pipeline_mode<synchronous>, transform_indices = @transform_13, window_bounds = array<i64: 7, 512>}, {pipeline_mode = #tpu.pipeline_mode<synchronous>, transform_indices = @transform_14, window_bounds = array<i64: 1, 512>}, {pipeline_mode = #tpu.pipeline_mode<synchronous>, transform_indices = @transform_15, window_bounds = array<i64: 1, 512>}, {pipeline_mode = #tpu.pipeline_mode<synchronous>, transform_indices = @transform_16, window_bounds = array<i64: 512, 256>}, {pipeline_mode = #tpu.pipeline_mode<synchronous>, transform_indices = @transform_17, window_bounds = array<i64: 1, 256>}, {pipeline_mode = #tpu.pipeline_mode<synchronous>, transform_indices = @transform_18, window_bounds = array<i64: 1, 256>}, {pipeline_mode = #tpu.pipeline_mode<synchronous>, transform_indices = @transform_19, window_bounds = array<i64: 256, 4>}, {pipeline_mode = #tpu.pipeline_mode<synchronous>, transform_indices = @transform_20, window_bounds = array<i64: 1, 4>}, {pipeline_mode = #tpu.pipeline_mode<synchronous>, transform_indices = @transform_21, window_bounds = array<i64: 2, 4>}]} {
    %c0_i32 = arith.constant 0 : i32
    %0 = arith.cmpi eq, %arg0, %c0_i32 : i32
    %1 = arith.extui %0 : i1 to i32
    %c0_i32_0 = arith.constant 0 : i32
    %2 = arith.cmpi ne, %1, %c0_i32_0 : i32
    scf.if %2 {
      %cst_9 = arith.constant 0.000000e+00 : f32
      %12 = vector.broadcast %cst_9 : f32 to vector<2x512xf32>
      %c0_10 = arith.constant 0 : index
      %c0_11 = arith.constant 0 : index
      %13 = vector.load %arg23[%c0_10, %c0_11] : memref<2x512xf32, #tpu.memory_space<vmem>>, vector<2x512xf32>
      tpu.vector_store %arg23[%c0_10, %c0_11], %12 {strides = array<i32>} : memref<2x512xf32, #tpu.memory_space<vmem>>, vector<2x512xf32>,
    } else {
    }
    %c0 = arith.constant 0 : index
    %c0_1 = arith.constant 0 : index
    %3 = vector.load %arg23[%c0, %c0_1] : memref<2x512xf32, #tpu.memory_space<vmem>>, vector<2x512xf32>
    %c0_2 = arith.constant 0 : index
    %c0_3 = arith.constant 0 : index
    %4 = vector.load %arg1[%c0_2, %c0_3] : memref<2x512xbf16, #tpu.memory_space<vmem>>, vector<2x512xbf16>
    %c0_4 = arith.constant 0 : index
    %c0_5 = arith.constant 0 : index
    %5 = vector.load %arg2[%c0_4, %c0_5] : memref<512x512xbf16, #tpu.memory_space<vmem>>, vector<512x512xbf16>
    %cst = arith.constant dense<0.000000e+00> : vector<2x512xf32>
    %6 = tpu.matmul %4, %5, %cst {dimension_numbers = #tpu.dot_dimension_numbers<[1], [0], [0], [1], [0, 0, 1, 1], [], []>} : vector<2x512xbf16>, vector<512x512xbf16>, vector<2x512xf32> -> vector<2x512xf32>
    %7 = arith.addf %3, %6 : vector<2x512xf32>
    %c0_6 = arith.constant 0 : index
    %c0_7 = arith.constant 0 : index
    %8 = vector.load %arg23[%c0_6, %c0_7] : memref<2x512xf32, #tpu.memory_space<vmem>>, vector<2x512xf32>
    tpu.vector_store %arg23[%c0_6, %c0_7], %7 {strides = array<i32>} : memref<2x512xf32, #tpu.memory_space<vmem>>, vector<2x512xf32>,
    %c3_i32 = arith.constant 3 : i32
    %9 = arith.cmpi eq, %arg0, %c3_i32 : i32
    %10 = arith.extui %9 : i1 to i32
    %c0_i32_8 = arith.constant 0 : i32
    %11 = arith.cmpi ne, %10, %c0_i32_8 : i32
    scf.if %11 {
      %c0_9 = arith.constant 0 : index
      %c0_10 = arith.constant 0 : index
      %c0_11 = arith.constant 0 : index
      %12 = vector.load %arg4[%c0_9, %c0_10, %c0_11] : memref<2x3x256xf32, #tpu.memory_space<vmem>>, vector<2x3x256xf32>
      %13 = vector.extract_strided_slice %12 {offsets = [0, 0, 0], sizes = [2, 1, 256], strides = [1, 1, 1]} : vector<2x3x256xf32> to vector<2x1x256xf32>
      %14 = vector.shape_cast %13 : vector<2x1x256xf32> to vector<2x256xf32>
      %c0_12 = arith.constant 0 : index
      %c0_13 = arith.constant 0 : index
      %15 = memref.load %arg5[%c0_12, %c0_13] : memref<3x7xf32, #tpu.memory_space<smem>>
      %16 = vector.broadcast %15 : f32 to vector<2x256xf32>
      %17 = arith.mulf %14, %16 : vector<2x256xf32>
      %18 = vector.extract_strided_slice %12 {offsets = [0, 1, 0], sizes = [2, 1, 256], strides = [1, 1, 1]} : vector<2x3x256xf32> to vector<2x1x256xf32>
      %19 = vector.shape_cast %18 : vector<2x1x256xf32> to vector<2x256xf32>
      %c1 = arith.constant 1 : index
      %c0_14 = arith.constant 0 : index
      %20 = memref.load %arg5[%c1, %c0_14] : memref<3x7xf32, #tpu.memory_space<smem>>
      %21 = vector.broadcast %20 : f32 to vector<2x256xf32>
      %22 = arith.mulf %19, %21 : vector<2x256xf32>
      %23 = arith.addf %17, %22 : vector<2x256xf32>
      %24 = vector.extract_strided_slice %12 {offsets = [0, 2, 0], sizes = [2, 1, 256], strides = [1, 1, 1]} : vector<2x3x256xf32> to vector<2x1x256xf32>
      %25 = vector.shape_cast %24 : vector<2x1x256xf32> to vector<2x256xf32>
      %c2 = arith.constant 2 : index
      %c0_15 = arith.constant 0 : index
      %26 = memref.load %arg5[%c2, %c0_15] : memref<3x7xf32, #tpu.memory_space<smem>>
      %27 = vector.broadcast %26 : f32 to vector<2x256xf32>
      %28 = arith.mulf %25, %27 : vector<2x256xf32>
      %29 = arith.addf %23, %28 : vector<2x256xf32>
      %c0_16 = arith.constant 0 : index
      %c0_17 = arith.constant 0 : index
      %30 = memref.load %arg6[%c0_16, %c0_17] : memref<1x7xf32, #tpu.memory_space<smem>>
      %31 = vector.broadcast %30 : f32 to vector<2x256xf32>
      %32 = arith.addf %29, %31 : vector<2x256xf32>
      %cst_18 = arith.constant 0.000000e+00 : f32
      %33 = vector.broadcast %cst_18 : f32 to vector<2x256xf32>
      %34 = arith.maximumf %32, %33 : vector<2x256xf32>
      %cst_19 = arith.constant dense<0.000000e+00> : vector<2xf32>
      %35 = vector.multi_reduction <add>, %34, %cst_19 [1] : vector<2x256xf32> to vector<2xf32>
      %36 = vector.shape_cast %35 : vector<2xf32> to vector<2x1xf32>
      %cst_20 = arith.constant 2.560000e+02 : f32
      %37 = vector.broadcast %cst_20 : f32 to vector<2x1xf32>
      %38 = arith.divf %36, %37 : vector<2x1xf32>
      %39 = vector.extract_strided_slice %12 {offsets = [0, 0, 0], sizes = [2, 1, 256], strides = [1, 1, 1]} : vector<2x3x256xf32> to vector<2x1x256xf32>
      %40 = vector.shape_cast %39 : vector<2x1x256xf32> to vector<2x256xf32>
      %c0_21 = arith.constant 0 : index
      %c1_22 = arith.constant 1 : index
      %41 = memref.load %arg5[%c0_21, %c1_22] : memref<3x7xf32, #tpu.memory_space<smem>>
      %42 = vector.broadcast %41 : f32 to vector<2x256xf32>
      %43 = arith.mulf %40, %42 : vector<2x256xf32>
      %44 = vector.extract_strided_slice %12 {offsets = [0, 1, 0], sizes = [2, 1, 256], strides = [1, 1, 1]} : vector<2x3x256xf32> to vector<2x1x256xf32>
      %45 = vector.shape_cast %44 : vector<2x1x256xf32> to vector<2x256xf32>
      %c1_23 = arith.constant 1 : index
      %c1_24 = arith.constant 1 : index
      %46 = memref.load %arg5[%c1_23, %c1_24] : memref<3x7xf32, #tpu.memory_space<smem>>
      %47 = vector.broadcast %46 : f32 to vector<2x256xf32>
      %48 = arith.mulf %45, %47 : vector<2x256xf32>
      %49 = arith.addf %43, %48 : vector<2x256xf32>
      %50 = vector.extract_strided_slice %12 {offsets = [0, 2, 0], sizes = [2, 1, 256], strides = [1, 1, 1]} : vector<2x3x256xf32> to vector<2x1x256xf32>
      %51 = vector.shape_cast %50 : vector<2x1x256xf32> to vector<2x256xf32>
      %c2_25 = arith.constant 2 : index
      %c1_26 = arith.constant 1 : index
      %52 = memref.load %arg5[%c2_25, %c1_26] : memref<3x7xf32, #tpu.memory_space<smem>>
      %53 = vector.broadcast %52 : f32 to vector<2x256xf32>
      %54 = arith.mulf %51, %53 : vector<2x256xf32>
      %55 = arith.addf %49, %54 : vector<2x256xf32>
      %c0_27 = arith.constant 0 : index
      %c1_28 = arith.constant 1 : index
      %56 = memref.load %arg6[%c0_27, %c1_28] : memref<1x7xf32, #tpu.memory_space<smem>>
      %57 = vector.broadcast %56 : f32 to vector<2x256xf32>
      %58 = arith.addf %55, %57 : vector<2x256xf32>
      %cst_29 = arith.constant 0.000000e+00 : f32
      %59 = vector.broadcast %cst_29 : f32 to vector<2x256xf32>
      %60 = arith.maximumf %58, %59 : vector<2x256xf32>
      %cst_30 = arith.constant dense<0.000000e+00> : vector<2xf32>
      %61 = vector.multi_reduction <add>, %60, %cst_30 [1] : vector<2x256xf32> to vector<2xf32>
      %62 = vector.shape_cast %61 : vector<2xf32> to vector<2x1xf32>
      %cst_31 = arith.constant 2.560000e+02 : f32
      %63 = vector.broadcast %cst_31 : f32 to vector<2x1xf32>
      %64 = arith.divf %62, %63 : vector<2x1xf32>
      %65 = vector.extract_strided_slice %12 {offsets = [0, 0, 0], sizes = [2, 1, 256], strides = [1, 1, 1]} : vector<2x3x256xf32> to vector<2x1x256xf32>
      %66 = vector.shape_cast %65 : vector<2x1x256xf32> to vector<2x256xf32>
      %c0_32 = arith.constant 0 : index
      %c2_33 = arith.constant 2 : index
      %67 = memref.load %arg5[%c0_32, %c2_33] : memref<3x7xf32, #tpu.memory_space<smem>>
      %68 = vector.broadcast %67 : f32 to vector<2x256xf32>
      %69 = arith.mulf %66, %68 : vector<2x256xf32>
      %70 = vector.extract_strided_slice %12 {offsets = [0, 1, 0], sizes = [2, 1, 256], strides = [1, 1, 1]} : vector<2x3x256xf32> to vector<2x1x256xf32>
      %71 = vector.shape_cast %70 : vector<2x1x256xf32> to vector<2x256xf32>
      %c1_34 = arith.constant 1 : index
      %c2_35 = arith.constant 2 : index
      %72 = memref.load %arg5[%c1_34, %c2_35] : memref<3x7xf32, #tpu.memory_space<smem>>
      %73 = vector.broadcast %72 : f32 to vector<2x256xf32>
      %74 = arith.mulf %71, %73 : vector<2x256xf32>
      %75 = arith.addf %69, %74 : vector<2x256xf32>
      %76 = vector.extract_strided_slice %12 {offsets = [0, 2, 0], sizes = [2, 1, 256], strides = [1, 1, 1]} : vector<2x3x256xf32> to vector<2x1x256xf32>
      %77 = vector.shape_cast %76 : vector<2x1x256xf32> to vector<2x256xf32>
      %c2_36 = arith.constant 2 : index
      %c2_37 = arith.constant 2 : index
      %78 = memref.load %arg5[%c2_36, %c2_37] : memref<3x7xf32, #tpu.memory_space<smem>>
      %79 = vector.broadcast %78 : f32 to vector<2x256xf32>
      %80 = arith.mulf %77, %79 : vector<2x256xf32>
      %81 = arith.addf %75, %80 : vector<2x256xf32>
      %c0_38 = arith.constant 0 : index
      %c2_39 = arith.constant 2 : index
      %82 = memref.load %arg6[%c0_38, %c2_39] : memref<1x7xf32, #tpu.memory_space<smem>>
      %83 = vector.broadcast %82 : f32 to vector<2x256xf32>
      %84 = arith.addf %81, %83 : vector<2x256xf32>
      %cst_40 = arith.constant 0.000000e+00 : f32
      %85 = vector.broadcast %cst_40 : f32 to vector<2x256xf32>
      %86 = arith.maximumf %84, %85 : vector<2x256xf32>
      %cst_41 = arith.constant dense<0.000000e+00> : vector<2xf32>
      %87 = vector.multi_reduction <add>, %86, %cst_41 [1] : vector<2x256xf32> to vector<2xf32>
      %88 = vector.shape_cast %87 : vector<2xf32> to vector<2x1xf32>
      %cst_42 = arith.constant 2.560000e+02 : f32
      %89 = vector.broadcast %cst_42 : f32 to vector<2x1xf32>
      %90 = arith.divf %88, %89 : vector<2x1xf32>
      %91 = vector.extract_strided_slice %12 {offsets = [0, 0, 0], sizes = [2, 1, 256], strides = [1, 1, 1]} : vector<2x3x256xf32> to vector<2x1x256xf32>
      %92 = vector.shape_cast %91 : vector<2x1x256xf32> to vector<2x256xf32>
      %c0_43 = arith.constant 0 : index
      %c3 = arith.constant 3 : index
      %93 = memref.load %arg5[%c0_43, %c3] : memref<3x7xf32, #tpu.memory_space<smem>>
      %94 = vector.broadcast %93 : f32 to vector<2x256xf32>
      %95 = arith.mulf %92, %94 : vector<2x256xf32>
      %96 = vector.extract_strided_slice %12 {offsets = [0, 1, 0], sizes = [2, 1, 256], strides = [1, 1, 1]} : vector<2x3x256xf32> to vector<2x1x256xf32>
      %97 = vector.shape_cast %96 : vector<2x1x256xf32> to vector<2x256xf32>
      %c1_44 = arith.constant 1 : index
      %c3_45 = arith.constant 3 : index
      %98 = memref.load %arg5[%c1_44, %c3_45] : memref<3x7xf32, #tpu.memory_space<smem>>
      %99 = vector.broadcast %98 : f32 to vector<2x256xf32>
      %100 = arith.mulf %97, %99 : vector<2x256xf32>
      %101 = arith.addf %95, %100 : vector<2x256xf32>
      %102 = vector.extract_strided_slice %12 {offsets = [0, 2, 0], sizes = [2, 1, 256], strides = [1, 1, 1]} : vector<2x3x256xf32> to vector<2x1x256xf32>
      %103 = vector.shape_cast %102 : vector<2x1x256xf32> to vector<2x256xf32>
      %c2_46 = arith.constant 2 : index
      %c3_47 = arith.constant 3 : index
      %104 = memref.load %arg5[%c2_46, %c3_47] : memref<3x7xf32, #tpu.memory_space<smem>>
      %105 = vector.broadcast %104 : f32 to vector<2x256xf32>
      %106 = arith.mulf %103, %105 : vector<2x256xf32>
      %107 = arith.addf %101, %106 : vector<2x256xf32>
      %c0_48 = arith.constant 0 : index
      %c3_49 = arith.constant 3 : index
      %108 = memref.load %arg6[%c0_48, %c3_49] : memref<1x7xf32, #tpu.memory_space<smem>>
      %109 = vector.broadcast %108 : f32 to vector<2x256xf32>
      %110 = arith.addf %107, %109 : vector<2x256xf32>
      %cst_50 = arith.constant 0.000000e+00 : f32
      %111 = vector.broadcast %cst_50 : f32 to vector<2x256xf32>
      %112 = arith.maximumf %110, %111 : vector<2x256xf32>
      %cst_51 = arith.constant dense<0.000000e+00> : vector<2xf32>
      %113 = vector.multi_reduction <add>, %112, %cst_51 [1] : vector<2x256xf32> to vector<2xf32>
      %114 = vector.shape_cast %113 : vector<2xf32> to vector<2x1xf32>
      %cst_52 = arith.constant 2.560000e+02 : f32
      %115 = vector.broadcast %cst_52 : f32 to vector<2x1xf32>
      %116 = arith.divf %114, %115 : vector<2x1xf32>
      %117 = vector.extract_strided_slice %12 {offsets = [0, 0, 0], sizes = [2, 1, 256], strides = [1, 1, 1]} : vector<2x3x256xf32> to vector<2x1x256xf32>
      %118 = vector.shape_cast %117 : vector<2x1x256xf32> to vector<2x256xf32>
      %c0_53 = arith.constant 0 : index
      %c4 = arith.constant 4 : index
      %119 = memref.load %arg5[%c0_53, %c4] : memref<3x7xf32, #tpu.memory_space<smem>>
      %120 = vector.broadcast %119 : f32 to vector<2x256xf32>
      %121 = arith.mulf %118, %120 : vector<2x256xf32>
      %122 = vector.extract_strided_slice %12 {offsets = [0, 1, 0], sizes = [2, 1, 256], strides = [1, 1, 1]} : vector<2x3x256xf32> to vector<2x1x256xf32>
      %123 = vector.shape_cast %122 : vector<2x1x256xf32> to vector<2x256xf32>
      %c1_54 = arith.constant 1 : index
      %c4_55 = arith.constant 4 : index
      %124 = memref.load %arg5[%c1_54, %c4_55] : memref<3x7xf32, #tpu.memory_space<smem>>
      %125 = vector.broadcast %124 : f32 to vector<2x256xf32>
      %126 = arith.mulf %123, %125 : vector<2x256xf32>
      %127 = arith.addf %121, %126 : vector<2x256xf32>
      %128 = vector.extract_strided_slice %12 {offsets = [0, 2, 0], sizes = [2, 1, 256], strides = [1, 1, 1]} : vector<2x3x256xf32> to vector<2x1x256xf32>
      %129 = vector.shape_cast %128 : vector<2x1x256xf32> to vector<2x256xf32>
      %c2_56 = arith.constant 2 : index
      %c4_57 = arith.constant 4 : index
      %130 = memref.load %arg5[%c2_56, %c4_57] : memref<3x7xf32, #tpu.memory_space<smem>>
      %131 = vector.broadcast %130 : f32 to vector<2x256xf32>
      %132 = arith.mulf %129, %131 : vector<2x256xf32>
      %133 = arith.addf %127, %132 : vector<2x256xf32>
      %c0_58 = arith.constant 0 : index
      %c4_59 = arith.constant 4 : index
      %134 = memref.load %arg6[%c0_58, %c4_59] : memref<1x7xf32, #tpu.memory_space<smem>>
      %135 = vector.broadcast %134 : f32 to vector<2x256xf32>
      %136 = arith.addf %133, %135 : vector<2x256xf32>
      %cst_60 = arith.constant 0.000000e+00 : f32
      %137 = vector.broadcast %cst_60 : f32 to vector<2x256xf32>
      %138 = arith.maximumf %136, %137 : vector<2x256xf32>
      %cst_61 = arith.constant dense<0.000000e+00> : vector<2xf32>
      %139 = vector.multi_reduction <add>, %138, %cst_61 [1] : vector<2x256xf32> to vector<2xf32>
      %140 = vector.shape_cast %139 : vector<2xf32> to vector<2x1xf32>
      %cst_62 = arith.constant 2.560000e+02 : f32
      %141 = vector.broadcast %cst_62 : f32 to vector<2x1xf32>
      %142 = arith.divf %140, %141 : vector<2x1xf32>
      %143 = vector.extract_strided_slice %12 {offsets = [0, 0, 0], sizes = [2, 1, 256], strides = [1, 1, 1]} : vector<2x3x256xf32> to vector<2x1x256xf32>
      %144 = vector.shape_cast %143 : vector<2x1x256xf32> to vector<2x256xf32>
      %c0_63 = arith.constant 0 : index
      %c5 = arith.constant 5 : index
      %145 = memref.load %arg5[%c0_63, %c5] : memref<3x7xf32, #tpu.memory_space<smem>>
      %146 = vector.broadcast %145 : f32 to vector<2x256xf32>
      %147 = arith.mulf %144, %146 : vector<2x256xf32>
      %148 = vector.extract_strided_slice %12 {offsets = [0, 1, 0], sizes = [2, 1, 256], strides = [1, 1, 1]} : vector<2x3x256xf32> to vector<2x1x256xf32>
      %149 = vector.shape_cast %148 : vector<2x1x256xf32> to vector<2x256xf32>
      %c1_64 = arith.constant 1 : index
      %c5_65 = arith.constant 5 : index
      %150 = memref.load %arg5[%c1_64, %c5_65] : memref<3x7xf32, #tpu.memory_space<smem>>
      %151 = vector.broadcast %150 : f32 to vector<2x256xf32>
      %152 = arith.mulf %149, %151 : vector<2x256xf32>
      %153 = arith.addf %147, %152 : vector<2x256xf32>
      %154 = vector.extract_strided_slice %12 {offsets = [0, 2, 0], sizes = [2, 1, 256], strides = [1, 1, 1]} : vector<2x3x256xf32> to vector<2x1x256xf32>
      %155 = vector.shape_cast %154 : vector<2x1x256xf32> to vector<2x256xf32>
      %c2_66 = arith.constant 2 : index
      %c5_67 = arith.constant 5 : index
      %156 = memref.load %arg5[%c2_66, %c5_67] : memref<3x7xf32, #tpu.memory_space<smem>>
      %157 = vector.broadcast %156 : f32 to vector<2x256xf32>
      %158 = arith.mulf %155, %157 : vector<2x256xf32>
      %159 = arith.addf %153, %158 : vector<2x256xf32>
      %c0_68 = arith.constant 0 : index
      %c5_69 = arith.constant 5 : index
      %160 = memref.load %arg6[%c0_68, %c5_69] : memref<1x7xf32, #tpu.memory_space<smem>>
      %161 = vector.broadcast %160 : f32 to vector<2x256xf32>
      %162 = arith.addf %159, %161 : vector<2x256xf32>
      %cst_70 = arith.constant 0.000000e+00 : f32
      %163 = vector.broadcast %cst_70 : f32 to vector<2x256xf32>
      %164 = arith.maximumf %162, %163 : vector<2x256xf32>
      %cst_71 = arith.constant dense<0.000000e+00> : vector<2xf32>
      %165 = vector.multi_reduction <add>, %164, %cst_71 [1] : vector<2x256xf32> to vector<2xf32>
      %166 = vector.shape_cast %165 : vector<2xf32> to vector<2x1xf32>
      %cst_72 = arith.constant 2.560000e+02 : f32
      %167 = vector.broadcast %cst_72 : f32 to vector<2x1xf32>
      %168 = arith.divf %166, %167 : vector<2x1xf32>
      %169 = vector.extract_strided_slice %12 {offsets = [0, 0, 0], sizes = [2, 1, 256], strides = [1, 1, 1]} : vector<2x3x256xf32> to vector<2x1x256xf32>
      %170 = vector.shape_cast %169 : vector<2x1x256xf32> to vector<2x256xf32>
      %c0_73 = arith.constant 0 : index
      %c6 = arith.constant 6 : index
      %171 = memref.load %arg5[%c0_73, %c6] : memref<3x7xf32, #tpu.memory_space<smem>>
      %172 = vector.broadcast %171 : f32 to vector<2x256xf32>
      %173 = arith.mulf %170, %172 : vector<2x256xf32>
      %174 = vector.extract_strided_slice %12 {offsets = [0, 1, 0], sizes = [2, 1, 256], strides = [1, 1, 1]} : vector<2x3x256xf32> to vector<2x1x256xf32>
      %175 = vector.shape_cast %174 : vector<2x1x256xf32> to vector<2x256xf32>
      %c1_74 = arith.constant 1 : index
      %c6_75 = arith.constant 6 : index
      %176 = memref.load %arg5[%c1_74, %c6_75] : memref<3x7xf32, #tpu.memory_space<smem>>
      %177 = vector.broadcast %176 : f32 to vector<2x256xf32>
      %178 = arith.mulf %175, %177 : vector<2x256xf32>
      %179 = arith.addf %173, %178 : vector<2x256xf32>
      %180 = vector.extract_strided_slice %12 {offsets = [0, 2, 0], sizes = [2, 1, 256], strides = [1, 1, 1]} : vector<2x3x256xf32> to vector<2x1x256xf32>
      %181 = vector.shape_cast %180 : vector<2x1x256xf32> to vector<2x256xf32>
      %c2_76 = arith.constant 2 : index
      %c6_77 = arith.constant 6 : index
      %182 = memref.load %arg5[%c2_76, %c6_77] : memref<3x7xf32, #tpu.memory_space<smem>>
      %183 = vector.broadcast %182 : f32 to vector<2x256xf32>
      %184 = arith.mulf %181, %183 : vector<2x256xf32>
      %185 = arith.addf %179, %184 : vector<2x256xf32>
      %c0_78 = arith.constant 0 : index
      %c6_79 = arith.constant 6 : index
      %186 = memref.load %arg6[%c0_78, %c6_79] : memref<1x7xf32, #tpu.memory_space<smem>>
      %187 = vector.broadcast %186 : f32 to vector<2x256xf32>
      %188 = arith.addf %185, %187 : vector<2x256xf32>
      %cst_80 = arith.constant 0.000000e+00 : f32
      %189 = vector.broadcast %cst_80 : f32 to vector<2x256xf32>
      %190 = arith.maximumf %188, %189 : vector<2x256xf32>
      %cst_81 = arith.constant dense<0.000000e+00> : vector<2xf32>
      %191 = vector.multi_reduction <add>, %190, %cst_81 [1] : vector<2x256xf32> to vector<2xf32>
      %192 = vector.shape_cast %191 : vector<2xf32> to vector<2x1xf32>
      %cst_82 = arith.constant 2.560000e+02 : f32
      %193 = vector.broadcast %cst_82 : f32 to vector<2x1xf32>
      %194 = arith.divf %192, %193 : vector<2x1xf32>
      %195 = tpu.concatenate %38, %64, %90, %116, %142, %168, %194 in 1 : vector<2x1xf32>, vector<2x1xf32>, vector<2x1xf32>, vector<2x1xf32>, vector<2x1xf32>, vector<2x1xf32>, vector<2x1xf32> -> vector<2x7xf32>
      %c0_83 = arith.constant 0 : index
      %c0_84 = arith.constant 0 : index
      %196 = vector.load %arg7[%c0_83, %c0_84] : memref<7x16xf32, #tpu.memory_space<vmem>>, vector<7x16xf32>
      %cst_85 = arith.constant dense<0.000000e+00> : vector<2x16xf32>
      %197 = tpu.matmul %195, %196, %cst_85 {dimension_numbers = #tpu.dot_dimension_numbers<[1], [0], [0], [1], [0, 0, 1, 1], [], []>} : vector<2x7xf32>, vector<7x16xf32>, vector<2x16xf32> -> vector<2x16xf32>
      %c0_86 = arith.constant 0 : index
      %c0_87 = arith.constant 0 : index
      %198 = vector.load %arg8[%c0_86, %c0_87] : memref<1x16xf32, #tpu.memory_space<vmem>>, vector<1x16xf32>
      %199 = vector.broadcast %198 : vector<1x16xf32> to vector<2x16xf32>
      %200 = arith.addf %197, %199 : vector<2x16xf32>
      %cst_88 = arith.constant 0.000000e+00 : f32
      %201 = vector.broadcast %cst_88 : f32 to vector<2x16xf32>
      %202 = arith.maximumf %200, %201 : vector<2x16xf32>
      %c0_89 = arith.constant 0 : index
      %c0_90 = arith.constant 0 : index
      %203 = vector.load %arg9[%c0_89, %c0_90] : memref<16x7xf32, #tpu.memory_space<vmem>>, vector<16x7xf32>
      %cst_91 = arith.constant dense<0.000000e+00> : vector<2x7xf32>
      %204 = tpu.matmul %202, %203, %cst_91 {dimension_numbers = #tpu.dot_dimension_numbers<[1], [0], [0], [1], [0, 0, 1, 1], [], []>} : vector<2x16xf32>, vector<16x7xf32>, vector<2x7xf32> -> vector<2x7xf32>
      %c0_92 = arith.constant 0 : index
      %c0_93 = arith.constant 0 : index
      %205 = vector.load %arg10[%c0_92, %c0_93] : memref<1x7xf32, #tpu.memory_space<vmem>>, vector<1x7xf32>
      %206 = vector.broadcast %205 : vector<1x7xf32> to vector<2x7xf32>
      %207 = arith.addf %204, %206 : vector<2x7xf32>
      %208 = arith.negf %207 : vector<2x7xf32>
      %209 = math.exp %208 : vector<2x7xf32>
      %cst_94 = arith.constant 1.000000e+00 : f32
      %210 = vector.broadcast %cst_94 : f32 to vector<2x7xf32>
      %211 = arith.addf %210, %209 : vector<2x7xf32>
      %212 = arith.divf %210, %211 : vector<2x7xf32>
      %213 = arith.mulf %195, %212 : vector<2x7xf32>
      %c0_95 = arith.constant 0 : index
      %c0_96 = arith.constant 0 : index
      %214 = vector.load %arg3[%c0_95, %c0_96] : memref<2x48xbf16, #tpu.memory_space<vmem>>, vector<2x48xbf16>
      %c0_97 = arith.constant 0 : index
      %c0_98 = arith.constant 0 : index
      %215 = vector.load %arg11[%c0_97, %c0_98] : memref<48x768xbf16, #tpu.memory_space<vmem>>, vector<48x768xbf16>
      %cst_99 = arith.constant dense<0.000000e+00> : vector<2x768xf32>
      %216 = tpu.matmul %214, %215, %cst_99 {dimension_numbers = #tpu.dot_dimension_numbers<[1], [0], [0], [1], [0, 0, 1, 1], [], []>} : vector<2x48xbf16>, vector<48x768xbf16>, vector<2x768xf32> -> vector<2x768xf32>
      %c0_100 = arith.constant 0 : index
      %c0_101 = arith.constant 0 : index
      %217 = vector.load %arg12[%c0_100, %c0_101] : memref<1x768xf32, #tpu.memory_space<vmem>>, vector<1x768xf32>
      %218 = vector.broadcast %217 : vector<1x768xf32> to vector<2x768xf32>
      %219 = arith.addf %216, %218 : vector<2x768xf32>
      %c0_102 = arith.constant 0 : index
      %c0_103 = arith.constant 0 : index
      %220 = vector.load %arg23[%c0_102, %c0_103] : memref<2x512xf32, #tpu.memory_space<vmem>>, vector<2x512xf32>
      %221 = arith.truncf %219 : vector<2x768xf32> to vector<2x768xbf16>
      %c0_104 = arith.constant 0 : index
      %c0_105 = arith.constant 0 : index
      %222 = vector.load %arg13[%c0_104, %c0_105] : memref<768x512xbf16, #tpu.memory_space<vmem>>, vector<768x512xbf16>
      %cst_106 = arith.constant dense<0.000000e+00> : vector<2x512xf32>
      %223 = tpu.matmul %221, %222, %cst_106 {dimension_numbers = #tpu.dot_dimension_numbers<[1], [0], [0], [1], [0, 0, 1, 1], [], []>} : vector<2x768xbf16>, vector<768x512xbf16>, vector<2x512xf32> -> vector<2x512xf32>
      %224 = arith.addf %220, %223 : vector<2x512xf32>
      %225 = arith.truncf %213 : vector<2x7xf32> to vector<2x7xbf16>
      %c0_107 = arith.constant 0 : index
      %c0_108 = arith.constant 0 : index
      %226 = vector.load %arg14[%c0_107, %c0_108] : memref<7x512xbf16, #tpu.memory_space<vmem>>, vector<7x512xbf16>
      %cst_109 = arith.constant dense<0.000000e+00> : vector<2x512xf32>
      %227 = tpu.matmul %225, %226, %cst_109 {dimension_numbers = #tpu.dot_dimension_numbers<[1], [0], [0], [1], [0, 0, 1, 1], [], []>} : vector<2x7xbf16>, vector<7x512xbf16>, vector<2x512xf32> -> vector<2x512xf32>
      %228 = arith.addf %224, %227 : vector<2x512xf32>
      %c0_110 = arith.constant 0 : index
      %c0_111 = arith.constant 0 : index
      %229 = vector.load %arg15[%c0_110, %c0_111] : memref<1x512xf32, #tpu.memory_space<vmem>>, vector<1x512xf32>
      %230 = vector.broadcast %229 : vector<1x512xf32> to vector<2x512xf32>
      %231 = arith.mulf %228, %230 : vector<2x512xf32>
      %c0_112 = arith.constant 0 : index
      %c0_113 = arith.constant 0 : index
      %232 = vector.load %arg16[%c0_112, %c0_113] : memref<1x512xf32, #tpu.memory_space<vmem>>, vector<1x512xf32>
      %233 = vector.broadcast %232 : vector<1x512xf32> to vector<2x512xf32>
      %234 = arith.addf %231, %233 : vector<2x512xf32>
      %cst_114 = arith.constant 0.000000e+00 : f32
      %235 = vector.broadcast %cst_114 : f32 to vector<2x512xf32>
      %236 = arith.maximumf %234, %235 : vector<2x512xf32>
      %237 = arith.truncf %236 : vector<2x512xf32> to vector<2x512xbf16>
      %c0_115 = arith.constant 0 : index
      %c0_116 = arith.constant 0 : index
      %238 = vector.load %arg17[%c0_115, %c0_116] : memref<512x256xbf16, #tpu.memory_space<vmem>>, vector<512x256xbf16>
      %cst_117 = arith.constant dense<0.000000e+00> : vector<2x256xf32>
      %239 = tpu.matmul %237, %238, %cst_117 {dimension_numbers = #tpu.dot_dimension_numbers<[1], [0], [0], [1], [0, 0, 1, 1], [], []>} : vector<2x512xbf16>, vector<512x256xbf16>, vector<2x256xf32> -> vector<2x256xf32>
      %c0_118 = arith.constant 0 : index
      %c0_119 = arith.constant 0 : index
      %240 = vector.load %arg18[%c0_118, %c0_119] : memref<1x256xf32, #tpu.memory_space<vmem>>, vector<1x256xf32>
      %241 = vector.broadcast %240 : vector<1x256xf32> to vector<2x256xf32>
      %242 = arith.mulf %239, %241 : vector<2x256xf32>
      %c0_120 = arith.constant 0 : index
      %c0_121 = arith.constant 0 : index
      %243 = vector.load %arg19[%c0_120, %c0_121] : memref<1x256xf32, #tpu.memory_space<vmem>>, vector<1x256xf32>
      %244 = vector.broadcast %243 : vector<1x256xf32> to vector<2x256xf32>
      %245 = arith.addf %242, %244 : vector<2x256xf32>
      %cst_122 = arith.constant 0.000000e+00 : f32
      %246 = vector.broadcast %cst_122 : f32 to vector<2x256xf32>
      %247 = arith.maximumf %245, %246 : vector<2x256xf32>
      %248 = arith.truncf %247 : vector<2x256xf32> to vector<2x256xbf16>
      %c0_123 = arith.constant 0 : index
      %c0_124 = arith.constant 0 : index
      %249 = vector.load %arg20[%c0_123, %c0_124] : memref<256x4xbf16, #tpu.memory_space<vmem>>, vector<256x4xbf16>
      %cst_125 = arith.constant dense<0.000000e+00> : vector<2x4xf32>
      %250 = tpu.matmul %248, %249, %cst_125 {dimension_numbers = #tpu.dot_dimension_numbers<[1], [0], [0], [1], [0, 0, 1, 1], [], []>} : vector<2x256xbf16>, vector<256x4xbf16>, vector<2x4xf32> -> vector<2x4xf32>
      %c0_126 = arith.constant 0 : index
      %c0_127 = arith.constant 0 : index
      %251 = vector.load %arg21[%c0_126, %c0_127] : memref<1x4xf32, #tpu.memory_space<vmem>>, vector<1x4xf32>
      %252 = vector.broadcast %251 : vector<1x4xf32> to vector<2x4xf32>
      %253 = arith.addf %250, %252 : vector<2x4xf32>
      %c0_128 = arith.constant 0 : index
      %c0_129 = arith.constant 0 : index
      %254 = vector.load %arg22[%c0_128, %c0_129] : memref<2x4xf32, #tpu.memory_space<vmem>>, vector<2x4xf32>
      tpu.vector_store %arg22[%c0_128, %c0_129], %253 {strides = array<i32>} : memref<2x4xf32, #tpu.memory_space<vmem>>, vector<2x4xf32>,
    } else {
    }
    return
  }
  func.func @transform_0(%arg0: i32) -> (i32, i32) {
    %c0_i32 = arith.constant 0 : i32
    %c0_i32_0 = arith.constant 0 : i32
    return %c0_i32, %arg0 : i32, i32
  }
  func.func @transform_1(%arg0: i32) -> (i32, i32) {
    %c0_i32 = arith.constant 0 : i32
    %c0_i32_0 = arith.constant 0 : i32
    return %arg0, %c0_i32 : i32, i32
  }
  func.func @transform_2(%arg0: i32) -> (i32, i32) {
    %c0_i32 = arith.constant 0 : i32
    %c0_i32_0 = arith.constant 0 : i32
    %c0_i32_1 = arith.constant 0 : i32
    return %c0_i32, %c0_i32_0 : i32, i32
  }
  func.func @transform_3(%arg0: i32) -> (i32, i32, i32) {
    %c0_i32 = arith.constant 0 : i32
    %c0_i32_0 = arith.constant 0 : i32
    %c0_i32_1 = arith.constant 0 : i32
    %c0_i32_2 = arith.constant 0 : i32
    return %c0_i32, %c0_i32_0, %c0_i32_1 : i32, i32, i32
  }
  func.func @transform_4(%arg0: i32) -> (i32, i32) {
    %c0_i32 = arith.constant 0 : i32
    %c0_i32_0 = arith.constant 0 : i32
    %c0_i32_1 = arith.constant 0 : i32
    return %c0_i32, %c0_i32_0 : i32, i32
  }
  func.func @transform_5(%arg0: i32) -> (i32, i32) {
    %c0_i32 = arith.constant 0 : i32
    %c0_i32_0 = arith.constant 0 : i32
    %c0_i32_1 = arith.constant 0 : i32
    return %c0_i32, %c0_i32_0 : i32, i32
  }
  func.func @transform_6(%arg0: i32) -> (i32, i32) {
    %c0_i32 = arith.constant 0 : i32
    %c0_i32_0 = arith.constant 0 : i32
    %c0_i32_1 = arith.constant 0 : i32
    return %c0_i32, %c0_i32_0 : i32, i32
  }
  func.func @transform_7(%arg0: i32) -> (i32, i32) {
    %c0_i32 = arith.constant 0 : i32
    %c0_i32_0 = arith.constant 0 : i32
    %c0_i32_1 = arith.constant 0 : i32
    return %c0_i32, %c0_i32_0 : i32, i32
  }
  func.func @transform_8(%arg0: i32) -> (i32, i32) {
    %c0_i32 = arith.constant 0 : i32
    %c0_i32_0 = arith.constant 0 : i32
    %c0_i32_1 = arith.constant 0 : i32
    return %c0_i32, %c0_i32_0 : i32, i32
  }
  func.func @transform_9(%arg0: i32) -> (i32, i32) {
    %c0_i32 = arith.constant 0 : i32
    %c0_i32_0 = arith.constant 0 : i32
    %c0_i32_1 = arith.constant 0 : i32
    return %c0_i32, %c0_i32_0 : i32, i32
  }
  func.func @transform_10(%arg0: i32) -> (i32, i32) {
    %c0_i32 = arith.constant 0 : i32
    %c0_i32_0 = arith.constant 0 : i32
    %c0_i32_1 = arith.constant 0 : i32
    return %c0_i32, %c0_i32_0 : i32, i32
  }
  func.func @transform_11(%arg0: i32) -> (i32, i32) {
    %c0_i32 = arith.constant 0 : i32
    %c0_i32_0 = arith.constant 0 : i32
    %c0_i32_1 = arith.constant 0 : i32
    return %c0_i32, %c0_i32_0 : i32, i32
  }
  func.func @transform_12(%arg0: i32) -> (i32, i32) {
    %c0_i32 = arith.constant 0 : i32
    %c0_i32_0 = arith.constant 0 : i32
    %c0_i32_1 = arith.constant 0 : i32
    return %c0_i32, %c0_i32_0 : i32, i32
  }
  func.func @transform_13(%arg0: i32) -> (i32, i32) {
    %c0_i32 = arith.constant 0 : i32
    %c0_i32_0 = arith.constant 0 : i32
    %c0_i32_1 = arith.constant 0 : i32
    return %c0_i32, %c0_i32_0 : i32, i32
  }
  func.func @transform_14(%arg0: i32) -> (i32, i32) {
    %c0_i32 = arith.constant 0 : i32
    %c0_i32_0 = arith.constant 0 : i32
    %c0_i32_1 = arith.constant 0 : i32
    return %c0_i32, %c0_i32_0 : i32, i32
  }
  func.func @transform_15(%arg0: i32) -> (i32, i32) {
    %c0_i32 = arith.constant 0 : i32
    %c0_i32_0 = arith.constant 0 : i32
    %c0_i32_1 = arith.constant 0 : i32
    return %c0_i32, %c0_i32_0 : i32, i32
  }
  func.func @transform_16(%arg0: i32) -> (i32, i32) {
    %c0_i32 = arith.constant 0 : i32
    %c0_i32_0 = arith.constant 0 : i32
    %c0_i32_1 = arith.constant 0 : i32
    return %c0_i32, %c0_i32_0 : i32, i32
  }
  func.func @transform_17(%arg0: i32) -> (i32, i32) {
    %c0_i32 = arith.constant 0 : i32
    %c0_i32_0 = arith.constant 0 : i32
    %c0_i32_1 = arith.constant 0 : i32
    return %c0_i32, %c0_i32_0 : i32, i32
  }
  func.func @transform_18(%arg0: i32) -> (i32, i32) {
    %c0_i32 = arith.constant 0 : i32
    %c0_i32_0 = arith.constant 0 : i32
    %c0_i32_1 = arith.constant 0 : i32
    return %c0_i32, %c0_i32_0 : i32, i32
  }
  func.func @transform_19(%arg0: i32) -> (i32, i32) {
    %c0_i32 = arith.constant 0 : i32
    %c0_i32_0 = arith.constant 0 : i32
    %c0_i32_1 = arith.constant 0 : i32
    return %c0_i32, %c0_i32_0 : i32, i32
  }
  func.func @transform_20(%arg0: i32) -> (i32, i32) {
    %c0_i32 = arith.constant 0 : i32
    %c0_i32_0 = arith.constant 0 : i32
    %c0_i32_1 = arith.constant 0 : i32
    return %c0_i32, %c0_i32_0 : i32, i32
  }
  func.func @transform_21(%arg0: i32) -> (i32, i32) {
    %c0_i32 = arith.constant 0 : i32
    %c0_i32_0 = arith.constant 0 : i32
    %c0_i32_1 = arith.constant 0 : i32
    return %c0_i32, %c0_i32_0 : i32, i32
  }
}

</mosaic_0001>

<llo_original>
// kernel: hybrid_forest_forward.2
$region0: #{hybrid_forest_forward.2}
  #allocation0 [shape = 'u32[]', space=smem, size = 0x4, offset = 0x4, fixed_abs, tag = 'smem constant byte address 0x4 - core index']
  #allocation1 [shape = 'u32[144,128]{1,0:T(1,128)}', space=vmem, size = 0x12000, scoped, tag = 'internal scratch']
  #allocation2 [shape = 'bf16[1,10,10,64]{3,2,1,0:T(8,128)(2,1)}', space=vmem, size = 0xa000, scoped, tag = 'scratch operand']
  %s0 = inlined_call_operand.vmem [shape: bf16[2,256,27], index: 0, kind: input, shape index: {}]
  %s1 = inlined_call_operand.hbm [shape: bf16[27,64], index: 1, kind: input, shape index: {}]
  %s2 = inlined_call_operand.hbm [shape: f32[1,64], index: 2, kind: input, shape index: {}]
  %s3 = inlined_call_operand.hbm [shape: f32[1,64], index: 3, kind: input, shape index: {}]
  %s4 = inlined_call_operand.hbm [shape: bf16[9,64,128], index: 4, kind: input, shape index: {}]
  %s5 = inlined_call_operand.hbm [shape: f32[1,128], index: 5, kind: input, shape index: {}]
  %s6 = inlined_call_operand.hbm [shape: f32[1,128], index: 6, kind: input, shape index: {}]
  %s7 = inlined_call_operand.vmem [shape: bf16[2,4,4,128], index: 7, kind: output, shape index: {}]
  %s8 = sld [smem:[#allocation0]]
  $region85: #{hybrid_forest_forward.2} parent=0
    _
  %s10 = ssub.s32 1, %s8
  %s11 = scalar_select 0, %s10, %s8
  $region1: #{hybrid_forest_forward.2} parent=0
    #allocation3 [shape = 'u8[8192]{0}', space=vmem, size = 0x2000, scoped, tag = 'input window, operand 1, single buffered']
    #allocation4 [shape = 's32[2]{0}', space=sflag, size = 0x8, scoped, tag = 'scoped memory for hybrid_forest_forward.2']
    #allocation5 [shape = 'u8[512]{0}', space=vmem, size = 0x400, scoped, tag = 'input window, operand 2, single buffered']
    #allocation6 [shape = 's32[1]{0}', space=sflag, size = 0x4, scoped, tag = 'scoped memory for hybrid_forest_forward.2']
    #allocation7 [shape = 'u8[512]{0}', space=vmem, size = 0x400, scoped, tag = 'input window, operand 3, single buffered']
    #allocation8 [shape = 'u8[147456]{0}', space=vmem, size = 0x24000, scoped, tag = 'input window, operand 4, single buffered']
    #allocation9 [shape = 's32[1]{0}', space=sflag, size = 0x4, scoped, tag = 'scoped memory for hybrid_forest_forward.2']
    #allocation10 [shape = 'u8[512]{0}', space=vmem, size = 0x400, scoped, tag = 'input window, operand 5, single buffered']
    #allocation11 [shape = 'u8[512]{0}', space=vmem, size = 0x400, scoped, tag = 'input window, operand 6, single buffered']
    #allocation12 [shape = 's32[1]{0}', space=sflag, size = 0x4, scoped, tag = 'scoped memory for hybrid_forest_forward.2']
    %12 = vsyncpa [#allocation4], 0
    %13 = vsyncpa [#allocation6], 0
    %14 = vsyncpa [#allocation9], 0
    %15 = vsyncpa [#allocation12], 0
    loop: start=0, step=1, limit=4
    $region2: #{hybrid_forest_forward.2} parent=1 // loop_pre_header
      _
    $region3: #{hybrid_forest_forward.2} parent=1 // loop_header
      %s17 = sphi 0, %s21
      %p18 = scmp.ge.s32.totalorder %s17, 4
      %s27 = sphi 0, %s29
      %s30 = sphi 0, %s27
      %s31 = sphi 0, %s30
      %s47 = sphi 0, %s31
      %s51 = sphi 0, %s51
      %s53 = sphi 0, %s51
      %s54 = sphi 0, %s53
      %s68 = sphi 0, %s54
      %s72 = sphi 0, %s72
      %s74 = sphi 0, %s72
      %s75 = sphi 0, %s74
      %s89 = sphi 0, %s75
      %s93 = sphi 0, %s93
      %s95 = sphi 0, %s93
      %s96 = sphi 0, %s95
      %s110 = sphi 0, %s96
      %s114 = sphi 0, %s114
      %s116 = sphi 0, %s114
      %s117 = sphi 0, %s116
      %s131 = sphi 0, %s117
      %s135 = sphi 0, %s135
      %s137 = sphi 0, %s135
      %s138 = sphi 0, %s137
      %s152 = sphi 0, %s138
      %s156 = sphi 0, %s156
      %s158 = sphi 0, %s156
      %s159 = sphi 0, %s158
      %s173 = sphi 0, %s159
      %s179 = sphi 0, %s181
      %s182 = sphi 0, %s179
      %s183 = sphi 0, %s182
      %s199 = sphi 0, %s183
    $region4: #{hybrid_forest_forward.2} parent=1 // loop_header_branch
      %20 = sbr.rel (%p18) target = $region8
    $region5: #{hybrid_forest_forward.2} parent=1 // loop_body
      %s22 = ssub.s32 %s17, 1
      %s23 = ssub.s32 %s17, 2
      %s24 = sadd.s32 %s17, 1
      %s25 = ssub.s32 %s17, %s24
      %p26 = scmp.eq.s32.totalorder %s25, 0
      %s28 = sadd.s32 %s27, 1
      %s29 = scalar_select %p26, %s27, %s28
      %p32 = pneg %p26
      %p33 = scmp.eq.s32.totalorder %s17, 1
      %p34 = por %p32, %p33
      %p35 = scmp.ne.s32.totalorder %s27, %s30
      %p36 = scmp.eq.s32.totalorder %s17, 0
      %p37 = por %p35, %p36
      %p38 = scmp.ne.s32.totalorder %s27, %s30
      %p39 = scmp.eq.s32.totalorder %s22, 1
      %p40 = por %p38, %p39
      %p41 = scmp.ne.s32.totalorder %s30, %s31
      %p42 = scmp.eq.s32.totalorder %s22, 0
      %p43 = por %p41, %p42
      %p44 = scmp.ne.s32.totalorder %s30, %s31
      %p45 = scmp.eq.s32.totalorder %s23, 1
      %p46 = por %p44, %p45
      %p48 = scmp.ne.s32.totalorder %s31, %s47
      %p49 = scmp.eq.s32.totalorder %s23, 0
      %p50 = por %p48, %p49
      %s52 = sadd.s32 %s51, 1
      %p55 = scmp.eq.s32.totalorder %s17, 1
      %p56 = scmp.ne.s32.totalorder %s51, %s53
      %p57 = scmp.eq.s32.totalorder %s17, 0
      %p58 = por %p56, %p57
      %p59 = scmp.ne.s32.totalorder %s51, %s53
      %p60 = scmp.eq.s32.totalorder %s22, 1
      %p61 = por %p59, %p60
      %p62 = scmp.ne.s32.totalorder %s53, %s54
      %p63 = scmp.eq.s32.totalorder %s22, 0
      %p64 = por %p62, %p63
      %p65 = scmp.ne.s32.totalorder %s53, %s54
      %p66 = scmp.eq.s32.totalorder %s23, 1
      %p67 = por %p65, %p66
      %p69 = scmp.ne.s32.totalorder %s54, %s68
      %p70 = scmp.eq.s32.totalorder %s23, 0
      %p71 = por %p69, %p70
      %s73 = sadd.s32 %s72, 1
      %p76 = scmp.eq.s32.totalorder %s17, 1
      %p77 = scmp.ne.s32.totalorder %s72, %s74
      %p78 = scmp.eq.s32.totalorder %s17, 0
      %p79 = por %p77, %p78
      %p80 = scmp.ne.s32.totalorder %s72, %s74
      %p81 = scmp.eq.s32.totalorder %s22, 1
      %p82 = por %p80, %p81
      %p83 = scmp.ne.s32.totalorder %s74, %s75
      %p84 = scmp.eq.s32.totalorder %s22, 0
      %p85 = por %p83, %p84
      %p86 = scmp.ne.s32.totalorder %s74, %s75
      %p87 = scmp.eq.s32.totalorder %s23, 1
      %p88 = por %p86, %p87
      %p90 = scmp.ne.s32.totalorder %s75, %s89
      %p91 = scmp.eq.s32.totalorder %s23, 0
      %p92 = por %p90, %p91
      %s94 = sadd.s32 %s93, 1
      %p97 = scmp.eq.s32.totalorder %s17, 1
      %p98 = scmp.ne.s32.totalorder %s93, %s95
      %p99 = scmp.eq.s32.totalorder %s17, 0
      %p100 = por %p98, %p99
      %p101 = scmp.ne.s32.totalorder %s93, %s95
      %p102 = scmp.eq.s32.totalorder %s22, 1
      %p103 = por %p101, %p102
      %p104 = scmp.ne.s32.totalorder %s95, %s96
      %p105 = scmp.eq.s32.totalorder %s22, 0
      %p106 = por %p104, %p105
      %p107 = scmp.ne.s32.totalorder %s95, %s96
      %p108 = scmp.eq.s32.totalorder %s23, 1
      %p109 = por %p107, %p108
      %p111 = scmp.ne.s32.totalorder %s96, %s110
      %p112 = scmp.eq.s32.totalorder %s23, 0
      %p113 = por %p111, %p112
      %s115 = sadd.s32 %s114, 1
      %p118 = scmp.eq.s32.totalorder %s17, 1
      %p119 = scmp.ne.s32.totalorder %s114, %s116
      %p120 = scmp.eq.s32.totalorder %s17, 0
      %p121 = por %p119, %p120
      %p122 = scmp.ne.s32.totalorder %s114, %s116
      %p123 = scmp.eq.s32.totalorder %s22, 1
      %p124 = por %p122, %p123
      %p125 = scmp.ne.s32.totalorder %s116, %s117
      %p126 = scmp.eq.s32.totalorder %s22, 0
      %p127 = por %p125, %p126
      %p128 = scmp.ne.s32.totalorder %s116, %s117
      %p129 = scmp.eq.s32.totalorder %s23, 1
      %p130 = por %p128, %p129
      %p132 = scmp.ne.s32.totalorder %s117, %s131
      %p133 = scmp.eq.s32.totalorder %s23, 0
      %p134 = por %p132, %p133
      %s136 = sadd.s32 %s135, 1
      %p139 = scmp.eq.s32.totalorder %s17, 1
      %p140 = scmp.ne.s32.totalorder %s135, %s137
      %p141 = scmp.eq.s32.totalorder %s17, 0
      %p142 = por %p140, %p141
      %p143 = scmp.ne.s32.totalorder %s135, %s137
      %p144 = scmp.eq.s32.totalorder %s22, 1
      %p145 = por %p143, %p144
      %p146 = scmp.ne.s32.totalorder %s137, %s138
      %p147 = scmp.eq.s32.totalorder %s22, 0
      %p148 = por %p146, %p147
      %p149 = scmp.ne.s32.totalorder %s137, %s138
      %p150 = scmp.eq.s32.totalorder %s23, 1
      %p151 = por %p149, %p150
      %p153 = scmp.ne.s32.totalorder %s138, %s152
      %p154 = scmp.eq.s32.totalorder %s23, 0
      %p155 = por %p153, %p154
      %s157 = sadd.s32 %s156, 1
      %p160 = scmp.eq.s32.totalorder %s17, 1
      %p161 = scmp.ne.s32.totalorder %s156, %s158
      %p162 = scmp.eq.s32.totalorder %s17, 0
      %p163 = por %p161, %p162
      %p164 = scmp.ne.s32.totalorder %s156, %s158
      %p165 = scmp.eq.s32.totalorder %s22, 1
      %p166 = por %p164, %p165
      %p167 = scmp.ne.s32.totalorder %s158, %s159
      %p168 = scmp.eq.s32.totalorder %s22, 0
      %p169 = por %p167, %p168
      %p170 = scmp.ne.s32.totalorder %s158, %s159
      %p171 = scmp.eq.s32.totalorder %s23, 1
      %p172 = por %p170, %p171
      %p174 = scmp.ne.s32.totalorder %s159, %s173
      %p175 = scmp.eq.s32.totalorder %s23, 0
      %p176 = por %p174, %p175
      %s177 = ssub.s32 %s17, %s24
      %p178 = scmp.eq.s32.totalorder %s177, 0
      %s180 = sadd.s32 %s179, 1
      %s181 = scalar_select %p178, %s179, %s180
      %p184 = pneg %p178
      %p185 = scmp.eq.s32.totalorder %s17, 1
      %p186 = por %p184, %p185
      %p187 = scmp.ne.s32.totalorder %s179, %s182
      %p188 = scmp.eq.s32.totalorder %s17, 0
      %p189 = por %p187, %p188
      %p190 = scmp.ne.s32.totalorder %s179, %s182
      %p191 = scmp.eq.s32.totalorder %s22, 1
      %p192 = por %p190, %p191
      %p193 = scmp.ne.s32.totalorder %s182, %s183
      %p194 = scmp.eq.s32.totalorder %s22, 0
      %p195 = por %p193, %p194
      %p196 = scmp.ne.s32.totalorder %s182, %s183
      %p197 = scmp.eq.s32.totalorder %s23, 1
      %p198 = por %p196, %p197
      %p200 = scmp.ne.s32.totalorder %s183, %s199
      %p201 = scmp.eq.s32.totalorder %s23, 0
      %p202 = por %p200, %p201
      %p203 = scmp.le.s32.totalorder 1, %s17
      %p204 = scmp.lt.s32.totalorder %s17, 3
      %p205 = pnand %p203, %p204
      %p206 = pneg %p205
      // Predicated region
      $region9: #{hybrid_forest_forward.2} parent=5 // pred_check
        _
      $region10: #{hybrid_forest_forward.2} parent=5 // pred_check_branch
        %208 = sbr.rel (%p205) target = $region12
      $region11: #{hybrid_forest_forward.2} parent=5 // pred_region
        %s209 = ssub.s32 %s17, 1
        // Predicated region
        $region13: #{hybrid_forest_forward.2} parent=11 // pred_check
          %p210 = pneg %p64
        $region14: #{hybrid_forest_forward.2} parent=11 // pred_check_branch
          %212 = sbr.rel (%p210) target = $region16
        $region15: #{hybrid_forest_forward.2} parent=11 // pred_region
          %s214 = ssub.s32 256, 256
          %215 = vsyncadd [#allocation4], %s214
          %s216 = sshll.u32 [#allocation3], 4
          %s217 = int_to_ptr.vmem [resolvable:$true] %s216
          %222 = dma.hbm_to_vmem [thread:$0]  %s1, 256, %s217, [#allocation4], 64, 64, 4
        $region16: #{hybrid_forest_forward.2} parent=11 // pred_fallthru
          _
        // Predicated region
        $region17: #{hybrid_forest_forward.2} parent=11 // pred_check
          %p223 = pneg %p85
        $region18: #{hybrid_forest_forward.2} parent=11 // pred_check_branch
          %225 = sbr.rel (%p223) target = $region20
        $region19: #{hybrid_forest_forward.2} parent=11 // pred_region
          %s227 = ssub.s32 16, 16
          %228 = vsyncadd [#allocation6], %s227
          %s230 = sshll.u32 [#allocation5], 4
          %s231 = int_to_ptr.vmem [resolvable:$true] %s230
          %233 = dma.hbm_to_vmem [thread:$0]  %s2, 16, %s231, [#allocation6]
        $region20: #{hybrid_forest_forward.2} parent=11 // pred_fallthru
          _
        // Predicated region
        $region21: #{hybrid_forest_forward.2} parent=11 // pred_check
          %p234 = pneg %p106
        $region22: #{hybrid_forest_forward.2} parent=11 // pred_check_branch
          %236 = sbr.rel (%p234) target = $region24
        $region23: #{hybrid_forest_forward.2} parent=11 // pred_region
          %s238 = ssub.s32 16, 16
          %239 = vsyncadd [#allocation6], %s238
          %s241 = sshll.u32 [#allocation7], 4
          %s242 = int_to_ptr.vmem [resolvable:$true] %s241
          %244 = dma.hbm_to_vmem [thread:$0]  %s3, 16, %s242, [#allocation6]
        $region24: #{hybrid_forest_forward.2} parent=11 // pred_fallthru
          _
        // Predicated region
        $region25: #{hybrid_forest_forward.2} parent=11 // pred_check
          %p245 = pneg %p127
        $region26: #{hybrid_forest_forward.2} parent=11 // pred_check_branch
          %247 = sbr.rel (%p245) target = $region28
        $region27: #{hybrid_forest_forward.2} parent=11 // pred_region
          %s249 = ssub.s32 4608, 4608
          %250 = vsyncadd [#allocation9], %s249
          %s251 = sshll.u32 [#allocation8], 4
          %s252 = int_to_ptr.vmem [resolvable:$true] %s251
          %257 = dma.hbm_to_vmem [thread:$0]  %s4, 4608, %s252, [#allocation9], 64, 64, 4
        $region28: #{hybrid_forest_forward.2} parent=11 // pred_fallthru
          _
        // Predicated region
        $region29: #{hybrid_forest_forward.2} parent=11 // pred_check
          %p258 = pneg %p148
        $region30: #{hybrid_forest_forward.2} parent=11 // pred_check_branch
          %260 = sbr.rel (%p258) target = $region32
        $region31: #{hybrid_forest_forward.2} parent=11 // pred_region
          %s262 = ssub.s32 16, 16
          %263 = vsyncadd [#allocation9], %s262
          %s265 = sshll.u32 [#allocation10], 4
          %s266 = int_to_ptr.vmem [resolvable:$true] %s265
          %268 = dma.hbm_to_vmem [thread:$0]  %s5, 16, %s266, [#allocation9]
        $region32: #{hybrid_forest_forward.2} parent=11 // pred_fallthru
          _
        // Predicated region
        $region33: #{hybrid_forest_forward.2} parent=11 // pred_check
          %p269 = pneg %p169
        $region34: #{hybrid_forest_forward.2} parent=11 // pred_check_branch
          %271 = sbr.rel (%p269) target = $region36
        $region35: #{hybrid_forest_forward.2} parent=11 // pred_region
          %s273 = ssub.s32 16, 16
          %274 = vsyncadd [#allocation12], %s273
          %s276 = sshll.u32 [#allocation11], 4
          %s277 = int_to_ptr.vmem [resolvable:$true] %s276
          %279 = dma.hbm_to_vmem [thread:$0]  %s6, 16, %s277, [#allocation12]
        $region36: #{hybrid_forest_forward.2} parent=11 // pred_fallthru
          _
      $region12: #{hybrid_forest_forward.2} parent=5 // pred_fallthru
        _
      %p280 = scmp.lt.s32.totalorder %s17, 2
      // Predicated region
      $region37: #{hybrid_forest_forward.2} parent=5 // pred_check
        %p281 = pneg %p280
      $region38: #{hybrid_forest_forward.2} parent=5 // pred_check_branch
        %283 = sbr.rel (%p281) target = $region40
      $region39: #{hybrid_forest_forward.2} parent=5 // pred_region
        // Predicated region
        $region41: #{hybrid_forest_forward.2} parent=39 // pred_check
          %p284 = pneg %p37
        $region42: #{hybrid_forest_forward.2} parent=39 // pred_check_branch
          %286 = sbr.rel (%p284) target = $region44
        $region43: #{hybrid_forest_forward.2} parent=39 // pred_region
          %p287 = scmp.lt.s32.totalorder %s17, 1
          %s288 = scalar_select %p287, %s17, 1
          %s289 = smul.addr %s288, 32
          %s290 = smul.addr %s289, 4
          %s291 = scalar_lea.vmem %s0, %s290
        $region44: #{hybrid_forest_forward.2} parent=39 // pred_fallthru
          _
      $region40: #{hybrid_forest_forward.2} parent=5 // pred_fallthru
        _
      %p292 = scmp.le.s32.totalorder 1, %s17
      %p293 = scmp.lt.s32.totalorder %s17, 3
      %p294 = pnand %p292, %p293
      %p295 = pneg %p294
      // Predicated region
      $region45: #{hybrid_forest_forward.2} parent=5 // pred_check
        _
      $region46: #{hybrid_forest_forward.2} parent=5 // pred_check_branch
        %297 = sbr.rel (%p294) target = $region48
      $region47: #{hybrid_forest_forward.2} parent=5 // pred_region
        %s298 = ssub.s32 %s17, 1
        // Predicated region
        $region49: #{hybrid_forest_forward.2} parent=47 // pred_check
          %p299 = pneg %p64
        $region50: #{hybrid_forest_forward.2} parent=47 // pred_check_branch
          %301 = sbr.rel (%p299) target = $region52
        $region51: #{hybrid_forest_forward.2} parent=47 // pred_region
          %302 = dma.done [#allocation4], 256
        $region52: #{hybrid_forest_forward.2} parent=47 // pred_fallthru
          _
        // Predicated region
        $region53: #{hybrid_forest_forward.2} parent=47 // pred_check
          %p303 = pneg %p85
        $region54: #{hybrid_forest_forward.2} parent=47 // pred_check_branch
          %305 = sbr.rel (%p303) target = $region56
        $region55: #{hybrid_forest_forward.2} parent=47 // pred_region
          %306 = dma.done [#allocation6], 16
        $region56: #{hybrid_forest_forward.2} parent=47 // pred_fallthru
          _
        // Predicated region
        $region57: #{hybrid_forest_forward.2} parent=47 // pred_check
          %p307 = pneg %p106
        $region58: #{hybrid_forest_forward.2} parent=47 // pred_check_branch
          %309 = sbr.rel (%p307) target = $region60
        $region59: #{hybrid_forest_forward.2} parent=47 // pred_region
          %310 = dma.done [#allocation6], 16
        $region60: #{hybrid_forest_forward.2} parent=47 // pred_fallthru
          _
        // Predicated region
        $region61: #{hybrid_forest_forward.2} parent=47 // pred_check
          %p311 = pneg %p127
        $region62: #{hybrid_forest_forward.2} parent=47 // pred_check_branch
          %313 = sbr.rel (%p311) target = $region64
        $region63: #{hybrid_forest_forward.2} parent=47 // pred_region
          %314 = dma.done [#allocation9], 4608
        $region64: #{hybrid_forest_forward.2} parent=47 // pred_fallthru
          _
        // Predicated region
        $region65: #{hybrid_forest_forward.2} parent=47 // pred_check
          %p315 = pneg %p148
        $region66: #{hybrid_forest_forward.2} parent=47 // pred_check_branch
          %317 = sbr.rel (%p315) target = $region68
        $region67: #{hybrid_forest_forward.2} parent=47 // pred_region
          %318 = dma.done [#allocation9], 16
        $region68: #{hybrid_forest_forward.2} parent=47 // pred_fallthru
          _
        // Predicated region
        $region69: #{hybrid_forest_forward.2} parent=47 // pred_check
          %p319 = pneg %p169
        $region70: #{hybrid_forest_forward.2} parent=47 // pred_check_branch
          %321 = sbr.rel (%p319) target = $region72
        $region71: #{hybrid_forest_forward.2} parent=47 // pred_region
          %322 = dma.done [#allocation12], 16
        $region72: #{hybrid_forest_forward.2} parent=47 // pred_fallthru
          _
        %p323 = scmp.lt.s32.totalorder %s22, 1
        %s324 = scalar_select %p323, %s22, 1
        %s325 = smul.addr %s324, 32
        %s326 = smul.addr %s325, 4
        %s327 = scalar_lea.vmem %s0, %s326
        %p328 = pneg %p43
        %p329 = pneg %p40
        %p330 = pneg %p64
        %p331 = pneg %p61
        %p332 = pneg %p85
        %p333 = pneg %p82
        %p334 = pneg %p106
        %p335 = pneg %p103
        %p336 = pneg %p127
        %p337 = pneg %p124
        %p338 = pneg %p148
        %p339 = pneg %p145
        %p340 = pneg %p169
        %p341 = pneg %p166
        %p342 = pneg %p195
        %p343 = pneg %p192
        %p344 = scmp.lt.s32.totalorder %s22, 1
        %s345 = scalar_select %p344, %s22, 1
        %s346 = smul.addr %s345, 4
        %s347 = smul.addr %s346, 2
        %s348 = scalar_lea.vmem %s7, %s347
        %p349 = scmp.lt.s32.totalorder %s22, 1
        %s350 = scalar_select %p349, %s22, 1
        %s351 = smul.addr %s350, 32
        %s352 = smul.addr %s351, 4
        %s353 = scalar_lea.vmem %s0, %s352
        %p354 = scmp.lt.s32.totalorder %s22, 1
        %s355 = scalar_select %p354, %s22, 1
        %s356 = smul.addr %s355, 4
        %s357 = smul.addr %s356, 2
        %s358 = scalar_lea.vmem %s7, %s357
        %v360 = vld [vmem:[%s353] sm:$0xf]
        %v361 = vld [vmem:[%s353 + $0x4] sm:$0xf]
        %v362 = vld [vmem:[%s353 + $0x8] sm:$0xf]
        %v363 = vld [vmem:[%s353 + $0xc] sm:$0xf]
        %v364 = vld [vmem:[%s353 + $0x10] sm:$0xf]
        %v365 = vld [vmem:[%s353 + $0x14] sm:$0xf]
        %v366 = vld [vmem:[%s353 + $0x18] sm:$0xf]
        %v367 = vld [vmem:[%s353 + $0x1c] sm:$0xf]
        %v368 = vld [vmem:[%s353 + $0x20] sm:$0xf]
        %v369 = vld [vmem:[%s353 + $0x24] sm:$0xf]
        %v370 = vld [vmem:[%s353 + $0x28] sm:$0xf]
        %v371 = vld [vmem:[%s353 + $0x2c] sm:$0xf]
        %v372 = vld [vmem:[%s353 + $0x30] sm:$0xf]
        %v373 = vld [vmem:[%s353 + $0x34] sm:$0xf]
        %v374 = vld [vmem:[%s353 + $0x38] sm:$0xf]
        %v375 = vld [vmem:[%s353 + $0x3c] sm:$0xf]
        %v376 = vld [vmem:[%s353 + $0x40] sm:$0xf]
        %v377 = vld [vmem:[%s353 + $0x44] sm:$0xf]
        %v378 = vld [vmem:[%s353 + $0x48] sm:$0xf]
        %v379 = vld [vmem:[%s353 + $0x4c] sm:$0xf]
        %v380 = vld [vmem:[%s353 + $0x50] sm:$0xf]
        %v381 = vld [vmem:[%s353 + $0x54] sm:$0xf]
        %v382 = vld [vmem:[%s353 + $0x58] sm:$0xf]
        %v383 = vld [vmem:[%s353 + $0x5c] sm:$0xf]
        %v384 = vld [vmem:[%s353 + $0x60] sm:$0xf]
        %v385 = vld [vmem:[%s353 + $0x64] sm:$0xf]
        %v386 = vld [vmem:[%s353 + $0x68] sm:$0xf]
        %v387 = vld [vmem:[%s353 + $0x6c] sm:$0xf]
        %v388 = vld [vmem:[%s353 + $0x70] sm:$0xf]
        %v389 = vld [vmem:[%s353 + $0x74] sm:$0xf]
        %v390 = vld [vmem:[%s353 + $0x78] sm:$0xf]
        %v391 = vld [vmem:[%s353 + $0x7c] sm:$0xf]
        %v392 = vld [vmem:[#allocation3] sm:$0xf]
        %v393 = vld [vmem:[#allocation3 + $0x4] sm:$0xf]
        %v394 = vld [vmem:[#allocation3 + $0x8] sm:$0xf]
        %v395 = vld [vmem:[#allocation3 + $0xc] sm:$0x3]
        %v428 = vunpack.c.l.b16 %v360
        %v429 = vunpack.c.l.b16 %v361
        %v430 = vunpack.c.l.b16 %v362
        %v431 = vunpack.c.l.b16 %v363
        %v432 = vunpack.c.l.b16 %v364
        %v433 = vunpack.c.l.b16 %v365
        %v434 = vunpack.c.l.b16 %v366
        %v435 = vunpack.c.l.b16 %v367
        %v436 = vunpack.c.l.b16 %v368
        %v437 = vunpack.c.l.b16 %v369
        %v438 = vunpack.c.l.b16 %v370
        %v439 = vunpack.c.l.b16 %v371
        %v440 = vunpack.c.l.b16 %v372
        %v441 = vunpack.c.l.b16 %v373
        %v442 = vunpack.c.l.b16 %v374
        %v443 = vunpack.c.l.b16 %v375
        %v444 = vunpack.c.l.b16 %v376
        %v445 = vunpack.c.l.b16 %v377
        %v446 = vunpack.c.l.b16 %v378
        %v447 = vunpack.c.l.b16 %v379
        %v448 = vunpack.c.l.b16 %v380
        %v449 = vunpack.c.l.b16 %v381
        %v450 = vunpack.c.l.b16 %v382
        %v451 = vunpack.c.l.b16 %v383
        %v452 = vunpack.c.l.b16 %v384
        %v453 = vunpack.c.l.b16 %v385
        %v454 = vunpack.c.l.b16 %v386
        %v455 = vunpack.c.l.b16 %v387
        %v456 = vunpack.c.l.b16 %v388
        %v457 = vunpack.c.l.b16 %v389
        %v458 = vunpack.c.l.b16 %v390
        %v459 = vunpack.c.l.b16 %v391
        %v460 = vpack.c.b16 %v429, %v428
        %v461 = vpack.c.b16 %v431, %v430
        %v462 = vpack.c.b16 %v433, %v432
        %v463 = vpack.c.b16 %v435, %v434
        %v464 = vpack.c.b16 %v437, %v436
        %v465 = vpack.c.b16 %v439, %v438
        %v466 = vpack.c.b16 %v441, %v440
        %v467 = vpack.c.b16 %v443, %v442
        %v468 = vpack.c.b16 %v445, %v444
        %v469 = vpack.c.b16 %v447, %v446
        %v470 = vpack.c.b16 %v449, %v448
        %v471 = vpack.c.b16 %v451, %v450
        %v472 = vpack.c.b16 %v453, %v452
        %v473 = vpack.c.b16 %v455, %v454
        %v474 = vpack.c.b16 %v457, %v456
        %v475 = vpack.c.b16 %v459, %v458
        %v480 = vunpack.c.l.b16 %v392
        %v481 = vunpack.c.l.b16 %v393
        %v482 = vunpack.c.l.b16 %v394
        %v483 = vunpack.c.l.b16 %v395
        %v484 = vpack.c.b16 %v481, %v480
        %v485 = vpack.c.b16 %v483, %v482
        %vm487 = vcmask 220160
        %v489 = vsel %vm487, %v460, 0
        %v492 = vsel %vm487, %v461, 0
        %v495 = vsel %vm487, %v462, 0
        %v498 = vsel %vm487, %v463, 0
        %v501 = vsel %vm487, %v464, 0
        %v504 = vsel %vm487, %v465, 0
        %v507 = vsel %vm487, %v466, 0
        %v510 = vsel %vm487, %v467, 0
        %v513 = vsel %vm487, %v468, 0
        %v516 = vsel %vm487, %v469, 0
        %v519 = vsel %vm487, %v470, 0
        %v522 = vsel %vm487, %v471, 0
        %v525 = vsel %vm487, %v472, 0
        %v528 = vsel %vm487, %v473, 0
        %v531 = vsel %vm487, %v474, 0
        %v534 = vsel %vm487, %v475, 0
        %vm536 = vcmask 1044480
        %vm537 = vcmask 1045504
        %v538 = vsel %vm536, 4294967295, 65535
        %v539 = vsel %vm537, %v538, 0
        %v541 = vand.u32 %v485, %v539
        %543 = vmatprep.subr.bf16.mxu0 0
        %544 = vmatpush1.bf16.msra.mxu0 0
        %545 = vmatprep.subr.bf16.mxu0 0
        %546 = vmatpush1.bf16.msra.mxu0 0
        %547 = vmatprep.subr.bf16.mxu0 0
        %548 = vmatpush1.bf16.msra.mxu0 0
        %549 = vmatprep.subr.bf16.mxu0 0
        %550 = vmatpush1.bf16.msra.mxu0 0
        %551 = vmatprep.subr.bf16.mxu0 0
        %552 = vmatpush1.bf16.msra.mxu0 0
        %553 = vmatprep.subr.bf16.mxu0 0
        %554 = vmatpush1.bf16.msra.mxu0 0
        %555 = vmatprep.subr.bf16.mxu0 0
        %556 = vmatpush1.bf16.msra.mxu0 %v541
        %557 = vmatprep.subr.bf16.mxu0 0
        %558 = vmatpush1.bf16.msra.mxu0 %v484
        %559 = vmatprep.subr.bf16.mxu0 0
        %560 = vmatpush2.bf16.msra.mxu0 0
        %561 = vmatprep.subr.bf16.mxu0 0
        %562 = vmatpush2.bf16.msra.mxu0 0
        %563 = vmatprep.subr.bf16.mxu0 0
        %564 = vmatpush2.bf16.msra.mxu0 0
        %565 = vmatprep.subr.bf16.mxu0 0
        %566 = vmatpush2.bf16.msra.mxu0 0
        %567 = vmatprep.subr.bf16.mxu0 0
        %568 = vmatpush2.bf16.msra.mxu0 0
        %569 = vmatprep.subr.bf16.mxu0 0
        %570 = vmatpush2.bf16.msra.mxu0 0
        %571 = vmatprep.subr.bf16.mxu0 0
        %572 = vmatpush2.bf16.msra.mxu0 0
        %573 = vmatprep.subr.bf16.mxu0 0
        %574 = vmatpush2.bf16.msra.mxu0 0
        %575 = vmatprep.mubr.bf16.mxu0 0
        %576 = vmatmul.mubr.bf16.gmra.mxu0 %v489
        %v577 = vpop.f32.mrf.mxu0
        %v578 = vadd.f32 0.0, %v577
        %v579 = vpop.f32.mrf.mxu0
        %v580 = vpop.f32.mrf.mxu0
        %v581 = vadd.f32 0.0, %v580
        %v582 = vpop.f32.mrf.mxu0
        %583 = vmatprep.mubr.bf16.mxu0 0
        %584 = vmatmul.mubr.bf16.gmra.mxu0 %v492
        %v585 = vpop.f32.mrf.mxu0
        %v586 = vadd.f32 0.0, %v585
        %v587 = vpop.f32.mrf.mxu0
        %v588 = vpop.f32.mrf.mxu0
        %v589 = vadd.f32 0.0, %v588
        %v590 = vpop.f32.mrf.mxu0
        %591 = vmatprep.mubr.bf16.mxu0 0
        %592 = vmatmul.mubr.bf16.gmra.mxu0 %v495
        %v593 = vpop.f32.mrf.mxu0
        %v594 = vadd.f32 0.0, %v593
        %v595 = vpop.f32.mrf.mxu0
        %v596 = vpop.f32.mrf.mxu0
        %v597 = vadd.f32 0.0, %v596
        %v598 = vpop.f32.mrf.mxu0
        %599 = vmatprep.mubr.bf16.mxu0 0
        %600 = vmatmul.mubr.bf16.gmra.mxu0 %v498
        %v601 = vpop.f32.mrf.mxu0
        %v602 = vadd.f32 0.0, %v601
        %v603 = vpop.f32.mrf.mxu0
        %v604 = vpop.f32.mrf.mxu0
        %v605 = vadd.f32 0.0, %v604
        %v606 = vpop.f32.mrf.mxu0
        %607 = vmatprep.mubr.bf16.mxu0 0
        %608 = vmatmul.mubr.bf16.gmra.mxu0 %v501
        %v609 = vpop.f32.mrf.mxu0
        %v610 = vadd.f32 0.0, %v609
        %v611 = vpop.f32.mrf.mxu0
        %v612 = vpop.f32.mrf.mxu0
        %v613 = vadd.f32 0.0, %v612
        %v614 = vpop.f32.mrf.mxu0
        %615 = vmatprep.mubr.bf16.mxu0 0
        %616 = vmatmul.mubr.bf16.gmra.mxu0 %v504
        %v617 = vpop.f32.mrf.mxu0
        %v618 = vadd.f32 0.0, %v617
        %v619 = vpop.f32.mrf.mxu0
        %v620 = vpop.f32.mrf.mxu0
        %v621 = vadd.f32 0.0, %v620
        %v622 = vpop.f32.mrf.mxu0
        %623 = vmatprep.mubr.bf16.mxu0 0
        %624 = vmatmul.mubr.bf16.gmra.mxu0 %v507
        %v625 = vpop.f32.mrf.mxu0
        %v626 = vadd.f32 0.0, %v625
        %v627 = vpop.f32.mrf.mxu0
        %v628 = vpop.f32.mrf.mxu0
        %v629 = vadd.f32 0.0, %v628
        %v630 = vpop.f32.mrf.mxu0
        %631 = vmatprep.mubr.bf16.mxu0 0
        %632 = vmatmul.mubr.bf16.gmra.mxu0 %v510
        %v633 = vpop.f32.mrf.mxu0
        %v634 = vadd.f32 0.0, %v633
        %v635 = vpop.f32.mrf.mxu0
        %v636 = vpop.f32.mrf.mxu0
        %v637 = vadd.f32 0.0, %v636
        %v638 = vpop.f32.mrf.mxu0
        %639 = vmatprep.mubr.bf16.mxu0 0
        %640 = vmatmul.mubr.bf16.gmra.mxu0 %v513
        %v641 = vpop.f32.mrf.mxu0
        %v642 = vadd.f32 0.0, %v641
        %v643 = vpop.f32.mrf.mxu0
        %v644 = vpop.f32.mrf.mxu0
        %v645 = vadd.f32 0.0, %v644
        %v646 = vpop.f32.mrf.mxu0
        %647 = vmatprep.mubr.bf16.mxu0 0
        %648 = vmatmul.mubr.bf16.gmra.mxu0 %v516
        %v649 = vpop.f32.mrf.mxu0
        %v650 = vadd.f32 0.0, %v649
        %v651 = vpop.f32.mrf.mxu0
        %v652 = vpop.f32.mrf.mxu0
        %v653 = vadd.f32 0.0, %v652
        %v654 = vpop.f32.mrf.mxu0
        %655 = vmatprep.mubr.bf16.mxu0 0
        %656 = vmatmul.mubr.bf16.gmra.mxu0 %v519
        %v657 = vpop.f32.mrf.mxu0
        %v658 = vadd.f32 0.0, %v657
        %v659 = vpop.f32.mrf.mxu0
        %v660 = vpop.f32.mrf.mxu0
        %v661 = vadd.f32 0.0, %v660
        %v662 = vpop.f32.mrf.mxu0
        %663 = vmatprep.mubr.bf16.mxu0 0
        %664 = vmatmul.mubr.bf16.gmra.mxu0 %v522
        %v665 = vpop.f32.mrf.mxu0
        %v666 = vadd.f32 0.0, %v665
        %v667 = vpop.f32.mrf.mxu0
        %v668 = vpop.f32.mrf.mxu0
        %v669 = vadd.f32 0.0, %v668
        %v670 = vpop.f32.mrf.mxu0
        %671 = vmatprep.mubr.bf16.mxu0 0
        %672 = vmatmul.mubr.bf16.gmra.mxu0 %v525
        %v673 = vpop.f32.mrf.mxu0
        %v674 = vadd.f32 0.0, %v673
        %v675 = vpop.f32.mrf.mxu0
        %v676 = vpop.f32.mrf.mxu0
        %v677 = vadd.f32 0.0, %v676
        %v678 = vpop.f32.mrf.mxu0
        %679 = vmatprep.mubr.bf16.mxu0 0
        %680 = vmatmul.mubr.bf16.gmra.mxu0 %v528
        %v681 = vpop.f32.mrf.mxu0
        %v682 = vadd.f32 0.0, %v681
        %v683 = vpop.f32.mrf.mxu0
        %v684 = vpop.f32.mrf.mxu0
        %v685 = vadd.f32 0.0, %v684
        %v686 = vpop.f32.mrf.mxu0
        %687 = vmatprep.mubr.bf16.mxu0 0
        %688 = vmatmul.mubr.bf16.gmra.mxu0 %v531
        %v689 = vpop.f32.mrf.mxu0
        %v690 = vadd.f32 0.0, %v689
        %v691 = vpop.f32.mrf.mxu0
        %v692 = vpop.f32.mrf.mxu0
        %v693 = vadd.f32 0.0, %v692
        %v694 = vpop.f32.mrf.mxu0
        %695 = vmatprep.mubr.bf16.mxu0 0
        %696 = vmatmul.mubr.bf16.gmra.mxu0 %v534
        %v697 = vpop.f32.mrf.mxu0
        %v698 = vadd.f32 0.0, %v697
        %v699 = vpop.f32.mrf.mxu0
        %v700 = vpop.f32.mrf.mxu0
        %v701 = vadd.f32 0.0, %v700
        %v702 = vpop.f32.mrf.mxu0
        %703 = vdwg.mxu0
        %v704 = vld [vmem:[#allocation5] sm:$0x1]
        %v706 = vlaneseq
        %v707 = vshrl.u32 %v706, 7
        %v708 = vsub.s32 0, %v707
        %v709 = vrot.slane %v704, %v708
        %v711 = vmul.f32 %v578, %v709
        %v712 = vmul.f32 %v581, %v709
        %v713 = vmul.f32 %v586, %v709
        %v714 = vmul.f32 %v589, %v709
        %v715 = vmul.f32 %v594, %v709
        %v716 = vmul.f32 %v597, %v709
        %v717 = vmul.f32 %v602, %v709
        %v718 = vmul.f32 %v605, %v709
        %v719 = vmul.f32 %v610, %v709
        %v720 = vmul.f32 %v613, %v709
        %v721 = vmul.f32 %v618, %v709
        %v722 = vmul.f32 %v621, %v709
        %v723 = vmul.f32 %v626, %v709
        %v724 = vmul.f32 %v629, %v709
        %v725 = vmul.f32 %v634, %v709
        %v726 = vmul.f32 %v637, %v709
        %v727 = vmul.f32 %v642, %v709
        %v728 = vmul.f32 %v645, %v709
        %v729 = vmul.f32 %v650, %v709
        %v730 = vmul.f32 %v653, %v709
        %v731 = vmul.f32 %v658, %v709
        %v732 = vmul.f32 %v661, %v709
        %v733 = vmul.f32 %v666, %v709
        %v734 = vmul.f32 %v669, %v709
        %v735 = vmul.f32 %v674, %v709
        %v736 = vmul.f32 %v677, %v709
        %v737 = vmul.f32 %v682, %v709
        %v738 = vmul.f32 %v685, %v709
        %v739 = vmul.f32 %v690, %v709
        %v740 = vmul.f32 %v693, %v709
        %v741 = vmul.f32 %v698, %v709
        %v742 = vmul.f32 %v701, %v709
        %v743 = vld [vmem:[#allocation7] sm:$0x1]
        %v745 = vlaneseq
        %v746 = vshrl.u32 %v745, 7
        %v747 = vsub.s32 0, %v746
        %v748 = vrot.slane %v743, %v747
        %v750 = vadd.f32 %v711, %v748
        %v751 = vadd.f32 %v712, %v748
        %v752 = vadd.f32 %v713, %v748
        %v753 = vadd.f32 %v714, %v748
        %v754 = vadd.f32 %v715, %v748
        %v755 = vadd.f32 %v716, %v748
        %v756 = vadd.f32 %v717, %v748
        %v757 = vadd.f32 %v718, %v748
        %v758 = vadd.f32 %v719, %v748
        %v759 = vadd.f32 %v720, %v748
        %v760 = vadd.f32 %v721, %v748
        %v761 = vadd.f32 %v722, %v748
        %v762 = vadd.f32 %v723, %v748
        %v763 = vadd.f32 %v724, %v748
        %v764 = vadd.f32 %v725, %v748
        %v765 = vadd.f32 %v726, %v748
        %v766 = vadd.f32 %v727, %v748
        %v767 = vadd.f32 %v728, %v748
        %v768 = vadd.f32 %v729, %v748
        %v769 = vadd.f32 %v730, %v748
        %v770 = vadd.f32 %v731, %v748
        %v771 = vadd.f32 %v732, %v748
        %v772 = vadd.f32 %v733, %v748
        %v773 = vadd.f32 %v734, %v748
        %v774 = vadd.f32 %v735, %v748
        %v775 = vadd.f32 %v736, %v748
        %v776 = vadd.f32 %v737, %v748
        %v777 = vadd.f32 %v738, %v748
        %v778 = vadd.f32 %v739, %v748
        %v779 = vadd.f32 %v740, %v748
        %v780 = vadd.f32 %v741, %v748
        %v781 = vadd.f32 %v742, %v748
        %v782 = vmax.f32 %v750, 0.0
        %v783 = vmax.f32 %v751, 0.0
        %v784 = vmax.f32 %v752, 0.0
        %v785 = vmax.f32 %v753, 0.0
        %v786 = vmax.f32 %v754, 0.0
        %v787 = vmax.f32 %v755, 0.0
        %v788 = vmax.f32 %v756, 0.0
        %v789 = vmax.f32 %v757, 0.0
        %v790 = vmax.f32 %v758, 0.0
        %v791 = vmax.f32 %v759, 0.0
        %v792 = vmax.f32 %v760, 0.0
        %v793 = vmax.f32 %v761, 0.0
        %v794 = vmax.f32 %v762, 0.0
        %v795 = vmax.f32 %v763, 0.0
        %v796 = vmax.f32 %v764, 0.0
        %v797 = vmax.f32 %v765, 0.0
        %v798 = vmax.f32 %v766, 0.0
        %v799 = vmax.f32 %v767, 0.0
        %v800 = vmax.f32 %v768, 0.0
        %v801 = vmax.f32 %v769, 0.0
        %v802 = vmax.f32 %v770, 0.0
        %v803 = vmax.f32 %v771, 0.0
        %v804 = vmax.f32 %v772, 0.0
        %v805 = vmax.f32 %v773, 0.0
        %v806 = vmax.f32 %v774, 0.0
        %v807 = vmax.f32 %v775, 0.0
        %v808 = vmax.f32 %v776, 0.0
        %v809 = vmax.f32 %v777, 0.0
        %v810 = vmax.f32 %v778, 0.0
        %v811 = vmax.f32 %v779, 0.0
        %v812 = vmax.f32 %v780, 0.0
        %v813 = vmax.f32 %v781, 0.0
        %v846 = vcombine.high %v782, %v782
        %v848 = vunpack.c.l.s4 1983009808
        %v849 = vunpack.c.0.s8 %v848
        %v850 = vlaneseq
        %v851 = vshrl.u32 %v850, 7
        %v852 = vsub.s32 %v849, %v851
        %v853 = vrot.slane %v782, %v852
        %v855 = vunpack.c.l.s4 1983009808
        %v856 = vunpack.c.0.s8 %v855
        %v857 = vlaneseq
        %v858 = vshrl.u32 %v857, 7
        %v859 = vsub.s32 %v856, %v858
        %v860 = vrot.slane %v846, %v859
        %v861 = vcombine.high %v853, %v853
        %v862 = vcombine.high %v860, %v860
        %v863 = vcombine.high %v783, %v783
        %v865 = vunpack.c.l.s4 1983009808
        %v866 = vunpack.c.0.s8 %v865
        %v867 = vlaneseq
        %v868 = vshrl.u32 %v867, 7
        %v869 = vsub.s32 %v866, %v868
        %v870 = vrot.slane %v783, %v869
        %v872 = vunpack.c.l.s4 1983009808
        %v873 = vunpack.c.0.s8 %v872
        %v874 = vlaneseq
        %v875 = vshrl.u32 %v874, 7
        %v876 = vsub.s32 %v873, %v875
        %v877 = vrot.slane %v863, %v876
        %v878 = vcombine.high %v870, %v870
        %v879 = vcombine.high %v877, %v877
        %v880 = vcombine.high %v784, %v784
        %v882 = vunpack.c.l.s4 1983009808
        %v883 = vunpack.c.0.s8 %v882
        %v884 = vlaneseq
        %v885 = vshrl.u32 %v884, 7
        %v886 = vsub.s32 %v883, %v885
        %v887 = vrot.slane %v784, %v886
        %v889 = vunpack.c.l.s4 1983009808
        %v890 = vunpack.c.0.s8 %v889
        %v891 = vlaneseq
        %v892 = vshrl.u32 %v891, 7
        %v893 = vsub.s32 %v890, %v892
        %v894 = vrot.slane %v880, %v893
        %v895 = vcombine.high %v887, %v887
        %v896 = vcombine.high %v894, %v894
        %v897 = vcombine.high %v785, %v785
        %v899 = vunpack.c.l.s4 1983009808
        %v900 = vunpack.c.0.s8 %v899
        %v901 = vlaneseq
        %v902 = vshrl.u32 %v901, 7
        %v903 = vsub.s32 %v900, %v902
        %v904 = vrot.slane %v785, %v903
        %v906 = vunpack.c.l.s4 1983009808
        %v907 = vunpack.c.0.s8 %v906
        %v908 = vlaneseq
        %v909 = vshrl.u32 %v908, 7
        %v910 = vsub.s32 %v907, %v909
        %v911 = vrot.slane %v897, %v910
        %v912 = vcombine.high %v904, %v904
        %v913 = vcombine.high %v911, %v911
        %v914 = vcombine.high %v786, %v786
        %v916 = vunpack.c.l.s4 1983009808
        %v917 = vunpack.c.0.s8 %v916
        %v918 = vlaneseq
        %v919 = vshrl.u32 %v918, 7
        %v920 = vsub.s32 %v917, %v919
        %v921 = vrot.slane %v786, %v920
        %v923 = vunpack.c.l.s4 1983009808
        %v924 = vunpack.c.0.s8 %v923
        %v925 = vlaneseq
        %v926 = vshrl.u32 %v925, 7
        %v927 = vsub.s32 %v924, %v926
        %v928 = vrot.slane %v914, %v927
        %v929 = vcombine.high %v921, %v921
        %v930 = vcombine.high %v928, %v928
        %v931 = vcombine.high %v787, %v787
        %v933 = vunpack.c.l.s4 1983009808
        %v934 = vunpack.c.0.s8 %v933
        %v935 = vlaneseq
        %v936 = vshrl.u32 %v935, 7
        %v937 = vsub.s32 %v934, %v936
        %v938 = vrot.slane %v787, %v937
        %v940 = vunpack.c.l.s4 1983009808
        %v941 = vunpack.c.0.s8 %v940
        %v942 = vlaneseq
        %v943 = vshrl.u32 %v942, 7
        %v944 = vsub.s32 %v941, %v943
        %v945 = vrot.slane %v931, %v944
        %v946 = vcombine.high %v938, %v938
        %v947 = vcombine.high %v945, %v945
        %v948 = vcombine.high %v788, %v788
        %v950 = vunpack.c.l.s4 1983009808
        %v951 = vunpack.c.0.s8 %v950
        %v952 = vlaneseq
        %v953 = vshrl.u32 %v952, 7
        %v954 = vsub.s32 %v951, %v953
        %v955 = vrot.slane %v788, %v954
        %v957 = vunpack.c.l.s4 1983009808
        %v958 = vunpack.c.0.s8 %v957
        %v959 = vlaneseq
        %v960 = vshrl.u32 %v959, 7
        %v961 = vsub.s32 %v958, %v960
        %v962 = vrot.slane %v948, %v961
        %v963 = vcombine.high %v955, %v955
        %v964 = vcombine.high %v962, %v962
        %v965 = vcombine.high %v789, %v789
        %v967 = vunpack.c.l.s4 1983009808
        %v968 = vunpack.c.0.s8 %v967
        %v969 = vlaneseq
        %v970 = vshrl.u32 %v969, 7
        %v971 = vsub.s32 %v968, %v970
        %v972 = vrot.slane %v789, %v971
        %v974 = vunpack.c.l.s4 1983009808
        %v975 = vunpack.c.0.s8 %v974
        %v976 = vlaneseq
        %v977 = vshrl.u32 %v976, 7
        %v978 = vsub.s32 %v975, %v977
        %v979 = vrot.slane %v965, %v978
        %v980 = vcombine.high %v972, %v972
        %v981 = vcombine.high %v979, %v979
        %v982 = vcombine.high %v790, %v790
        %v984 = vunpack.c.l.s4 1983009808
        %v985 = vunpack.c.0.s8 %v984
        %v986 = vlaneseq
        %v987 = vshrl.u32 %v986, 7
        %v988 = vsub.s32 %v985, %v987
        %v989 = vrot.slane %v790, %v988
        %v991 = vunpack.c.l.s4 1983009808
        %v992 = vunpack.c.0.s8 %v991
        %v993 = vlaneseq
        %v994 = vshrl.u32 %v993, 7
        %v995 = vsub.s32 %v992, %v994
        %v996 = vrot.slane %v982, %v995
        %v997 = vcombine.high %v989, %v989
        %v998 = vcombine.high %v996, %v996
        %v999 = vcombine.high %v791, %v791
        %v1001 = vunpack.c.l.s4 1983009808
        %v1002 = vunpack.c.0.s8 %v1001
        %v1003 = vlaneseq
        %v1004 = vshrl.u32 %v1003, 7
        %v1005 = vsub.s32 %v1002, %v1004
        %v1006 = vrot.slane %v791, %v1005
        %v1008 = vunpack.c.l.s4 1983009808
        %v1009 = vunpack.c.0.s8 %v1008
        %v1010 = vlaneseq
        %v1011 = vshrl.u32 %v1010, 7
        %v1012 = vsub.s32 %v1009, %v1011
        %v1013 = vrot.slane %v999, %v1012
        %v1014 = vcombine.high %v1006, %v1006
        %v1015 = vcombine.high %v1013, %v1013
        %v1016 = vcombine.high %v792, %v792
        %v1018 = vunpack.c.l.s4 1983009808
        %v1019 = vunpack.c.0.s8 %v1018
        %v1020 = vlaneseq
        %v1021 = vshrl.u32 %v1020, 7
        %v1022 = vsub.s32 %v1019, %v1021
        %v1023 = vrot.slane %v792, %v1022
        %v1025 = vunpack.c.l.s4 1983009808
        %v1026 = vunpack.c.0.s8 %v1025
        %v1027 = vlaneseq
        %v1028 = vshrl.u32 %v1027, 7
        %v1029 = vsub.s32 %v1026, %v1028
        %v1030 = vrot.slane %v1016, %v1029
        %v1031 = vcombine.high %v1023, %v1023
        %v1032 = vcombine.high %v1030, %v1030
        %v1033 = vcombine.high %v793, %v793
        %v1035 = vunpack.c.l.s4 1983009808
        %v1036 = vunpack.c.0.s8 %v1035
        %v1037 = vlaneseq
        %v1038 = vshrl.u32 %v1037, 7
        %v1039 = vsub.s32 %v1036, %v1038
        %v1040 = vrot.slane %v793, %v1039
        %v1042 = vunpack.c.l.s4 1983009808
        %v1043 = vunpack.c.0.s8 %v1042
        %v1044 = vlaneseq
        %v1045 = vshrl.u32 %v1044, 7
        %v1046 = vsub.s32 %v1043, %v1045
        %v1047 = vrot.slane %v1033, %v1046
        %v1048 = vcombine.high %v1040, %v1040
        %v1049 = vcombine.high %v1047, %v1047
        %v1050 = vcombine.high %v794, %v794
        %v1052 = vunpack.c.l.s4 1983009808
        %v1053 = vunpack.c.0.s8 %v1052
        %v1054 = vlaneseq
        %v1055 = vshrl.u32 %v1054, 7
        %v1056 = vsub.s32 %v1053, %v1055
        %v1057 = vrot.slane %v794, %v1056
        %v1059 = vunpack.c.l.s4 1983009808
        %v1060 = vunpack.c.0.s8 %v1059
        %v1061 = vlaneseq
        %v1062 = vshrl.u32 %v1061, 7
        %v1063 = vsub.s32 %v1060, %v1062
        %v1064 = vrot.slane %v1050, %v1063
        %v1065 = vcombine.high %v1057, %v1057
        %v1066 = vcombine.high %v1064, %v1064
        %v1067 = vcombine.high %v795, %v795
        %v1069 = vunpack.c.l.s4 1983009808
        %v1070 = vunpack.c.0.s8 %v1069
        %v1071 = vlaneseq
        %v1072 = vshrl.u32 %v1071, 7
        %v1073 = vsub.s32 %v1070, %v1072
        %v1074 = vrot.slane %v795, %v1073
        %v1076 = vunpack.c.l.s4 1983009808
        %v1077 = vunpack.c.0.s8 %v1076
        %v1078 = vlaneseq
        %v1079 = vshrl.u32 %v1078, 7
        %v1080 = vsub.s32 %v1077, %v1079
        %v1081 = vrot.slane %v1067, %v1080
        %v1082 = vcombine.high %v1074, %v1074
        %v1083 = vcombine.high %v1081, %v1081
        %v1084 = vcombine.high %v796, %v796
        %v1086 = vunpack.c.l.s4 1983009808
        %v1087 = vunpack.c.0.s8 %v1086
        %v1088 = vlaneseq
        %v1089 = vshrl.u32 %v1088, 7
        %v1090 = vsub.s32 %v1087, %v1089
        %v1091 = vrot.slane %v796, %v1090
        %v1093 = vunpack.c.l.s4 1983009808
        %v1094 = vunpack.c.0.s8 %v1093
        %v1095 = vlaneseq
        %v1096 = vshrl.u32 %v1095, 7
        %v1097 = vsub.s32 %v1094, %v1096
        %v1098 = vrot.slane %v1084, %v1097
        %v1099 = vcombine.high %v1091, %v1091
        %v1100 = vcombine.high %v1098, %v1098
        %v1101 = vcombine.high %v797, %v797
        %v1103 = vunpack.c.l.s4 1983009808
        %v1104 = vunpack.c.0.s8 %v1103
        %v1105 = vlaneseq
        %v1106 = vshrl.u32 %v1105, 7
        %v1107 = vsub.s32 %v1104, %v1106
        %v1108 = vrot.slane %v797, %v1107
        %v1110 = vunpack.c.l.s4 1983009808
        %v1111 = vunpack.c.0.s8 %v1110
        %v1112 = vlaneseq
        %v1113 = vshrl.u32 %v1112, 7
        %v1114 = vsub.s32 %v1111, %v1113
        %v1115 = vrot.slane %v1101, %v1114
        %v1116 = vcombine.high %v1108, %v1108
        %v1117 = vcombine.high %v1115, %v1115
        %v1118 = vcombine.high %v798, %v798
        %v1120 = vunpack.c.l.s4 1983009808
        %v1121 = vunpack.c.0.s8 %v1120
        %v1122 = vlaneseq
        %v1123 = vshrl.u32 %v1122, 7
        %v1124 = vsub.s32 %v1121, %v1123
        %v1125 = vrot.slane %v798, %v1124
        %v1127 = vunpack.c.l.s4 1983009808
        %v1128 = vunpack.c.0.s8 %v1127
        %v1129 = vlaneseq
        %v1130 = vshrl.u32 %v1129, 7
        %v1131 = vsub.s32 %v1128, %v1130
        %v1132 = vrot.slane %v1118, %v1131
        %v1133 = vcombine.high %v1125, %v1125
        %v1134 = vcombine.high %v1132, %v1132
        %v1135 = vcombine.high %v799, %v799
        %v1137 = vunpack.c.l.s4 1983009808
        %v1138 = vunpack.c.0.s8 %v1137
        %v1139 = vlaneseq
        %v1140 = vshrl.u32 %v1139, 7
        %v1141 = vsub.s32 %v1138, %v1140
        %v1142 = vrot.slane %v799, %v1141
        %v1144 = vunpack.c.l.s4 1983009808
        %v1145 = vunpack.c.0.s8 %v1144
        %v1146 = vlaneseq
        %v1147 = vshrl.u32 %v1146, 7
        %v1148 = vsub.s32 %v1145, %v1147
        %v1149 = vrot.slane %v1135, %v1148
        %v1150 = vcombine.high %v1142, %v1142
        %v1151 = vcombine.high %v1149, %v1149
        %v1152 = vcombine.high %v800, %v800
        %v1154 = vunpack.c.l.s4 1983009808
        %v1155 = vunpack.c.0.s8 %v1154
        %v1156 = vlaneseq
        %v1157 = vshrl.u32 %v1156, 7
        %v1158 = vsub.s32 %v1155, %v1157
        %v1159 = vrot.slane %v800, %v1158
        %v1161 = vunpack.c.l.s4 1983009808
        %v1162 = vunpack.c.0.s8 %v1161
        %v1163 = vlaneseq
        %v1164 = vshrl.u32 %v1163, 7
        %v1165 = vsub.s32 %v1162, %v1164
        %v1166 = vrot.slane %v1152, %v1165
        %v1167 = vcombine.high %v1159, %v1159
        %v1168 = vcombine.high %v1166, %v1166
        %v1169 = vcombine.high %v801, %v801
        %v1171 = vunpack.c.l.s4 1983009808
        %v1172 = vunpack.c.0.s8 %v1171
        %v1173 = vlaneseq
        %v1174 = vshrl.u32 %v1173, 7
        %v1175 = vsub.s32 %v1172, %v1174
        %v1176 = vrot.slane %v801, %v1175
        %v1178 = vunpack.c.l.s4 1983009808
        %v1179 = vunpack.c.0.s8 %v1178
        %v1180 = vlaneseq
        %v1181 = vshrl.u32 %v1180, 7
        %v1182 = vsub.s32 %v1179, %v1181
        %v1183 = vrot.slane %v1169, %v1182
        %v1184 = vcombine.high %v1176, %v1176
        %v1185 = vcombine.high %v1183, %v1183
        %v1186 = vcombine.high %v802, %v802
        %v1188 = vunpack.c.l.s4 1983009808
        %v1189 = vunpack.c.0.s8 %v1188
        %v1190 = vlaneseq
        %v1191 = vshrl.u32 %v1190, 7
        %v1192 = vsub.s32 %v1189, %v1191
        %v1193 = vrot.slane %v802, %v1192
        %v1195 = vunpack.c.l.s4 1983009808
        %v1196 = vunpack.c.0.s8 %v1195
        %v1197 = vlaneseq
        %v1198 = vshrl.u32 %v1197, 7
        %v1199 = vsub.s32 %v1196, %v1198
        %v1200 = vrot.slane %v1186, %v1199
        %v1201 = vcombine.high %v1193, %v1193
        %v1202 = vcombine.high %v1200, %v1200
        %v1203 = vcombine.high %v803, %v803
        %v1205 = vunpack.c.l.s4 1983009808
        %v1206 = vunpack.c.0.s8 %v1205
        %v1207 = vlaneseq
        %v1208 = vshrl.u32 %v1207, 7
        %v1209 = vsub.s32 %v1206, %v1208
        %v1210 = vrot.slane %v803, %v1209
        %v1212 = vunpack.c.l.s4 1983009808
        %v1213 = vunpack.c.0.s8 %v1212
        %v1214 = vlaneseq
        %v1215 = vshrl.u32 %v1214, 7
        %v1216 = vsub.s32 %v1213, %v1215
        %v1217 = vrot.slane %v1203, %v1216
        %v1218 = vcombine.high %v1210, %v1210
        %v1219 = vcombine.high %v1217, %v1217
        %v1220 = vcombine.high %v804, %v804
        %v1222 = vunpack.c.l.s4 1983009808
        %v1223 = vunpack.c.0.s8 %v1222
        %v1224 = vlaneseq
        %v1225 = vshrl.u32 %v1224, 7
        %v1226 = vsub.s32 %v1223, %v1225
        %v1227 = vrot.slane %v804, %v1226
        %v1229 = vunpack.c.l.s4 1983009808
        %v1230 = vunpack.c.0.s8 %v1229
        %v1231 = vlaneseq
        %v1232 = vshrl.u32 %v1231, 7
        %v1233 = vsub.s32 %v1230, %v1232
        %v1234 = vrot.slane %v1220, %v1233
        %v1235 = vcombine.high %v1227, %v1227
        %v1236 = vcombine.high %v1234, %v1234
        %v1237 = vcombine.high %v805, %v805
        %v1239 = vunpack.c.l.s4 1983009808
        %v1240 = vunpack.c.0.s8 %v1239
        %v1241 = vlaneseq
        %v1242 = vshrl.u32 %v1241, 7
        %v1243 = vsub.s32 %v1240, %v1242
        %v1244 = vrot.slane %v805, %v1243
        %v1246 = vunpack.c.l.s4 1983009808
        %v1247 = vunpack.c.0.s8 %v1246
        %v1248 = vlaneseq
        %v1249 = vshrl.u32 %v1248, 7
        %v1250 = vsub.s32 %v1247, %v1249
        %v1251 = vrot.slane %v1237, %v1250
        %v1252 = vcombine.high %v1244, %v1244
        %v1253 = vcombine.high %v1251, %v1251
        %v1254 = vcombine.high %v806, %v806
        %v1256 = vunpack.c.l.s4 1983009808
        %v1257 = vunpack.c.0.s8 %v1256
        %v1258 = vlaneseq
        %v1259 = vshrl.u32 %v1258, 7
        %v1260 = vsub.s32 %v1257, %v1259
        %v1261 = vrot.slane %v806, %v1260
        %v1263 = vunpack.c.l.s4 1983009808
        %v1264 = vunpack.c.0.s8 %v1263
        %v1265 = vlaneseq
        %v1266 = vshrl.u32 %v1265, 7
        %v1267 = vsub.s32 %v1264, %v1266
        %v1268 = vrot.slane %v1254, %v1267
        %v1269 = vcombine.high %v1261, %v1261
        %v1270 = vcombine.high %v1268, %v1268
        %v1271 = vcombine.high %v807, %v807
        %v1273 = vunpack.c.l.s4 1983009808
        %v1274 = vunpack.c.0.s8 %v1273
        %v1275 = vlaneseq
        %v1276 = vshrl.u32 %v1275, 7
        %v1277 = vsub.s32 %v1274, %v1276
        %v1278 = vrot.slane %v807, %v1277
        %v1280 = vunpack.c.l.s4 1983009808
        %v1281 = vunpack.c.0.s8 %v1280
        %v1282 = vlaneseq
        %v1283 = vshrl.u32 %v1282, 7
        %v1284 = vsub.s32 %v1281, %v1283
        %v1285 = vrot.slane %v1271, %v1284
        %v1286 = vcombine.high %v1278, %v1278
        %v1287 = vcombine.high %v1285, %v1285
        %v1288 = vcombine.high %v808, %v808
        %v1290 = vunpack.c.l.s4 1983009808
        %v1291 = vunpack.c.0.s8 %v1290
        %v1292 = vlaneseq
        %v1293 = vshrl.u32 %v1292, 7
        %v1294 = vsub.s32 %v1291, %v1293
        %v1295 = vrot.slane %v808, %v1294
        %v1297 = vunpack.c.l.s4 1983009808
        %v1298 = vunpack.c.0.s8 %v1297
        %v1299 = vlaneseq
        %v1300 = vshrl.u32 %v1299, 7
        %v1301 = vsub.s32 %v1298, %v1300
        %v1302 = vrot.slane %v1288, %v1301
        %v1303 = vcombine.high %v1295, %v1295
        %v1304 = vcombine.high %v1302, %v1302
        %v1305 = vcombine.high %v809, %v809
        %v1307 = vunpack.c.l.s4 1983009808
        %v1308 = vunpack.c.0.s8 %v1307
        %v1309 = vlaneseq
        %v1310 = vshrl.u32 %v1309, 7
        %v1311 = vsub.s32 %v1308, %v1310
        %v1312 = vrot.slane %v809, %v1311
        %v1314 = vunpack.c.l.s4 1983009808
        %v1315 = vunpack.c.0.s8 %v1314
        %v1316 = vlaneseq
        %v1317 = vshrl.u32 %v1316, 7
        %v1318 = vsub.s32 %v1315, %v1317
        %v1319 = vrot.slane %v1305, %v1318
        %v1320 = vcombine.high %v1312, %v1312
        %v1321 = vcombine.high %v1319, %v1319
        %v1322 = vcombine.high %v810, %v810
        %v1324 = vunpack.c.l.s4 1983009808
        %v1325 = vunpack.c.0.s8 %v1324
        %v1326 = vlaneseq
        %v1327 = vshrl.u32 %v1326, 7
        %v1328 = vsub.s32 %v1325, %v1327
        %v1329 = vrot.slane %v810, %v1328
        %v1331 = vunpack.c.l.s4 1983009808
        %v1332 = vunpack.c.0.s8 %v1331
        %v1333 = vlaneseq
        %v1334 = vshrl.u32 %v1333, 7
        %v1335 = vsub.s32 %v1332, %v1334
        %v1336 = vrot.slane %v1322, %v1335
        %v1337 = vcombine.high %v1329, %v1329
        %v1338 = vcombine.high %v1336, %v1336
        %v1339 = vcombine.high %v811, %v811
        %v1341 = vunpack.c.l.s4 1983009808
        %v1342 = vunpack.c.0.s8 %v1341
        %v1343 = vlaneseq
        %v1344 = vshrl.u32 %v1343, 7
        %v1345 = vsub.s32 %v1342, %v1344
        %v1346 = vrot.slane %v811, %v1345
        %v1348 = vunpack.c.l.s4 1983009808
        %v1349 = vunpack.c.0.s8 %v1348
        %v1350 = vlaneseq
        %v1351 = vshrl.u32 %v1350, 7
        %v1352 = vsub.s32 %v1349, %v1351
        %v1353 = vrot.slane %v1339, %v1352
        %v1354 = vcombine.high %v1346, %v1346
        %v1355 = vcombine.high %v1353, %v1353
        %v1356 = vcombine.high %v812, %v812
        %v1358 = vunpack.c.l.s4 1983009808
        %v1359 = vunpack.c.0.s8 %v1358
        %v1360 = vlaneseq
        %v1361 = vshrl.u32 %v1360, 7
        %v1362 = vsub.s32 %v1359, %v1361
        %v1363 = vrot.slane %v812, %v1362
        %v1365 = vunpack.c.l.s4 1983009808
        %v1366 = vunpack.c.0.s8 %v1365
        %v1367 = vlaneseq
        %v1368 = vshrl.u32 %v1367, 7
        %v1369 = vsub.s32 %v1366, %v1368
        %v1370 = vrot.slane %v1356, %v1369
        %v1371 = vcombine.high %v1363, %v1363
        %v1372 = vcombine.high %v1370, %v1370
        %v1373 = vcombine.high %v813, %v813
        %v1375 = vunpack.c.l.s4 1983009808
        %v1376 = vunpack.c.0.s8 %v1375
        %v1377 = vlaneseq
        %v1378 = vshrl.u32 %v1377, 7
        %v1379 = vsub.s32 %v1376, %v1378
        %v1380 = vrot.slane %v813, %v1379
        %v1382 = vunpack.c.l.s4 1983009808
        %v1383 = vunpack.c.0.s8 %v1382
        %v1384 = vlaneseq
        %v1385 = vshrl.u32 %v1384, 7
        %v1386 = vsub.s32 %v1383, %v1385
        %v1387 = vrot.slane %v1373, %v1386
        %v1388 = vcombine.high %v1380, %v1380
        %v1389 = vcombine.high %v1387, %v1387
        %vm1518 = vcmask 517120
        %v1519 = vsel %vm1518, %v853, -inf
        %v1520 = vsel %vm1518, %v887, -inf
        %v1521 = vmax.f32 %v1519, %v1520
        %v1522 = vrot.slane %v1521, 4
        %v1523 = vmax.f32 %v1521, %v1522
        %v1524 = vrot.slane %v1523, 2
        %v1525 = vmax.f32 %v1523, %v1524
        %v1526 = vrot.slane %v1525, 1
        %v1527 = vmax.f32 %v1525, %v1526
        %v1528 = vsel %vm1518, %v861, -inf
        %v1529 = vsel %vm1518, %v895, -inf
        %v1530 = vmax.f32 %v1528, %v1529
        %v1531 = vrot.slane %v1530, 4
        %v1532 = vmax.f32 %v1530, %v1531
        %v1533 = vrot.slane %v1532, 2
        %v1534 = vmax.f32 %v1532, %v1533
        %v1535 = vrot.slane %v1534, 1
        %v1536 = vmax.f32 %v1534, %v1535
        %v1537 = vsel %vm1518, %v860, -inf
        %v1538 = vsel %vm1518, %v894, -inf
        %v1539 = vmax.f32 %v1537, %v1538
        %v1540 = vrot.slane %v1539, 4
        %v1541 = vmax.f32 %v1539, %v1540
        %v1542 = vrot.slane %v1541, 2
        %v1543 = vmax.f32 %v1541, %v1542
        %v1544 = vrot.slane %v1543, 1
        %v1545 = vmax.f32 %v1543, %v1544
        %v1546 = vsel %vm1518, %v862, -inf
        %v1547 = vsel %vm1518, %v896, -inf
        %v1548 = vmax.f32 %v1546, %v1547
        %v1549 = vrot.slane %v1548, 4
        %v1550 = vmax.f32 %v1548, %v1549
        %v1551 = vrot.slane %v1550, 2
        %v1552 = vmax.f32 %v1550, %v1551
        %v1553 = vrot.slane %v1552, 1
        %v1554 = vmax.f32 %v1552, %v1553
        %v1555 = vsel %vm1518, %v870, -inf
        %v1556 = vsel %vm1518, %v904, -inf
        %v1557 = vmax.f32 %v1555, %v1556
        %v1558 = vrot.slane %v1557, 4
        %v1559 = vmax.f32 %v1557, %v1558
        %v1560 = vrot.slane %v1559, 2
        %v1561 = vmax.f32 %v1559, %v1560
        %v1562 = vrot.slane %v1561, 1
        %v1563 = vmax.f32 %v1561, %v1562
        %v1564 = vsel %vm1518, %v878, -inf
        %v1565 = vsel %vm1518, %v912, -inf
        %v1566 = vmax.f32 %v1564, %v1565
        %v1567 = vrot.slane %v1566, 4
        %v1568 = vmax.f32 %v1566, %v1567
        %v1569 = vrot.slane %v1568, 2
        %v1570 = vmax.f32 %v1568, %v1569
        %v1571 = vrot.slane %v1570, 1
        %v1572 = vmax.f32 %v1570, %v1571
        %v1573 = vsel %vm1518, %v877, -inf
        %v1574 = vsel %vm1518, %v911, -inf
        %v1575 = vmax.f32 %v1573, %v1574
        %v1576 = vrot.slane %v1575, 4
        %v1577 = vmax.f32 %v1575, %v1576
        %v1578 = vrot.slane %v1577, 2
        %v1579 = vmax.f32 %v1577, %v1578
        %v1580 = vrot.slane %v1579, 1
        %v1581 = vmax.f32 %v1579, %v1580
        %v1582 = vsel %vm1518, %v879, -inf
        %v1583 = vsel %vm1518, %v913, -inf
        %v1584 = vmax.f32 %v1582, %v1583
        %v1585 = vrot.slane %v1584, 4
        %v1586 = vmax.f32 %v1584, %v1585
        %v1587 = vrot.slane %v1586, 2
        %v1588 = vmax.f32 %v1586, %v1587
        %v1589 = vrot.slane %v1588, 1
        %v1590 = vmax.f32 %v1588, %v1589
        %v1591 = vsel %vm1518, %v921, -inf
        %v1592 = vsel %vm1518, %v955, -inf
        %v1593 = vmax.f32 %v1591, %v1592
        %v1594 = vrot.slane %v1593, 4
        %v1595 = vmax.f32 %v1593, %v1594
        %v1596 = vrot.slane %v1595, 2
        %v1597 = vmax.f32 %v1595, %v1596
        %v1598 = vrot.slane %v1597, 1
        %v1599 = vmax.f32 %v1597, %v1598
        %v1600 = vsel %vm1518, %v929, -inf
        %v1601 = vsel %vm1518, %v963, -inf
        %v1602 = vmax.f32 %v1600, %v1601
        %v1603 = vrot.slane %v1602, 4
        %v1604 = vmax.f32 %v1602, %v1603
        %v1605 = vrot.slane %v1604, 2
        %v1606 = vmax.f32 %v1604, %v1605
        %v1607 = vrot.slane %v1606, 1
        %v1608 = vmax.f32 %v1606, %v1607
        %v1609 = vsel %vm1518, %v928, -inf
        %v1610 = vsel %vm1518, %v962, -inf
        %v1611 = vmax.f32 %v1609, %v1610
        %v1612 = vrot.slane %v1611, 4
        %v1613 = vmax.f32 %v1611, %v1612
        %v1614 = vrot.slane %v1613, 2
        %v1615 = vmax.f32 %v1613, %v1614
        %v1616 = vrot.slane %v1615, 1
        %v1617 = vmax.f32 %v1615, %v1616
        %v1618 = vsel %vm1518, %v930, -inf
        %v1619 = vsel %vm1518, %v964, -inf
        %v1620 = vmax.f32 %v1618, %v1619
        %v1621 = vrot.slane %v1620, 4
        %v1622 = vmax.f32 %v1620, %v1621
        %v1623 = vrot.slane %v1622, 2
        %v1624 = vmax.f32 %v1622, %v1623
        %v1625 = vrot.slane %v1624, 1
        %v1626 = vmax.f32 %v1624, %v1625
        %v1627 = vsel %vm1518, %v938, -inf
        %v1628 = vsel %vm1518, %v972, -inf
        %v1629 = vmax.f32 %v1627, %v1628
        %v1630 = vrot.slane %v1629, 4
        %v1631 = vmax.f32 %v1629, %v1630
        %v1632 = vrot.slane %v1631, 2
        %v1633 = vmax.f32 %v1631, %v1632
        %v1634 = vrot.slane %v1633, 1
        %v1635 = vmax.f32 %v1633, %v1634
        %v1636 = vsel %vm1518, %v946, -inf
        %v1637 = vsel %vm1518, %v980, -inf
        %v1638 = vmax.f32 %v1636, %v1637
        %v1639 = vrot.slane %v1638, 4
        %v1640 = vmax.f32 %v1638, %v1639
        %v1641 = vrot.slane %v1640, 2
        %v1642 = vmax.f32 %v1640, %v1641
        %v1643 = vrot.slane %v1642, 1
        %v1644 = vmax.f32 %v1642, %v1643
        %v1645 = vsel %vm1518, %v945, -inf
        %v1646 = vsel %vm1518, %v979, -inf
        %v1647 = vmax.f32 %v1645, %v1646
        %v1648 = vrot.slane %v1647, 4
        %v1649 = vmax.f32 %v1647, %v1648
        %v1650 = vrot.slane %v1649, 2
        %v1651 = vmax.f32 %v1649, %v1650
        %v1652 = vrot.slane %v1651, 1
        %v1653 = vmax.f32 %v1651, %v1652
        %v1654 = vsel %vm1518, %v947, -inf
        %v1655 = vsel %vm1518, %v981, -inf
        %v1656 = vmax.f32 %v1654, %v1655
        %v1657 = vrot.slane %v1656, 4
        %v1658 = vmax.f32 %v1656, %v1657
        %v1659 = vrot.slane %v1658, 2
        %v1660 = vmax.f32 %v1658, %v1659
        %v1661 = vrot.slane %v1660, 1
        %v1662 = vmax.f32 %v1660, %v1661
        %v1663 = vsel %vm1518, %v989, -inf
        %v1664 = vsel %vm1518, %v1023, -inf
        %v1665 = vmax.f32 %v1663, %v1664
        %v1666 = vrot.slane %v1665, 4
        %v1667 = vmax.f32 %v1665, %v1666
        %v1668 = vrot.slane %v1667, 2
        %v1669 = vmax.f32 %v1667, %v1668
        %v1670 = vrot.slane %v1669, 1
        %v1671 = vmax.f32 %v1669, %v1670
        %v1672 = vsel %vm1518, %v997, -inf
        %v1673 = vsel %vm1518, %v1031, -inf
        %v1674 = vmax.f32 %v1672, %v1673
        %v1675 = vrot.slane %v1674, 4
        %v1676 = vmax.f32 %v1674, %v1675
        %v1677 = vrot.slane %v1676, 2
        %v1678 = vmax.f32 %v1676, %v1677
        %v1679 = vrot.slane %v1678, 1
        %v1680 = vmax.f32 %v1678, %v1679
        %v1681 = vsel %vm1518, %v996, -inf
        %v1682 = vsel %vm1518, %v1030, -inf
        %v1683 = vmax.f32 %v1681, %v1682
        %v1684 = vrot.slane %v1683, 4
        %v1685 = vmax.f32 %v1683, %v1684
        %v1686 = vrot.slane %v1685, 2
        %v1687 = vmax.f32 %v1685, %v1686
        %v1688 = vrot.slane %v1687, 1
        %v1689 = vmax.f32 %v1687, %v1688
        %v1690 = vsel %vm1518, %v998, -inf
        %v1691 = vsel %vm1518, %v1032, -inf
        %v1692 = vmax.f32 %v1690, %v1691
        %v1693 = vrot.slane %v1692, 4
        %v1694 = vmax.f32 %v1692, %v1693
        %v1695 = vrot.slane %v1694, 2
        %v1696 = vmax.f32 %v1694, %v1695
        %v1697 = vrot.slane %v1696, 1
        %v1698 = vmax.f32 %v1696, %v1697
        %v1699 = vsel %vm1518, %v1006, -inf
        %v1700 = vsel %vm1518, %v1040, -inf
        %v1701 = vmax.f32 %v1699, %v1700
        %v1702 = vrot.slane %v1701, 4
        %v1703 = vmax.f32 %v1701, %v1702
        %v1704 = vrot.slane %v1703, 2
        %v1705 = vmax.f32 %v1703, %v1704
        %v1706 = vrot.slane %v1705, 1
        %v1707 = vmax.f32 %v1705, %v1706
        %v1708 = vsel %vm1518, %v1014, -inf
        %v1709 = vsel %vm1518, %v1048, -inf
        %v1710 = vmax.f32 %v1708, %v1709
        %v1711 = vrot.slane %v1710, 4
        %v1712 = vmax.f32 %v1710, %v1711
        %v1713 = vrot.slane %v1712, 2
        %v1714 = vmax.f32 %v1712, %v1713
        %v1715 = vrot.slane %v1714, 1
        %v1716 = vmax.f32 %v1714, %v1715
        %v1717 = vsel %vm1518, %v1013, -inf
        %v1718 = vsel %vm1518, %v1047, -inf
        %v1719 = vmax.f32 %v1717, %v1718
        %v1720 = vrot.slane %v1719, 4
        %v1721 = vmax.f32 %v1719, %v1720
        %v1722 = vrot.slane %v1721, 2
        %v1723 = vmax.f32 %v1721, %v1722
        %v1724 = vrot.slane %v1723, 1
        %v1725 = vmax.f32 %v1723, %v1724
        %v1726 = vsel %vm1518, %v1015, -inf
        %v1727 = vsel %vm1518, %v1049, -inf
        %v1728 = vmax.f32 %v1726, %v1727
        %v1729 = vrot.slane %v1728, 4
        %v1730 = vmax.f32 %v1728, %v1729
        %v1731 = vrot.slane %v1730, 2
        %v1732 = vmax.f32 %v1730, %v1731
        %v1733 = vrot.slane %v1732, 1
        %v1734 = vmax.f32 %v1732, %v1733
        %v1735 = vsel %vm1518, %v1057, -inf
        %v1736 = vsel %vm1518, %v1091, -inf
        %v1737 = vmax.f32 %v1735, %v1736
        %v1738 = vrot.slane %v1737, 4
        %v1739 = vmax.f32 %v1737, %v1738
        %v1740 = vrot.slane %v1739, 2
        %v1741 = vmax.f32 %v1739, %v1740
        %v1742 = vrot.slane %v1741, 1
        %v1743 = vmax.f32 %v1741, %v1742
        %v1744 = vsel %vm1518, %v1065, -inf
        %v1745 = vsel %vm1518, %v1099, -inf
        %v1746 = vmax.f32 %v1744, %v1745
        %v1747 = vrot.slane %v1746, 4
        %v1748 = vmax.f32 %v1746, %v1747
        %v1749 = vrot.slane %v1748, 2
        %v1750 = vmax.f32 %v1748, %v1749
        %v1751 = vrot.slane %v1750, 1
        %v1752 = vmax.f32 %v1750, %v1751
        %v1753 = vsel %vm1518, %v1064, -inf
        %v1754 = vsel %vm1518, %v1098, -inf
        %v1755 = vmax.f32 %v1753, %v1754
        %v1756 = vrot.slane %v1755, 4
        %v1757 = vmax.f32 %v1755, %v1756
        %v1758 = vrot.slane %v1757, 2
        %v1759 = vmax.f32 %v1757, %v1758
        %v1760 = vrot.slane %v1759, 1
        %v1761 = vmax.f32 %v1759, %v1760
        %v1762 = vsel %vm1518, %v1066, -inf
        %v1763 = vsel %vm1518, %v1100, -inf
        %v1764 = vmax.f32 %v1762, %v1763
        %v1765 = vrot.slane %v1764, 4
        %v1766 = vmax.f32 %v1764, %v1765
        %v1767 = vrot.slane %v1766, 2
        %v1768 = vmax.f32 %v1766, %v1767
        %v1769 = vrot.slane %v1768, 1
        %v1770 = vmax.f32 %v1768, %v1769
        %v1771 = vsel %vm1518, %v1074, -inf
        %v1772 = vsel %vm1518, %v1108, -inf
        %v1773 = vmax.f32 %v1771, %v1772
        %v1774 = vrot.slane %v1773, 4
        %v1775 = vmax.f32 %v1773, %v1774
        %v1776 = vrot.slane %v1775, 2
        %v1777 = vmax.f32 %v1775, %v1776
        %v1778 = vrot.slane %v1777, 1
        %v1779 = vmax.f32 %v1777, %v1778
        %v1780 = vsel %vm1518, %v1082, -inf
        %v1781 = vsel %vm1518, %v1116, -inf
        %v1782 = vmax.f32 %v1780, %v1781
        %v1783 = vrot.slane %v1782, 4
        %v1784 = vmax.f32 %v1782, %v1783
        %v1785 = vrot.slane %v1784, 2
        %v1786 = vmax.f32 %v1784, %v1785
        %v1787 = vrot.slane %v1786, 1
        %v1788 = vmax.f32 %v1786, %v1787
        %v1789 = vsel %vm1518, %v1081, -inf
        %v1790 = vsel %vm1518, %v1115, -inf
        %v1791 = vmax.f32 %v1789, %v1790
        %v1792 = vrot.slane %v1791, 4
        %v1793 = vmax.f32 %v1791, %v1792
        %v1794 = vrot.slane %v1793, 2
        %v1795 = vmax.f32 %v1793, %v1794
        %v1796 = vrot.slane %v1795, 1
        %v1797 = vmax.f32 %v1795, %v1796
        %v1798 = vsel %vm1518, %v1083, -inf
        %v1799 = vsel %vm1518, %v1117, -inf
        %v1800 = vmax.f32 %v1798, %v1799
        %v1801 = vrot.slane %v1800, 4
        %v1802 = vmax.f32 %v1800, %v1801
        %v1803 = vrot.slane %v1802, 2
        %v1804 = vmax.f32 %v1802, %v1803
        %v1805 = vrot.slane %v1804, 1
        %v1806 = vmax.f32 %v1804, %v1805
        %v1807 = vsel %vm1518, %v1125, -inf
        %v1808 = vsel %vm1518, %v1159, -inf
        %v1809 = vmax.f32 %v1807, %v1808
        %v1810 = vrot.slane %v1809, 4
        %v1811 = vmax.f32 %v1809, %v1810
        %v1812 = vrot.slane %v1811, 2
        %v1813 = vmax.f32 %v1811, %v1812
        %v1814 = vrot.slane %v1813, 1
        %v1815 = vmax.f32 %v1813, %v1814
        %v1816 = vsel %vm1518, %v1133, -inf
        %v1817 = vsel %vm1518, %v1167, -inf
        %v1818 = vmax.f32 %v1816, %v1817
        %v1819 = vrot.slane %v1818, 4
        %v1820 = vmax.f32 %v1818, %v1819
        %v1821 = vrot.slane %v1820, 2
        %v1822 = vmax.f32 %v1820, %v1821
        %v1823 = vrot.slane %v1822, 1
        %v1824 = vmax.f32 %v1822, %v1823
        %v1825 = vsel %vm1518, %v1132, -inf
        %v1826 = vsel %vm1518, %v1166, -inf
        %v1827 = vmax.f32 %v1825, %v1826
        %v1828 = vrot.slane %v1827, 4
        %v1829 = vmax.f32 %v1827, %v1828
        %v1830 = vrot.slane %v1829, 2
        %v1831 = vmax.f32 %v1829, %v1830
        %v1832 = vrot.slane %v1831, 1
        %v1833 = vmax.f32 %v1831, %v1832
        %v1834 = vsel %vm1518, %v1134, -inf
        %v1835 = vsel %vm1518, %v1168, -inf
        %v1836 = vmax.f32 %v1834, %v1835
        %v1837 = vrot.slane %v1836, 4
        %v1838 = vmax.f32 %v1836, %v1837
        %v1839 = vrot.slane %v1838, 2
        %v1840 = vmax.f32 %v1838, %v1839
        %v1841 = vrot.slane %v1840, 1
        %v1842 = vmax.f32 %v1840, %v1841
        %v1843 = vsel %vm1518, %v1142, -inf
        %v1844 = vsel %vm1518, %v1176, -inf
        %v1845 = vmax.f32 %v1843, %v1844
        %v1846 = vrot.slane %v1845, 4
        %v1847 = vmax.f32 %v1845, %v1846
        %v1848 = vrot.slane %v1847, 2
        %v1849 = vmax.f32 %v1847, %v1848
        %v1850 = vrot.slane %v1849, 1
        %v1851 = vmax.f32 %v1849, %v1850
        %v1852 = vsel %vm1518, %v1150, -inf
        %v1853 = vsel %vm1518, %v1184, -inf
        %v1854 = vmax.f32 %v1852, %v1853
        %v1855 = vrot.slane %v1854, 4
        %v1856 = vmax.f32 %v1854, %v1855
        %v1857 = vrot.slane %v1856, 2
        %v1858 = vmax.f32 %v1856, %v1857
        %v1859 = vrot.slane %v1858, 1
        %v1860 = vmax.f32 %v1858, %v1859
        %v1861 = vsel %vm1518, %v1149, -inf
        %v1862 = vsel %vm1518, %v1183, -inf
        %v1863 = vmax.f32 %v1861, %v1862
        %v1864 = vrot.slane %v1863, 4
        %v1865 = vmax.f32 %v1863, %v1864
        %v1866 = vrot.slane %v1865, 2
        %v1867 = vmax.f32 %v1865, %v1866
        %v1868 = vrot.slane %v1867, 1
        %v1869 = vmax.f32 %v1867, %v1868
        %v1870 = vsel %vm1518, %v1151, -inf
        %v1871 = vsel %vm1518, %v1185, -inf
        %v1872 = vmax.f32 %v1870, %v1871
        %v1873 = vrot.slane %v1872, 4
        %v1874 = vmax.f32 %v1872, %v1873
        %v1875 = vrot.slane %v1874, 2
        %v1876 = vmax.f32 %v1874, %v1875
        %v1877 = vrot.slane %v1876, 1
        %v1878 = vmax.f32 %v1876, %v1877
        %v1879 = vsel %vm1518, %v1193, -inf
        %v1880 = vsel %vm1518, %v1227, -inf
        %v1881 = vmax.f32 %v1879, %v1880
        %v1882 = vrot.slane %v1881, 4
        %v1883 = vmax.f32 %v1881, %v1882
        %v1884 = vrot.slane %v1883, 2
        %v1885 = vmax.f32 %v1883, %v1884
        %v1886 = vrot.slane %v1885, 1
        %v1887 = vmax.f32 %v1885, %v1886
        %v1888 = vsel %vm1518, %v1201, -inf
        %v1889 = vsel %vm1518, %v1235, -inf
        %v1890 = vmax.f32 %v1888, %v1889
        %v1891 = vrot.slane %v1890, 4
        %v1892 = vmax.f32 %v1890, %v1891
        %v1893 = vrot.slane %v1892, 2
        %v1894 = vmax.f32 %v1892, %v1893
        %v1895 = vrot.slane %v1894, 1
        %v1896 = vmax.f32 %v1894, %v1895
        %v1897 = vsel %vm1518, %v1200, -inf
        %v1898 = vsel %vm1518, %v1234, -inf
        %v1899 = vmax.f32 %v1897, %v1898
        %v1900 = vrot.slane %v1899, 4
        %v1901 = vmax.f32 %v1899, %v1900
        %v1902 = vrot.slane %v1901, 2
        %v1903 = vmax.f32 %v1901, %v1902
        %v1904 = vrot.slane %v1903, 1
        %v1905 = vmax.f32 %v1903, %v1904
        %v1906 = vsel %vm1518, %v1202, -inf
        %v1907 = vsel %vm1518, %v1236, -inf
        %v1908 = vmax.f32 %v1906, %v1907
        %v1909 = vrot.slane %v1908, 4
        %v1910 = vmax.f32 %v1908, %v1909
        %v1911 = vrot.slane %v1910, 2
        %v1912 = vmax.f32 %v1910, %v1911
        %v1913 = vrot.slane %v1912, 1
        %v1914 = vmax.f32 %v1912, %v1913
        %v1915 = vsel %vm1518, %v1210, -inf
        %v1916 = vsel %vm1518, %v1244, -inf
        %v1917 = vmax.f32 %v1915, %v1916
        %v1918 = vrot.slane %v1917, 4
        %v1919 = vmax.f32 %v1917, %v1918
        %v1920 = vrot.slane %v1919, 2
        %v1921 = vmax.f32 %v1919, %v1920
        %v1922 = vrot.slane %v1921, 1
        %v1923 = vmax.f32 %v1921, %v1922
        %v1924 = vsel %vm1518, %v1218, -inf
        %v1925 = vsel %vm1518, %v1252, -inf
        %v1926 = vmax.f32 %v1924, %v1925
        %v1927 = vrot.slane %v1926, 4
        %v1928 = vmax.f32 %v1926, %v1927
        %v1929 = vrot.slane %v1928, 2
        %v1930 = vmax.f32 %v1928, %v1929
        %v1931 = vrot.slane %v1930, 1
        %v1932 = vmax.f32 %v1930, %v1931
        %v1933 = vsel %vm1518, %v1217, -inf
        %v1934 = vsel %vm1518, %v1251, -inf
        %v1935 = vmax.f32 %v1933, %v1934
        %v1936 = vrot.slane %v1935, 4
        %v1937 = vmax.f32 %v1935, %v1936
        %v1938 = vrot.slane %v1937, 2
        %v1939 = vmax.f32 %v1937, %v1938
        %v1940 = vrot.slane %v1939, 1
        %v1941 = vmax.f32 %v1939, %v1940
        %v1942 = vsel %vm1518, %v1219, -inf
        %v1943 = vsel %vm1518, %v1253, -inf
        %v1944 = vmax.f32 %v1942, %v1943
        %v1945 = vrot.slane %v1944, 4
        %v1946 = vmax.f32 %v1944, %v1945
        %v1947 = vrot.slane %v1946, 2
        %v1948 = vmax.f32 %v1946, %v1947
        %v1949 = vrot.slane %v1948, 1
        %v1950 = vmax.f32 %v1948, %v1949
        %v1951 = vsel %vm1518, %v1261, -inf
        %v1952 = vsel %vm1518, %v1295, -inf
        %v1953 = vmax.f32 %v1951, %v1952
        %v1954 = vrot.slane %v1953, 4
        %v1955 = vmax.f32 %v1953, %v1954
        %v1956 = vrot.slane %v1955, 2
        %v1957 = vmax.f32 %v1955, %v1956
        %v1958 = vrot.slane %v1957, 1
        %v1959 = vmax.f32 %v1957, %v1958
        %v1960 = vsel %vm1518, %v1269, -inf
        %v1961 = vsel %vm1518, %v1303, -inf
        %v1962 = vmax.f32 %v1960, %v1961
        %v1963 = vrot.slane %v1962, 4
        %v1964 = vmax.f32 %v1962, %v1963
        %v1965 = vrot.slane %v1964, 2
        %v1966 = vmax.f32 %v1964, %v1965
        %v1967 = vrot.slane %v1966, 1
        %v1968 = vmax.f32 %v1966, %v1967
        %v1969 = vsel %vm1518, %v1268, -inf
        %v1970 = vsel %vm1518, %v1302, -inf
        %v1971 = vmax.f32 %v1969, %v1970
        %v1972 = vrot.slane %v1971, 4
        %v1973 = vmax.f32 %v1971, %v1972
        %v1974 = vrot.slane %v1973, 2
        %v1975 = vmax.f32 %v1973, %v1974
        %v1976 = vrot.slane %v1975, 1
        %v1977 = vmax.f32 %v1975, %v1976
        %v1978 = vsel %vm1518, %v1270, -inf
        %v1979 = vsel %vm1518, %v1304, -inf
        %v1980 = vmax.f32 %v1978, %v1979
        %v1981 = vrot.slane %v1980, 4
        %v1982 = vmax.f32 %v1980, %v1981
        %v1983 = vrot.slane %v1982, 2
        %v1984 = vmax.f32 %v1982, %v1983
        %v1985 = vrot.slane %v1984, 1
        %v1986 = vmax.f32 %v1984, %v1985
        %v1987 = vsel %vm1518, %v1278, -inf
        %v1988 = vsel %vm1518, %v1312, -inf
        %v1989 = vmax.f32 %v1987, %v1988
        %v1990 = vrot.slane %v1989, 4
        %v1991 = vmax.f32 %v1989, %v1990
        %v1992 = vrot.slane %v1991, 2
        %v1993 = vmax.f32 %v1991, %v1992
        %v1994 = vrot.slane %v1993, 1
        %v1995 = vmax.f32 %v1993, %v1994
        %v1996 = vsel %vm1518, %v1286, -inf
        %v1997 = vsel %vm1518, %v1320, -inf
        %v1998 = vmax.f32 %v1996, %v1997
        %v1999 = vrot.slane %v1998, 4
        %v2000 = vmax.f32 %v1998, %v1999
        %v2001 = vrot.slane %v2000, 2
        %v2002 = vmax.f32 %v2000, %v2001
        %v2003 = vrot.slane %v2002, 1
        %v2004 = vmax.f32 %v2002, %v2003
        %v2005 = vsel %vm1518, %v1285, -inf
        %v2006 = vsel %vm1518, %v1319, -inf
        %v2007 = vmax.f32 %v2005, %v2006
        %v2008 = vrot.slane %v2007, 4
        %v2009 = vmax.f32 %v2007, %v2008
        %v2010 = vrot.slane %v2009, 2
        %v2011 = vmax.f32 %v2009, %v2010
        %v2012 = vrot.slane %v2011, 1
        %v2013 = vmax.f32 %v2011, %v2012
        %v2014 = vsel %vm1518, %v1287, -inf
        %v2015 = vsel %vm1518, %v1321, -inf
        %v2016 = vmax.f32 %v2014, %v2015
        %v2017 = vrot.slane %v2016, 4
        %v2018 = vmax.f32 %v2016, %v2017
        %v2019 = vrot.slane %v2018, 2
        %v2020 = vmax.f32 %v2018, %v2019
        %v2021 = vrot.slane %v2020, 1
        %v2022 = vmax.f32 %v2020, %v2021
        %v2023 = vsel %vm1518, %v1329, -inf
        %v2024 = vsel %vm1518, %v1363, -inf
        %v2025 = vmax.f32 %v2023, %v2024
        %v2026 = vrot.slane %v2025, 4
        %v2027 = vmax.f32 %v2025, %v2026
        %v2028 = vrot.slane %v2027, 2
        %v2029 = vmax.f32 %v2027, %v2028
        %v2030 = vrot.slane %v2029, 1
        %v2031 = vmax.f32 %v2029, %v2030
        %v2032 = vsel %vm1518, %v1337, -inf
        %v2033 = vsel %vm1518, %v1371, -inf
        %v2034 = vmax.f32 %v2032, %v2033
        %v2035 = vrot.slane %v2034, 4
        %v2036 = vmax.f32 %v2034, %v2035
        %v2037 = vrot.slane %v2036, 2
        %v2038 = vmax.f32 %v2036, %v2037
        %v2039 = vrot.slane %v2038, 1
        %v2040 = vmax.f32 %v2038, %v2039
        %v2041 = vsel %vm1518, %v1336, -inf
        %v2042 = vsel %vm1518, %v1370, -inf
        %v2043 = vmax.f32 %v2041, %v2042
        %v2044 = vrot.slane %v2043, 4
        %v2045 = vmax.f32 %v2043, %v2044
        %v2046 = vrot.slane %v2045, 2
        %v2047 = vmax.f32 %v2045, %v2046
        %v2048 = vrot.slane %v2047, 1
        %v2049 = vmax.f32 %v2047, %v2048
        %v2050 = vsel %vm1518, %v1338, -inf
        %v2051 = vsel %vm1518, %v1372, -inf
        %v2052 = vmax.f32 %v2050, %v2051
        %v2053 = vrot.slane %v2052, 4
        %v2054 = vmax.f32 %v2052, %v2053
        %v2055 = vrot.slane %v2054, 2
        %v2056 = vmax.f32 %v2054, %v2055
        %v2057 = vrot.slane %v2056, 1
        %v2058 = vmax.f32 %v2056, %v2057
        %v2059 = vsel %vm1518, %v1346, -inf
        %v2060 = vsel %vm1518, %v1380, -inf
        %v2061 = vmax.f32 %v2059, %v2060
        %v2062 = vrot.slane %v2061, 4
        %v2063 = vmax.f32 %v2061, %v2062
        %v2064 = vrot.slane %v2063, 2
        %v2065 = vmax.f32 %v2063, %v2064
        %v2066 = vrot.slane %v2065, 1
        %v2067 = vmax.f32 %v2065, %v2066
        %v2068 = vsel %vm1518, %v1354, -inf
        %v2069 = vsel %vm1518, %v1388, -inf
        %v2070 = vmax.f32 %v2068, %v2069
        %v2071 = vrot.slane %v2070, 4
        %v2072 = vmax.f32 %v2070, %v2071
        %v2073 = vrot.slane %v2072, 2
        %v2074 = vmax.f32 %v2072, %v2073
        %v2075 = vrot.slane %v2074, 1
        %v2076 = vmax.f32 %v2074, %v2075
        %v2077 = vsel %vm1518, %v1353, -inf
        %v2078 = vsel %vm1518, %v1387, -inf
        %v2079 = vmax.f32 %v2077, %v2078
        %v2080 = vrot.slane %v2079, 4
        %v2081 = vmax.f32 %v2079, %v2080
        %v2082 = vrot.slane %v2081, 2
        %v2083 = vmax.f32 %v2081, %v2082
        %v2084 = vrot.slane %v2083, 1
        %v2085 = vmax.f32 %v2083, %v2084
        %v2086 = vsel %vm1518, %v1355, -inf
        %v2087 = vsel %vm1518, %v1389, -inf
        %v2088 = vmax.f32 %v2086, %v2087
        %v2089 = vrot.slane %v2088, 4
        %v2090 = vmax.f32 %v2088, %v2089
        %v2091 = vrot.slane %v2090, 2
        %v2092 = vmax.f32 %v2090, %v2091
        %v2093 = vrot.slane %v2092, 1
        %v2094 = vmax.f32 %v2092, %v2093
        %v2095 = vpack.c.bf16 %v1527, %v1527
        %v2096 = vpack.c.bf16 %v1536, %v1536
        %v2097 = vpack.c.bf16 %v1545, %v1545
        %v2098 = vpack.c.bf16 %v1554, %v1554
        %v2099 = vpack.c.bf16 %v1563, %v1563
        %v2100 = vpack.c.bf16 %v1572, %v1572
        %v2101 = vpack.c.bf16 %v1581, %v1581
        %v2102 = vpack.c.bf16 %v1590, %v1590
        %v2103 = vpack.c.bf16 %v1599, %v1599
        %v2104 = vpack.c.bf16 %v1608, %v1608
        %v2105 = vpack.c.bf16 %v1617, %v1617
        %v2106 = vpack.c.bf16 %v1626, %v1626
        %v2107 = vpack.c.bf16 %v1635, %v1635
        %v2108 = vpack.c.bf16 %v1644, %v1644
        %v2109 = vpack.c.bf16 %v1653, %v1653
        %v2110 = vpack.c.bf16 %v1662, %v1662
        %v2111 = vpack.c.bf16 %v1671, %v1671
        %v2112 = vpack.c.bf16 %v1680, %v1680
        %v2113 = vpack.c.bf16 %v1689, %v1689
        %v2114 = vpack.c.bf16 %v1698, %v1698
        %v2115 = vpack.c.bf16 %v1707, %v1707
        %v2116 = vpack.c.bf16 %v1716, %v1716
        %v2117 = vpack.c.bf16 %v1725, %v1725
        %v2118 = vpack.c.bf16 %v1734, %v1734
        %v2119 = vpack.c.bf16 %v1743, %v1743
        %v2120 = vpack.c.bf16 %v1752, %v1752
        %v2121 = vpack.c.bf16 %v1761, %v1761
        %v2122 = vpack.c.bf16 %v1770, %v1770
        %v2123 = vpack.c.bf16 %v1779, %v1779
        %v2124 = vpack.c.bf16 %v1788, %v1788
        %v2125 = vpack.c.bf16 %v1797, %v1797
        %v2126 = vpack.c.bf16 %v1806, %v1806
        %v2127 = vpack.c.bf16 %v1815, %v1815
        %v2128 = vpack.c.bf16 %v1824, %v1824
        %v2129 = vpack.c.bf16 %v1833, %v1833
        %v2130 = vpack.c.bf16 %v1842, %v1842
        %v2131 = vpack.c.bf16 %v1851, %v1851
        %v2132 = vpack.c.bf16 %v1860, %v1860
        %v2133 = vpack.c.bf16 %v1869, %v1869
        %v2134 = vpack.c.bf16 %v1878, %v1878
        %v2135 = vpack.c.bf16 %v1887, %v1887
        %v2136 = vpack.c.bf16 %v1896, %v1896
        %v2137 = vpack.c.bf16 %v1905, %v1905
        %v2138 = vpack.c.bf16 %v1914, %v1914
        %v2139 = vpack.c.bf16 %v1923, %v1923
        %v2140 = vpack.c.bf16 %v1932, %v1932
        %v2141 = vpack.c.bf16 %v1941, %v1941
        %v2142 = vpack.c.bf16 %v1950, %v1950
        %v2143 = vpack.c.bf16 %v1959, %v1959
        %v2144 = vpack.c.bf16 %v1968, %v1968
        %v2145 = vpack.c.bf16 %v1977, %v1977
        %v2146 = vpack.c.bf16 %v1986, %v1986
        %v2147 = vpack.c.bf16 %v1995, %v1995
        %v2148 = vpack.c.bf16 %v2004, %v2004
        %v2149 = vpack.c.bf16 %v2013, %v2013
        %v2150 = vpack.c.bf16 %v2022, %v2022
        %v2151 = vpack.c.bf16 %v2031, %v2031
        %v2152 = vpack.c.bf16 %v2040, %v2040
        %v2153 = vpack.c.bf16 %v2049, %v2049
        %v2154 = vpack.c.bf16 %v2058, %v2058
        %v2155 = vpack.c.bf16 %v2067, %v2067
        %v2156 = vpack.c.bf16 %v2076, %v2076
        %v2157 = vpack.c.bf16 %v2085, %v2085
        %v2158 = vpack.c.bf16 %v2094, %v2094
        %vm2159 = vcmask 519168
        %2160 = vst.msk [vmem:[#allocation2] sm:$0xf] %vm2159, 0
        %vm2161 = vcmask 516096
        %2162 = vst.msk [vmem:[#allocation2 + $0x4] sm:$0x1] %vm2161, 0
        %s2163 = scalar_lea.vmem [#allocation2], 72
        %2164 = vst.msk [vmem:[%s2163] sm:$0xf] %vm2159, 0
        %2165 = vst.msk [vmem:[%s2163 + $0x4] sm:$0x1] %vm2161, 0
        %vm2166 = vcmask 516096
        %vm2167 = vsmask.f32 256
        %vm2168 = vmand %vm2166, %vm2167
        %v2169 = vld [vmem:[#allocation2] sm:$0x1]
        %v2170 = vsel %vm2168, 0, %v2169
        %2171 = vst [vmem:[#allocation2] sm:$0x1] %v2170
        %v2172 = vld [vmem:[#allocation2 + $0x8] sm:$0x1]
        %v2173 = vsel %vm2168, 0, %v2172
        %2174 = vst [vmem:[#allocation2 + $0x8] sm:$0x1] %v2173
        %v2175 = vld [vmem:[#allocation2 + $0x10] sm:$0x1]
        %v2176 = vsel %vm2168, 0, %v2175
        %2177 = vst [vmem:[#allocation2 + $0x10] sm:$0x1] %v2176
        %v2178 = vld [vmem:[#allocation2 + $0x18] sm:$0x1]
        %v2179 = vsel %vm2168, 0, %v2178
        %2180 = vst [vmem:[#allocation2 + $0x18] sm:$0x1] %v2179
        %v2181 = vld [vmem:[#allocation2 + $0x20] sm:$0x1]
        %v2182 = vsel %vm2168, 0, %v2181
        %2183 = vst [vmem:[#allocation2 + $0x20] sm:$0x1] %v2182
        %v2184 = vld [vmem:[#allocation2 + $0x28] sm:$0x1]
        %v2185 = vsel %vm2168, 0, %v2184
        %2186 = vst [vmem:[#allocation2 + $0x28] sm:$0x1] %v2185
        %v2187 = vld [vmem:[#allocation2 + $0x30] sm:$0x1]
        %v2188 = vsel %vm2168, 0, %v2187
        %2189 = vst [vmem:[#allocation2 + $0x30] sm:$0x1] %v2188
        %v2190 = vld [vmem:[#allocation2 + $0x38] sm:$0x1]
        %v2191 = vsel %vm2168, 0, %v2190
        %2192 = vst [vmem:[#allocation2 + $0x38] sm:$0x1] %v2191
        %v2193 = vld [vmem:[#allocation2 + $0x40] sm:$0x1]
        %v2194 = vsel %vm2168, 0, %v2193
        %2195 = vst [vmem:[#allocation2 + $0x40] sm:$0x1] %v2194
        %v2196 = vld [vmem:[#allocation2 + $0x48] sm:$0x1]
        %v2197 = vsel %vm2168, 0, %v2196
        %2198 = vst [vmem:[#allocation2 + $0x48] sm:$0x1] %v2197
        %vm2199 = vsmask.f32 7938
        %vm2200 = vmand %vm2166, %vm2199
        %v2201 = vld [vmem:[#allocation2 + $0x4] sm:$0x1]
        %v2202 = vsel %vm2200, 0, %v2201
        %2203 = vst [vmem:[#allocation2 + $0x4] sm:$0x1] %v2202
        %v2204 = vld [vmem:[#allocation2 + $0xc] sm:$0x1]
        %v2205 = vsel %vm2200, 0, %v2204
        %2206 = vst [vmem:[#allocation2 + $0xc] sm:$0x1] %v2205
        %v2207 = vld [vmem:[#allocation2 + $0x14] sm:$0x1]
        %v2208 = vsel %vm2200, 0, %v2207
        %2209 = vst [vmem:[#allocation2 + $0x14] sm:$0x1] %v2208
        %v2210 = vld [vmem:[#allocation2 + $0x1c] sm:$0x1]
        %v2211 = vsel %vm2200, 0, %v2210
        %2212 = vst [vmem:[#allocation2 + $0x1c] sm:$0x1] %v2211
        %v2213 = vld [vmem:[#allocation2 + $0x24] sm:$0x1]
        %v2214 = vsel %vm2200, 0, %v2213
        %2215 = vst [vmem:[#allocation2 + $0x24] sm:$0x1] %v2214
        %v2216 = vld [vmem:[#allocation2 + $0x2c] sm:$0x1]
        %v2217 = vsel %vm2200, 0, %v2216
        %2218 = vst [vmem:[#allocation2 + $0x2c] sm:$0x1] %v2217
        %v2219 = vld [vmem:[#allocation2 + $0x34] sm:$0x1]
        %v2220 = vsel %vm2200, 0, %v2219
        %2221 = vst [vmem:[#allocation2 + $0x34] sm:$0x1] %v2220
        %v2222 = vld [vmem:[#allocation2 + $0x3c] sm:$0x1]
        %v2223 = vsel %vm2200, 0, %v2222
        %2224 = vst [vmem:[#allocation2 + $0x3c] sm:$0x1] %v2223
        %v2225 = vld [vmem:[#allocation2 + $0x44] sm:$0x1]
        %v2226 = vsel %vm2200, 0, %v2225
        %2227 = vst [vmem:[#allocation2 + $0x44] sm:$0x1] %v2226
        %v2228 = vld [vmem:[#allocation2 + $0x4c] sm:$0x1]
        %v2229 = vsel %vm2200, 0, %v2228
        %2230 = vst [vmem:[#allocation2 + $0x4c] sm:$0x1] %v2229
        %v2295 = vunpack.c.l.b16 %v2095
        %v2296 = vunpack.c.l.b16 %v2096
        %v2297 = vunpack.c.l.b16 %v2097
        %v2298 = vunpack.c.l.b16 %v2098
        %v2299 = vunpack.c.l.b16 %v2099
        %v2300 = vunpack.c.l.b16 %v2100
        %v2301 = vunpack.c.l.b16 %v2101
        %v2302 = vunpack.c.l.b16 %v2102
        %v2303 = vunpack.c.l.b16 %v2103
        %v2304 = vunpack.c.l.b16 %v2104
        %v2305 = vunpack.c.l.b16 %v2105
        %v2306 = vunpack.c.l.b16 %v2106
        %v2307 = vunpack.c.l.b16 %v2107
        %v2308 = vunpack.c.l.b16 %v2108
        %v2309 = vunpack.c.l.b16 %v2109
        %v2310 = vunpack.c.l.b16 %v2110
        %v2311 = vunpack.c.l.b16 %v2111
        %v2312 = vunpack.c.l.b16 %v2112
        %v2313 = vunpack.c.l.b16 %v2113
        %v2314 = vunpack.c.l.b16 %v2114
        %v2315 = vunpack.c.l.b16 %v2115
        %v2316 = vunpack.c.l.b16 %v2116
        %v2317 = vunpack.c.l.b16 %v2117
        %v2318 = vunpack.c.l.b16 %v2118
        %v2319 = vunpack.c.l.b16 %v2119
        %v2320 = vunpack.c.l.b16 %v2120
        %v2321 = vunpack.c.l.b16 %v2121
        %v2322 = vunpack.c.l.b16 %v2122
        %v2323 = vunpack.c.l.b16 %v2123
        %v2324 = vunpack.c.l.b16 %v2124
        %v2325 = vunpack.c.l.b16 %v2125
        %v2326 = vunpack.c.l.b16 %v2126
        %v2327 = vunpack.c.l.b16 %v2127
        %v2328 = vunpack.c.l.b16 %v2128
        %v2329 = vunpack.c.l.b16 %v2129
        %v2330 = vunpack.c.l.b16 %v2130
        %v2331 = vunpack.c.l.b16 %v2131
        %v2332 = vunpack.c.l.b16 %v2132
        %v2333 = vunpack.c.l.b16 %v2133
        %v2334 = vunpack.c.l.b16 %v2134
        %v2335 = vunpack.c.l.b16 %v2135
        %v2336 = vunpack.c.l.b16 %v2136
        %v2337 = vunpack.c.l.b16 %v2137
        %v2338 = vunpack.c.l.b16 %v2138
        %v2339 = vunpack.c.l.b16 %v2139
        %v2340 = vunpack.c.l.b16 %v2140
        %v2341 = vunpack.c.l.b16 %v2141
        %v2342 = vunpack.c.l.b16 %v2142
        %v2343 = vunpack.c.l.b16 %v2143
        %v2344 = vunpack.c.l.b16 %v2144
        %v2345 = vunpack.c.l.b16 %v2145
        %v2346 = vunpack.c.l.b16 %v2146
        %v2347 = vunpack.c.l.b16 %v2147
        %v2348 = vunpack.c.l.b16 %v2148
        %v2349 = vunpack.c.l.b16 %v2149
        %v2350 = vunpack.c.l.b16 %v2150
        %v2351 = vunpack.c.l.b16 %v2151
        %v2352 = vunpack.c.l.b16 %v2152
        %v2353 = vunpack.c.l.b16 %v2153
        %v2354 = vunpack.c.l.b16 %v2154
        %v2355 = vunpack.c.l.b16 %v2155
        %v2356 = vunpack.c.l.b16 %v2156
        %v2357 = vunpack.c.l.b16 %v2157
        %v2358 = vunpack.c.l.b16 %v2158
        %v2359 = vpack.c.b16 %v2295, %v2295
        %v2360 = vpack.c.b16 %v2296, %v2296
        %v2361 = vpack.c.b16 %v2297, %v2297
        %v2362 = vpack.c.b16 %v2298, %v2298
        %v2363 = vpack.c.b16 %v2299, %v2299
        %v2364 = vpack.c.b16 %v2300, %v2300
        %v2365 = vpack.c.b16 %v2301, %v2301
        %v2366 = vpack.c.b16 %v2302, %v2302
        %v2367 = vpack.c.b16 %v2303, %v2303
        %v2368 = vpack.c.b16 %v2304, %v2304
        %v2369 = vpack.c.b16 %v2305, %v2305
        %v2370 = vpack.c.b16 %v2306, %v2306
        %v2371 = vpack.c.b16 %v2307, %v2307
        %v2372 = vpack.c.b16 %v2308, %v2308
        %v2373 = vpack.c.b16 %v2309, %v2309
        %v2374 = vpack.c.b16 %v2310, %v2310
        %v2375 = vpack.c.b16 %v2311, %v2311
        %v2376 = vpack.c.b16 %v2312, %v2312
        %v2377 = vpack.c.b16 %v2313, %v2313
        %v2378 = vpack.c.b16 %v2314, %v2314
        %v2379 = vpack.c.b16 %v2315, %v2315
        %v2380 = vpack.c.b16 %v2316, %v2316
        %v2381 = vpack.c.b16 %v2317, %v2317
        %v2382 = vpack.c.b16 %v2318, %v2318
        %v2383 = vpack.c.b16 %v2319, %v2319
        %v2384 = vpack.c.b16 %v2320, %v2320
        %v2385 = vpack.c.b16 %v2321, %v2321
        %v2386 = vpack.c.b16 %v2322, %v2322
        %v2387 = vpack.c.b16 %v2323, %v2323
        %v2388 = vpack.c.b16 %v2324, %v2324
        %v2389 = vpack.c.b16 %v2325, %v2325
        %v2390 = vpack.c.b16 %v2326, %v2326
        %v2391 = vpack.c.b16 %v2327, %v2327
        %v2392 = vpack.c.b16 %v2328, %v2328
        %v2393 = vpack.c.b16 %v2329, %v2329
        %v2394 = vpack.c.b16 %v2330, %v2330
        %v2395 = vpack.c.b16 %v2331, %v2331
        %v2396 = vpack.c.b16 %v2332, %v2332
        %v2397 = vpack.c.b16 %v2333, %v2333
        %v2398 = vpack.c.b16 %v2334, %v2334
        %v2399 = vpack.c.b16 %v2335, %v2335
        %v2400 = vpack.c.b16 %v2336, %v2336
        %v2401 = vpack.c.b16 %v2337, %v2337
        %v2402 = vpack.c.b16 %v2338, %v2338
        %v2403 = vpack.c.b16 %v2339, %v2339
        %v2404 = vpack.c.b16 %v2340, %v2340
        %v2405 = vpack.c.b16 %v2341, %v2341
        %v2406 = vpack.c.b16 %v2342, %v2342
        %v2407 = vpack.c.b16 %v2343, %v2343
        %v2408 = vpack.c.b16 %v2344, %v2344
        %v2409 = vpack.c.b16 %v2345, %v2345
        %v2410 = vpack.c.b16 %v2346, %v2346
        %v2411 = vpack.c.b16 %v2347, %v2347
        %v2412 = vpack.c.b16 %v2348, %v2348
        %v2413 = vpack.c.b16 %v2349, %v2349
        %v2414 = vpack.c.b16 %v2350, %v2350
        %v2415 = vpack.c.b16 %v2351, %v2351
        %v2416 = vpack.c.b16 %v2352, %v2352
        %v2417 = vpack.c.b16 %v2353, %v2353
        %v2418 = vpack.c.b16 %v2354, %v2354
        %v2419 = vpack.c.b16 %v2355, %v2355
        %v2420 = vpack.c.b16 %v2356, %v2356
        %v2421 = vpack.c.b16 %v2357, %v2357
        %v2422 = vpack.c.b16 %v2358, %v2358
        %v2423 = vunpack.c.l.b16 %v2359
        %v2424 = vunpack.c.l.b16 %v2360
        %v2425 = vunpack.c.l.b16 %v2361
        %v2426 = vunpack.c.l.b16 %v2362
        %v2427 = vunpack.c.l.b16 %v2363
        %v2428 = vunpack.c.l.b16 %v2364
        %v2429 = vunpack.c.l.b16 %v2365
        %v2430 = vunpack.c.l.b16 %v2366
        %v2431 = vunpack.c.l.b16 %v2367
        %v2432 = vunpack.c.l.b16 %v2368
        %v2433 = vunpack.c.l.b16 %v2369
        %v2434 = vunpack.c.l.b16 %v2370
        %v2435 = vunpack.c.l.b16 %v2371
        %v2436 = vunpack.c.l.b16 %v2372
        %v2437 = vunpack.c.l.b16 %v2373
        %v2438 = vunpack.c.l.b16 %v2374
        %v2439 = vunpack.c.l.b16 %v2375
        %v2440 = vunpack.c.l.b16 %v2376
        %v2441 = vunpack.c.l.b16 %v2377
        %v2442 = vunpack.c.l.b16 %v2378
        %v2443 = vunpack.c.l.b16 %v2379
        %v2444 = vunpack.c.l.b16 %v2380
        %v2445 = vunpack.c.l.b16 %v2381
        %v2446 = vunpack.c.l.b16 %v2382
        %v2447 = vunpack.c.l.b16 %v2383
        %v2448 = vunpack.c.l.b16 %v2384
        %v2449 = vunpack.c.l.b16 %v2385
        %v2450 = vunpack.c.l.b16 %v2386
        %v2451 = vunpack.c.l.b16 %v2387
        %v2452 = vunpack.c.l.b16 %v2388
        %v2453 = vunpack.c.l.b16 %v2389
        %v2454 = vunpack.c.l.b16 %v2390
        %v2455 = vunpack.c.l.b16 %v2391
        %v2456 = vunpack.c.l.b16 %v2392
        %v2457 = vunpack.c.l.b16 %v2393
        %v2458 = vunpack.c.l.b16 %v2394
        %v2459 = vunpack.c.l.b16 %v2395
        %v2460 = vunpack.c.l.b16 %v2396
        %v2461 = vunpack.c.l.b16 %v2397
        %v2462 = vunpack.c.l.b16 %v2398
        %v2463 = vunpack.c.l.b16 %v2399
        %v2464 = vunpack.c.l.b16 %v2400
        %v2465 = vunpack.c.l.b16 %v2401
        %v2466 = vunpack.c.l.b16 %v2402
        %v2467 = vunpack.c.l.b16 %v2403
        %v2468 = vunpack.c.l.b16 %v2404
        %v2469 = vunpack.c.l.b16 %v2405
        %v2470 = vunpack.c.l.b16 %v2406
        %v2471 = vunpack.c.l.b16 %v2407
        %v2472 = vunpack.c.l.b16 %v2408
        %v2473 = vunpack.c.l.b16 %v2409
        %v2474 = vunpack.c.l.b16 %v2410
        %v2475 = vunpack.c.l.b16 %v2411
        %v2476 = vunpack.c.l.b16 %v2412
        %v2477 = vunpack.c.l.b16 %v2413
        %v2478 = vunpack.c.l.b16 %v2414
        %v2479 = vunpack.c.l.b16 %v2415
        %v2480 = vunpack.c.l.b16 %v2416
        %v2481 = vunpack.c.l.b16 %v2417
        %v2482 = vunpack.c.l.b16 %v2418
        %v2483 = vunpack.c.l.b16 %v2419
        %v2484 = vunpack.c.l.b16 %v2420
        %v2485 = vunpack.c.l.b16 %v2421
        %v2486 = vunpack.c.l.b16 %v2422
        %vm2487 = vcmask 1042434
        %v2488 = vsel %vm2487, %v2424, %v2423
        %vm2489 = vcmask 1043459
        %v2490 = vsel %vm2489, %v2425, %v2488
        %vm2491 = vcmask 1044484
        %v2492 = vsel %vm2491, %v2426, %v2490
        %vm2493 = vcmask 1045509
        %v2494 = vsel %vm2493, %v2427, %v2492
        %vm2495 = vcmask 1046534
        %v2496 = vsel %vm2495, %v2428, %v2494
        %vm2497 = vcmask 1047559
        %v2498 = vsel %vm2497, %v2429, %v2496
        %v2499 = vsel %vm2487, %v2432, %v2431
        %v2500 = vsel %vm2489, %v2433, %v2499
        %v2501 = vsel %vm2491, %v2434, %v2500
        %v2502 = vsel %vm2493, %v2435, %v2501
        %v2503 = vsel %vm2495, %v2436, %v2502
        %v2504 = vsel %vm2497, %v2437, %v2503
        %v2505 = vsel %vm2487, %v2440, %v2439
        %v2506 = vsel %vm2489, %v2441, %v2505
        %v2507 = vsel %vm2491, %v2442, %v2506
        %v2508 = vsel %vm2493, %v2443, %v2507
        %v2509 = vsel %vm2495, %v2444, %v2508
        %v2510 = vsel %vm2497, %v2445, %v2509
        %v2511 = vsel %vm2487, %v2448, %v2447
        %v2512 = vsel %vm2489, %v2449, %v2511
        %v2513 = vsel %vm2491, %v2450, %v2512
        %v2514 = vsel %vm2493, %v2451, %v2513
        %v2515 = vsel %vm2495, %v2452, %v2514
        %v2516 = vsel %vm2497, %v2453, %v2515
        %v2517 = vsel %vm2487, %v2456, %v2455
        %v2518 = vsel %vm2489, %v2457, %v2517
        %v2519 = vsel %vm2491, %v2458, %v2518
        %v2520 = vsel %vm2493, %v2459, %v2519
        %v2521 = vsel %vm2495, %v2460, %v2520
        %v2522 = vsel %vm2497, %v2461, %v2521
        %v2523 = vsel %vm2487, %v2464, %v2463
        %v2524 = vsel %vm2489, %v2465, %v2523
        %v2525 = vsel %vm2491, %v2466, %v2524
        %v2526 = vsel %vm2493, %v2467, %v2525
        %v2527 = vsel %vm2495, %v2468, %v2526
        %v2528 = vsel %vm2497, %v2469, %v2527
        %v2529 = vsel %vm2487, %v2472, %v2471
        %v2530 = vsel %vm2489, %v2473, %v2529
        %v2531 = vsel %vm2491, %v2474, %v2530
        %v2532 = vsel %vm2493, %v2475, %v2531
        %v2533 = vsel %vm2495, %v2476, %v2532
        %v2534 = vsel %vm2497, %v2477, %v2533
        %v2535 = vsel %vm2487, %v2480, %v2479
        %v2536 = vsel %vm2489, %v2481, %v2535
        %v2537 = vsel %vm2491, %v2482, %v2536
        %v2538 = vsel %vm2493, %v2483, %v2537
        %v2539 = vsel %vm2495, %v2484, %v2538
        %v2540 = vsel %vm2497, %v2485, %v2539
        %v2541 = vpack.c.b16 %v2498, %v2498
        %v2542 = vpack.c.b16 %v2430, %v2430
        %v2543 = vpack.c.b16 %v2504, %v2504
        %v2544 = vpack.c.b16 %v2438, %v2438
        %v2545 = vpack.c.b16 %v2510, %v2510
        %v2546 = vpack.c.b16 %v2446, %v2446
        %v2547 = vpack.c.b16 %v2516, %v2516
        %v2548 = vpack.c.b16 %v2454, %v2454
        %v2549 = vpack.c.b16 %v2522, %v2522
        %v2550 = vpack.c.b16 %v2462, %v2462
        %v2551 = vpack.c.b16 %v2528, %v2528
        %v2552 = vpack.c.b16 %v2470, %v2470
        %v2553 = vpack.c.b16 %v2534, %v2534
        %v2554 = vpack.c.b16 %v2478, %v2478
        %v2555 = vpack.c.b16 %v2540, %v2540
        %v2556 = vpack.c.b16 %v2486, %v2486
        %s2573 = scalar_lea.vmem [#allocation2], 8
        %vm2574 = vcmask 519168
        %vm2575 = vmand %vm2574, %vm2199
        %v2576 = vld [vmem:[%s2573] sm:$0xf]
        %v2577 = vsel %vm2575, %v2541, %v2576
        %2578 = vst [vmem:[%s2573] sm:$0xf] %v2577
        %v2579 = vld [vmem:[%s2573 + $0x4] sm:$0x1]
        %v2580 = vsel %vm2168, %v2542, %v2579
        %2581 = vst [vmem:[%s2573 + $0x4] sm:$0x1] %v2580
        %v2582 = vld [vmem:[%s2573 + $0x8] sm:$0xf]
        %v2583 = vsel %vm2575, %v2543, %v2582
        %2584 = vst [vmem:[%s2573 + $0x8] sm:$0xf] %v2583
        %v2585 = vld [vmem:[%s2573 + $0xc] sm:$0x1]
        %v2586 = vsel %vm2168, %v2544, %v2585
        %2587 = vst [vmem:[%s2573 + $0xc] sm:$0x1] %v2586
        %v2588 = vld [vmem:[%s2573 + $0x10] sm:$0xf]
        %v2589 = vsel %vm2575, %v2545, %v2588
        %2590 = vst [vmem:[%s2573 + $0x10] sm:$0xf] %v2589
        %v2591 = vld [vmem:[%s2573 + $0x14] sm:$0x1]
        %v2592 = vsel %vm2168, %v2546, %v2591
        %2593 = vst [vmem:[%s2573 + $0x14] sm:$0x1] %v2592
        %v2594 = vld [vmem:[%s2573 + $0x18] sm:$0xf]
        %v2595 = vsel %vm2575, %v2547, %v2594
        %2596 = vst [vmem:[%s2573 + $0x18] sm:$0xf] %v2595
        %v2597 = vld [vmem:[%s2573 + $0x1c] sm:$0x1]
        %v2598 = vsel %vm2168, %v2548, %v2597
        %2599 = vst [vmem:[%s2573 + $0x1c] sm:$0x1] %v2598
        %v2600 = vld [vmem:[%s2573 + $0x20] sm:$0xf]
        %v2601 = vsel %vm2575, %v2549, %v2600
        %2602 = vst [vmem:[%s2573 + $0x20] sm:$0xf] %v2601
        %v2603 = vld [vmem:[%s2573 + $0x24] sm:$0x1]
        %v2604 = vsel %vm2168, %v2550, %v2603
        %2605 = vst [vmem:[%s2573 + $0x24] sm:$0x1] %v2604
        %v2606 = vld [vmem:[%s2573 + $0x28] sm:$0xf]
        %v2607 = vsel %vm2575, %v2551, %v2606
        %2608 = vst [vmem:[%s2573 + $0x28] sm:$0xf] %v2607
        %v2609 = vld [vmem:[%s2573 + $0x2c] sm:$0x1]
        %v2610 = vsel %vm2168, %v2552, %v2609
        %2611 = vst [vmem:[%s2573 + $0x2c] sm:$0x1] %v2610
        %v2612 = vld [vmem:[%s2573 + $0x30] sm:$0xf]
        %v2613 = vsel %vm2575, %v2553, %v2612
        %2614 = vst [vmem:[%s2573 + $0x30] sm:$0xf] %v2613
        %v2615 = vld [vmem:[%s2573 + $0x34] sm:$0x1]
        %v2616 = vsel %vm2168, %v2554, %v2615
        %2617 = vst [vmem:[%s2573 + $0x34] sm:$0x1] %v2616
        %v2618 = vld [vmem:[%s2573 + $0x38] sm:$0xf]
        %v2619 = vsel %vm2575, %v2555, %v2618
        %2620 = vst [vmem:[%s2573 + $0x38] sm:$0xf] %v2619
        %v2621 = vld [vmem:[%s2573 + $0x3c] sm:$0x1]
        %v2622 = vsel %vm2168, %v2556, %v2621
        %2623 = vst [vmem:[%s2573 + $0x3c] sm:$0x1] %v2622
        %v2624 = vld [vmem:[#allocation2] sm:$0xf]
        %v2625 = vld [vmem:[#allocation2 + $0x8] sm:$0xf]
        %v2626 = vld [vmem:[#allocation2 + $0x10] sm:$0xf]
        %v2627 = vld [vmem:[#allocation2 + $0x18] sm:$0xf]
        %v2628 = vld [vmem:[#allocation2 + $0x20] sm:$0xf]
        %v2629 = vld [vmem:[#allocation2 + $0x28] sm:$0xf]
        %v2630 = vld [vmem:[#allocation2 + $0x30] sm:$0xf]
        %v2631 = vld [vmem:[#allocation2 + $0x38] sm:$0xf]
        %v2632 = vld [vmem:[#allocation8] sm:$0xf]
        %v2633 = vld [vmem:[#allocation8 + $0x4] sm:$0xf]
        %v2634 = vld [vmem:[#allocation8 + $0x8] sm:$0xf]
        %v2635 = vld [vmem:[#allocation8 + $0xc] sm:$0xf]
        %v2636 = vld [vmem:[#allocation8 + $0x10] sm:$0xf]
        %v2637 = vld [vmem:[#allocation8 + $0x14] sm:$0xf]
        %v2638 = vld [vmem:[#allocation8 + $0x18] sm:$0xf]
        %v2639 = vld [vmem:[#allocation8 + $0x1c] sm:$0xf]
        %v2640 = vld [vmem:[#allocation2 + $0x4] sm:$0x1]
        %v2641 = vld [vmem:[#allocation2 + $0xc] sm:$0x1]
        %v2642 = vld [vmem:[#allocation2 + $0x14] sm:$0x1]
        %v2643 = vld [vmem:[#allocation2 + $0x1c] sm:$0x1]
        %v2644 = vld [vmem:[#allocation2 + $0x24] sm:$0x1]
        %v2645 = vld [vmem:[#allocation2 + $0x2c] sm:$0x1]
        %v2646 = vld [vmem:[#allocation2 + $0x34] sm:$0x1]
        %v2647 = vld [vmem:[#allocation2 + $0x3c] sm:$0x1]
        %vm2648 = vsmask.f32 3328
        %vm2649 = vsmask.f32 7440
        %vm2650 = vmor %vm2648, %vm2649
        %v2652 = vshrl.u32 %v2624, 16
        %v2654 = vrot.slane %v2652, 4
        %v2655 = vshll.u32 %v2624, 16
        %v2657 = vrot.slane %v2655, 5
        %v2658 = vor.u32 %v2654, %v2657
        %v2659 = vrot.slane %v2658, 4
        %v2661 = vshll.u32 %v2640, 16
        %v2663 = vrot.slane %v2661, 5
        %v2664 = vsel %vm2650, %v2659, %v2663
        %v2666 = vshrl.u32 %v2625, 16
        %v2668 = vrot.slane %v2666, 4
        %v2669 = vshll.u32 %v2625, 16
        %v2671 = vrot.slane %v2669, 5
        %v2672 = vor.u32 %v2668, %v2671
        %v2673 = vrot.slane %v2672, 4
        %v2675 = vshll.u32 %v2641, 16
        %v2677 = vrot.slane %v2675, 5
        %v2678 = vsel %vm2650, %v2673, %v2677
        %v2680 = vshrl.u32 %v2626, 16
        %v2682 = vrot.slane %v2680, 4
        %v2683 = vshll.u32 %v2626, 16
        %v2685 = vrot.slane %v2683, 5
        %v2686 = vor.u32 %v2682, %v2685
        %v2687 = vrot.slane %v2686, 4
        %v2689 = vshll.u32 %v2642, 16
        %v2691 = vrot.slane %v2689, 5
        %v2692 = vsel %vm2650, %v2687, %v2691
        %v2694 = vshrl.u32 %v2627, 16
        %v2696 = vrot.slane %v2694, 4
        %v2697 = vshll.u32 %v2627, 16
        %v2699 = vrot.slane %v2697, 5
        %v2700 = vor.u32 %v2696, %v2699
        %v2701 = vrot.slane %v2700, 4
        %v2703 = vshll.u32 %v2643, 16
        %v2705 = vrot.slane %v2703, 5
        %v2706 = vsel %vm2650, %v2701, %v2705
        %v2708 = vshrl.u32 %v2628, 16
        %v2710 = vrot.slane %v2708, 4
        %v2711 = vshll.u32 %v2628, 16
        %v2713 = vrot.slane %v2711, 5
        %v2714 = vor.u32 %v2710, %v2713
        %v2715 = vrot.slane %v2714, 4
        %v2717 = vshll.u32 %v2644, 16
        %v2719 = vrot.slane %v2717, 5
        %v2720 = vsel %vm2650, %v2715, %v2719
        %v2722 = vshrl.u32 %v2629, 16
        %v2724 = vrot.slane %v2722, 4
        %v2725 = vshll.u32 %v2629, 16
        %v2727 = vrot.slane %v2725, 5
        %v2728 = vor.u32 %v2724, %v2727
        %v2729 = vrot.slane %v2728, 4
        %v2731 = vshll.u32 %v2645, 16
        %v2733 = vrot.slane %v2731, 5
        %v2734 = vsel %vm2650, %v2729, %v2733
        %v2736 = vshrl.u32 %v2630, 16
        %v2738 = vrot.slane %v2736, 4
        %v2739 = vshll.u32 %v2630, 16
        %v2741 = vrot.slane %v2739, 5
        %v2742 = vor.u32 %v2738, %v2741
        %v2743 = vrot.slane %v2742, 4
        %v2745 = vshll.u32 %v2646, 16
        %v2747 = vrot.slane %v2745, 5
        %v2748 = vsel %vm2650, %v2743, %v2747
        %v2750 = vshrl.u32 %v2631, 16
        %v2752 = vrot.slane %v2750, 4
        %v2753 = vshll.u32 %v2631, 16
        %v2755 = vrot.slane %v2753, 5
        %v2756 = vor.u32 %v2752, %v2755
        %v2757 = vrot.slane %v2756, 4
        %v2759 = vshll.u32 %v2647, 16
        %v2761 = vrot.slane %v2759, 5
        %v2762 = vsel %vm2650, %v2757, %v2761
        %s2763 = scalar_lea.vmem [#allocation8], 32
        %v2764 = vld [vmem:[%s2763] sm:$0xf]
        %v2765 = vld [vmem:[%s2763 + $0x4] sm:$0xf]
        %v2766 = vld [vmem:[%s2763 + $0x8] sm:$0xf]
        %v2767 = vld [vmem:[%s2763 + $0xc] sm:$0xf]
        %v2768 = vld [vmem:[%s2763 + $0x10] sm:$0xf]
        %v2769 = vld [vmem:[%s2763 + $0x14] sm:$0xf]
        %v2770 = vld [vmem:[%s2763 + $0x18] sm:$0xf]
        %v2771 = vld [vmem:[%s2763 + $0x1c] sm:$0xf]
        %v2772 = vunpack.c.l.b16 %v2664
        %v2773 = vunpack.c.l.b16 %v2678
        %v2774 = vunpack.c.l.b16 %v2692
        %v2775 = vunpack.c.l.b16 %v2706
        %v2776 = vunpack.c.l.b16 %v2720
        %v2777 = vunpack.c.l.b16 %v2734
        %v2778 = vunpack.c.l.b16 %v2748
        %v2779 = vunpack.c.l.b16 %v2762
        %v2780 = vpack.c.b16 %v2773, %v2772
        %v2781 = vpack.c.b16 %v2775, %v2774
        %v2782 = vpack.c.b16 %v2777, %v2776
        %v2783 = vpack.c.b16 %v2779, %v2778
        %v2792 = vunpack.c.l.b16 %v2764
        %v2793 = vunpack.c.l.b16 %v2765
        %v2794 = vunpack.c.l.b16 %v2766
        %v2795 = vunpack.c.l.b16 %v2767
        %v2796 = vunpack.c.l.b16 %v2768
        %v2797 = vunpack.c.l.b16 %v2769
        %v2798 = vunpack.c.l.b16 %v2770
        %v2799 = vunpack.c.l.b16 %v2771
        %v2800 = vpack.c.b16 %v2793, %v2792
        %v2801 = vpack.c.b16 %v2795, %v2794
        %v2802 = vpack.c.b16 %v2797, %v2796
        %v2803 = vpack.c.b16 %v2799, %v2798
        %vm2808 = vcmask 523264
        %v2810 = vsel %vm2808, %v2780, 0
        %v2813 = vsel %vm2808, %v2781, 0
        %v2816 = vsel %vm2808, %v2782, 0
        %v2819 = vsel %vm2808, %v2783, 0
        %2821 = vmatprep.subr.bf16.mxu0 0
        %2822 = vmatpush1.bf16.msra.mxu0 0
        %2823 = vmatprep.subr.bf16.mxu0 0
        %2824 = vmatpush1.bf16.msra.mxu0 0
        %2825 = vmatprep.subr.bf16.mxu0 0
        %2826 = vmatpush1.bf16.msra.mxu0 0
        %2827 = vmatprep.subr.bf16.mxu0 0
        %2828 = vmatpush1.bf16.msra.mxu0 0
        %2829 = vmatprep.subr.bf16.mxu0 0
        %2830 = vmatpush1.bf16.msra.mxu0 %v2803
        %2831 = vmatprep.subr.bf16.mxu0 0
        %2832 = vmatpush1.bf16.msra.mxu0 %v2802
        %2833 = vmatprep.subr.bf16.mxu0 0
        %2834 = vmatpush1.bf16.msra.mxu0 %v2801
        %2835 = vmatprep.subr.bf16.mxu0 0
        %2836 = vmatpush1.bf16.msra.mxu0 %v2800
        %2837 = vmatprep.subr.bf16.mxu0 0
        %2838 = vmatpush2.bf16.msra.mxu0 0
        %2839 = vmatprep.subr.bf16.mxu0 0
        %2840 = vmatpush2.bf16.msra.mxu0 0
        %2841 = vmatprep.subr.bf16.mxu0 0
        %2842 = vmatpush2.bf16.msra.mxu0 0
        %2843 = vmatprep.subr.bf16.mxu0 0
        %2844 = vmatpush2.bf16.msra.mxu0 0
        %2845 = vmatprep.subr.bf16.mxu0 0
        %2846 = vmatpush2.bf16.msra.mxu0 0
        %2847 = vmatprep.subr.bf16.mxu0 0
        %2848 = vmatpush2.bf16.msra.mxu0 0
        %2849 = vmatprep.subr.bf16.mxu0 0
        %2850 = vmatpush2.bf16.msra.mxu0 0
        %2851 = vmatprep.subr.bf16.mxu0 0
        %2852 = vmatpush2.bf16.msra.mxu0 0
        %2853 = vmatprep.mubr.bf16.mxu0 0
        %2854 = vmatmul.mubr.bf16.gmra.mxu0 %v2810
        %v2855 = vpop.f32.mrf.mxu0
        %v2856 = vadd.f32 0.0, %v2855
        %v2857 = vpop.f32.mrf.mxu0
        %v2858 = vpop.f32.mrf.mxu0
        %v2859 = vadd.f32 0.0, %v2858
        %v2860 = vpop.f32.mrf.mxu0
        %2861 = vmatprep.mubr.bf16.mxu0 0
        %2862 = vmatmul.mubr.bf16.gmra.mxu0 %v2813
        %v2863 = vpop.f32.mrf.mxu0
        %v2864 = vadd.f32 0.0, %v2863
        %v2865 = vpop.f32.mrf.mxu0
        %v2866 = vpop.f32.mrf.mxu0
        %v2867 = vadd.f32 0.0, %v2866
        %v2868 = vpop.f32.mrf.mxu0
        %2869 = vmatprep.mubr.bf16.mxu0 0
        %2870 = vmatmul.mubr.bf16.gmra.mxu0 %v2816
        %v2871 = vpop.f32.mrf.mxu0
        %v2872 = vadd.f32 0.0, %v2871
        %v2873 = vpop.f32.mrf.mxu0
        %v2874 = vpop.f32.mrf.mxu0
        %v2875 = vadd.f32 0.0, %v2874
        %v2876 = vpop.f32.mrf.mxu0
        %2877 = vmatprep.mubr.bf16.mxu0 0
        %2878 = vmatmul.mubr.bf16.gmra.mxu0 %v2819
        %v2879 = vpop.f32.mrf.mxu0
        %v2880 = vadd.f32 0.0, %v2879
        %v2881 = vpop.f32.mrf.mxu0
        %v2882 = vpop.f32.mrf.mxu0
        %v2883 = vadd.f32 0.0, %v2882
        %v2884 = vpop.f32.mrf.mxu0
        %2885 = vdwg.mxu0
        %v2894 = vunpack.c.l.b16 %v2624
        %v2895 = vunpack.c.l.b16 %v2625
        %v2896 = vunpack.c.l.b16 %v2626
        %v2897 = vunpack.c.l.b16 %v2627
        %v2898 = vunpack.c.l.b16 %v2628
        %v2899 = vunpack.c.l.b16 %v2629
        %v2900 = vunpack.c.l.b16 %v2630
        %v2901 = vunpack.c.l.b16 %v2631
        %v2902 = vpack.c.b16 %v2895, %v2894
        %v2903 = vpack.c.b16 %v2897, %v2896
        %v2904 = vpack.c.b16 %v2899, %v2898
        %v2905 = vpack.c.b16 %v2901, %v2900
        %v2914 = vunpack.c.l.b16 %v2632
        %v2915 = vunpack.c.l.b16 %v2633
        %v2916 = vunpack.c.l.b16 %v2634
        %v2917 = vunpack.c.l.b16 %v2635
        %v2918 = vunpack.c.l.b16 %v2636
        %v2919 = vunpack.c.l.b16 %v2637
        %v2920 = vunpack.c.l.b16 %v2638
        %v2921 = vunpack.c.l.b16 %v2639
        %v2922 = vpack.c.b16 %v2915, %v2914
        %v2923 = vpack.c.b16 %v2917, %v2916
        %v2924 = vpack.c.b16 %v2919, %v2918
        %v2925 = vpack.c.b16 %v2921, %v2920
        %v2931 = vsel %vm2808, %v2902, 0
        %v2934 = vsel %vm2808, %v2903, 0
        %v2937 = vsel %vm2808, %v2904, 0
        %v2940 = vsel %vm2808, %v2905, 0
        %2942 = vmatprep.subr.bf16.mxu0 0
        %2943 = vmatpush1.bf16.msra.mxu0 0
        %2944 = vmatprep.subr.bf16.mxu0 0
        %2945 = vmatpush1.bf16.msra.mxu0 0
        %2946 = vmatprep.subr.bf16.mxu0 0
        %2947 = vmatpush1.bf16.msra.mxu0 0
        %2948 = vmatprep.subr.bf16.mxu0 0
        %2949 = vmatpush1.bf16.msra.mxu0 0
        %2950 = vmatprep.subr.bf16.mxu0 0
        %2951 = vmatpush1.bf16.msra.mxu0 %v2925
        %2952 = vmatprep.subr.bf16.mxu0 0
        %2953 = vmatpush1.bf16.msra.mxu0 %v2924
        %2954 = vmatprep.subr.bf16.mxu0 0
        %2955 = vmatpush1.bf16.msra.mxu0 %v2923
        %2956 = vmatprep.subr.bf16.mxu0 0
        %2957 = vmatpush1.bf16.msra.mxu0 %v2922
        %2958 = vmatprep.subr.bf16.mxu0 0
        %2959 = vmatpush2.bf16.msra.mxu0 0
        %2960 = vmatprep.subr.bf16.mxu0 0
        %2961 = vmatpush2.bf16.msra.mxu0 0
        %2962 = vmatprep.subr.bf16.mxu0 0
        %2963 = vmatpush2.bf16.msra.mxu0 0
        %2964 = vmatprep.subr.bf16.mxu0 0
        %2965 = vmatpush2.bf16.msra.mxu0 0
        %2966 = vmatprep.subr.bf16.mxu0 0
        %2967 = vmatpush2.bf16.msra.mxu0 0
        %2968 = vmatprep.subr.bf16.mxu0 0
        %2969 = vmatpush2.bf16.msra.mxu0 0
        %2970 = vmatprep.subr.bf16.mxu0 0
        %2971 = vmatpush2.bf16.msra.mxu0 0
        %2972 = vmatprep.subr.bf16.mxu0 0
        %2973 = vmatpush2.bf16.msra.mxu0 0
        %2974 = vmatprep.mubr.bf16.mxu0 0
        %2975 = vmatmul.mubr.bf16.gmra.mxu0 %v2931
        %v2976 = vpop.f32.mrf.mxu0
        %v2977 = vadd.f32 %v2856, %v2976
        %v2978 = vpop.f32.mrf.mxu0
        %v2979 = vpop.f32.mrf.mxu0
        %v2980 = vadd.f32 %v2859, %v2979
        %v2981 = vpop.f32.mrf.mxu0
        %2982 = vmatprep.mubr.bf16.mxu0 0
        %2983 = vmatmul.mubr.bf16.gmra.mxu0 %v2934
        %v2984 = vpop.f32.mrf.mxu0
        %v2985 = vadd.f32 %v2864, %v2984
        %v2986 = vpop.f32.mrf.mxu0
        %v2987 = vpop.f32.mrf.mxu0
        %v2988 = vadd.f32 %v2867, %v2987
        %v2989 = vpop.f32.mrf.mxu0
        %2990 = vmatprep.mubr.bf16.mxu0 0
        %2991 = vmatmul.mubr.bf16.gmra.mxu0 %v2937
        %v2992 = vpop.f32.mrf.mxu0
        %v2993 = vadd.f32 %v2872, %v2992
        %v2994 = vpop.f32.mrf.mxu0
        %v2995 = vpop.f32.mrf.mxu0
        %v2996 = vadd.f32 %v2875, %v2995
        %v2997 = vpop.f32.mrf.mxu0
        %2998 = vmatprep.mubr.bf16.mxu0 0
        %2999 = vmatmul.mubr.bf16.gmra.mxu0 %v2940
        %v3000 = vpop.f32.mrf.mxu0
        %v3001 = vadd.f32 %v2880, %v3000
        %v3002 = vpop.f32.mrf.mxu0
        %v3003 = vpop.f32.mrf.mxu0
        %v3004 = vadd.f32 %v2883, %v3003
        %v3005 = vpop.f32.mrf.mxu0
        %3006 = vdwg.mxu0
        %v3007 = vld [vmem:[#allocation2] sm:$0xe]
        %v3008 = vld [vmem:[#allocation2 + $0x8] sm:$0xe]
        %v3009 = vld [vmem:[#allocation2 + $0x10] sm:$0xe]
        %v3010 = vld [vmem:[#allocation2 + $0x18] sm:$0xe]
        %v3011 = vld [vmem:[#allocation2 + $0x20] sm:$0xe]
        %v3012 = vld [vmem:[#allocation2 + $0x28] sm:$0xe]
        %v3013 = vld [vmem:[#allocation2 + $0x30] sm:$0xe]
        %v3014 = vld [vmem:[#allocation2 + $0x38] sm:$0xe]
        %vm3031 = vcmask 1042432
        %vm3032 = vcmask 1046532
        %vm3033 = vmor %vm3031, %vm3032
        %v3034 = vrot.slane %v3007, 5
        %v3035 = vrot.slane %v3034, 4
        %v3036 = vrot.slane %v2640, 5
        %v3037 = vsel %vm3033, %v3035, %v3036
        %v3038 = vrot.slane %v3008, 5
        %v3039 = vrot.slane %v3038, 4
        %v3040 = vrot.slane %v2641, 5
        %v3041 = vsel %vm3033, %v3039, %v3040
        %v3042 = vrot.slane %v3009, 5
        %v3043 = vrot.slane %v3042, 4
        %v3044 = vrot.slane %v2642, 5
        %v3045 = vsel %vm3033, %v3043, %v3044
        %v3046 = vrot.slane %v3010, 5
        %v3047 = vrot.slane %v3046, 4
        %v3048 = vrot.slane %v2643, 5
        %v3049 = vsel %vm3033, %v3047, %v3048
        %v3050 = vrot.slane %v3011, 5
        %v3051 = vrot.slane %v3050, 4
        %v3052 = vrot.slane %v2644, 5
        %v3053 = vsel %vm3033, %v3051, %v3052
        %v3054 = vrot.slane %v3012, 5
        %v3055 = vrot.slane %v3054, 4
        %v3056 = vrot.slane %v2645, 5
        %v3057 = vsel %vm3033, %v3055, %v3056
        %v3058 = vrot.slane %v3013, 5
        %v3059 = vrot.slane %v3058, 4
        %v3060 = vrot.slane %v2646, 5
        %v3061 = vsel %vm3033, %v3059, %v3060
        %v3062 = vrot.slane %v3014, 5
        %v3063 = vrot.slane %v3062, 4
        %v3064 = vrot.slane %v2647, 5
        %v3065 = vsel %vm3033, %v3063, %v3064
        %s3066 = scalar_lea.vmem [#allocation8], 64
        %v3067 = vld [vmem:[%s3066] sm:$0xf]
        %v3068 = vld [vmem:[%s3066 + $0x4] sm:$0xf]
        %v3069 = vld [vmem:[%s3066 + $0x8] sm:$0xf]
        %v3070 = vld [vmem:[%s3066 + $0xc] sm:$0xf]
        %v3071 = vld [vmem:[%s3066 + $0x10] sm:$0xf]
        %v3072 = vld [vmem:[%s3066 + $0x14] sm:$0xf]
        %v3073 = vld [vmem:[%s3066 + $0x18] sm:$0xf]
        %v3074 = vld [vmem:[%s3066 + $0x1c] sm:$0xf]
        %v3075 = vunpack.c.l.b16 %v3037
        %v3076 = vunpack.c.l.b16 %v3041
        %v3077 = vunpack.c.l.b16 %v3045
        %v3078 = vunpack.c.l.b16 %v3049
        %v3079 = vunpack.c.l.b16 %v3053
        %v3080 = vunpack.c.l.b16 %v3057
        %v3081 = vunpack.c.l.b16 %v3061
        %v3082 = vunpack.c.l.b16 %v3065
        %v3083 = vpack.c.b16 %v3076, %v3075
        %v3084 = vpack.c.b16 %v3078, %v3077
        %v3085 = vpack.c.b16 %v3080, %v3079
        %v3086 = vpack.c.b16 %v3082, %v3081
        %v3095 = vunpack.c.l.b16 %v3067
        %v3096 = vunpack.c.l.b16 %v3068
        %v3097 = vunpack.c.l.b16 %v3069
        %v3098 = vunpack.c.l.b16 %v3070
        %v3099 = vunpack.c.l.b16 %v3071
        %v3100 = vunpack.c.l.b16 %v3072
        %v3101 = vunpack.c.l.b16 %v3073
        %v3102 = vunpack.c.l.b16 %v3074
        %v3103 = vpack.c.b16 %v3096, %v3095
        %v3104 = vpack.c.b16 %v3098, %v3097
        %v3105 = vpack.c.b16 %v3100, %v3099
        %v3106 = vpack.c.b16 %v3102, %v3101
        %v3112 = vsel %vm2808, %v3083, 0
        %v3115 = vsel %vm2808, %v3084, 0
        %v3118 = vsel %vm2808, %v3085, 0
        %v3121 = vsel %vm2808, %v3086, 0
        %3123 = vmatprep.subr.bf16.mxu0 0
        %3124 = vmatpush1.bf16.msra.mxu0 0
        %3125 = vmatprep.subr.bf16.mxu0 0
        %3126 = vmatpush1.bf16.msra.mxu0 0
        %3127 = vmatprep.subr.bf16.mxu0 0
        %3128 = vmatpush1.bf16.msra.mxu0 0
        %3129 = vmatprep.subr.bf16.mxu0 0
        %3130 = vmatpush1.bf16.msra.mxu0 0
        %3131 = vmatprep.subr.bf16.mxu0 0
        %3132 = vmatpush1.bf16.msra.mxu0 %v3106
        %3133 = vmatprep.subr.bf16.mxu0 0
        %3134 = vmatpush1.bf16.msra.mxu0 %v3105
        %3135 = vmatprep.subr.bf16.mxu0 0
        %3136 = vmatpush1.bf16.msra.mxu0 %v3104
        %3137 = vmatprep.subr.bf16.mxu0 0
        %3138 = vmatpush1.bf16.msra.mxu0 %v3103
        %3139 = vmatprep.subr.bf16.mxu0 0
        %3140 = vmatpush2.bf16.msra.mxu0 0
        %3141 = vmatprep.subr.bf16.mxu0 0
        %3142 = vmatpush2.bf16.msra.mxu0 0
        %3143 = vmatprep.subr.bf16.mxu0 0
        %3144 = vmatpush2.bf16.msra.mxu0 0
        %3145 = vmatprep.subr.bf16.mxu0 0
        %3146 = vmatpush2.bf16.msra.mxu0 0
        %3147 = vmatprep.subr.bf16.mxu0 0
        %3148 = vmatpush2.bf16.msra.mxu0 0
        %3149 = vmatprep.subr.bf16.mxu0 0
        %3150 = vmatpush2.bf16.msra.mxu0 0
        %3151 = vmatprep.subr.bf16.mxu0 0
        %3152 = vmatpush2.bf16.msra.mxu0 0
        %3153 = vmatprep.subr.bf16.mxu0 0
        %3154 = vmatpush2.bf16.msra.mxu0 0
        %3155 = vmatprep.mubr.bf16.mxu0 0
        %3156 = vmatmul.mubr.bf16.gmra.mxu0 %v3112
        %v3157 = vpop.f32.mrf.mxu0
        %v3158 = vadd.f32 0.0, %v3157
        %v3159 = vpop.f32.mrf.mxu0
        %v3160 = vpop.f32.mrf.mxu0
        %v3161 = vadd.f32 0.0, %v3160
        %v3162 = vpop.f32.mrf.mxu0
        %3163 = vmatprep.mubr.bf16.mxu0 0
        %3164 = vmatmul.mubr.bf16.gmra.mxu0 %v3115
        %v3165 = vpop.f32.mrf.mxu0
        %v3166 = vadd.f32 0.0, %v3165
        %v3167 = vpop.f32.mrf.mxu0
        %v3168 = vpop.f32.mrf.mxu0
        %v3169 = vadd.f32 0.0, %v3168
        %v3170 = vpop.f32.mrf.mxu0
        %3171 = vmatprep.mubr.bf16.mxu0 0
        %3172 = vmatmul.mubr.bf16.gmra.mxu0 %v3118
        %v3173 = vpop.f32.mrf.mxu0
        %v3174 = vadd.f32 0.0, %v3173
        %v3175 = vpop.f32.mrf.mxu0
        %v3176 = vpop.f32.mrf.mxu0
        %v3177 = vadd.f32 0.0, %v3176
        %v3178 = vpop.f32.mrf.mxu0
        %3179 = vmatprep.mubr.bf16.mxu0 0
        %3180 = vmatmul.mubr.bf16.gmra.mxu0 %v3121
        %v3181 = vpop.f32.mrf.mxu0
        %v3182 = vadd.f32 0.0, %v3181
        %v3183 = vpop.f32.mrf.mxu0
        %v3184 = vpop.f32.mrf.mxu0
        %v3185 = vadd.f32 0.0, %v3184
        %v3186 = vpop.f32.mrf.mxu0
        %3187 = vdwg.mxu0
        %v3188 = vadd.f32 %v2977, %v3158
        %v3189 = vadd.f32 %v2980, %v3161
        %v3190 = vadd.f32 %v2985, %v3166
        %v3191 = vadd.f32 %v2988, %v3169
        %v3192 = vadd.f32 %v2993, %v3174
        %v3193 = vadd.f32 %v2996, %v3177
        %v3194 = vadd.f32 %v3001, %v3182
        %v3195 = vadd.f32 %v3004, %v3185
        %v3196 = vld [vmem:[%s2573] sm:$0xf]
        %v3197 = vld [vmem:[%s2573 + $0x8] sm:$0xf]
        %v3198 = vld [vmem:[%s2573 + $0x10] sm:$0xf]
        %v3199 = vld [vmem:[%s2573 + $0x18] sm:$0xf]
        %v3200 = vld [vmem:[%s2573 + $0x20] sm:$0xf]
        %v3201 = vld [vmem:[%s2573 + $0x28] sm:$0xf]
        %v3202 = vld [vmem:[%s2573 + $0x30] sm:$0xf]
        %v3203 = vld [vmem:[%s2573 + $0x38] sm:$0xf]
        %s3204 = scalar_lea.vmem [#allocation8], 96
        %v3205 = vld [vmem:[%s3204] sm:$0xf]
        %v3206 = vld [vmem:[%s3204 + $0x4] sm:$0xf]
        %v3207 = vld [vmem:[%s3204 + $0x8] sm:$0xf]
        %v3208 = vld [vmem:[%s3204 + $0xc] sm:$0xf]
        %v3209 = vld [vmem:[%s3204 + $0x10] sm:$0xf]
        %v3210 = vld [vmem:[%s3204 + $0x14] sm:$0xf]
        %v3211 = vld [vmem:[%s3204 + $0x18] sm:$0xf]
        %v3212 = vld [vmem:[%s3204 + $0x1c] sm:$0xf]
        %v3221 = vunpack.c.l.b16 %v3196
        %v3222 = vunpack.c.l.b16 %v3197
        %v3223 = vunpack.c.l.b16 %v3198
        %v3224 = vunpack.c.l.b16 %v3199
        %v3225 = vunpack.c.l.b16 %v3200
        %v3226 = vunpack.c.l.b16 %v3201
        %v3227 = vunpack.c.l.b16 %v3202
        %v3228 = vunpack.c.l.b16 %v3203
        %v3229 = vpack.c.b16 %v3222, %v3221
        %v3230 = vpack.c.b16 %v3224, %v3223
        %v3231 = vpack.c.b16 %v3226, %v3225
        %v3232 = vpack.c.b16 %v3228, %v3227
        %v3241 = vunpack.c.l.b16 %v3205
        %v3242 = vunpack.c.l.b16 %v3206
        %v3243 = vunpack.c.l.b16 %v3207
        %v3244 = vunpack.c.l.b16 %v3208
        %v3245 = vunpack.c.l.b16 %v3209
        %v3246 = vunpack.c.l.b16 %v3210
        %v3247 = vunpack.c.l.b16 %v3211
        %v3248 = vunpack.c.l.b16 %v3212
        %v3249 = vpack.c.b16 %v3242, %v3241
        %v3250 = vpack.c.b16 %v3244, %v3243
        %v3251 = vpack.c.b16 %v3246, %v3245
        %v3252 = vpack.c.b16 %v3248, %v3247
        %v3258 = vsel %vm2808, %v3229, 0
        %v3261 = vsel %vm2808, %v3230, 0
        %v3264 = vsel %vm2808, %v3231, 0
        %v3267 = vsel %vm2808, %v3232, 0
        %3269 = vmatprep.subr.bf16.mxu0 0
        %3270 = vmatpush1.bf16.msra.mxu0 0
        %3271 = vmatprep.subr.bf16.mxu0 0
        %3272 = vmatpush1.bf16.msra.mxu0 0
        %3273 = vmatprep.subr.bf16.mxu0 0
        %3274 = vmatpush1.bf16.msra.mxu0 0
        %3275 = vmatprep.subr.bf16.mxu0 0
        %3276 = vmatpush1.bf16.msra.mxu0 0
        %3277 = vmatprep.subr.bf16.mxu0 0
        %3278 = vmatpush1.bf16.msra.mxu0 %v3252
        %3279 = vmatprep.subr.bf16.mxu0 0
        %3280 = vmatpush1.bf16.msra.mxu0 %v3251
        %3281 = vmatprep.subr.bf16.mxu0 0
        %3282 = vmatpush1.bf16.msra.mxu0 %v3250
        %3283 = vmatprep.subr.bf16.mxu0 0
        %3284 = vmatpush1.bf16.msra.mxu0 %v3249
        %3285 = vmatprep.subr.bf16.mxu0 0
        %3286 = vmatpush2.bf16.msra.mxu0 0
        %3287 = vmatprep.subr.bf16.mxu0 0
        %3288 = vmatpush2.bf16.msra.mxu0 0
        %3289 = vmatprep.subr.bf16.mxu0 0
        %3290 = vmatpush2.bf16.msra.mxu0 0
        %3291 = vmatprep.subr.bf16.mxu0 0
        %3292 = vmatpush2.bf16.msra.mxu0 0
        %3293 = vmatprep.subr.bf16.mxu0 0
        %3294 = vmatpush2.bf16.msra.mxu0 0
        %3295 = vmatprep.subr.bf16.mxu0 0
        %3296 = vmatpush2.bf16.msra.mxu0 0
        %3297 = vmatprep.subr.bf16.mxu0 0
        %3298 = vmatpush2.bf16.msra.mxu0 0
        %3299 = vmatprep.subr.bf16.mxu0 0
        %3300 = vmatpush2.bf16.msra.mxu0 0
        %3301 = vmatprep.mubr.bf16.mxu0 0
        %3302 = vmatmul.mubr.bf16.gmra.mxu0 %v3258
        %v3303 = vpop.f32.mrf.mxu0
        %v3304 = vadd.f32 0.0, %v3303
        %v3305 = vpop.f32.mrf.mxu0
        %v3306 = vpop.f32.mrf.mxu0
        %v3307 = vadd.f32 0.0, %v3306
        %v3308 = vpop.f32.mrf.mxu0
        %3309 = vmatprep.mubr.bf16.mxu0 0
        %3310 = vmatmul.mubr.bf16.gmra.mxu0 %v3261
        %v3311 = vpop.f32.mrf.mxu0
        %v3312 = vadd.f32 0.0, %v3311
        %v3313 = vpop.f32.mrf.mxu0
        %v3314 = vpop.f32.mrf.mxu0
        %v3315 = vadd.f32 0.0, %v3314
        %v3316 = vpop.f32.mrf.mxu0
        %3317 = vmatprep.mubr.bf16.mxu0 0
        %3318 = vmatmul.mubr.bf16.gmra.mxu0 %v3264
        %v3319 = vpop.f32.mrf.mxu0
        %v3320 = vadd.f32 0.0, %v3319
        %v3321 = vpop.f32.mrf.mxu0
        %v3322 = vpop.f32.mrf.mxu0
        %v3323 = vadd.f32 0.0, %v3322
        %v3324 = vpop.f32.mrf.mxu0
        %3325 = vmatprep.mubr.bf16.mxu0 0
        %3326 = vmatmul.mubr.bf16.gmra.mxu0 %v3267
        %v3327 = vpop.f32.mrf.mxu0
        %v3328 = vadd.f32 0.0, %v3327
        %v3329 = vpop.f32.mrf.mxu0
        %v3330 = vpop.f32.mrf.mxu0
        %v3331 = vadd.f32 0.0, %v3330
        %v3332 = vpop.f32.mrf.mxu0
        %3333 = vdwg.mxu0
        %v3334 = vadd.f32 %v3188, %v3304
        %v3335 = vadd.f32 %v3189, %v3307
        %v3336 = vadd.f32 %v3190, %v3312
        %v3337 = vadd.f32 %v3191, %v3315
        %v3338 = vadd.f32 %v3192, %v3320
        %v3339 = vadd.f32 %v3193, %v3323
        %v3340 = vadd.f32 %v3194, %v3328
        %v3341 = vadd.f32 %v3195, %v3331
        %v3342 = vld [vmem:[%s2573] sm:$0xf]
        %v3343 = vld [vmem:[%s2573 + $0x4] sm:$0x1]
        %v3344 = vld [vmem:[%s2573 + $0x8] sm:$0xf]
        %v3345 = vld [vmem:[%s2573 + $0xc] sm:$0x1]
        %v3346 = vld [vmem:[%s2573 + $0x10] sm:$0xf]
        %v3347 = vld [vmem:[%s2573 + $0x14] sm:$0x1]
        %v3348 = vld [vmem:[%s2573 + $0x18] sm:$0xf]
        %v3349 = vld [vmem:[%s2573 + $0x1c] sm:$0x1]
        %v3350 = vld [vmem:[%s2573 + $0x20] sm:$0xf]
        %v3351 = vld [vmem:[%s2573 + $0x24] sm:$0x1]
        %v3352 = vld [vmem:[%s2573 + $0x28] sm:$0xf]
        %v3353 = vld [vmem:[%s2573 + $0x2c] sm:$0x1]
        %v3354 = vld [vmem:[%s2573 + $0x30] sm:$0xf]
        %v3355 = vld [vmem:[%s2573 + $0x34] sm:$0x1]
        %v3356 = vld [vmem:[%s2573 + $0x38] sm:$0xf]
        %v3357 = vld [vmem:[%s2573 + $0x3c] sm:$0x1]
        %v3359 = vshrl.u32 %v3342, 16
        %v3361 = vrot.slane %v3359, 4
        %v3362 = vshll.u32 %v3342, 16
        %v3364 = vrot.slane %v3362, 5
        %v3365 = vor.u32 %v3361, %v3364
        %v3366 = vrot.slane %v3365, 4
        %v3368 = vshll.u32 %v3343, 16
        %v3370 = vrot.slane %v3368, 5
        %v3371 = vsel %vm2650, %v3366, %v3370
        %v3373 = vshrl.u32 %v3344, 16
        %v3375 = vrot.slane %v3373, 4
        %v3376 = vshll.u32 %v3344, 16
        %v3378 = vrot.slane %v3376, 5
        %v3379 = vor.u32 %v3375, %v3378
        %v3380 = vrot.slane %v3379, 4
        %v3382 = vshll.u32 %v3345, 16
        %v3384 = vrot.slane %v3382, 5
        %v3385 = vsel %vm2650, %v3380, %v3384
        %v3387 = vshrl.u32 %v3346, 16
        %v3389 = vrot.slane %v3387, 4
        %v3390 = vshll.u32 %v3346, 16
        %v3392 = vrot.slane %v3390, 5
        %v3393 = vor.u32 %v3389, %v3392
        %v3394 = vrot.slane %v3393, 4
        %v3396 = vshll.u32 %v3347, 16
        %v3398 = vrot.slane %v3396, 5
        %v3399 = vsel %vm2650, %v3394, %v3398
        %v3401 = vshrl.u32 %v3348, 16
        %v3403 = vrot.slane %v3401, 4
        %v3404 = vshll.u32 %v3348, 16
        %v3406 = vrot.slane %v3404, 5
        %v3407 = vor.u32 %v3403, %v3406
        %v3408 = vrot.slane %v3407, 4
        %v3410 = vshll.u32 %v3349, 16
        %v3412 = vrot.slane %v3410, 5
        %v3413 = vsel %vm2650, %v3408, %v3412
        %v3415 = vshrl.u32 %v3350, 16
        %v3417 = vrot.slane %v3415, 4
        %v3418 = vshll.u32 %v3350, 16
        %v3420 = vrot.slane %v3418, 5
        %v3421 = vor.u32 %v3417, %v3420
        %v3422 = vrot.slane %v3421, 4
        %v3424 = vshll.u32 %v3351, 16
        %v3426 = vrot.slane %v3424, 5
        %v3427 = vsel %vm2650, %v3422, %v3426
        %v3429 = vshrl.u32 %v3352, 16
        %v3431 = vrot.slane %v3429, 4
        %v3432 = vshll.u32 %v3352, 16
        %v3434 = vrot.slane %v3432, 5
        %v3435 = vor.u32 %v3431, %v3434
        %v3436 = vrot.slane %v3435, 4
        %v3438 = vshll.u32 %v3353, 16
        %v3440 = vrot.slane %v3438, 5
        %v3441 = vsel %vm2650, %v3436, %v3440
        %v3443 = vshrl.u32 %v3354, 16
        %v3445 = vrot.slane %v3443, 4
        %v3446 = vshll.u32 %v3354, 16
        %v3448 = vrot.slane %v3446, 5
        %v3449 = vor.u32 %v3445, %v3448
        %v3450 = vrot.slane %v3449, 4
        %v3452 = vshll.u32 %v3355, 16
        %v3454 = vrot.slane %v3452, 5
        %v3455 = vsel %vm2650, %v3450, %v3454
        %v3457 = vshrl.u32 %v3356, 16
        %v3459 = vrot.slane %v3457, 4
        %v3460 = vshll.u32 %v3356, 16
        %v3462 = vrot.slane %v3460, 5
        %v3463 = vor.u32 %v3459, %v3462
        %v3464 = vrot.slane %v3463, 4
        %v3466 = vshll.u32 %v3357, 16
        %v3468 = vrot.slane %v3466, 5
        %v3469 = vsel %vm2650, %v3464, %v3468
        %s3470 = scalar_lea.vmem [#allocation8], 128
        %v3471 = vld [vmem:[%s3470] sm:$0xf]
        %v3472 = vld [vmem:[%s3470 + $0x4] sm:$0xf]
        %v3473 = vld [vmem:[%s3470 + $0x8] sm:$0xf]
        %v3474 = vld [vmem:[%s3470 + $0xc] sm:$0xf]
        %v3475 = vld [vmem:[%s3470 + $0x10] sm:$0xf]
        %v3476 = vld [vmem:[%s3470 + $0x14] sm:$0xf]
        %v3477 = vld [vmem:[%s3470 + $0x18] sm:$0xf]
        %v3478 = vld [vmem:[%s3470 + $0x1c] sm:$0xf]
        %v3479 = vunpack.c.l.b16 %v3371
        %v3480 = vunpack.c.l.b16 %v3385
        %v3481 = vunpack.c.l.b16 %v3399
        %v3482 = vunpack.c.l.b16 %v3413
        %v3483 = vunpack.c.l.b16 %v3427
        %v3484 = vunpack.c.l.b16 %v3441
        %v3485 = vunpack.c.l.b16 %v3455
        %v3486 = vunpack.c.l.b16 %v3469
        %v3487 = vpack.c.b16 %v3480, %v3479
        %v3488 = vpack.c.b16 %v3482, %v3481
        %v3489 = vpack.c.b16 %v3484, %v3483
        %v3490 = vpack.c.b16 %v3486, %v3485
        %v3499 = vunpack.c.l.b16 %v3471
        %v3500 = vunpack.c.l.b16 %v3472
        %v3501 = vunpack.c.l.b16 %v3473
        %v3502 = vunpack.c.l.b16 %v3474
        %v3503 = vunpack.c.l.b16 %v3475
        %v3504 = vunpack.c.l.b16 %v3476
        %v3505 = vunpack.c.l.b16 %v3477
        %v3506 = vunpack.c.l.b16 %v3478
        %v3507 = vpack.c.b16 %v3500, %v3499
        %v3508 = vpack.c.b16 %v3502, %v3501
        %v3509 = vpack.c.b16 %v3504, %v3503
        %v3510 = vpack.c.b16 %v3506, %v3505
        %v3516 = vsel %vm2808, %v3487, 0
        %v3519 = vsel %vm2808, %v3488, 0
        %v3522 = vsel %vm2808, %v3489, 0
        %v3525 = vsel %vm2808, %v3490, 0
        %3527 = vmatprep.subr.bf16.mxu0 0
        %3528 = vmatpush1.bf16.msra.mxu0 0
        %3529 = vmatprep.subr.bf16.mxu0 0
        %3530 = vmatpush1.bf16.msra.mxu0 0
        %3531 = vmatprep.subr.bf16.mxu0 0
        %3532 = vmatpush1.bf16.msra.mxu0 0
        %3533 = vmatprep.subr.bf16.mxu0 0
        %3534 = vmatpush1.bf16.msra.mxu0 0
        %3535 = vmatprep.subr.bf16.mxu0 0
        %3536 = vmatpush1.bf16.msra.mxu0 %v3510
        %3537 = vmatprep.subr.bf16.mxu0 0
        %3538 = vmatpush1.bf16.msra.mxu0 %v3509
        %3539 = vmatprep.subr.bf16.mxu0 0
        %3540 = vmatpush1.bf16.msra.mxu0 %v3508
        %3541 = vmatprep.subr.bf16.mxu0 0
        %3542 = vmatpush1.bf16.msra.mxu0 %v3507
        %3543 = vmatprep.subr.bf16.mxu0 0
        %3544 = vmatpush2.bf16.msra.mxu0 0
        %3545 = vmatprep.subr.bf16.mxu0 0
        %3546 = vmatpush2.bf16.msra.mxu0 0
        %3547 = vmatprep.subr.bf16.mxu0 0
        %3548 = vmatpush2.bf16.msra.mxu0 0
        %3549 = vmatprep.subr.bf16.mxu0 0
        %3550 = vmatpush2.bf16.msra.mxu0 0
        %3551 = vmatprep.subr.bf16.mxu0 0
        %3552 = vmatpush2.bf16.msra.mxu0 0
        %3553 = vmatprep.subr.bf16.mxu0 0
        %3554 = vmatpush2.bf16.msra.mxu0 0
        %3555 = vmatprep.subr.bf16.mxu0 0
        %3556 = vmatpush2.bf16.msra.mxu0 0
        %3557 = vmatprep.subr.bf16.mxu0 0
        %3558 = vmatpush2.bf16.msra.mxu0 0
        %3559 = vmatprep.mubr.bf16.mxu0 0
        %3560 = vmatmul.mubr.bf16.gmra.mxu0 %v3516
        %v3561 = vpop.f32.mrf.mxu0
        %v3562 = vadd.f32 0.0, %v3561
        %v3563 = vpop.f32.mrf.mxu0
        %v3564 = vpop.f32.mrf.mxu0
        %v3565 = vadd.f32 0.0, %v3564
        %v3566 = vpop.f32.mrf.mxu0
        %3567 = vmatprep.mubr.bf16.mxu0 0
        %3568 = vmatmul.mubr.bf16.gmra.mxu0 %v3519
        %v3569 = vpop.f32.mrf.mxu0
        %v3570 = vadd.f32 0.0, %v3569
        %v3571 = vpop.f32.mrf.mxu0
        %v3572 = vpop.f32.mrf.mxu0
        %v3573 = vadd.f32 0.0, %v3572
        %v3574 = vpop.f32.mrf.mxu0
        %3575 = vmatprep.mubr.bf16.mxu0 0
        %3576 = vmatmul.mubr.bf16.gmra.mxu0 %v3522
        %v3577 = vpop.f32.mrf.mxu0
        %v3578 = vadd.f32 0.0, %v3577
        %v3579 = vpop.f32.mrf.mxu0
        %v3580 = vpop.f32.mrf.mxu0
        %v3581 = vadd.f32 0.0, %v3580
        %v3582 = vpop.f32.mrf.mxu0
        %3583 = vmatprep.mubr.bf16.mxu0 0
        %3584 = vmatmul.mubr.bf16.gmra.mxu0 %v3525
        %v3585 = vpop.f32.mrf.mxu0
        %v3586 = vadd.f32 0.0, %v3585
        %v3587 = vpop.f32.mrf.mxu0
        %v3588 = vpop.f32.mrf.mxu0
        %v3589 = vadd.f32 0.0, %v3588
        %v3590 = vpop.f32.mrf.mxu0
        %3591 = vdwg.mxu0
        %v3592 = vadd.f32 %v3334, %v3562
        %v3593 = vadd.f32 %v3335, %v3565
        %v3594 = vadd.f32 %v3336, %v3570
        %v3595 = vadd.f32 %v3337, %v3573
        %v3596 = vadd.f32 %v3338, %v3578
        %v3597 = vadd.f32 %v3339, %v3581
        %v3598 = vadd.f32 %v3340, %v3586
        %v3599 = vadd.f32 %v3341, %v3589
        %v3600 = vld [vmem:[%s2573] sm:$0xe]
        %v3601 = vld [vmem:[%s2573 + $0x8] sm:$0xe]
        %v3602 = vld [vmem:[%s2573 + $0x10] sm:$0xe]
        %v3603 = vld [vmem:[%s2573 + $0x18] sm:$0xe]
        %v3604 = vld [vmem:[%s2573 + $0x20] sm:$0xe]
        %v3605 = vld [vmem:[%s2573 + $0x28] sm:$0xe]
        %v3606 = vld [vmem:[%s2573 + $0x30] sm:$0xe]
        %v3607 = vld [vmem:[%s2573 + $0x38] sm:$0xe]
        %v3624 = vrot.slane %v3600, 5
        %v3625 = vrot.slane %v3624, 4
        %v3626 = vrot.slane %v3343, 5
        %v3627 = vsel %vm3033, %v3625, %v3626
        %v3628 = vrot.slane %v3601, 5
        %v3629 = vrot.slane %v3628, 4
        %v3630 = vrot.slane %v3345, 5
        %v3631 = vsel %vm3033, %v3629, %v3630
        %v3632 = vrot.slane %v3602, 5
        %v3633 = vrot.slane %v3632, 4
        %v3634 = vrot.slane %v3347, 5
        %v3635 = vsel %vm3033, %v3633, %v3634
        %v3636 = vrot.slane %v3603, 5
        %v3637 = vrot.slane %v3636, 4
        %v3638 = vrot.slane %v3349, 5
        %v3639 = vsel %vm3033, %v3637, %v3638
        %v3640 = vrot.slane %v3604, 5
        %v3641 = vrot.slane %v3640, 4
        %v3642 = vrot.slane %v3351, 5
        %v3643 = vsel %vm3033, %v3641, %v3642
        %v3644 = vrot.slane %v3605, 5
        %v3645 = vrot.slane %v3644, 4
        %v3646 = vrot.slane %v3353, 5
        %v3647 = vsel %vm3033, %v3645, %v3646
        %v3648 = vrot.slane %v3606, 5
        %v3649 = vrot.slane %v3648, 4
        %v3650 = vrot.slane %v3355, 5
        %v3651 = vsel %vm3033, %v3649, %v3650
        %v3652 = vrot.slane %v3607, 5
        %v3653 = vrot.slane %v3652, 4
        %v3654 = vrot.slane %v3357, 5
        %v3655 = vsel %vm3033, %v3653, %v3654
        %s3656 = scalar_lea.vmem [#allocation8], 160
        %v3657 = vld [vmem:[%s3656] sm:$0xf]
        %v3658 = vld [vmem:[%s3656 + $0x4] sm:$0xf]
        %v3659 = vld [vmem:[%s3656 + $0x8] sm:$0xf]
        %v3660 = vld [vmem:[%s3656 + $0xc] sm:$0xf]
        %v3661 = vld [vmem:[%s3656 + $0x10] sm:$0xf]
        %v3662 = vld [vmem:[%s3656 + $0x14] sm:$0xf]
        %v3663 = vld [vmem:[%s3656 + $0x18] sm:$0xf]
        %v3664 = vld [vmem:[%s3656 + $0x1c] sm:$0xf]
        %v3665 = vunpack.c.l.b16 %v3627
        %v3666 = vunpack.c.l.b16 %v3631
        %v3667 = vunpack.c.l.b16 %v3635
        %v3668 = vunpack.c.l.b16 %v3639
        %v3669 = vunpack.c.l.b16 %v3643
        %v3670 = vunpack.c.l.b16 %v3647
        %v3671 = vunpack.c.l.b16 %v3651
        %v3672 = vunpack.c.l.b16 %v3655
        %v3673 = vpack.c.b16 %v3666, %v3665
        %v3674 = vpack.c.b16 %v3668, %v3667
        %v3675 = vpack.c.b16 %v3670, %v3669
        %v3676 = vpack.c.b16 %v3672, %v3671
        %v3685 = vunpack.c.l.b16 %v3657
        %v3686 = vunpack.c.l.b16 %v3658
        %v3687 = vunpack.c.l.b16 %v3659
        %v3688 = vunpack.c.l.b16 %v3660
        %v3689 = vunpack.c.l.b16 %v3661
        %v3690 = vunpack.c.l.b16 %v3662
        %v3691 = vunpack.c.l.b16 %v3663
        %v3692 = vunpack.c.l.b16 %v3664
        %v3693 = vpack.c.b16 %v3686, %v3685
        %v3694 = vpack.c.b16 %v3688, %v3687
        %v3695 = vpack.c.b16 %v3690, %v3689
        %v3696 = vpack.c.b16 %v3692, %v3691
        %v3702 = vsel %vm2808, %v3673, 0
        %v3705 = vsel %vm2808, %v3674, 0
        %v3708 = vsel %vm2808, %v3675, 0
        %v3711 = vsel %vm2808, %v3676, 0
        %3713 = vmatprep.subr.bf16.mxu0 0
        %3714 = vmatpush1.bf16.msra.mxu0 0
        %3715 = vmatprep.subr.bf16.mxu0 0
        %3716 = vmatpush1.bf16.msra.mxu0 0
        %3717 = vmatprep.subr.bf16.mxu0 0
        %3718 = vmatpush1.bf16.msra.mxu0 0
        %3719 = vmatprep.subr.bf16.mxu0 0
        %3720 = vmatpush1.bf16.msra.mxu0 0
        %3721 = vmatprep.subr.bf16.mxu0 0
        %3722 = vmatpush1.bf16.msra.mxu0 %v3696
        %3723 = vmatprep.subr.bf16.mxu0 0
        %3724 = vmatpush1.bf16.msra.mxu0 %v3695
        %3725 = vmatprep.subr.bf16.mxu0 0
        %3726 = vmatpush1.bf16.msra.mxu0 %v3694
        %3727 = vmatprep.subr.bf16.mxu0 0
        %3728 = vmatpush1.bf16.msra.mxu0 %v3693
        %3729 = vmatprep.subr.bf16.mxu0 0
        %3730 = vmatpush2.bf16.msra.mxu0 0
        %3731 = vmatprep.subr.bf16.mxu0 0
        %3732 = vmatpush2.bf16.msra.mxu0 0
        %3733 = vmatprep.subr.bf16.mxu0 0
        %3734 = vmatpush2.bf16.msra.mxu0 0
        %3735 = vmatprep.subr.bf16.mxu0 0
        %3736 = vmatpush2.bf16.msra.mxu0 0
        %3737 = vmatprep.subr.bf16.mxu0 0
        %3738 = vmatpush2.bf16.msra.mxu0 0
        %3739 = vmatprep.subr.bf16.mxu0 0
        %3740 = vmatpush2.bf16.msra.mxu0 0
        %3741 = vmatprep.subr.bf16.mxu0 0
        %3742 = vmatpush2.bf16.msra.mxu0 0
        %3743 = vmatprep.subr.bf16.mxu0 0
        %3744 = vmatpush2.bf16.msra.mxu0 0
        %3745 = vmatprep.mubr.bf16.mxu0 0
        %3746 = vmatmul.mubr.bf16.gmra.mxu0 %v3702
        %v3747 = vpop.f32.mrf.mxu0
        %v3748 = vadd.f32 0.0, %v3747
        %v3749 = vpop.f32.mrf.mxu0
        %v3750 = vpop.f32.mrf.mxu0
        %v3751 = vadd.f32 0.0, %v3750
        %v3752 = vpop.f32.mrf.mxu0
        %3753 = vmatprep.mubr.bf16.mxu0 0
        %3754 = vmatmul.mubr.bf16.gmra.mxu0 %v3705
        %v3755 = vpop.f32.mrf.mxu0
        %v3756 = vadd.f32 0.0, %v3755
        %v3757 = vpop.f32.mrf.mxu0
        %v3758 = vpop.f32.mrf.mxu0
        %v3759 = vadd.f32 0.0, %v3758
        %v3760 = vpop.f32.mrf.mxu0
        %3761 = vmatprep.mubr.bf16.mxu0 0
        %3762 = vmatmul.mubr.bf16.gmra.mxu0 %v3708
        %v3763 = vpop.f32.mrf.mxu0
        %v3764 = vadd.f32 0.0, %v3763
        %v3765 = vpop.f32.mrf.mxu0
        %v3766 = vpop.f32.mrf.mxu0
        %v3767 = vadd.f32 0.0, %v3766
        %v3768 = vpop.f32.mrf.mxu0
        %3769 = vmatprep.mubr.bf16.mxu0 0
        %3770 = vmatmul.mubr.bf16.gmra.mxu0 %v3711
        %v3771 = vpop.f32.mrf.mxu0
        %v3772 = vadd.f32 0.0, %v3771
        %v3773 = vpop.f32.mrf.mxu0
        %v3774 = vpop.f32.mrf.mxu0
        %v3775 = vadd.f32 0.0, %v3774
        %v3776 = vpop.f32.mrf.mxu0
        %3777 = vdwg.mxu0
        %v3778 = vadd.f32 %v3592, %v3748
        %v3779 = vadd.f32 %v3593, %v3751
        %v3780 = vadd.f32 %v3594, %v3756
        %v3781 = vadd.f32 %v3595, %v3759
        %v3782 = vadd.f32 %v3596, %v3764
        %v3783 = vadd.f32 %v3597, %v3767
        %v3784 = vadd.f32 %v3598, %v3772
        %v3785 = vadd.f32 %v3599, %v3775
        %s3786 = scalar_lea.vmem [#allocation2], 16
        %v3787 = vld [vmem:[%s3786] sm:$0xf]
        %v3788 = vld [vmem:[%s3786 + $0x8] sm:$0xf]
        %v3789 = vld [vmem:[%s3786 + $0x10] sm:$0xf]
        %v3790 = vld [vmem:[%s3786 + $0x18] sm:$0xf]
        %v3791 = vld [vmem:[%s3786 + $0x20] sm:$0xf]
        %v3792 = vld [vmem:[%s3786 + $0x28] sm:$0xf]
        %v3793 = vld [vmem:[%s3786 + $0x30] sm:$0xf]
        %v3794 = vld [vmem:[%s3786 + $0x38] sm:$0xf]
        %s3795 = scalar_lea.vmem [#allocation8], 192
        %v3796 = vld [vmem:[%s3795] sm:$0xf]
        %v3797 = vld [vmem:[%s3795 + $0x4] sm:$0xf]
        %v3798 = vld [vmem:[%s3795 + $0x8] sm:$0xf]
        %v3799 = vld [vmem:[%s3795 + $0xc] sm:$0xf]
        %v3800 = vld [vmem:[%s3795 + $0x10] sm:$0xf]
        %v3801 = vld [vmem:[%s3795 + $0x14] sm:$0xf]
        %v3802 = vld [vmem:[%s3795 + $0x18] sm:$0xf]
        %v3803 = vld [vmem:[%s3795 + $0x1c] sm:$0xf]
        %v3812 = vunpack.c.l.b16 %v3787
        %v3813 = vunpack.c.l.b16 %v3788
        %v3814 = vunpack.c.l.b16 %v3789
        %v3815 = vunpack.c.l.b16 %v3790
        %v3816 = vunpack.c.l.b16 %v3791
        %v3817 = vunpack.c.l.b16 %v3792
        %v3818 = vunpack.c.l.b16 %v3793
        %v3819 = vunpack.c.l.b16 %v3794
        %v3820 = vpack.c.b16 %v3813, %v3812
        %v3821 = vpack.c.b16 %v3815, %v3814
        %v3822 = vpack.c.b16 %v3817, %v3816
        %v3823 = vpack.c.b16 %v3819, %v3818
        %v3832 = vunpack.c.l.b16 %v3796
        %v3833 = vunpack.c.l.b16 %v3797
        %v3834 = vunpack.c.l.b16 %v3798
        %v3835 = vunpack.c.l.b16 %v3799
        %v3836 = vunpack.c.l.b16 %v3800
        %v3837 = vunpack.c.l.b16 %v3801
        %v3838 = vunpack.c.l.b16 %v3802
        %v3839 = vunpack.c.l.b16 %v3803
        %v3840 = vpack.c.b16 %v3833, %v3832
        %v3841 = vpack.c.b16 %v3835, %v3834
        %v3842 = vpack.c.b16 %v3837, %v3836
        %v3843 = vpack.c.b16 %v3839, %v3838
        %v3849 = vsel %vm2808, %v3820, 0
        %v3852 = vsel %vm2808, %v3821, 0
        %v3855 = vsel %vm2808, %v3822, 0
        %v3858 = vsel %vm2808, %v3823, 0
        %3860 = vmatprep.subr.bf16.mxu0 0
        %3861 = vmatpush1.bf16.msra.mxu0 0
        %3862 = vmatprep.subr.bf16.mxu0 0
        %3863 = vmatpush1.bf16.msra.mxu0 0
        %3864 = vmatprep.subr.bf16.mxu0 0
        %3865 = vmatpush1.bf16.msra.mxu0 0
        %3866 = vmatprep.subr.bf16.mxu0 0
        %3867 = vmatpush1.bf16.msra.mxu0 0
        %3868 = vmatprep.subr.bf16.mxu0 0
        %3869 = vmatpush1.bf16.msra.mxu0 %v3843
        %3870 = vmatprep.subr.bf16.mxu0 0
        %3871 = vmatpush1.bf16.msra.mxu0 %v3842
        %3872 = vmatprep.subr.bf16.mxu0 0
        %3873 = vmatpush1.bf16.msra.mxu0 %v3841
        %3874 = vmatprep.subr.bf16.mxu0 0
        %3875 = vmatpush1.bf16.msra.mxu0 %v3840
        %3876 = vmatprep.subr.bf16.mxu0 0
        %3877 = vmatpush2.bf16.msra.mxu0 0
        %3878 = vmatprep.subr.bf16.mxu0 0
        %3879 = vmatpush2.bf16.msra.mxu0 0
        %3880 = vmatprep.subr.bf16.mxu0 0
        %3881 = vmatpush2.bf16.msra.mxu0 0
        %3882 = vmatprep.subr.bf16.mxu0 0
        %3883 = vmatpush2.bf16.msra.mxu0 0
        %3884 = vmatprep.subr.bf16.mxu0 0
        %3885 = vmatpush2.bf16.msra.mxu0 0
        %3886 = vmatprep.subr.bf16.mxu0 0
        %3887 = vmatpush2.bf16.msra.mxu0 0
        %3888 = vmatprep.subr.bf16.mxu0 0
        %3889 = vmatpush2.bf16.msra.mxu0 0
        %3890 = vmatprep.subr.bf16.mxu0 0
        %3891 = vmatpush2.bf16.msra.mxu0 0
        %3892 = vmatprep.mubr.bf16.mxu0 0
        %3893 = vmatmul.mubr.bf16.gmra.mxu0 %v3849
        %v3894 = vpop.f32.mrf.mxu0
        %v3895 = vadd.f32 0.0, %v3894
        %v3896 = vpop.f32.mrf.mxu0
        %v3897 = vpop.f32.mrf.mxu0
        %v3898 = vadd.f32 0.0, %v3897
        %v3899 = vpop.f32.mrf.mxu0
        %3900 = vmatprep.mubr.bf16.mxu0 0
        %3901 = vmatmul.mubr.bf16.gmra.mxu0 %v3852
        %v3902 = vpop.f32.mrf.mxu0
        %v3903 = vadd.f32 0.0, %v3902
        %v3904 = vpop.f32.mrf.mxu0
        %v3905 = vpop.f32.mrf.mxu0
        %v3906 = vadd.f32 0.0, %v3905
        %v3907 = vpop.f32.mrf.mxu0
        %3908 = vmatprep.mubr.bf16.mxu0 0
        %3909 = vmatmul.mubr.bf16.gmra.mxu0 %v3855
        %v3910 = vpop.f32.mrf.mxu0
        %v3911 = vadd.f32 0.0, %v3910
        %v3912 = vpop.f32.mrf.mxu0
        %v3913 = vpop.f32.mrf.mxu0
        %v3914 = vadd.f32 0.0, %v3913
        %v3915 = vpop.f32.mrf.mxu0
        %3916 = vmatprep.mubr.bf16.mxu0 0
        %3917 = vmatmul.mubr.bf16.gmra.mxu0 %v3858
        %v3918 = vpop.f32.mrf.mxu0
        %v3919 = vadd.f32 0.0, %v3918
        %v3920 = vpop.f32.mrf.mxu0
        %v3921 = vpop.f32.mrf.mxu0
        %v3922 = vadd.f32 0.0, %v3921
        %v3923 = vpop.f32.mrf.mxu0
        %3924 = vdwg.mxu0
        %v3925 = vadd.f32 %v3778, %v3895
        %v3926 = vadd.f32 %v3779, %v3898
        %v3927 = vadd.f32 %v3780, %v3903
        %v3928 = vadd.f32 %v3781, %v3906
        %v3929 = vadd.f32 %v3782, %v3911
        %v3930 = vadd.f32 %v3783, %v3914
        %v3931 = vadd.f32 %v3784, %v3919
        %v3932 = vadd.f32 %v3785, %v3922
        %v3933 = vld [vmem:[%s3786] sm:$0xf]
        %v3934 = vld [vmem:[%s3786 + $0x4] sm:$0x1]
        %v3935 = vld [vmem:[%s3786 + $0x8] sm:$0xf]
        %v3936 = vld [vmem:[%s3786 + $0xc] sm:$0x1]
        %v3937 = vld [vmem:[%s3786 + $0x10] sm:$0xf]
        %v3938 = vld [vmem:[%s3786 + $0x14] sm:$0x1]
        %v3939 = vld [vmem:[%s3786 + $0x18] sm:$0xf]
        %v3940 = vld [vmem:[%s3786 + $0x1c] sm:$0x1]
        %v3941 = vld [vmem:[%s3786 + $0x20] sm:$0xf]
        %v3942 = vld [vmem:[%s3786 + $0x24] sm:$0x1]
        %v3943 = vld [vmem:[%s3786 + $0x28] sm:$0xf]
        %v3944 = vld [vmem:[%s3786 + $0x2c] sm:$0x1]
        %v3945 = vld [vmem:[%s3786 + $0x30] sm:$0xf]
        %v3946 = vld [vmem:[%s3786 + $0x34] sm:$0x1]
        %v3947 = vld [vmem:[%s3786 + $0x38] sm:$0xf]
        %v3948 = vld [vmem:[%s3786 + $0x3c] sm:$0x1]
        %v3950 = vshrl.u32 %v3933, 16
        %v3952 = vrot.slane %v3950, 4
        %v3953 = vshll.u32 %v3933, 16
        %v3955 = vrot.slane %v3953, 5
        %v3956 = vor.u32 %v3952, %v3955
        %v3957 = vrot.slane %v3956, 4
        %v3959 = vshll.u32 %v3934, 16
        %v3961 = vrot.slane %v3959, 5
        %v3962 = vsel %vm2650, %v3957, %v3961
        %v3964 = vshrl.u32 %v3935, 16
        %v3966 = vrot.slane %v3964, 4
        %v3967 = vshll.u32 %v3935, 16
        %v3969 = vrot.slane %v3967, 5
        %v3970 = vor.u32 %v3966, %v3969
        %v3971 = vrot.slane %v3970, 4
        %v3973 = vshll.u32 %v3936, 16
        %v3975 = vrot.slane %v3973, 5
        %v3976 = vsel %vm2650, %v3971, %v3975
        %v3978 = vshrl.u32 %v3937, 16
        %v3980 = vrot.slane %v3978, 4
        %v3981 = vshll.u32 %v3937, 16
        %v3983 = vrot.slane %v3981, 5
        %v3984 = vor.u32 %v3980, %v3983
        %v3985 = vrot.slane %v3984, 4
        %v3987 = vshll.u32 %v3938, 16
        %v3989 = vrot.slane %v3987, 5
        %v3990 = vsel %vm2650, %v3985, %v3989
        %v3992 = vshrl.u32 %v3939, 16
        %v3994 = vrot.slane %v3992, 4
        %v3995 = vshll.u32 %v3939, 16
        %v3997 = vrot.slane %v3995, 5
        %v3998 = vor.u32 %v3994, %v3997
        %v3999 = vrot.slane %v3998, 4
        %v4001 = vshll.u32 %v3940, 16
        %v4003 = vrot.slane %v4001, 5
        %v4004 = vsel %vm2650, %v3999, %v4003
        %v4006 = vshrl.u32 %v3941, 16
        %v4008 = vrot.slane %v4006, 4
        %v4009 = vshll.u32 %v3941, 16
        %v4011 = vrot.slane %v4009, 5
        %v4012 = vor.u32 %v4008, %v4011
        %v4013 = vrot.slane %v4012, 4
        %v4015 = vshll.u32 %v3942, 16
        %v4017 = vrot.slane %v4015, 5
        %v4018 = vsel %vm2650, %v4013, %v4017
        %v4020 = vshrl.u32 %v3943, 16
        %v4022 = vrot.slane %v4020, 4
        %v4023 = vshll.u32 %v3943, 16
        %v4025 = vrot.slane %v4023, 5
        %v4026 = vor.u32 %v4022, %v4025
        %v4027 = vrot.slane %v4026, 4
        %v4029 = vshll.u32 %v3944, 16
        %v4031 = vrot.slane %v4029, 5
        %v4032 = vsel %vm2650, %v4027, %v4031
        %v4034 = vshrl.u32 %v3945, 16
        %v4036 = vrot.slane %v4034, 4
        %v4037 = vshll.u32 %v3945, 16
        %v4039 = vrot.slane %v4037, 5
        %v4040 = vor.u32 %v4036, %v4039
        %v4041 = vrot.slane %v4040, 4
        %v4043 = vshll.u32 %v3946, 16
        %v4045 = vrot.slane %v4043, 5
        %v4046 = vsel %vm2650, %v4041, %v4045
        %v4048 = vshrl.u32 %v3947, 16
        %v4050 = vrot.slane %v4048, 4
        %v4051 = vshll.u32 %v3947, 16
        %v4053 = vrot.slane %v4051, 5
        %v4054 = vor.u32 %v4050, %v4053
        %v4055 = vrot.slane %v4054, 4
        %v4057 = vshll.u32 %v3948, 16
        %v4059 = vrot.slane %v4057, 5
        %v4060 = vsel %vm2650, %v4055, %v4059
        %s4061 = scalar_lea.vmem [#allocation8], 224
        %v4062 = vld [vmem:[%s4061] sm:$0xf]
        %v4063 = vld [vmem:[%s4061 + $0x4] sm:$0xf]
        %v4064 = vld [vmem:[%s4061 + $0x8] sm:$0xf]
        %v4065 = vld [vmem:[%s4061 + $0xc] sm:$0xf]
        %v4066 = vld [vmem:[%s4061 + $0x10] sm:$0xf]
        %v4067 = vld [vmem:[%s4061 + $0x14] sm:$0xf]
        %v4068 = vld [vmem:[%s4061 + $0x18] sm:$0xf]
        %v4069 = vld [vmem:[%s4061 + $0x1c] sm:$0xf]
        %v4070 = vunpack.c.l.b16 %v3962
        %v4071 = vunpack.c.l.b16 %v3976
        %v4072 = vunpack.c.l.b16 %v3990
        %v4073 = vunpack.c.l.b16 %v4004
        %v4074 = vunpack.c.l.b16 %v4018
        %v4075 = vunpack.c.l.b16 %v4032
        %v4076 = vunpack.c.l.b16 %v4046
        %v4077 = vunpack.c.l.b16 %v4060
        %v4078 = vpack.c.b16 %v4071, %v4070
        %v4079 = vpack.c.b16 %v4073, %v4072
        %v4080 = vpack.c.b16 %v4075, %v4074
        %v4081 = vpack.c.b16 %v4077, %v4076
        %v4090 = vunpack.c.l.b16 %v4062
        %v4091 = vunpack.c.l.b16 %v4063
        %v4092 = vunpack.c.l.b16 %v4064
        %v4093 = vunpack.c.l.b16 %v4065
        %v4094 = vunpack.c.l.b16 %v4066
        %v4095 = vunpack.c.l.b16 %v4067
        %v4096 = vunpack.c.l.b16 %v4068
        %v4097 = vunpack.c.l.b16 %v4069
        %v4098 = vpack.c.b16 %v4091, %v4090
        %v4099 = vpack.c.b16 %v4093, %v4092
        %v4100 = vpack.c.b16 %v4095, %v4094
        %v4101 = vpack.c.b16 %v4097, %v4096
        %v4107 = vsel %vm2808, %v4078, 0
        %v4110 = vsel %vm2808, %v4079, 0
        %v4113 = vsel %vm2808, %v4080, 0
        %v4116 = vsel %vm2808, %v4081, 0
        %4118 = vmatprep.subr.bf16.mxu0 0
        %4119 = vmatpush1.bf16.msra.mxu0 0
        %4120 = vmatprep.subr.bf16.mxu0 0
        %4121 = vmatpush1.bf16.msra.mxu0 0
        %4122 = vmatprep.subr.bf16.mxu0 0
        %4123 = vmatpush1.bf16.msra.mxu0 0
        %4124 = vmatprep.subr.bf16.mxu0 0
        %4125 = vmatpush1.bf16.msra.mxu0 0
        %4126 = vmatprep.subr.bf16.mxu0 0
        %4127 = vmatpush1.bf16.msra.mxu0 %v4101
        %4128 = vmatprep.subr.bf16.mxu0 0
        %4129 = vmatpush1.bf16.msra.mxu0 %v4100
        %4130 = vmatprep.subr.bf16.mxu0 0
        %4131 = vmatpush1.bf16.msra.mxu0 %v4099
        %4132 = vmatprep.subr.bf16.mxu0 0
        %4133 = vmatpush1.bf16.msra.mxu0 %v4098
        %4134 = vmatprep.subr.bf16.mxu0 0
        %4135 = vmatpush2.bf16.msra.mxu0 0
        %4136 = vmatprep.subr.bf16.mxu0 0
        %4137 = vmatpush2.bf16.msra.mxu0 0
        %4138 = vmatprep.subr.bf16.mxu0 0
        %4139 = vmatpush2.bf16.msra.mxu0 0
        %4140 = vmatprep.subr.bf16.mxu0 0
        %4141 = vmatpush2.bf16.msra.mxu0 0
        %4142 = vmatprep.subr.bf16.mxu0 0
        %4143 = vmatpush2.bf16.msra.mxu0 0
        %4144 = vmatprep.subr.bf16.mxu0 0
        %4145 = vmatpush2.bf16.msra.mxu0 0
        %4146 = vmatprep.subr.bf16.mxu0 0
        %4147 = vmatpush2.bf16.msra.mxu0 0
        %4148 = vmatprep.subr.bf16.mxu0 0
        %4149 = vmatpush2.bf16.msra.mxu0 0
        %4150 = vmatprep.mubr.bf16.mxu0 0
        %4151 = vmatmul.mubr.bf16.gmra.mxu0 %v4107
        %v4152 = vpop.f32.mrf.mxu0
        %v4153 = vadd.f32 0.0, %v4152
        %v4154 = vpop.f32.mrf.mxu0
        %v4155 = vpop.f32.mrf.mxu0
        %v4156 = vadd.f32 0.0, %v4155
        %v4157 = vpop.f32.mrf.mxu0
        %4158 = vmatprep.mubr.bf16.mxu0 0
        %4159 = vmatmul.mubr.bf16.gmra.mxu0 %v4110
        %v4160 = vpop.f32.mrf.mxu0
        %v4161 = vadd.f32 0.0, %v4160
        %v4162 = vpop.f32.mrf.mxu0
        %v4163 = vpop.f32.mrf.mxu0
        %v4164 = vadd.f32 0.0, %v4163
        %v4165 = vpop.f32.mrf.mxu0
        %4166 = vmatprep.mubr.bf16.mxu0 0
        %4167 = vmatmul.mubr.bf16.gmra.mxu0 %v4113
        %v4168 = vpop.f32.mrf.mxu0
        %v4169 = vadd.f32 0.0, %v4168
        %v4170 = vpop.f32.mrf.mxu0
        %v4171 = vpop.f32.mrf.mxu0
        %v4172 = vadd.f32 0.0, %v4171
        %v4173 = vpop.f32.mrf.mxu0
        %4174 = vmatprep.mubr.bf16.mxu0 0
        %4175 = vmatmul.mubr.bf16.gmra.mxu0 %v4116
        %v4176 = vpop.f32.mrf.mxu0
        %v4177 = vadd.f32 0.0, %v4176
        %v4178 = vpop.f32.mrf.mxu0
        %v4179 = vpop.f32.mrf.mxu0
        %v4180 = vadd.f32 0.0, %v4179
        %v4181 = vpop.f32.mrf.mxu0
        %4182 = vdwg.mxu0
        %v4183 = vadd.f32 %v3925, %v4153
        %v4184 = vadd.f32 %v3926, %v4156
        %v4185 = vadd.f32 %v3927, %v4161
        %v4186 = vadd.f32 %v3928, %v4164
        %v4187 = vadd.f32 %v3929, %v4169
        %v4188 = vadd.f32 %v3930, %v4172
        %v4189 = vadd.f32 %v3931, %v4177
        %v4190 = vadd.f32 %v3932, %v4180
        %v4191 = vld [vmem:[%s3786] sm:$0xe]
        %v4192 = vld [vmem:[%s3786 + $0x8] sm:$0xe]
        %v4193 = vld [vmem:[%s3786 + $0x10] sm:$0xe]
        %v4194 = vld [vmem:[%s3786 + $0x18] sm:$0xe]
        %v4195 = vld [vmem:[%s3786 + $0x20] sm:$0xe]
        %v4196 = vld [vmem:[%s3786 + $0x28] sm:$0xe]
        %v4197 = vld [vmem:[%s3786 + $0x30] sm:$0xe]
        %v4198 = vld [vmem:[%s3786 + $0x38] sm:$0xe]
        %v4215 = vrot.slane %v4191, 5
        %v4216 = vrot.slane %v4215, 4
        %v4217 = vrot.slane %v3934, 5
        %v4218 = vsel %vm3033, %v4216, %v4217
        %v4219 = vrot.slane %v4192, 5
        %v4220 = vrot.slane %v4219, 4
        %v4221 = vrot.slane %v3936, 5
        %v4222 = vsel %vm3033, %v4220, %v4221
        %v4223 = vrot.slane %v4193, 5
        %v4224 = vrot.slane %v4223, 4
        %v4225 = vrot.slane %v3938, 5
        %v4226 = vsel %vm3033, %v4224, %v4225
        %v4227 = vrot.slane %v4194, 5
        %v4228 = vrot.slane %v4227, 4
        %v4229 = vrot.slane %v3940, 5
        %v4230 = vsel %vm3033, %v4228, %v4229
        %v4231 = vrot.slane %v4195, 5
        %v4232 = vrot.slane %v4231, 4
        %v4233 = vrot.slane %v3942, 5
        %v4234 = vsel %vm3033, %v4232, %v4233
        %v4235 = vrot.slane %v4196, 5
        %v4236 = vrot.slane %v4235, 4
        %v4237 = vrot.slane %v3944, 5
        %v4238 = vsel %vm3033, %v4236, %v4237
        %v4239 = vrot.slane %v4197, 5
        %v4240 = vrot.slane %v4239, 4
        %v4241 = vrot.slane %v3946, 5
        %v4242 = vsel %vm3033, %v4240, %v4241
        %v4243 = vrot.slane %v4198, 5
        %v4244 = vrot.slane %v4243, 4
        %v4245 = vrot.slane %v3948, 5
        %v4246 = vsel %vm3033, %v4244, %v4245
        %s4247 = scalar_lea.vmem [#allocation8], 256
        %v4248 = vld [vmem:[%s4247] sm:$0xf]
        %v4249 = vld [vmem:[%s4247 + $0x4] sm:$0xf]
        %v4250 = vld [vmem:[%s4247 + $0x8] sm:$0xf]
        %v4251 = vld [vmem:[%s4247 + $0xc] sm:$0xf]
        %v4252 = vld [vmem:[%s4247 + $0x10] sm:$0xf]
        %v4253 = vld [vmem:[%s4247 + $0x14] sm:$0xf]
        %v4254 = vld [vmem:[%s4247 + $0x18] sm:$0xf]
        %v4255 = vld [vmem:[%s4247 + $0x1c] sm:$0xf]
        %v4256 = vunpack.c.l.b16 %v4218
        %v4257 = vunpack.c.l.b16 %v4222
        %v4258 = vunpack.c.l.b16 %v4226
        %v4259 = vunpack.c.l.b16 %v4230
        %v4260 = vunpack.c.l.b16 %v4234
        %v4261 = vunpack.c.l.b16 %v4238
        %v4262 = vunpack.c.l.b16 %v4242
        %v4263 = vunpack.c.l.b16 %v4246
        %v4264 = vpack.c.b16 %v4257, %v4256
        %v4265 = vpack.c.b16 %v4259, %v4258
        %v4266 = vpack.c.b16 %v4261, %v4260
        %v4267 = vpack.c.b16 %v4263, %v4262
        %v4276 = vunpack.c.l.b16 %v4248
        %v4277 = vunpack.c.l.b16 %v4249
        %v4278 = vunpack.c.l.b16 %v4250
        %v4279 = vunpack.c.l.b16 %v4251
        %v4280 = vunpack.c.l.b16 %v4252
        %v4281 = vunpack.c.l.b16 %v4253
        %v4282 = vunpack.c.l.b16 %v4254
        %v4283 = vunpack.c.l.b16 %v4255
        %v4284 = vpack.c.b16 %v4277, %v4276
        %v4285 = vpack.c.b16 %v4279, %v4278
        %v4286 = vpack.c.b16 %v4281, %v4280
        %v4287 = vpack.c.b16 %v4283, %v4282
        %v4293 = vsel %vm2808, %v4264, 0
        %v4296 = vsel %vm2808, %v4265, 0
        %v4299 = vsel %vm2808, %v4266, 0
        %v4302 = vsel %vm2808, %v4267, 0
        %4304 = vmatprep.subr.bf16.mxu0 0
        %4305 = vmatpush1.bf16.msra.mxu0 0
        %4306 = vmatprep.subr.bf16.mxu0 0
        %4307 = vmatpush1.bf16.msra.mxu0 0
        %4308 = vmatprep.subr.bf16.mxu0 0
        %4309 = vmatpush1.bf16.msra.mxu0 0
        %4310 = vmatprep.subr.bf16.mxu0 0
        %4311 = vmatpush1.bf16.msra.mxu0 0
        %4312 = vmatprep.subr.bf16.mxu0 0
        %4313 = vmatpush1.bf16.msra.mxu0 %v4287
        %4314 = vmatprep.subr.bf16.mxu0 0
        %4315 = vmatpush1.bf16.msra.mxu0 %v4286
        %4316 = vmatprep.subr.bf16.mxu0 0
        %4317 = vmatpush1.bf16.msra.mxu0 %v4285
        %4318 = vmatprep.subr.bf16.mxu0 0
        %4319 = vmatpush1.bf16.msra.mxu0 %v4284
        %4320 = vmatprep.subr.bf16.mxu0 0
        %4321 = vmatpush2.bf16.msra.mxu0 0
        %4322 = vmatprep.subr.bf16.mxu0 0
        %4323 = vmatpush2.bf16.msra.mxu0 0
        %4324 = vmatprep.subr.bf16.mxu0 0
        %4325 = vmatpush2.bf16.msra.mxu0 0
        %4326 = vmatprep.subr.bf16.mxu0 0
        %4327 = vmatpush2.bf16.msra.mxu0 0
        %4328 = vmatprep.subr.bf16.mxu0 0
        %4329 = vmatpush2.bf16.msra.mxu0 0
        %4330 = vmatprep.subr.bf16.mxu0 0
        %4331 = vmatpush2.bf16.msra.mxu0 0
        %4332 = vmatprep.subr.bf16.mxu0 0
        %4333 = vmatpush2.bf16.msra.mxu0 0
        %4334 = vmatprep.subr.bf16.mxu0 0
        %4335 = vmatpush2.bf16.msra.mxu0 0
        %4336 = vmatprep.mubr.bf16.mxu0 0
        %4337 = vmatmul.mubr.bf16.gmra.mxu0 %v4293
        %v4338 = vpop.f32.mrf.mxu0
        %v4339 = vadd.f32 0.0, %v4338
        %v4340 = vpop.f32.mrf.mxu0
        %v4341 = vpop.f32.mrf.mxu0
        %v4342 = vadd.f32 0.0, %v4341
        %v4343 = vpop.f32.mrf.mxu0
        %4344 = vmatprep.mubr.bf16.mxu0 0
        %4345 = vmatmul.mubr.bf16.gmra.mxu0 %v4296
        %v4346 = vpop.f32.mrf.mxu0
        %v4347 = vadd.f32 0.0, %v4346
        %v4348 = vpop.f32.mrf.mxu0
        %v4349 = vpop.f32.mrf.mxu0
        %v4350 = vadd.f32 0.0, %v4349
        %v4351 = vpop.f32.mrf.mxu0
        %4352 = vmatprep.mubr.bf16.mxu0 0
        %4353 = vmatmul.mubr.bf16.gmra.mxu0 %v4299
        %v4354 = vpop.f32.mrf.mxu0
        %v4355 = vadd.f32 0.0, %v4354
        %v4356 = vpop.f32.mrf.mxu0
        %v4357 = vpop.f32.mrf.mxu0
        %v4358 = vadd.f32 0.0, %v4357
        %v4359 = vpop.f32.mrf.mxu0
        %4360 = vmatprep.mubr.bf16.mxu0 0
        %4361 = vmatmul.mubr.bf16.gmra.mxu0 %v4302
        %v4362 = vpop.f32.mrf.mxu0
        %v4363 = vadd.f32 0.0, %v4362
        %v4364 = vpop.f32.mrf.mxu0
        %v4365 = vpop.f32.mrf.mxu0
        %v4366 = vadd.f32 0.0, %v4365
        %v4367 = vpop.f32.mrf.mxu0
        %4368 = vdwg.mxu0
        %v4369 = vadd.f32 %v4183, %v4339
        %v4370 = vadd.f32 %v4184, %v4342
        %v4371 = vadd.f32 %v4185, %v4347
        %v4372 = vadd.f32 %v4186, %v4350
        %v4373 = vadd.f32 %v4187, %v4355
        %v4374 = vadd.f32 %v4188, %v4358
        %v4375 = vadd.f32 %v4189, %v4363
        %v4376 = vadd.f32 %v4190, %v4366
        %v4377 = vld [vmem:[#allocation10] sm:$0x1]
        %v4379 = vlaneseq
        %v4380 = vshrl.u32 %v4379, 7
        %v4381 = vsub.s32 0, %v4380
        %v4382 = vrot.slane %v4377, %v4381
        %v4384 = vmul.f32 %v4369, %v4382
        %v4385 = vmul.f32 %v4370, %v4382
        %v4386 = vmul.f32 %v4371, %v4382
        %v4387 = vmul.f32 %v4372, %v4382
        %v4388 = vmul.f32 %v4373, %v4382
        %v4389 = vmul.f32 %v4374, %v4382
        %v4390 = vmul.f32 %v4375, %v4382
        %v4391 = vmul.f32 %v4376, %v4382
        %v4392 = vld [vmem:[#allocation11] sm:$0x1]
        %v4394 = vlaneseq
        %v4395 = vshrl.u32 %v4394, 7
        %v4396 = vsub.s32 0, %v4395
        %v4397 = vrot.slane %v4392, %v4396
        %v4399 = vadd.f32 %v4384, %v4397
        %v4400 = vadd.f32 %v4385, %v4397
        %v4401 = vadd.f32 %v4386, %v4397
        %v4402 = vadd.f32 %v4387, %v4397
        %v4403 = vadd.f32 %v4388, %v4397
        %v4404 = vadd.f32 %v4389, %v4397
        %v4405 = vadd.f32 %v4390, %v4397
        %v4406 = vadd.f32 %v4391, %v4397
        %v4407 = vmax.f32 %v4399, 0.0
        %v4408 = vmax.f32 %v4400, 0.0
        %v4409 = vmax.f32 %v4401, 0.0
        %v4410 = vmax.f32 %v4402, 0.0
        %v4411 = vmax.f32 %v4403, 0.0
        %v4412 = vmax.f32 %v4404, 0.0
        %v4413 = vmax.f32 %v4405, 0.0
        %v4414 = vmax.f32 %v4406, 0.0
        %v4423 = vcombine.high %v4407, %v4407
        %v4425 = vunpack.c.l.s4 1983009808
        %v4426 = vunpack.c.0.s8 %v4425
        %v4427 = vlaneseq
        %v4428 = vshrl.u32 %v4427, 7
        %v4429 = vsub.s32 %v4426, %v4428
        %v4430 = vrot.slane %v4407, %v4429
        %v4432 = vunpack.c.l.s4 1983009808
        %v4433 = vunpack.c.0.s8 %v4432
        %v4434 = vlaneseq
        %v4435 = vshrl.u32 %v4434, 7
        %v4436 = vsub.s32 %v4433, %v4435
        %v4437 = vrot.slane %v4423, %v4436
        %v4438 = vcombine.high %v4430, %v4430
        %v4439 = vcombine.high %v4437, %v4437
        %v4440 = vcombine.high %v4408, %v4408
        %v4442 = vunpack.c.l.s4 1983009808
        %v4443 = vunpack.c.0.s8 %v4442
        %v4444 = vlaneseq
        %v4445 = vshrl.u32 %v4444, 7
        %v4446 = vsub.s32 %v4443, %v4445
        %v4447 = vrot.slane %v4408, %v4446
        %v4449 = vunpack.c.l.s4 1983009808
        %v4450 = vunpack.c.0.s8 %v4449
        %v4451 = vlaneseq
        %v4452 = vshrl.u32 %v4451, 7
        %v4453 = vsub.s32 %v4450, %v4452
        %v4454 = vrot.slane %v4440, %v4453
        %v4455 = vcombine.high %v4447, %v4447
        %v4456 = vcombine.high %v4454, %v4454
        %v4457 = vcombine.high %v4409, %v4409
        %v4459 = vunpack.c.l.s4 1983009808
        %v4460 = vunpack.c.0.s8 %v4459
        %v4461 = vlaneseq
        %v4462 = vshrl.u32 %v4461, 7
        %v4463 = vsub.s32 %v4460, %v4462
        %v4464 = vrot.slane %v4409, %v4463
        %v4466 = vunpack.c.l.s4 1983009808
        %v4467 = vunpack.c.0.s8 %v4466
        %v4468 = vlaneseq
        %v4469 = vshrl.u32 %v4468, 7
        %v4470 = vsub.s32 %v4467, %v4469
        %v4471 = vrot.slane %v4457, %v4470
        %v4472 = vcombine.high %v4464, %v4464
        %v4473 = vcombine.high %v4471, %v4471
        %v4474 = vcombine.high %v4410, %v4410
        %v4476 = vunpack.c.l.s4 1983009808
        %v4477 = vunpack.c.0.s8 %v4476
        %v4478 = vlaneseq
        %v4479 = vshrl.u32 %v4478, 7
        %v4480 = vsub.s32 %v4477, %v4479
        %v4481 = vrot.slane %v4410, %v4480
        %v4483 = vunpack.c.l.s4 1983009808
        %v4484 = vunpack.c.0.s8 %v4483
        %v4485 = vlaneseq
        %v4486 = vshrl.u32 %v4485, 7
        %v4487 = vsub.s32 %v4484, %v4486
        %v4488 = vrot.slane %v4474, %v4487
        %v4489 = vcombine.high %v4481, %v4481
        %v4490 = vcombine.high %v4488, %v4488
        %v4491 = vcombine.high %v4411, %v4411
        %v4493 = vunpack.c.l.s4 1983009808
        %v4494 = vunpack.c.0.s8 %v4493
        %v4495 = vlaneseq
        %v4496 = vshrl.u32 %v4495, 7
        %v4497 = vsub.s32 %v4494, %v4496
        %v4498 = vrot.slane %v4411, %v4497
        %v4500 = vunpack.c.l.s4 1983009808
        %v4501 = vunpack.c.0.s8 %v4500
        %v4502 = vlaneseq
        %v4503 = vshrl.u32 %v4502, 7
        %v4504 = vsub.s32 %v4501, %v4503
        %v4505 = vrot.slane %v4491, %v4504
        %v4506 = vcombine.high %v4498, %v4498
        %v4507 = vcombine.high %v4505, %v4505
        %v4508 = vcombine.high %v4412, %v4412
        %v4510 = vunpack.c.l.s4 1983009808
        %v4511 = vunpack.c.0.s8 %v4510
        %v4512 = vlaneseq
        %v4513 = vshrl.u32 %v4512, 7
        %v4514 = vsub.s32 %v4511, %v4513
        %v4515 = vrot.slane %v4412, %v4514
        %v4517 = vunpack.c.l.s4 1983009808
        %v4518 = vunpack.c.0.s8 %v4517
        %v4519 = vlaneseq
        %v4520 = vshrl.u32 %v4519, 7
        %v4521 = vsub.s32 %v4518, %v4520
        %v4522 = vrot.slane %v4508, %v4521
        %v4523 = vcombine.high %v4515, %v4515
        %v4524 = vcombine.high %v4522, %v4522
        %v4525 = vcombine.high %v4413, %v4413
        %v4527 = vunpack.c.l.s4 1983009808
        %v4528 = vunpack.c.0.s8 %v4527
        %v4529 = vlaneseq
        %v4530 = vshrl.u32 %v4529, 7
        %v4531 = vsub.s32 %v4528, %v4530
        %v4532 = vrot.slane %v4413, %v4531
        %v4534 = vunpack.c.l.s4 1983009808
        %v4535 = vunpack.c.0.s8 %v4534
        %v4536 = vlaneseq
        %v4537 = vshrl.u32 %v4536, 7
        %v4538 = vsub.s32 %v4535, %v4537
        %v4539 = vrot.slane %v4525, %v4538
        %v4540 = vcombine.high %v4532, %v4532
        %v4541 = vcombine.high %v4539, %v4539
        %v4542 = vcombine.high %v4414, %v4414
        %v4544 = vunpack.c.l.s4 1983009808
        %v4545 = vunpack.c.0.s8 %v4544
        %v4546 = vlaneseq
        %v4547 = vshrl.u32 %v4546, 7
        %v4548 = vsub.s32 %v4545, %v4547
        %v4549 = vrot.slane %v4414, %v4548
        %v4551 = vunpack.c.l.s4 1983009808
        %v4552 = vunpack.c.0.s8 %v4551
        %v4553 = vlaneseq
        %v4554 = vshrl.u32 %v4553, 7
        %v4555 = vsub.s32 %v4552, %v4554
        %v4556 = vrot.slane %v4542, %v4555
        %v4557 = vcombine.high %v4549, %v4549
        %v4558 = vcombine.high %v4556, %v4556
        %vm4591 = vcmask 1041408
        %v4592 = vsel %vm4591, %v4430, -inf
        %v4593 = vsel %vm4591, %v4447, -inf
        %v4594 = vmax.f32 %v4592, %v4593
        %v4595 = vrot.slane %v4594, 4
        %v4596 = vmax.f32 %v4594, %v4595
        %v4597 = vrot.slane %v4596, 2
        %v4598 = vmax.f32 %v4596, %v4597
        %v4599 = vrot.slane %v4598, 1
        %v4600 = vmax.f32 %v4598, %v4599
        %v4601 = vsel %vm4591, %v4438, -inf
        %v4602 = vsel %vm4591, %v4455, -inf
        %v4603 = vmax.f32 %v4601, %v4602
        %v4604 = vrot.slane %v4603, 4
        %v4605 = vmax.f32 %v4603, %v4604
        %v4606 = vrot.slane %v4605, 2
        %v4607 = vmax.f32 %v4605, %v4606
        %v4608 = vrot.slane %v4607, 1
        %v4609 = vmax.f32 %v4607, %v4608
        %v4610 = vsel %vm4591, %v4437, -inf
        %v4611 = vsel %vm4591, %v4454, -inf
        %v4612 = vmax.f32 %v4610, %v4611
        %v4613 = vrot.slane %v4612, 4
        %v4614 = vmax.f32 %v4612, %v4613
        %v4615 = vrot.slane %v4614, 2
        %v4616 = vmax.f32 %v4614, %v4615
        %v4617 = vrot.slane %v4616, 1
        %v4618 = vmax.f32 %v4616, %v4617
        %v4619 = vsel %vm4591, %v4439, -inf
        %v4620 = vsel %vm4591, %v4456, -inf
        %v4621 = vmax.f32 %v4619, %v4620
        %v4622 = vrot.slane %v4621, 4
        %v4623 = vmax.f32 %v4621, %v4622
        %v4624 = vrot.slane %v4623, 2
        %v4625 = vmax.f32 %v4623, %v4624
        %v4626 = vrot.slane %v4625, 1
        %v4627 = vmax.f32 %v4625, %v4626
        %v4628 = vsel %vm4591, %v4464, -inf
        %v4629 = vsel %vm4591, %v4481, -inf
        %v4630 = vmax.f32 %v4628, %v4629
        %v4631 = vrot.slane %v4630, 4
        %v4632 = vmax.f32 %v4630, %v4631
        %v4633 = vrot.slane %v4632, 2
        %v4634 = vmax.f32 %v4632, %v4633
        %v4635 = vrot.slane %v4634, 1
        %v4636 = vmax.f32 %v4634, %v4635
        %v4637 = vsel %vm4591, %v4472, -inf
        %v4638 = vsel %vm4591, %v4489, -inf
        %v4639 = vmax.f32 %v4637, %v4638
        %v4640 = vrot.slane %v4639, 4
        %v4641 = vmax.f32 %v4639, %v4640
        %v4642 = vrot.slane %v4641, 2
        %v4643 = vmax.f32 %v4641, %v4642
        %v4644 = vrot.slane %v4643, 1
        %v4645 = vmax.f32 %v4643, %v4644
        %v4646 = vsel %vm4591, %v4471, -inf
        %v4647 = vsel %vm4591, %v4488, -inf
        %v4648 = vmax.f32 %v4646, %v4647
        %v4649 = vrot.slane %v4648, 4
        %v4650 = vmax.f32 %v4648, %v4649
        %v4651 = vrot.slane %v4650, 2
        %v4652 = vmax.f32 %v4650, %v4651
        %v4653 = vrot.slane %v4652, 1
        %v4654 = vmax.f32 %v4652, %v4653
        %v4655 = vsel %vm4591, %v4473, -inf
        %v4656 = vsel %vm4591, %v4490, -inf
        %v4657 = vmax.f32 %v4655, %v4656
        %v4658 = vrot.slane %v4657, 4
        %v4659 = vmax.f32 %v4657, %v4658
        %v4660 = vrot.slane %v4659, 2
        %v4661 = vmax.f32 %v4659, %v4660
        %v4662 = vrot.slane %v4661, 1
        %v4663 = vmax.f32 %v4661, %v4662
        %v4664 = vsel %vm4591, %v4498, -inf
        %v4665 = vsel %vm4591, %v4515, -inf
        %v4666 = vmax.f32 %v4664, %v4665
        %v4667 = vrot.slane %v4666, 4
        %v4668 = vmax.f32 %v4666, %v4667
        %v4669 = vrot.slane %v4668, 2
        %v4670 = vmax.f32 %v4668, %v4669
        %v4671 = vrot.slane %v4670, 1
        %v4672 = vmax.f32 %v4670, %v4671
        %v4673 = vsel %vm4591, %v4506, -inf
        %v4674 = vsel %vm4591, %v4523, -inf
        %v4675 = vmax.f32 %v4673, %v4674
        %v4676 = vrot.slane %v4675, 4
        %v4677 = vmax.f32 %v4675, %v4676
        %v4678 = vrot.slane %v4677, 2
        %v4679 = vmax.f32 %v4677, %v4678
        %v4680 = vrot.slane %v4679, 1
        %v4681 = vmax.f32 %v4679, %v4680
        %v4682 = vsel %vm4591, %v4505, -inf
        %v4683 = vsel %vm4591, %v4522, -inf
        %v4684 = vmax.f32 %v4682, %v4683
        %v4685 = vrot.slane %v4684, 4
        %v4686 = vmax.f32 %v4684, %v4685
        %v4687 = vrot.slane %v4686, 2
        %v4688 = vmax.f32 %v4686, %v4687
        %v4689 = vrot.slane %v4688, 1
        %v4690 = vmax.f32 %v4688, %v4689
        %v4691 = vsel %vm4591, %v4507, -inf
        %v4692 = vsel %vm4591, %v4524, -inf
        %v4693 = vmax.f32 %v4691, %v4692
        %v4694 = vrot.slane %v4693, 4
        %v4695 = vmax.f32 %v4693, %v4694
        %v4696 = vrot.slane %v4695, 2
        %v4697 = vmax.f32 %v4695, %v4696
        %v4698 = vrot.slane %v4697, 1
        %v4699 = vmax.f32 %v4697, %v4698
        %v4700 = vsel %vm4591, %v4532, -inf
        %v4701 = vsel %vm4591, %v4549, -inf
        %v4702 = vmax.f32 %v4700, %v4701
        %v4703 = vrot.slane %v4702, 4
        %v4704 = vmax.f32 %v4702, %v4703
        %v4705 = vrot.slane %v4704, 2
        %v4706 = vmax.f32 %v4704, %v4705
        %v4707 = vrot.slane %v4706, 1
        %v4708 = vmax.f32 %v4706, %v4707
        %v4709 = vsel %vm4591, %v4540, -inf
        %v4710 = vsel %vm4591, %v4557, -inf
        %v4711 = vmax.f32 %v4709, %v4710
        %v4712 = vrot.slane %v4711, 4
        %v4713 = vmax.f32 %v4711, %v4712
        %v4714 = vrot.slane %v4713, 2
        %v4715 = vmax.f32 %v4713, %v4714
        %v4716 = vrot.slane %v4715, 1
        %v4717 = vmax.f32 %v4715, %v4716
        %v4718 = vsel %vm4591, %v4539, -inf
        %v4719 = vsel %vm4591, %v4556, -inf
        %v4720 = vmax.f32 %v4718, %v4719
        %v4721 = vrot.slane %v4720, 4
        %v4722 = vmax.f32 %v4720, %v4721
        %v4723 = vrot.slane %v4722, 2
        %v4724 = vmax.f32 %v4722, %v4723
        %v4725 = vrot.slane %v4724, 1
        %v4726 = vmax.f32 %v4724, %v4725
        %v4727 = vsel %vm4591, %v4541, -inf
        %v4728 = vsel %vm4591, %v4558, -inf
        %v4729 = vmax.f32 %v4727, %v4728
        %v4730 = vrot.slane %v4729, 4
        %v4731 = vmax.f32 %v4729, %v4730
        %v4732 = vrot.slane %v4731, 2
        %v4733 = vmax.f32 %v4731, %v4732
        %v4734 = vrot.slane %v4733, 1
        %v4735 = vmax.f32 %v4733, %v4734
        %v4736 = vpack.c.bf16 %v4600, %v4600
        %v4737 = vpack.c.bf16 %v4609, %v4609
        %v4738 = vpack.c.bf16 %v4618, %v4618
        %v4739 = vpack.c.bf16 %v4627, %v4627
        %v4740 = vpack.c.bf16 %v4636, %v4636
        %v4741 = vpack.c.bf16 %v4645, %v4645
        %v4742 = vpack.c.bf16 %v4654, %v4654
        %v4743 = vpack.c.bf16 %v4663, %v4663
        %v4744 = vpack.c.bf16 %v4672, %v4672
        %v4745 = vpack.c.bf16 %v4681, %v4681
        %v4746 = vpack.c.bf16 %v4690, %v4690
        %v4747 = vpack.c.bf16 %v4699, %v4699
        %v4748 = vpack.c.bf16 %v4708, %v4708
        %v4749 = vpack.c.bf16 %v4717, %v4717
        %v4750 = vpack.c.bf16 %v4726, %v4726
        %v4751 = vpack.c.bf16 %v4735, %v4735
        %v4769 = vunpack.c.l.s4 1983009808
        %v4770 = vunpack.c.0.s8 %v4769
        %v4771 = vlaneseq
        %v4772 = vshrl.u32 %v4771, 7
        %v4773 = vsub.s32 %v4770, %v4772
        %v4774 = vrot.slane %v4736, %v4773
        %v4776 = vunpack.c.l.s4 1983009808
        %v4777 = vunpack.c.0.s8 %v4776
        %v4778 = vlaneseq
        %v4779 = vshrl.u32 %v4778, 7
        %v4780 = vsub.s32 %v4777, %v4779
        %v4781 = vrot.slane %v4737, %v4780
        %v4783 = vunpack.c.l.s4 1983009808
        %v4784 = vunpack.c.0.s8 %v4783
        %v4785 = vlaneseq
        %v4786 = vshrl.u32 %v4785, 7
        %v4787 = vsub.s32 %v4784, %v4786
        %v4788 = vrot.slane %v4738, %v4787
        %v4790 = vunpack.c.l.s4 1983009808
        %v4791 = vunpack.c.0.s8 %v4790
        %v4792 = vlaneseq
        %v4793 = vshrl.u32 %v4792, 7
        %v4794 = vsub.s32 %v4791, %v4793
        %v4795 = vrot.slane %v4739, %v4794
        %v4797 = vunpack.c.l.s4 1983009808
        %v4798 = vunpack.c.0.s8 %v4797
        %v4799 = vlaneseq
        %v4800 = vshrl.u32 %v4799, 7
        %v4801 = vsub.s32 %v4798, %v4800
        %v4802 = vrot.slane %v4740, %v4801
        %v4804 = vunpack.c.l.s4 1983009808
        %v4805 = vunpack.c.0.s8 %v4804
        %v4806 = vlaneseq
        %v4807 = vshrl.u32 %v4806, 7
        %v4808 = vsub.s32 %v4805, %v4807
        %v4809 = vrot.slane %v4741, %v4808
        %v4811 = vunpack.c.l.s4 1983009808
        %v4812 = vunpack.c.0.s8 %v4811
        %v4813 = vlaneseq
        %v4814 = vshrl.u32 %v4813, 7
        %v4815 = vsub.s32 %v4812, %v4814
        %v4816 = vrot.slane %v4742, %v4815
        %v4818 = vunpack.c.l.s4 1983009808
        %v4819 = vunpack.c.0.s8 %v4818
        %v4820 = vlaneseq
        %v4821 = vshrl.u32 %v4820, 7
        %v4822 = vsub.s32 %v4819, %v4821
        %v4823 = vrot.slane %v4743, %v4822
        %v4825 = vunpack.c.l.s4 1983009808
        %v4826 = vunpack.c.0.s8 %v4825
        %v4827 = vlaneseq
        %v4828 = vshrl.u32 %v4827, 7
        %v4829 = vsub.s32 %v4826, %v4828
        %v4830 = vrot.slane %v4744, %v4829
        %v4832 = vunpack.c.l.s4 1983009808
        %v4833 = vunpack.c.0.s8 %v4832
        %v4834 = vlaneseq
        %v4835 = vshrl.u32 %v4834, 7
        %v4836 = vsub.s32 %v4833, %v4835
        %v4837 = vrot.slane %v4745, %v4836
        %v4839 = vunpack.c.l.s4 1983009808
        %v4840 = vunpack.c.0.s8 %v4839
        %v4841 = vlaneseq
        %v4842 = vshrl.u32 %v4841, 7
        %v4843 = vsub.s32 %v4840, %v4842
        %v4844 = vrot.slane %v4746, %v4843
        %v4846 = vunpack.c.l.s4 1983009808
        %v4847 = vunpack.c.0.s8 %v4846
        %v4848 = vlaneseq
        %v4849 = vshrl.u32 %v4848, 7
        %v4850 = vsub.s32 %v4847, %v4849
        %v4851 = vrot.slane %v4747, %v4850
        %v4853 = vunpack.c.l.s4 1983009808
        %v4854 = vunpack.c.0.s8 %v4853
        %v4855 = vlaneseq
        %v4856 = vshrl.u32 %v4855, 7
        %v4857 = vsub.s32 %v4854, %v4856
        %v4858 = vrot.slane %v4748, %v4857
        %v4860 = vunpack.c.l.s4 1983009808
        %v4861 = vunpack.c.0.s8 %v4860
        %v4862 = vlaneseq
        %v4863 = vshrl.u32 %v4862, 7
        %v4864 = vsub.s32 %v4861, %v4863
        %v4865 = vrot.slane %v4749, %v4864
        %v4867 = vunpack.c.l.s4 1983009808
        %v4868 = vunpack.c.0.s8 %v4867
        %v4869 = vlaneseq
        %v4870 = vshrl.u32 %v4869, 7
        %v4871 = vsub.s32 %v4868, %v4870
        %v4872 = vrot.slane %v4750, %v4871
        %v4874 = vunpack.c.l.s4 1983009808
        %v4875 = vunpack.c.0.s8 %v4874
        %v4876 = vlaneseq
        %v4877 = vshrl.u32 %v4876, 7
        %v4878 = vsub.s32 %v4875, %v4877
        %v4879 = vrot.slane %v4751, %v4878
        %v4881 = vunpack.c.l.s4 1983009808
        %v4882 = vunpack.c.0.s8 %v4881
        %v4883 = vlaneseq
        %v4884 = vshrl.u32 %v4883, 7
        %v4885 = vsub.s32 %v4882, %v4884
        %v4886 = vrot.slane %v4774, %v4885
        %v4888 = vunpack.c.l.s4 1983009808
        %v4889 = vunpack.c.0.s8 %v4888
        %v4890 = vlaneseq
        %v4891 = vshrl.u32 %v4890, 7
        %v4892 = vsub.s32 %v4889, %v4891
        %v4893 = vrot.slane %v4781, %v4892
        %v4895 = vunpack.c.l.s4 1983009808
        %v4896 = vunpack.c.0.s8 %v4895
        %v4897 = vlaneseq
        %v4898 = vshrl.u32 %v4897, 7
        %v4899 = vsub.s32 %v4896, %v4898
        %v4900 = vrot.slane %v4788, %v4899
        %v4902 = vunpack.c.l.s4 1983009808
        %v4903 = vunpack.c.0.s8 %v4902
        %v4904 = vlaneseq
        %v4905 = vshrl.u32 %v4904, 7
        %v4906 = vsub.s32 %v4903, %v4905
        %v4907 = vrot.slane %v4795, %v4906
        %v4909 = vunpack.c.l.s4 1983009808
        %v4910 = vunpack.c.0.s8 %v4909
        %v4911 = vlaneseq
        %v4912 = vshrl.u32 %v4911, 7
        %v4913 = vsub.s32 %v4910, %v4912
        %v4914 = vrot.slane %v4802, %v4913
        %v4916 = vunpack.c.l.s4 1983009808
        %v4917 = vunpack.c.0.s8 %v4916
        %v4918 = vlaneseq
        %v4919 = vshrl.u32 %v4918, 7
        %v4920 = vsub.s32 %v4917, %v4919
        %v4921 = vrot.slane %v4809, %v4920
        %v4923 = vunpack.c.l.s4 1983009808
        %v4924 = vunpack.c.0.s8 %v4923
        %v4925 = vlaneseq
        %v4926 = vshrl.u32 %v4925, 7
        %v4927 = vsub.s32 %v4924, %v4926
        %v4928 = vrot.slane %v4816, %v4927
        %v4930 = vunpack.c.l.s4 1983009808
        %v4931 = vunpack.c.0.s8 %v4930
        %v4932 = vlaneseq
        %v4933 = vshrl.u32 %v4932, 7
        %v4934 = vsub.s32 %v4931, %v4933
        %v4935 = vrot.slane %v4823, %v4934
        %v4937 = vunpack.c.l.s4 1983009808
        %v4938 = vunpack.c.0.s8 %v4937
        %v4939 = vlaneseq
        %v4940 = vshrl.u32 %v4939, 7
        %v4941 = vsub.s32 %v4938, %v4940
        %v4942 = vrot.slane %v4830, %v4941
        %v4944 = vunpack.c.l.s4 1983009808
        %v4945 = vunpack.c.0.s8 %v4944
        %v4946 = vlaneseq
        %v4947 = vshrl.u32 %v4946, 7
        %v4948 = vsub.s32 %v4945, %v4947
        %v4949 = vrot.slane %v4837, %v4948
        %v4951 = vunpack.c.l.s4 1983009808
        %v4952 = vunpack.c.0.s8 %v4951
        %v4953 = vlaneseq
        %v4954 = vshrl.u32 %v4953, 7
        %v4955 = vsub.s32 %v4952, %v4954
        %v4956 = vrot.slane %v4844, %v4955
        %v4958 = vunpack.c.l.s4 1983009808
        %v4959 = vunpack.c.0.s8 %v4958
        %v4960 = vlaneseq
        %v4961 = vshrl.u32 %v4960, 7
        %v4962 = vsub.s32 %v4959, %v4961
        %v4963 = vrot.slane %v4851, %v4962
        %v4965 = vunpack.c.l.s4 1983009808
        %v4966 = vunpack.c.0.s8 %v4965
        %v4967 = vlaneseq
        %v4968 = vshrl.u32 %v4967, 7
        %v4969 = vsub.s32 %v4966, %v4968
        %v4970 = vrot.slane %v4858, %v4969
        %v4972 = vunpack.c.l.s4 1983009808
        %v4973 = vunpack.c.0.s8 %v4972
        %v4974 = vlaneseq
        %v4975 = vshrl.u32 %v4974, 7
        %v4976 = vsub.s32 %v4973, %v4975
        %v4977 = vrot.slane %v4865, %v4976
        %v4979 = vunpack.c.l.s4 1983009808
        %v4980 = vunpack.c.0.s8 %v4979
        %v4981 = vlaneseq
        %v4982 = vshrl.u32 %v4981, 7
        %v4983 = vsub.s32 %v4980, %v4982
        %v4984 = vrot.slane %v4872, %v4983
        %v4986 = vunpack.c.l.s4 1983009808
        %v4987 = vunpack.c.0.s8 %v4986
        %v4988 = vlaneseq
        %v4989 = vshrl.u32 %v4988, 7
        %v4990 = vsub.s32 %v4987, %v4989
        %v4991 = vrot.slane %v4879, %v4990
        %v4992 = vunpack.c.l.b16 %v4886
        %v4993 = vunpack.c.l.b16 %v4893
        %v4994 = vunpack.c.l.b16 %v4900
        %v4995 = vunpack.c.l.b16 %v4907
        %v4996 = vunpack.c.l.b16 %v4914
        %v4997 = vunpack.c.l.b16 %v4921
        %v4998 = vunpack.c.l.b16 %v4928
        %v4999 = vunpack.c.l.b16 %v4935
        %v5000 = vunpack.c.l.b16 %v4942
        %v5001 = vunpack.c.l.b16 %v4949
        %v5002 = vunpack.c.l.b16 %v4956
        %v5003 = vunpack.c.l.b16 %v4963
        %v5004 = vunpack.c.l.b16 %v4970
        %v5005 = vunpack.c.l.b16 %v4977
        %v5006 = vunpack.c.l.b16 %v4984
        %v5007 = vunpack.c.l.b16 %v4991
        %v5008 = vrot.slane %v4993, 7
        %vm5009 = vcmask 1041409
        %v5010 = vsel %vm5009, %v5008, %v4992
        %v5011 = vrot.slane %v4994, 6
        %v5012 = vsel %vm2487, %v5011, %v5010
        %v5013 = vrot.slane %v4995, 5
        %v5014 = vsel %vm2489, %v5013, %v5012
        %v5015 = vrot.slane %v4997, 7
        %v5016 = vsel %vm5009, %v5015, %v4996
        %v5017 = vrot.slane %v4998, 6
        %v5018 = vsel %vm2487, %v5017, %v5016
        %v5019 = vrot.slane %v4999, 5
        %v5020 = vsel %vm2489, %v5019, %v5018
        %v5021 = vrot.slane %v5001, 7
        %v5022 = vsel %vm5009, %v5021, %v5000
        %v5023 = vrot.slane %v5002, 6
        %v5024 = vsel %vm2487, %v5023, %v5022
        %v5025 = vrot.slane %v5003, 5
        %v5026 = vsel %vm2489, %v5025, %v5024
        %v5027 = vrot.slane %v5005, 7
        %v5028 = vsel %vm5009, %v5027, %v5004
        %v5029 = vrot.slane %v5006, 6
        %v5030 = vsel %vm2487, %v5029, %v5028
        %v5031 = vrot.slane %v5007, 5
        %v5032 = vsel %vm2489, %v5031, %v5030
        %v5033 = vpack.c.b16 %v5014, %v5014
        %v5034 = vpack.c.b16 %v5020, %v5020
        %v5035 = vpack.c.b16 %v5026, %v5026
        %v5036 = vpack.c.b16 %v5032, %v5032
        %v5038 = vunpack.c.l.s4 1983009808
        %v5039 = vunpack.c.0.s8 %v5038
        %v5040 = vlaneseq
        %v5041 = vshrl.u32 %v5040, 7
        %v5042 = vsub.s32 %v5039, %v5041
        %v5043 = vrot.slane %v5033, %v5042
        %v5045 = vunpack.c.l.s4 1983009808
        %v5046 = vunpack.c.0.s8 %v5045
        %v5047 = vlaneseq
        %v5048 = vshrl.u32 %v5047, 7
        %v5049 = vsub.s32 %v5046, %v5048
        %v5050 = vrot.slane %v5034, %v5049
        %v5052 = vunpack.c.l.s4 1983009808
        %v5053 = vunpack.c.0.s8 %v5052
        %v5054 = vlaneseq
        %v5055 = vshrl.u32 %v5054, 7
        %v5056 = vsub.s32 %v5053, %v5055
        %v5057 = vrot.slane %v5035, %v5056
        %v5059 = vunpack.c.l.s4 1983009808
        %v5060 = vunpack.c.0.s8 %v5059
        %v5061 = vlaneseq
        %v5062 = vshrl.u32 %v5061, 7
        %v5063 = vsub.s32 %v5060, %v5062
        %v5064 = vrot.slane %v5036, %v5063
        %5069 = vst [vmem:[%s358] sm:$0x3] %v5043
        %5070 = vst [vmem:[%s358 + $0x2] sm:$0x3] %v5050
        %5071 = vst [vmem:[%s358 + $0x4] sm:$0x3] %v5057
        %5072 = vst [vmem:[%s358 + $0x6] sm:$0x3] %v5064
        %p5073 = scmp.lt.s32.totalorder %s22, 1
        %s5074 = scalar_select %p5073, %s22, 1
        %s5075 = smul.addr %s5074, 4
        %s5076 = smul.addr %s5075, 2
        %s5077 = scalar_lea.vmem %s7, %s5076
        // Predicated region
        $region73: #{hybrid_forest_forward.2} parent=47 // pred_check
          %p5078 = pneg %p192
        $region74: #{hybrid_forest_forward.2} parent=47 // pred_check_branch
          %5080 = sbr.rel (%p5078) target = $region76
        $region75: #{hybrid_forest_forward.2} parent=47 // pred_region
          _
        $region76: #{hybrid_forest_forward.2} parent=47 // pred_fallthru
          _
      $region48: #{hybrid_forest_forward.2} parent=5 // pred_fallthru
        _
      %p5081 = scmp.le.s32.totalorder 2, %s17
      // Predicated region
      $region77: #{hybrid_forest_forward.2} parent=5 // pred_check
        %p5082 = pneg %p5081
      $region78: #{hybrid_forest_forward.2} parent=5 // pred_check_branch
        %5084 = sbr.rel (%p5082) target = $region80
      $region79: #{hybrid_forest_forward.2} parent=5 // pred_region
        %s5085 = ssub.s32 %s17, 2
        // Predicated region
        $region81: #{hybrid_forest_forward.2} parent=79 // pred_check
          %p5086 = pneg %p198
        $region82: #{hybrid_forest_forward.2} parent=79 // pred_check_branch
          %5088 = sbr.rel (%p5086) target = $region84
        $region83: #{hybrid_forest_forward.2} parent=79 // pred_region
          %p5089 = scmp.lt.s32.totalorder %s23, 1
          %s5090 = scalar_select %p5089, %s23, 1
          %s5091 = smul.addr %s5090, 4
          %s5092 = smul.addr %s5091, 2
          %s5093 = scalar_lea.vmem %s7, %s5092
        $region84: #{hybrid_forest_forward.2} parent=79 // pred_fallthru
          _
      $region80: #{hybrid_forest_forward.2} parent=5 // pred_fallthru
        _
    $region6: #{hybrid_forest_forward.2} parent=1 // loop_footer
      %s21 = sadd.s32 1, %s17
    $region7: #{hybrid_forest_forward.2} parent=1 // loop_footer_branch
      %16 = sbr.rel target = $region3
    $region8: #{hybrid_forest_forward.2} parent=1 // loop_exit
      _
    %5094 = vsyncpa [#allocation4], 1
    %s5095 = scalar_lea.sflag [#allocation4], 1
    %5096 = vsyncpa %s5095, 1
    %5097 = vsyncpa [#allocation6], 1
    %5098 = vsyncpa [#allocation9], 1
    %5099 = vsyncpa [#allocation12], 1

// kernel: hybrid_forest_forward.3
$region0: #{hybrid_forest_forward.3}
  #allocation0 [shape = 'u32[]', space=smem, size = 0x4, offset = 0x4, fixed_abs, tag = 'smem constant byte address 0x4 - core index']
  #allocation1 [shape = 'u32[144,128]{1,0:T(1,128)}', space=vmem, size = 0x12000, scoped, tag = 'internal scratch']
  #allocation2 [shape = 'f32[2,512]{1,0:T(2,128)}', space=vmem, size = 0x1000, scoped, tag = 'scratch operand']
  %s0 = inlined_call_operand.vmem [shape: bf16[2,2048], index: 0, kind: input, shape index: {}]
  %s1 = inlined_call_operand.hbm [shape: bf16[2048,512], index: 1, kind: input, shape index: {}]
  %s2 = inlined_call_operand.vmem [shape: bf16[2,48], index: 2, kind: input, shape index: {}]
  %s3 = inlined_call_operand.vmem [shape: f32[2,3,256], index: 3, kind: input, shape index: {}]
  %s4 = inlined_call_operand.hbm [shape: f32[3,7], index: 4, kind: input, shape index: {}]
  %s5 = inlined_call_operand.hbm [shape: f32[1,7], index: 5, kind: input, shape index: {}]
  %s6 = inlined_call_operand.hbm [shape: f32[7,16], index: 6, kind: input, shape index: {}]
  %s7 = inlined_call_operand.hbm [shape: f32[1,16], index: 7, kind: input, shape index: {}]
  %s8 = inlined_call_operand.vmem [shape: f32[16,7], index: 8, kind: input, shape index: {}]
  %s9 = inlined_call_operand.hbm [shape: f32[1,7], index: 9, kind: input, shape index: {}]
  %s10 = inlined_call_operand.hbm [shape: bf16[48,768], index: 10, kind: input, shape index: {}]
  %s11 = inlined_call_operand.hbm [shape: f32[1,768], index: 11, kind: input, shape index: {}]
  %s12 = inlined_call_operand.vmem [shape: bf16[768,512], index: 12, kind: input, shape index: {}]
  %s13 = inlined_call_operand.hbm [shape: bf16[7,512], index: 13, kind: input, shape index: {}]
  %s14 = inlined_call_operand.hbm [shape: f32[1,512], index: 14, kind: input, shape index: {}]
  %s15 = inlined_call_operand.hbm [shape: f32[1,512], index: 15, kind: input, shape index: {}]
  %s16 = inlined_call_operand.vmem [shape: bf16[512,256], index: 16, kind: input, shape index: {}]
  %s17 = inlined_call_operand.hbm [shape: f32[1,256], index: 17, kind: input, shape index: {}]
  %s18 = inlined_call_operand.hbm [shape: f32[1,256], index: 18, kind: input, shape index: {}]
  %s19 = inlined_call_operand.vmem [shape: bf16[256,4], index: 19, kind: input, shape index: {}]
  %s20 = inlined_call_operand.hbm [shape: f32[1,4], index: 20, kind: input, shape index: {}]
  %s21 = inlined_call_operand.hbm [shape: f32[2,4], index: 21, kind: output, shape index: {}]
  %s22 = sld [smem:[#allocation0]]
  $region181: #{hybrid_forest_forward.3} parent=0
    _
  %s24 = ssub.s32 1, %s22
  %s25 = scalar_select 0, %s24, %s22
  $region1: #{hybrid_forest_forward.3} parent=0
    #allocation3 [shape = 'u8[1048576]{0}', space=vmem, size = 0x100000, scoped, tag = 'input window, operand 1']
    #allocation4 [shape = 's32[2]{0}', space=sflag, size = 0x8, scoped, tag = 'scoped memory for hybrid_forest_forward.3']
    #allocation5 [shape = 's32[2]{0}', space=sflag, size = 0x8, scoped, tag = 'scoped memory for hybrid_forest_forward.3']
    #allocation6 [shape = 's32[2]{0}', space=sflag, size = 0x8, scoped, tag = 'scoped memory for hybrid_forest_forward.3']
    #allocation7 [shape = 'u8[2048]{0}', space=smem, size = 0x800, scoped, tag = 'input window, operand 4, single buffered']
    #allocation8 [shape = 'u8[512]{0}', space=smem, size = 0x200, scoped, tag = 'input window, operand 5, single buffered']
    #allocation9 [shape = 's32[1]{0}', space=sflag, size = 0x4, scoped, tag = 'scoped memory for hybrid_forest_forward.3']
    #allocation10 [shape = 'u8[4096]{0}', space=vmem, size = 0x1000, scoped, tag = 'input window, operand 6, single buffered']
    #allocation11 [shape = 's32[1]{0}', space=sflag, size = 0x4, scoped, tag = 'scoped memory for hybrid_forest_forward.3']
    #allocation12 [shape = 'u8[512]{0}', space=vmem, size = 0x400, scoped, tag = 'input window, operand 7, single buffered']
    #allocation13 [shape = 'u8[512]{0}', space=vmem, size = 0x400, scoped, tag = 'input window, operand 9, single buffered']
    #allocation14 [shape = 's32[1]{0}', space=sflag, size = 0x4, scoped, tag = 'scoped memory for hybrid_forest_forward.3']
    #allocation15 [shape = 'u8[73728]{0}', space=vmem, size = 0x12000, scoped, tag = 'input window, operand 10, single buffered']
    #allocation16 [shape = 'u8[3072]{0}', space=vmem, size = 0xc00, scoped, tag = 'input window, operand 11, single buffered']
    #allocation17 [shape = 's32[1]{0}', space=sflag, size = 0x4, scoped, tag = 'scoped memory for hybrid_forest_forward.3']
    #allocation18 [shape = 'u8[8192]{0}', space=vmem, size = 0x2000, scoped, tag = 'input window, operand 13, single buffered']
    #allocation19 [shape = 'u8[2048]{0}', space=vmem, size = 0x800, scoped, tag = 'input window, operand 14, single buffered']
    #allocation20 [shape = 's32[1]{0}', space=sflag, size = 0x4, scoped, tag = 'scoped memory for hybrid_forest_forward.3']
    #allocation21 [shape = 'u8[2048]{0}', space=vmem, size = 0x800, scoped, tag = 'input window, operand 15, single buffered']
    #allocation22 [shape = 'u8[1024]{0}', space=vmem, size = 0x400, scoped, tag = 'input window, operand 17, single buffered']
    #allocation23 [shape = 's32[1]{0}', space=sflag, size = 0x4, scoped, tag = 'scoped memory for hybrid_forest_forward.3']
    #allocation24 [shape = 'u8[1024]{0}', space=vmem, size = 0x400, scoped, tag = 'input window, operand 18, single buffered']
    #allocation25 [shape = 'u8[512]{0}', space=vmem, size = 0x400, scoped, tag = 'input window, operand 20, single buffered']
    #allocation26 [shape = 's32[1]{0}', space=sflag, size = 0x4, scoped, tag = 'scoped memory for hybrid_forest_forward.3']
    #allocation27 [shape = 'u8[1024]{0}', space=vmem, size = 0x400, scoped, tag = 'output window, operand 0, single buffered']
    %26 = vsyncpa [#allocation4], 0
    %s27 = scalar_lea.sflag [#allocation4], 1
    %28 = vsyncpa %s27, 0
    %29 = vsyncpa [#allocation6], 0
    %30 = vsyncpa [#allocation9], 0
    %31 = vsyncpa [#allocation11], 0
    %32 = vsyncpa [#allocation14], 0
    %33 = vsyncpa [#allocation17], 0
    %34 = vsyncpa [#allocation20], 0
    %35 = vsyncpa [#allocation23], 0
    %36 = vsyncpa [#allocation26], 0
    %37 = vsyncpa [#allocation5], 0
    loop: start=0, step=1, limit=6
    $region2: #{hybrid_forest_forward.3} parent=1 // loop_pre_header
      _
    $region3: #{hybrid_forest_forward.3} parent=1 // loop_header
      %s39 = sphi 0, %s43
      %p40 = scmp.ge.s32.totalorder %s39, 6
      %s49 = sphi 0, %s51
      %s52 = sphi 0, %s49
      %s53 = sphi 0, %s52
      %s69 = sphi 0, %s53
      %s75 = sphi 0, %s77
      %s78 = sphi 0, %s75
      %s79 = sphi 0, %s78
      %s95 = sphi 0, %s79
      %s99 = sphi 0, %s99
      %s101 = sphi 0, %s99
      %s102 = sphi 0, %s101
      %s116 = sphi 0, %s102
      %s120 = sphi 0, %s120
      %s122 = sphi 0, %s120
      %s123 = sphi 0, %s122
      %s137 = sphi 0, %s123
      %s141 = sphi 0, %s141
      %s143 = sphi 0, %s141
      %s144 = sphi 0, %s143
      %s158 = sphi 0, %s144
      %s162 = sphi 0, %s162
      %s164 = sphi 0, %s162
      %s165 = sphi 0, %s164
      %s179 = sphi 0, %s165
      %s183 = sphi 0, %s183
      %s185 = sphi 0, %s183
      %s186 = sphi 0, %s185
      %s200 = sphi 0, %s186
      %s204 = sphi 0, %s204
      %s206 = sphi 0, %s204
      %s207 = sphi 0, %s206
      %s221 = sphi 0, %s207
      %s225 = sphi 0, %s225
      %s227 = sphi 0, %s225
      %s228 = sphi 0, %s227
      %s242 = sphi 0, %s228
      %s246 = sphi 0, %s246
      %s248 = sphi 0, %s246
      %s249 = sphi 0, %s248
      %s263 = sphi 0, %s249
      %s267 = sphi 0, %s267
      %s269 = sphi 0, %s267
      %s270 = sphi 0, %s269
      %s284 = sphi 0, %s270
      %s288 = sphi 0, %s288
      %s290 = sphi 0, %s288
      %s291 = sphi 0, %s290
      %s305 = sphi 0, %s291
      %s309 = sphi 0, %s309
      %s311 = sphi 0, %s309
      %s312 = sphi 0, %s311
      %s326 = sphi 0, %s312
      %s330 = sphi 0, %s330
      %s332 = sphi 0, %s330
      %s333 = sphi 0, %s332
      %s347 = sphi 0, %s333
      %s351 = sphi 0, %s351
      %s353 = sphi 0, %s351
      %s354 = sphi 0, %s353
      %s368 = sphi 0, %s354
      %s372 = sphi 0, %s372
      %s374 = sphi 0, %s372
      %s375 = sphi 0, %s374
      %s389 = sphi 0, %s375
      %s393 = sphi 0, %s393
      %s395 = sphi 0, %s393
      %s396 = sphi 0, %s395
      %s410 = sphi 0, %s396
      %s414 = sphi 0, %s414
      %s416 = sphi 0, %s414
      %s417 = sphi 0, %s416
      %s431 = sphi 0, %s417
      %s435 = sphi 0, %s435
      %s437 = sphi 0, %s435
      %s438 = sphi 0, %s437
      %s452 = sphi 0, %s438
      %s456 = sphi 0, %s456
      %s458 = sphi 0, %s456
      %s459 = sphi 0, %s458
      %s473 = sphi 0, %s459
      %s477 = sphi 0, %s477
      %s479 = sphi 0, %s477
      %s480 = sphi 0, %s479
      %s494 = sphi 0, %s480
      %s498 = sphi 0, %s498
      %s500 = sphi 0, %s498
      %s501 = sphi 0, %s500
      %s515 = sphi 0, %s501
    $region4: #{hybrid_forest_forward.3} parent=1 // loop_header_branch
      %42 = sbr.rel (%p40) target = $region8
    $region5: #{hybrid_forest_forward.3} parent=1 // loop_body
      %s44 = ssub.s32 %s39, 1
      %s45 = ssub.s32 %s39, 2
      %s46 = sadd.s32 %s39, 1
      %s47 = ssub.s32 %s39, %s46
      %p48 = scmp.eq.s32.totalorder %s47, 0
      %s50 = sadd.s32 %s49, 1
      %s51 = scalar_select %p48, %s49, %s50
      %p54 = pneg %p48
      %p55 = scmp.eq.s32.totalorder %s39, 3
      %p56 = por %p54, %p55
      %p57 = scmp.ne.s32.totalorder %s49, %s52
      %p58 = scmp.eq.s32.totalorder %s39, 0
      %p59 = por %p57, %p58
      %p60 = scmp.ne.s32.totalorder %s49, %s52
      %p61 = scmp.eq.s32.totalorder %s44, 3
      %p62 = por %p60, %p61
      %p63 = scmp.ne.s32.totalorder %s52, %s53
      %p64 = scmp.eq.s32.totalorder %s44, 0
      %p65 = por %p63, %p64
      %p66 = scmp.ne.s32.totalorder %s52, %s53
      %p67 = scmp.eq.s32.totalorder %s45, 3
      %p68 = por %p66, %p67
      %p70 = scmp.ne.s32.totalorder %s53, %s69
      %p71 = scmp.eq.s32.totalorder %s45, 0
      %p72 = por %p70, %p71
      %s73 = ssub.s32 %s39, %s46
      %p74 = scmp.eq.s32.totalorder %s73, 0
      %s76 = sadd.s32 %s75, 1
      %s77 = scalar_select %p74, %s75, %s76
      %p80 = pneg %p74
      %p81 = scmp.eq.s32.totalorder %s39, 3
      %p82 = por %p80, %p81
      %p83 = scmp.ne.s32.totalorder %s75, %s78
      %p84 = scmp.eq.s32.totalorder %s39, 0
      %p85 = por %p83, %p84
      %p86 = scmp.ne.s32.totalorder %s75, %s78
      %p87 = scmp.eq.s32.totalorder %s44, 3
      %p88 = por %p86, %p87
      %p89 = scmp.ne.s32.totalorder %s78, %s79
      %p90 = scmp.eq.s32.totalorder %s44, 0
      %p91 = por %p89, %p90
      %p92 = scmp.ne.s32.totalorder %s78, %s79
      %p93 = scmp.eq.s32.totalorder %s45, 3
      %p94 = por %p92, %p93
      %p96 = scmp.ne.s32.totalorder %s79, %s95
      %p97 = scmp.eq.s32.totalorder %s45, 0
      %p98 = por %p96, %p97
      %s100 = sadd.s32 %s99, 1
      %p103 = scmp.eq.s32.totalorder %s39, 3
      %p104 = scmp.ne.s32.totalorder %s99, %s101
      %p105 = scmp.eq.s32.totalorder %s39, 0
      %p106 = por %p104, %p105
      %p107 = scmp.ne.s32.totalorder %s99, %s101
      %p108 = scmp.eq.s32.totalorder %s44, 3
      %p109 = por %p107, %p108
      %p110 = scmp.ne.s32.totalorder %s101, %s102
      %p111 = scmp.eq.s32.totalorder %s44, 0
      %p112 = por %p110, %p111
      %p113 = scmp.ne.s32.totalorder %s101, %s102
      %p114 = scmp.eq.s32.totalorder %s45, 3
      %p115 = por %p113, %p114
      %p117 = scmp.ne.s32.totalorder %s102, %s116
      %p118 = scmp.eq.s32.totalorder %s45, 0
      %p119 = por %p117, %p118
      %s121 = sadd.s32 %s120, 1
      %p124 = scmp.eq.s32.totalorder %s39, 3
      %p125 = scmp.ne.s32.totalorder %s120, %s122
      %p126 = scmp.eq.s32.totalorder %s39, 0
      %p127 = por %p125, %p126
      %p128 = scmp.ne.s32.totalorder %s120, %s122
      %p129 = scmp.eq.s32.totalorder %s44, 3
      %p130 = por %p128, %p129
      %p131 = scmp.ne.s32.totalorder %s122, %s123
      %p132 = scmp.eq.s32.totalorder %s44, 0
      %p133 = por %p131, %p132
      %p134 = scmp.ne.s32.totalorder %s122, %s123
      %p135 = scmp.eq.s32.totalorder %s45, 3
      %p136 = por %p134, %p135
      %p138 = scmp.ne.s32.totalorder %s123, %s137
      %p139 = scmp.eq.s32.totalorder %s45, 0
      %p140 = por %p138, %p139
      %s142 = sadd.s32 %s141, 1
      %p145 = scmp.eq.s32.totalorder %s39, 3
      %p146 = scmp.ne.s32.totalorder %s141, %s143
      %p147 = scmp.eq.s32.totalorder %s39, 0
      %p148 = por %p146, %p147
      %p149 = scmp.ne.s32.totalorder %s141, %s143
      %p150 = scmp.eq.s32.totalorder %s44, 3
      %p151 = por %p149, %p150
      %p152 = scmp.ne.s32.totalorder %s143, %s144
      %p153 = scmp.eq.s32.totalorder %s44, 0
      %p154 = por %p152, %p153
      %p155 = scmp.ne.s32.totalorder %s143, %s144
      %p156 = scmp.eq.s32.totalorder %s45, 3
      %p157 = por %p155, %p156
      %p159 = scmp.ne.s32.totalorder %s144, %s158
      %p160 = scmp.eq.s32.totalorder %s45, 0
      %p161 = por %p159, %p160
      %s163 = sadd.s32 %s162, 1
      %p166 = scmp.eq.s32.totalorder %s39, 3
      %p167 = scmp.ne.s32.totalorder %s162, %s164
      %p168 = scmp.eq.s32.totalorder %s39, 0
      %p169 = por %p167, %p168
      %p170 = scmp.ne.s32.totalorder %s162, %s164
      %p171 = scmp.eq.s32.totalorder %s44, 3
      %p172 = por %p170, %p171
      %p173 = scmp.ne.s32.totalorder %s164, %s165
      %p174 = scmp.eq.s32.totalorder %s44, 0
      %p175 = por %p173, %p174
      %p176 = scmp.ne.s32.totalorder %s164, %s165
      %p177 = scmp.eq.s32.totalorder %s45, 3
      %p178 = por %p176, %p177
      %p180 = scmp.ne.s32.totalorder %s165, %s179
      %p181 = scmp.eq.s32.totalorder %s45, 0
      %p182 = por %p180, %p181
      %s184 = sadd.s32 %s183, 1
      %p187 = scmp.eq.s32.totalorder %s39, 3
      %p188 = scmp.ne.s32.totalorder %s183, %s185
      %p189 = scmp.eq.s32.totalorder %s39, 0
      %p190 = por %p188, %p189
      %p191 = scmp.ne.s32.totalorder %s183, %s185
      %p192 = scmp.eq.s32.totalorder %s44, 3
      %p193 = por %p191, %p192
      %p194 = scmp.ne.s32.totalorder %s185, %s186
      %p195 = scmp.eq.s32.totalorder %s44, 0
      %p196 = por %p194, %p195
      %p197 = scmp.ne.s32.totalorder %s185, %s186
      %p198 = scmp.eq.s32.totalorder %s45, 3
      %p199 = por %p197, %p198
      %p201 = scmp.ne.s32.totalorder %s186, %s200
      %p202 = scmp.eq.s32.totalorder %s45, 0
      %p203 = por %p201, %p202
      %s205 = sadd.s32 %s204, 1
      %p208 = scmp.eq.s32.totalorder %s39, 3
      %p209 = scmp.ne.s32.totalorder %s204, %s206
      %p210 = scmp.eq.s32.totalorder %s39, 0
      %p211 = por %p209, %p210
      %p212 = scmp.ne.s32.totalorder %s204, %s206
      %p213 = scmp.eq.s32.totalorder %s44, 3
      %p214 = por %p212, %p213
      %p215 = scmp.ne.s32.totalorder %s206, %s207
      %p216 = scmp.eq.s32.totalorder %s44, 0
      %p217 = por %p215, %p216
      %p218 = scmp.ne.s32.totalorder %s206, %s207
      %p219 = scmp.eq.s32.totalorder %s45, 3
      %p220 = por %p218, %p219
      %p222 = scmp.ne.s32.totalorder %s207, %s221
      %p223 = scmp.eq.s32.totalorder %s45, 0
      %p224 = por %p222, %p223
      %s226 = sadd.s32 %s225, 1
      %p229 = scmp.eq.s32.totalorder %s39, 3
      %p230 = scmp.ne.s32.totalorder %s225, %s227
      %p231 = scmp.eq.s32.totalorder %s39, 0
      %p232 = por %p230, %p231
      %p233 = scmp.ne.s32.totalorder %s225, %s227
      %p234 = scmp.eq.s32.totalorder %s44, 3
      %p235 = por %p233, %p234
      %p236 = scmp.ne.s32.totalorder %s227, %s228
      %p237 = scmp.eq.s32.totalorder %s44, 0
      %p238 = por %p236, %p237
      %p239 = scmp.ne.s32.totalorder %s227, %s228
      %p240 = scmp.eq.s32.totalorder %s45, 3
      %p241 = por %p239, %p240
      %p243 = scmp.ne.s32.totalorder %s228, %s242
      %p244 = scmp.eq.s32.totalorder %s45, 0
      %p245 = por %p243, %p244
      %s247 = sadd.s32 %s246, 1
      %p250 = scmp.eq.s32.totalorder %s39, 3
      %p251 = scmp.ne.s32.totalorder %s246, %s248
      %p252 = scmp.eq.s32.totalorder %s39, 0
      %p253 = por %p251, %p252
      %p254 = scmp.ne.s32.totalorder %s246, %s248
      %p255 = scmp.eq.s32.totalorder %s44, 3
      %p256 = por %p254, %p255
      %p257 = scmp.ne.s32.totalorder %s248, %s249
      %p258 = scmp.eq.s32.totalorder %s44, 0
      %p259 = por %p257, %p258
      %p260 = scmp.ne.s32.totalorder %s248, %s249
      %p261 = scmp.eq.s32.totalorder %s45, 3
      %p262 = por %p260, %p261
      %p264 = scmp.ne.s32.totalorder %s249, %s263
      %p265 = scmp.eq.s32.totalorder %s45, 0
      %p266 = por %p264, %p265
      %s268 = sadd.s32 %s267, 1
      %p271 = scmp.eq.s32.totalorder %s39, 3
      %p272 = scmp.ne.s32.totalorder %s267, %s269
      %p273 = scmp.eq.s32.totalorder %s39, 0
      %p274 = por %p272, %p273
      %p275 = scmp.ne.s32.totalorder %s267, %s269
      %p276 = scmp.eq.s32.totalorder %s44, 3
      %p277 = por %p275, %p276
      %p278 = scmp.ne.s32.totalorder %s269, %s270
      %p279 = scmp.eq.s32.totalorder %s44, 0
      %p280 = por %p278, %p279
      %p281 = scmp.ne.s32.totalorder %s269, %s270
      %p282 = scmp.eq.s32.totalorder %s45, 3
      %p283 = por %p281, %p282
      %p285 = scmp.ne.s32.totalorder %s270, %s284
      %p286 = scmp.eq.s32.totalorder %s45, 0
      %p287 = por %p285, %p286
      %s289 = sadd.s32 %s288, 1
      %p292 = scmp.eq.s32.totalorder %s39, 3
      %p293 = scmp.ne.s32.totalorder %s288, %s290
      %p294 = scmp.eq.s32.totalorder %s39, 0
      %p295 = por %p293, %p294
      %p296 = scmp.ne.s32.totalorder %s288, %s290
      %p297 = scmp.eq.s32.totalorder %s44, 3
      %p298 = por %p296, %p297
      %p299 = scmp.ne.s32.totalorder %s290, %s291
      %p300 = scmp.eq.s32.totalorder %s44, 0
      %p301 = por %p299, %p300
      %p302 = scmp.ne.s32.totalorder %s290, %s291
      %p303 = scmp.eq.s32.totalorder %s45, 3
      %p304 = por %p302, %p303
      %p306 = scmp.ne.s32.totalorder %s291, %s305
      %p307 = scmp.eq.s32.totalorder %s45, 0
      %p308 = por %p306, %p307
      %s310 = sadd.s32 %s309, 1
      %p313 = scmp.eq.s32.totalorder %s39, 3
      %p314 = scmp.ne.s32.totalorder %s309, %s311
      %p315 = scmp.eq.s32.totalorder %s39, 0
      %p316 = por %p314, %p315
      %p317 = scmp.ne.s32.totalorder %s309, %s311
      %p318 = scmp.eq.s32.totalorder %s44, 3
      %p319 = por %p317, %p318
      %p320 = scmp.ne.s32.totalorder %s311, %s312
      %p321 = scmp.eq.s32.totalorder %s44, 0
      %p322 = por %p320, %p321
      %p323 = scmp.ne.s32.totalorder %s311, %s312
      %p324 = scmp.eq.s32.totalorder %s45, 3
      %p325 = por %p323, %p324
      %p327 = scmp.ne.s32.totalorder %s312, %s326
      %p328 = scmp.eq.s32.totalorder %s45, 0
      %p329 = por %p327, %p328
      %s331 = sadd.s32 %s330, 1
      %p334 = scmp.eq.s32.totalorder %s39, 3
      %p335 = scmp.ne.s32.totalorder %s330, %s332
      %p336 = scmp.eq.s32.totalorder %s39, 0
      %p337 = por %p335, %p336
      %p338 = scmp.ne.s32.totalorder %s330, %s332
      %p339 = scmp.eq.s32.totalorder %s44, 3
      %p340 = por %p338, %p339
      %p341 = scmp.ne.s32.totalorder %s332, %s333
      %p342 = scmp.eq.s32.totalorder %s44, 0
      %p343 = por %p341, %p342
      %p344 = scmp.ne.s32.totalorder %s332, %s333
      %p345 = scmp.eq.s32.totalorder %s45, 3
      %p346 = por %p344, %p345
      %p348 = scmp.ne.s32.totalorder %s333, %s347
      %p349 = scmp.eq.s32.totalorder %s45, 0
      %p350 = por %p348, %p349
      %s352 = sadd.s32 %s351, 1
      %p355 = scmp.eq.s32.totalorder %s39, 3
      %p356 = scmp.ne.s32.totalorder %s351, %s353
      %p357 = scmp.eq.s32.totalorder %s39, 0
      %p358 = por %p356, %p357
      %p359 = scmp.ne.s32.totalorder %s351, %s353
      %p360 = scmp.eq.s32.totalorder %s44, 3
      %p361 = por %p359, %p360
      %p362 = scmp.ne.s32.totalorder %s353, %s354
      %p363 = scmp.eq.s32.totalorder %s44, 0
      %p364 = por %p362, %p363
      %p365 = scmp.ne.s32.totalorder %s353, %s354
      %p366 = scmp.eq.s32.totalorder %s45, 3
      %p367 = por %p365, %p366
      %p369 = scmp.ne.s32.totalorder %s354, %s368
      %p370 = scmp.eq.s32.totalorder %s45, 0
      %p371 = por %p369, %p370
      %s373 = sadd.s32 %s372, 1
      %p376 = scmp.eq.s32.totalorder %s39, 3
      %p377 = scmp.ne.s32.totalorder %s372, %s374
      %p378 = scmp.eq.s32.totalorder %s39, 0
      %p379 = por %p377, %p378
      %p380 = scmp.ne.s32.totalorder %s372, %s374
      %p381 = scmp.eq.s32.totalorder %s44, 3
      %p382 = por %p380, %p381
      %p383 = scmp.ne.s32.totalorder %s374, %s375
      %p384 = scmp.eq.s32.totalorder %s44, 0
      %p385 = por %p383, %p384
      %p386 = scmp.ne.s32.totalorder %s374, %s375
      %p387 = scmp.eq.s32.totalorder %s45, 3
      %p388 = por %p386, %p387
      %p390 = scmp.ne.s32.totalorder %s375, %s389
      %p391 = scmp.eq.s32.totalorder %s45, 0
      %p392 = por %p390, %p391
      %s394 = sadd.s32 %s393, 1
      %p397 = scmp.eq.s32.totalorder %s39, 3
      %p398 = scmp.ne.s32.totalorder %s393, %s395
      %p399 = scmp.eq.s32.totalorder %s39, 0
      %p400 = por %p398, %p399
      %p401 = scmp.ne.s32.totalorder %s393, %s395
      %p402 = scmp.eq.s32.totalorder %s44, 3
      %p403 = por %p401, %p402
      %p404 = scmp.ne.s32.totalorder %s395, %s396
      %p405 = scmp.eq.s32.totalorder %s44, 0
      %p406 = por %p404, %p405
      %p407 = scmp.ne.s32.totalorder %s395, %s396
      %p408 = scmp.eq.s32.totalorder %s45, 3
      %p409 = por %p407, %p408
      %p411 = scmp.ne.s32.totalorder %s396, %s410
      %p412 = scmp.eq.s32.totalorder %s45, 0
      %p413 = por %p411, %p412
      %s415 = sadd.s32 %s414, 1
      %p418 = scmp.eq.s32.totalorder %s39, 3
      %p419 = scmp.ne.s32.totalorder %s414, %s416
      %p420 = scmp.eq.s32.totalorder %s39, 0
      %p421 = por %p419, %p420
      %p422 = scmp.ne.s32.totalorder %s414, %s416
      %p423 = scmp.eq.s32.totalorder %s44, 3
      %p424 = por %p422, %p423
      %p425 = scmp.ne.s32.totalorder %s416, %s417
      %p426 = scmp.eq.s32.totalorder %s44, 0
      %p427 = por %p425, %p426
      %p428 = scmp.ne.s32.totalorder %s416, %s417
      %p429 = scmp.eq.s32.totalorder %s45, 3
      %p430 = por %p428, %p429
      %p432 = scmp.ne.s32.totalorder %s417, %s431
      %p433 = scmp.eq.s32.totalorder %s45, 0
      %p434 = por %p432, %p433
      %s436 = sadd.s32 %s435, 1
      %p439 = scmp.eq.s32.totalorder %s39, 3
      %p440 = scmp.ne.s32.totalorder %s435, %s437
      %p441 = scmp.eq.s32.totalorder %s39, 0
      %p442 = por %p440, %p441
      %p443 = scmp.ne.s32.totalorder %s435, %s437
      %p444 = scmp.eq.s32.totalorder %s44, 3
      %p445 = por %p443, %p444
      %p446 = scmp.ne.s32.totalorder %s437, %s438
      %p447 = scmp.eq.s32.totalorder %s44, 0
      %p448 = por %p446, %p447
      %p449 = scmp.ne.s32.totalorder %s437, %s438
      %p450 = scmp.eq.s32.totalorder %s45, 3
      %p451 = por %p449, %p450
      %p453 = scmp.ne.s32.totalorder %s438, %s452
      %p454 = scmp.eq.s32.totalorder %s45, 0
      %p455 = por %p453, %p454
      %s457 = sadd.s32 %s456, 1
      %p460 = scmp.eq.s32.totalorder %s39, 3
      %p461 = scmp.ne.s32.totalorder %s456, %s458
      %p462 = scmp.eq.s32.totalorder %s39, 0
      %p463 = por %p461, %p462
      %p464 = scmp.ne.s32.totalorder %s456, %s458
      %p465 = scmp.eq.s32.totalorder %s44, 3
      %p466 = por %p464, %p465
      %p467 = scmp.ne.s32.totalorder %s458, %s459
      %p468 = scmp.eq.s32.totalorder %s44, 0
      %p469 = por %p467, %p468
      %p470 = scmp.ne.s32.totalorder %s458, %s459
      %p471 = scmp.eq.s32.totalorder %s45, 3
      %p472 = por %p470, %p471
      %p474 = scmp.ne.s32.totalorder %s459, %s473
      %p475 = scmp.eq.s32.totalorder %s45, 0
      %p476 = por %p474, %p475
      %s478 = sadd.s32 %s477, 1
      %p481 = scmp.eq.s32.totalorder %s39, 3
      %p482 = scmp.ne.s32.totalorder %s477, %s479
      %p483 = scmp.eq.s32.totalorder %s39, 0
      %p484 = por %p482, %p483
      %p485 = scmp.ne.s32.totalorder %s477, %s479
      %p486 = scmp.eq.s32.totalorder %s44, 3
      %p487 = por %p485, %p486
      %p488 = scmp.ne.s32.totalorder %s479, %s480
      %p489 = scmp.eq.s32.totalorder %s44, 0
      %p490 = por %p488, %p489
      %p491 = scmp.ne.s32.totalorder %s479, %s480
      %p492 = scmp.eq.s32.totalorder %s45, 3
      %p493 = por %p491, %p492
      %p495 = scmp.ne.s32.totalorder %s480, %s494
      %p496 = scmp.eq.s32.totalorder %s45, 0
      %p497 = por %p495, %p496
      %s499 = sadd.s32 %s498, 1
      %p502 = scmp.eq.s32.totalorder %s39, 3
      %p503 = scmp.ne.s32.totalorder %s498, %s500
      %p504 = scmp.eq.s32.totalorder %s39, 0
      %p505 = por %p503, %p504
      %p506 = scmp.ne.s32.totalorder %s498, %s500
      %p507 = scmp.eq.s32.totalorder %s44, 3
      %p508 = por %p506, %p507
      %p509 = scmp.ne.s32.totalorder %s500, %s501
      %p510 = scmp.eq.s32.totalorder %s44, 0
      %p511 = por %p509, %p510
      %p512 = scmp.ne.s32.totalorder %s500, %s501
      %p513 = scmp.eq.s32.totalorder %s45, 3
      %p514 = por %p512, %p513
      %p516 = scmp.ne.s32.totalorder %s501, %s515
      %p517 = scmp.eq.s32.totalorder %s45, 0
      %p518 = por %p516, %p517
      %p519 = scmp.le.s32.totalorder 1, %s39
      %p520 = scmp.lt.s32.totalorder %s39, 5
      %p521 = pnand %p519, %p520
      %p522 = pneg %p521
      // Predicated region
      $region9: #{hybrid_forest_forward.3} parent=5 // pred_check
        _
      $region10: #{hybrid_forest_forward.3} parent=5 // pred_check_branch
        %524 = sbr.rel (%p521) target = $region12
      $region11: #{hybrid_forest_forward.3} parent=5 // pred_region
        %s525 = ssub.s32 %s39, 1
        // Predicated region
        $region13: #{hybrid_forest_forward.3} parent=11 // pred_check
          %p526 = pneg %p112
        $region14: #{hybrid_forest_forward.3} parent=11 // pred_check_branch
          %528 = sbr.rel (%p526) target = $region16
        $region15: #{hybrid_forest_forward.3} parent=11 // pred_region
          _
        $region16: #{hybrid_forest_forward.3} parent=11 // pred_fallthru
          _
        // Predicated region
        $region17: #{hybrid_forest_forward.3} parent=11 // pred_check
          %p529 = pneg %p133
        $region18: #{hybrid_forest_forward.3} parent=11 // pred_check_branch
          %531 = sbr.rel (%p529) target = $region20
        $region19: #{hybrid_forest_forward.3} parent=11 // pred_region
          _
        $region20: #{hybrid_forest_forward.3} parent=11 // pred_fallthru
          _
        // Predicated region
        $region21: #{hybrid_forest_forward.3} parent=11 // pred_check
          %p532 = pneg %p154
        $region22: #{hybrid_forest_forward.3} parent=11 // pred_check_branch
          %534 = sbr.rel (%p532) target = $region24
        $region23: #{hybrid_forest_forward.3} parent=11 // pred_region
          %s536 = ssub.s32 64, 64
          %537 = vsyncadd [#allocation6], %s536
          %540 = dma.hbm_to_smem %s4, 64, [#allocation7], [#allocation6]
        $region24: #{hybrid_forest_forward.3} parent=11 // pred_fallthru
          _
        // Predicated region
        $region25: #{hybrid_forest_forward.3} parent=11 // pred_check
          %p541 = pneg %p175
        $region26: #{hybrid_forest_forward.3} parent=11 // pred_check_branch
          %543 = sbr.rel (%p541) target = $region28
        $region27: #{hybrid_forest_forward.3} parent=11 // pred_region
          %s545 = ssub.s32 16, 16
          %546 = vsyncadd [#allocation9], %s545
          %549 = dma.hbm_to_smem %s5, 16, [#allocation8], [#allocation9]
        $region28: #{hybrid_forest_forward.3} parent=11 // pred_fallthru
          _
        // Predicated region
        $region29: #{hybrid_forest_forward.3} parent=11 // pred_check
          %p550 = pneg %p196
        $region30: #{hybrid_forest_forward.3} parent=11 // pred_check_branch
          %552 = sbr.rel (%p550) target = $region32
        $region31: #{hybrid_forest_forward.3} parent=11 // pred_region
          %s554 = ssub.s32 128, 128
          %555 = vsyncadd [#allocation11], %s554
          %s557 = sshll.u32 [#allocation10], 4
          %s558 = int_to_ptr.vmem [resolvable:$true] %s557
          %560 = dma.hbm_to_vmem [thread:$0]  %s6, 128, %s558, [#allocation11]
        $region32: #{hybrid_forest_forward.3} parent=11 // pred_fallthru
          _
        // Predicated region
        $region33: #{hybrid_forest_forward.3} parent=11 // pred_check
          %p561 = pneg %p217
        $region34: #{hybrid_forest_forward.3} parent=11 // pred_check_branch
          %563 = sbr.rel (%p561) target = $region36
        $region35: #{hybrid_forest_forward.3} parent=11 // pred_region
          %s565 = ssub.s32 16, 16
          %566 = vsyncadd [#allocation11], %s565
          %s568 = sshll.u32 [#allocation12], 4
          %s569 = int_to_ptr.vmem [resolvable:$true] %s568
          %571 = dma.hbm_to_vmem [thread:$0]  %s7, 16, %s569, [#allocation11]
        $region36: #{hybrid_forest_forward.3} parent=11 // pred_fallthru
          _
        // Predicated region
        $region37: #{hybrid_forest_forward.3} parent=11 // pred_check
          %p572 = pneg %p238
        $region38: #{hybrid_forest_forward.3} parent=11 // pred_check_branch
          %574 = sbr.rel (%p572) target = $region40
        $region39: #{hybrid_forest_forward.3} parent=11 // pred_region
          _
        $region40: #{hybrid_forest_forward.3} parent=11 // pred_fallthru
          _
        // Predicated region
        $region41: #{hybrid_forest_forward.3} parent=11 // pred_check
          %p575 = pneg %p259
        $region42: #{hybrid_forest_forward.3} parent=11 // pred_check_branch
          %577 = sbr.rel (%p575) target = $region44
        $region43: #{hybrid_forest_forward.3} parent=11 // pred_region
          %s579 = ssub.s32 16, 16
          %580 = vsyncadd [#allocation14], %s579
          %s582 = sshll.u32 [#allocation13], 4
          %s583 = int_to_ptr.vmem [resolvable:$true] %s582
          %585 = dma.hbm_to_vmem [thread:$0]  %s9, 16, %s583, [#allocation14]
        $region44: #{hybrid_forest_forward.3} parent=11 // pred_fallthru
          _
        // Predicated region
        $region45: #{hybrid_forest_forward.3} parent=11 // pred_check
          %p586 = pneg %p280
        $region46: #{hybrid_forest_forward.3} parent=11 // pred_check_branch
          %588 = sbr.rel (%p586) target = $region48
        $region47: #{hybrid_forest_forward.3} parent=11 // pred_region
          %s590 = ssub.s32 2304, 2304
          %591 = vsyncadd [#allocation14], %s590
          %s592 = sshll.u32 [#allocation15], 4
          %s593 = int_to_ptr.vmem [resolvable:$true] %s592
          %598 = dma.hbm_to_vmem [thread:$0]  %s10, 2304, %s593, [#allocation14], 384, 384, 24
        $region48: #{hybrid_forest_forward.3} parent=11 // pred_fallthru
          _
        // Predicated region
        $region49: #{hybrid_forest_forward.3} parent=11 // pred_check
          %p599 = pneg %p301
        $region50: #{hybrid_forest_forward.3} parent=11 // pred_check_branch
          %601 = sbr.rel (%p599) target = $region52
        $region51: #{hybrid_forest_forward.3} parent=11 // pred_region
          %s603 = ssub.s32 96, 96
          %604 = vsyncadd [#allocation17], %s603
          %s606 = sshll.u32 [#allocation16], 4
          %s607 = int_to_ptr.vmem [resolvable:$true] %s606
          %609 = dma.hbm_to_vmem [thread:$0]  %s11, 96, %s607, [#allocation17]
        $region52: #{hybrid_forest_forward.3} parent=11 // pred_fallthru
          _
        // Predicated region
        $region53: #{hybrid_forest_forward.3} parent=11 // pred_check
          %p610 = pneg %p322
        $region54: #{hybrid_forest_forward.3} parent=11 // pred_check_branch
          %612 = sbr.rel (%p610) target = $region56
        $region55: #{hybrid_forest_forward.3} parent=11 // pred_region
          _
        $region56: #{hybrid_forest_forward.3} parent=11 // pred_fallthru
          _
        // Predicated region
        $region57: #{hybrid_forest_forward.3} parent=11 // pred_check
          %p613 = pneg %p343
        $region58: #{hybrid_forest_forward.3} parent=11 // pred_check_branch
          %615 = sbr.rel (%p613) target = $region60
        $region59: #{hybrid_forest_forward.3} parent=11 // pred_region
          %s617 = ssub.s32 256, 256
          %618 = vsyncadd [#allocation17], %s617
          %s620 = sshll.u32 [#allocation18], 4
          %s621 = int_to_ptr.vmem [resolvable:$true] %s620
          %623 = dma.hbm_to_vmem [thread:$0]  %s13, 256, %s621, [#allocation17]
        $region60: #{hybrid_forest_forward.3} parent=11 // pred_fallthru
          _
        // Predicated region
        $region61: #{hybrid_forest_forward.3} parent=11 // pred_check
          %p624 = pneg %p364
        $region62: #{hybrid_forest_forward.3} parent=11 // pred_check_branch
          %626 = sbr.rel (%p624) target = $region64
        $region63: #{hybrid_forest_forward.3} parent=11 // pred_region
          %s628 = ssub.s32 64, 64
          %629 = vsyncadd [#allocation20], %s628
          %s631 = sshll.u32 [#allocation19], 4
          %s632 = int_to_ptr.vmem [resolvable:$true] %s631
          %634 = dma.hbm_to_vmem [thread:$0]  %s14, 64, %s632, [#allocation20]
        $region64: #{hybrid_forest_forward.3} parent=11 // pred_fallthru
          _
        // Predicated region
        $region65: #{hybrid_forest_forward.3} parent=11 // pred_check
          %p635 = pneg %p385
        $region66: #{hybrid_forest_forward.3} parent=11 // pred_check_branch
          %637 = sbr.rel (%p635) target = $region68
        $region67: #{hybrid_forest_forward.3} parent=11 // pred_region
          %s639 = ssub.s32 64, 64
          %640 = vsyncadd [#allocation20], %s639
          %s642 = sshll.u32 [#allocation21], 4
          %s643 = int_to_ptr.vmem [resolvable:$true] %s642
          %645 = dma.hbm_to_vmem [thread:$0]  %s15, 64, %s643, [#allocation20]
        $region68: #{hybrid_forest_forward.3} parent=11 // pred_fallthru
          _
        // Predicated region
        $region69: #{hybrid_forest_forward.3} parent=11 // pred_check
          %p646 = pneg %p406
        $region70: #{hybrid_forest_forward.3} parent=11 // pred_check_branch
          %648 = sbr.rel (%p646) target = $region72
        $region71: #{hybrid_forest_forward.3} parent=11 // pred_region
          _
        $region72: #{hybrid_forest_forward.3} parent=11 // pred_fallthru
          _
        // Predicated region
        $region73: #{hybrid_forest_forward.3} parent=11 // pred_check
          %p649 = pneg %p427
        $region74: #{hybrid_forest_forward.3} parent=11 // pred_check_branch
          %651 = sbr.rel (%p649) target = $region76
        $region75: #{hybrid_forest_forward.3} parent=11 // pred_region
          %s653 = ssub.s32 32, 32
          %654 = vsyncadd [#allocation23], %s653
          %s656 = sshll.u32 [#allocation22], 4
          %s657 = int_to_ptr.vmem [resolvable:$true] %s656
          %659 = dma.hbm_to_vmem [thread:$0]  %s17, 32, %s657, [#allocation23]
        $region76: #{hybrid_forest_forward.3} parent=11 // pred_fallthru
          _
        // Predicated region
        $region77: #{hybrid_forest_forward.3} parent=11 // pred_check
          %p660 = pneg %p448
        $region78: #{hybrid_forest_forward.3} parent=11 // pred_check_branch
          %662 = sbr.rel (%p660) target = $region80
        $region79: #{hybrid_forest_forward.3} parent=11 // pred_region
          %s664 = ssub.s32 32, 32
          %665 = vsyncadd [#allocation23], %s664
          %s667 = sshll.u32 [#allocation24], 4
          %s668 = int_to_ptr.vmem [resolvable:$true] %s667
          %670 = dma.hbm_to_vmem [thread:$0]  %s18, 32, %s668, [#allocation23]
        $region80: #{hybrid_forest_forward.3} parent=11 // pred_fallthru
          _
        // Predicated region
        $region81: #{hybrid_forest_forward.3} parent=11 // pred_check
          %p671 = pneg %p469
        $region82: #{hybrid_forest_forward.3} parent=11 // pred_check_branch
          %673 = sbr.rel (%p671) target = $region84
        $region83: #{hybrid_forest_forward.3} parent=11 // pred_region
          _
        $region84: #{hybrid_forest_forward.3} parent=11 // pred_fallthru
          _
        // Predicated region
        $region85: #{hybrid_forest_forward.3} parent=11 // pred_check
          %p674 = pneg %p490
        $region86: #{hybrid_forest_forward.3} parent=11 // pred_check_branch
          %676 = sbr.rel (%p674) target = $region88
        $region87: #{hybrid_forest_forward.3} parent=11 // pred_region
          %s678 = ssub.s32 16, 16
          %679 = vsyncadd [#allocation26], %s678
          %s681 = sshll.u32 [#allocation25], 4
          %s682 = int_to_ptr.vmem [resolvable:$true] %s681
          %684 = dma.hbm_to_vmem [thread:$0]  %s20, 16, %s682, [#allocation26]
        $region88: #{hybrid_forest_forward.3} parent=11 // pred_fallthru
          _
      $region12: #{hybrid_forest_forward.3} parent=5 // pred_fallthru
        _
      %p685 = scmp.lt.s32.totalorder %s39, 4
      // Predicated region
      $region89: #{hybrid_forest_forward.3} parent=5 // pred_check
        %p686 = pneg %p685
      $region90: #{hybrid_forest_forward.3} parent=5 // pred_check_branch
        %688 = sbr.rel (%p686) target = $region92
      $region91: #{hybrid_forest_forward.3} parent=5 // pred_region
        // Predicated region
        $region93: #{hybrid_forest_forward.3} parent=91 // pred_check
          %p689 = pneg %p59
        $region94: #{hybrid_forest_forward.3} parent=91 // pred_check_branch
          %691 = sbr.rel (%p689) target = $region96
        $region95: #{hybrid_forest_forward.3} parent=91 // pred_region
          %s692 = smul.u32 4, %s39
          %p693 = scmp.lt.s32.totalorder %s692, 15
          %s694 = scalar_select %p693, %s692, 15
          %s695 = scalar_lea.vmem %s0, %s694
          %s696 = smul.u32 4, %s39
        $region96: #{hybrid_forest_forward.3} parent=91 // pred_fallthru
          _
        // Predicated region
        $region97: #{hybrid_forest_forward.3} parent=91 // pred_check
          %p697 = pneg %p85
        $region98: #{hybrid_forest_forward.3} parent=91 // pred_check_branch
          %699 = sbr.rel (%p697) target = $region100
        $region99: #{hybrid_forest_forward.3} parent=91 // pred_region
          %s700 = sand.u32 %s75, 1
          %s701 = scalar_lea.sflag [#allocation4], %s700
          %s702 = sand.u32 %s75, 1
          %s703 = smul.addr %s702, 1024
          %s704 = scalar_lea.vmem [#allocation3], %s703
          %s705 = smul.u32 64, %s39
          %s707 = ssub.s32 16384, 16384
          %708 = vsyncadd %s701, %s707
          %s709 = smul.addr %s705, 4
          %s710 = smul.addr %s709, 64
          %s711 = scalar_lea.hbm %s1, %s710
          %s712 = sshll.u32 %s704, 4
          %s713 = int_to_ptr.vmem [resolvable:$true] %s712
          %718 = dma.hbm_to_vmem [thread:$0]  %s711, 16384, %s713, %s701, 256, 256, 16
        $region100: #{hybrid_forest_forward.3} parent=91 // pred_fallthru
          _
      $region92: #{hybrid_forest_forward.3} parent=5 // pred_fallthru
        _
      %p719 = scmp.le.s32.totalorder 1, %s39
      %p720 = scmp.lt.s32.totalorder %s39, 5
      %p721 = pnand %p719, %p720
      %p722 = pneg %p721
      // Predicated region
      $region101: #{hybrid_forest_forward.3} parent=5 // pred_check
        _
      $region102: #{hybrid_forest_forward.3} parent=5 // pred_check_branch
        %724 = sbr.rel (%p721) target = $region104
      $region103: #{hybrid_forest_forward.3} parent=5 // pred_region
        %s725 = ssub.s32 %s39, 1
        %s726 = sand.u32 %s78, 1
        %s727 = scalar_lea.sflag [#allocation4], %s726
        %s728 = sand.u32 %s78, 1
        %s729 = smul.addr %s728, 1024
        %s730 = scalar_lea.vmem [#allocation3], %s729
        // Predicated region
        $region105: #{hybrid_forest_forward.3} parent=103 // pred_check
          %p731 = pneg %p91
        $region106: #{hybrid_forest_forward.3} parent=103 // pred_check_branch
          %733 = sbr.rel (%p731) target = $region108
        $region107: #{hybrid_forest_forward.3} parent=103 // pred_region
          %734 = dma.done %s727, 16384
        $region108: #{hybrid_forest_forward.3} parent=103 // pred_fallthru
          _
        // Predicated region
        $region109: #{hybrid_forest_forward.3} parent=103 // pred_check
          %p735 = pneg %p154
        $region110: #{hybrid_forest_forward.3} parent=103 // pred_check_branch
          %737 = sbr.rel (%p735) target = $region112
        $region111: #{hybrid_forest_forward.3} parent=103 // pred_region
          %738 = dma.done [#allocation6], 64
        $region112: #{hybrid_forest_forward.3} parent=103 // pred_fallthru
          _
        // Predicated region
        $region113: #{hybrid_forest_forward.3} parent=103 // pred_check
          %p739 = pneg %p175
        $region114: #{hybrid_forest_forward.3} parent=103 // pred_check_branch
          %741 = sbr.rel (%p739) target = $region116
        $region115: #{hybrid_forest_forward.3} parent=103 // pred_region
          %742 = dma.done [#allocation9], 16
        $region116: #{hybrid_forest_forward.3} parent=103 // pred_fallthru
          _
        // Predicated region
        $region117: #{hybrid_forest_forward.3} parent=103 // pred_check
          %p743 = pneg %p196
        $region118: #{hybrid_forest_forward.3} parent=103 // pred_check_branch
          %745 = sbr.rel (%p743) target = $region120
        $region119: #{hybrid_forest_forward.3} parent=103 // pred_region
          %746 = dma.done [#allocation11], 128
        $region120: #{hybrid_forest_forward.3} parent=103 // pred_fallthru
          _
        // Predicated region
        $region121: #{hybrid_forest_forward.3} parent=103 // pred_check
          %p747 = pneg %p217
        $region122: #{hybrid_forest_forward.3} parent=103 // pred_check_branch
          %749 = sbr.rel (%p747) target = $region124
        $region123: #{hybrid_forest_forward.3} parent=103 // pred_region
          %750 = dma.done [#allocation11], 16
        $region124: #{hybrid_forest_forward.3} parent=103 // pred_fallthru
          _
        // Predicated region
        $region125: #{hybrid_forest_forward.3} parent=103 // pred_check
          %p751 = pneg %p259
        $region126: #{hybrid_forest_forward.3} parent=103 // pred_check_branch
          %753 = sbr.rel (%p751) target = $region128
        $region127: #{hybrid_forest_forward.3} parent=103 // pred_region
          %754 = dma.done [#allocation14], 16
        $region128: #{hybrid_forest_forward.3} parent=103 // pred_fallthru
          _
        // Predicated region
        $region129: #{hybrid_forest_forward.3} parent=103 // pred_check
          %p755 = pneg %p280
        $region130: #{hybrid_forest_forward.3} parent=103 // pred_check_branch
          %757 = sbr.rel (%p755) target = $region132
        $region131: #{hybrid_forest_forward.3} parent=103 // pred_region
          %758 = dma.done [#allocation14], 2304
        $region132: #{hybrid_forest_forward.3} parent=103 // pred_fallthru
          _
        // Predicated region
        $region133: #{hybrid_forest_forward.3} parent=103 // pred_check
          %p759 = pneg %p301
        $region134: #{hybrid_forest_forward.3} parent=103 // pred_check_branch
          %761 = sbr.rel (%p759) target = $region136
        $region135: #{hybrid_forest_forward.3} parent=103 // pred_region
          %762 = dma.done [#allocation17], 96
        $region136: #{hybrid_forest_forward.3} parent=103 // pred_fallthru
          _
        // Predicated region
        $region137: #{hybrid_forest_forward.3} parent=103 // pred_check
          %p763 = pneg %p343
        $region138: #{hybrid_forest_forward.3} parent=103 // pred_check_branch
          %765 = sbr.rel (%p763) target = $region140
        $region139: #{hybrid_forest_forward.3} parent=103 // pred_region
          %766 = dma.done [#allocation17], 256
        $region140: #{hybrid_forest_forward.3} parent=103 // pred_fallthru
          _
        // Predicated region
        $region141: #{hybrid_forest_forward.3} parent=103 // pred_check
          %p767 = pneg %p364
        $region142: #{hybrid_forest_forward.3} parent=103 // pred_check_branch
          %769 = sbr.rel (%p767) target = $region144
        $region143: #{hybrid_forest_forward.3} parent=103 // pred_region
          %770 = dma.done [#allocation20], 64
        $region144: #{hybrid_forest_forward.3} parent=103 // pred_fallthru
          _
        // Predicated region
        $region145: #{hybrid_forest_forward.3} parent=103 // pred_check
          %p771 = pneg %p385
        $region146: #{hybrid_forest_forward.3} parent=103 // pred_check_branch
          %773 = sbr.rel (%p771) target = $region148
        $region147: #{hybrid_forest_forward.3} parent=103 // pred_region
          %774 = dma.done [#allocation20], 64
        $region148: #{hybrid_forest_forward.3} parent=103 // pred_fallthru
          _
        // Predicated region
        $region149: #{hybrid_forest_forward.3} parent=103 // pred_check
          %p775 = pneg %p427
        $region150: #{hybrid_forest_forward.3} parent=103 // pred_check_branch
          %777 = sbr.rel (%p775) target = $region152
        $region151: #{hybrid_forest_forward.3} parent=103 // pred_region
          %778 = dma.done [#allocation23], 32
        $region152: #{hybrid_forest_forward.3} parent=103 // pred_fallthru
          _
        // Predicated region
        $region153: #{hybrid_forest_forward.3} parent=103 // pred_check
          %p779 = pneg %p448
        $region154: #{hybrid_forest_forward.3} parent=103 // pred_check_branch
          %781 = sbr.rel (%p779) target = $region156
        $region155: #{hybrid_forest_forward.3} parent=103 // pred_region
          %782 = dma.done [#allocation23], 32
        $region156: #{hybrid_forest_forward.3} parent=103 // pred_fallthru
          _
        // Predicated region
        $region157: #{hybrid_forest_forward.3} parent=103 // pred_check
          %p783 = pneg %p490
        $region158: #{hybrid_forest_forward.3} parent=103 // pred_check_branch
          %785 = sbr.rel (%p783) target = $region160
        $region159: #{hybrid_forest_forward.3} parent=103 // pred_region
          %786 = dma.done [#allocation26], 16
        $region160: #{hybrid_forest_forward.3} parent=103 // pred_fallthru
          _
        %787 = sfence
        %s788 = smul.u32 4, %s44
        %p789 = scmp.lt.s32.totalorder %s788, 15
        %s790 = scalar_select %p789, %s788, 15
        %s791 = scalar_lea.vmem %s0, %s790
        %p792 = pneg %p65
        %p793 = pneg %p62
        %s794 = sand.u32 %s78, 1
        %s795 = scalar_lea.sflag [#allocation4], %s794
        %s796 = sand.u32 %s78, 1
        %s797 = smul.addr %s796, 1024
        %s798 = scalar_lea.vmem [#allocation3], %s797
        %p799 = pneg %p91
        %p800 = pneg %p88
        %p801 = pneg %p112
        %p802 = pneg %p109
        %p803 = pneg %p133
        %p804 = pneg %p130
        %p805 = pneg %p154
        %p806 = pneg %p151
        %p807 = pneg %p175
        %p808 = pneg %p172
        %p809 = pneg %p196
        %p810 = pneg %p193
        %p811 = pneg %p217
        %p812 = pneg %p214
        %p813 = pneg %p238
        %p814 = pneg %p235
        %p815 = pneg %p259
        %p816 = pneg %p256
        %p817 = pneg %p280
        %p818 = pneg %p277
        %p819 = pneg %p301
        %p820 = pneg %p298
        %p821 = pneg %p322
        %p822 = pneg %p319
        %p823 = pneg %p343
        %p824 = pneg %p340
        %p825 = pneg %p364
        %p826 = pneg %p361
        %p827 = pneg %p385
        %p828 = pneg %p382
        %p829 = pneg %p406
        %p830 = pneg %p403
        %p831 = pneg %p427
        %p832 = pneg %p424
        %p833 = pneg %p448
        %p834 = pneg %p445
        %p835 = pneg %p469
        %p836 = pneg %p466
        %p837 = pneg %p490
        %p838 = pneg %p487
        %p839 = pneg %p511
        %p840 = pneg %p508
        %s841 = smul.u32 4, %s44
        %p842 = scmp.lt.s32.totalorder %s841, 15
        %s843 = scalar_select %p842, %s841, 15
        %s844 = scalar_lea.vmem %s0, %s843
        %s845 = smul.u32 4, %s44
        %s846 = smul.u32 64, %s44
        %p848 = scmp.eq.s32.totalorder %s44, 0
        // Predicated region
        $region161: #{hybrid_forest_forward.3} parent=103 // pred_check
          %p849 = pneg %p848
        $region162: #{hybrid_forest_forward.3} parent=103 // pred_check_branch
          %851 = sbr.rel (%p849) target = $region164
        $region163: #{hybrid_forest_forward.3} parent=103 // pred_region
          %852 = vst [vmem:[#allocation2] sm:$0xff] 0.0
        $region164: #{hybrid_forest_forward.3} parent=103 // pred_fallthru
          _
        %v853 = vld [vmem:[#allocation2] sm:$0xff]
        %v854 = vld [vmem:[%s844] sm:$0xf]
        %v855 = vld [vmem:[%s730] sm:$0xff]
        %v856 = vld [vmem:[%s730 + $0x8] sm:$0xff]
        %v857 = vld [vmem:[%s730 + $0x10] sm:$0xff]
        %v858 = vld [vmem:[%s730 + $0x18] sm:$0xff]
        %v859 = vld [vmem:[%s730 + $0x20] sm:$0xff]
        %v860 = vld [vmem:[%s730 + $0x28] sm:$0xff]
        %v861 = vld [vmem:[%s730 + $0x30] sm:$0xff]
        %v862 = vld [vmem:[%s730 + $0x38] sm:$0xff]
        %v863 = vld [vmem:[%s730 + $0x40] sm:$0xff]
        %v864 = vld [vmem:[%s730 + $0x48] sm:$0xff]
        %v865 = vld [vmem:[%s730 + $0x50] sm:$0xff]
        %v866 = vld [vmem:[%s730 + $0x58] sm:$0xff]
        %v867 = vld [vmem:[%s730 + $0x60] sm:$0xff]
        %v868 = vld [vmem:[%s730 + $0x68] sm:$0xff]
        %v869 = vld [vmem:[%s730 + $0x70] sm:$0xff]
        %v870 = vld [vmem:[%s730 + $0x78] sm:$0xff]
        %v871 = vld [vmem:[%s730 + $0x80] sm:$0xff]
        %v872 = vld [vmem:[%s730 + $0x88] sm:$0xff]
        %v873 = vld [vmem:[%s730 + $0x90] sm:$0xff]
        %v874 = vld [vmem:[%s730 + $0x98] sm:$0xff]
        %v875 = vld [vmem:[%s730 + $0xa0] sm:$0xff]
        %v876 = vld [vmem:[%s730 + $0xa8] sm:$0xff]
        %v877 = vld [vmem:[%s730 + $0xb0] sm:$0xff]
        %v878 = vld [vmem:[%s730 + $0xb8] sm:$0xff]
        %v879 = vld [vmem:[%s730 + $0xc0] sm:$0xff]
        %v880 = vld [vmem:[%s730 + $0xc8] sm:$0xff]
        %v881 = vld [vmem:[%s730 + $0xd0] sm:$0xff]
        %v882 = vld [vmem:[%s730 + $0xd8] sm:$0xff]
        %v883 = vld [vmem:[%s730 + $0xe0] sm:$0xff]
        %v884 = vld [vmem:[%s730 + $0xe8] sm:$0xff]
        %v885 = vld [vmem:[%s730 + $0xf0] sm:$0xff]
        %v886 = vld [vmem:[%s730 + $0xf8] sm:$0xff]
        %v887 = vld [vmem:[%s730 + $0x100] sm:$0xff]
        %v888 = vld [vmem:[%s730 + $0x108] sm:$0xff]
        %v889 = vld [vmem:[%s730 + $0x110] sm:$0xff]
        %v890 = vld [vmem:[%s730 + $0x118] sm:$0xff]
        %v891 = vld [vmem:[%s730 + $0x120] sm:$0xff]
        %v892 = vld [vmem:[%s730 + $0x128] sm:$0xff]
        %v893 = vld [vmem:[%s730 + $0x130] sm:$0xff]
        %v894 = vld [vmem:[%s730 + $0x138] sm:$0xff]
        %v895 = vld [vmem:[%s730 + $0x140] sm:$0xff]
        %v896 = vld [vmem:[%s730 + $0x148] sm:$0xff]
        %v897 = vld [vmem:[%s730 + $0x150] sm:$0xff]
        %v898 = vld [vmem:[%s730 + $0x158] sm:$0xff]
        %v899 = vld [vmem:[%s730 + $0x160] sm:$0xff]
        %v900 = vld [vmem:[%s730 + $0x168] sm:$0xff]
        %v901 = vld [vmem:[%s730 + $0x170] sm:$0xff]
        %v902 = vld [vmem:[%s730 + $0x178] sm:$0xff]
        %v903 = vld [vmem:[%s730 + $0x180] sm:$0xff]
        %v904 = vld [vmem:[%s730 + $0x188] sm:$0xff]
        %v905 = vld [vmem:[%s730 + $0x190] sm:$0xff]
        %v906 = vld [vmem:[%s730 + $0x198] sm:$0xff]
        %v907 = vld [vmem:[%s730 + $0x1a0] sm:$0xff]
        %v908 = vld [vmem:[%s730 + $0x1a8] sm:$0xff]
        %v909 = vld [vmem:[%s730 + $0x1b0] sm:$0xff]
        %v910 = vld [vmem:[%s730 + $0x1b8] sm:$0xff]
        %v911 = vld [vmem:[%s730 + $0x1c0] sm:$0xff]
        %v912 = vld [vmem:[%s730 + $0x1c8] sm:$0xff]
        %v913 = vld [vmem:[%s730 + $0x1d0] sm:$0xff]
        %v914 = vld [vmem:[%s730 + $0x1d8] sm:$0xff]
        %v915 = vld [vmem:[%s730 + $0x1e0] sm:$0xff]
        %v916 = vld [vmem:[%s730 + $0x1e8] sm:$0xff]
        %v917 = vld [vmem:[%s730 + $0x1f0] sm:$0xff]
        %v918 = vld [vmem:[%s730 + $0x1f8] sm:$0xff]
        %v919 = vld [vmem:[%s730 + $0x200] sm:$0xff]
        %v920 = vld [vmem:[%s730 + $0x208] sm:$0xff]
        %v921 = vld [vmem:[%s730 + $0x210] sm:$0xff]
        %v922 = vld [vmem:[%s730 + $0x218] sm:$0xff]
        %v923 = vld [vmem:[%s730 + $0x220] sm:$0xff]
        %v924 = vld [vmem:[%s730 + $0x228] sm:$0xff]
        %v925 = vld [vmem:[%s730 + $0x230] sm:$0xff]
        %v926 = vld [vmem:[%s730 + $0x238] sm:$0xff]
        %v927 = vld [vmem:[%s730 + $0x240] sm:$0xff]
        %v928 = vld [vmem:[%s730 + $0x248] sm:$0xff]
        %v929 = vld [vmem:[%s730 + $0x250] sm:$0xff]
        %v930 = vld [vmem:[%s730 + $0x258] sm:$0xff]
        %v931 = vld [vmem:[%s730 + $0x260] sm:$0xff]
        %v932 = vld [vmem:[%s730 + $0x268] sm:$0xff]
        %v933 = vld [vmem:[%s730 + $0x270] sm:$0xff]
        %v934 = vld [vmem:[%s730 + $0x278] sm:$0xff]
        %v935 = vld [vmem:[%s730 + $0x280] sm:$0xff]
        %v936 = vld [vmem:[%s730 + $0x288] sm:$0xff]
        %v937 = vld [vmem:[%s730 + $0x290] sm:$0xff]
        %v938 = vld [vmem:[%s730 + $0x298] sm:$0xff]
        %v939 = vld [vmem:[%s730 + $0x2a0] sm:$0xff]
        %v940 = vld [vmem:[%s730 + $0x2a8] sm:$0xff]
        %v941 = vld [vmem:[%s730 + $0x2b0] sm:$0xff]
        %v942 = vld [vmem:[%s730 + $0x2b8] sm:$0xff]
        %v943 = vld [vmem:[%s730 + $0x2c0] sm:$0xff]
        %v944 = vld [vmem:[%s730 + $0x2c8] sm:$0xff]
        %v945 = vld [vmem:[%s730 + $0x2d0] sm:$0xff]
        %v946 = vld [vmem:[%s730 + $0x2d8] sm:$0xff]
        %v947 = vld [vmem:[%s730 + $0x2e0] sm:$0xff]
        %v948 = vld [vmem:[%s730 + $0x2e8] sm:$0xff]
        %v949 = vld [vmem:[%s730 + $0x2f0] sm:$0xff]
        %v950 = vld [vmem:[%s730 + $0x2f8] sm:$0xff]
        %v951 = vld [vmem:[%s730 + $0x300] sm:$0xff]
        %v952 = vld [vmem:[%s730 + $0x308] sm:$0xff]
        %v953 = vld [vmem:[%s730 + $0x310] sm:$0xff]
        %v954 = vld [vmem:[%s730 + $0x318] sm:$0xff]
        %v955 = vld [vmem:[%s730 + $0x320] sm:$0xff]
        %v956 = vld [vmem:[%s730 + $0x328] sm:$0xff]
        %v957 = vld [vmem:[%s730 + $0x330] sm:$0xff]
        %v958 = vld [vmem:[%s730 + $0x338] sm:$0xff]
        %v959 = vld [vmem:[%s730 + $0x340] sm:$0xff]
        %v960 = vld [vmem:[%s730 + $0x348] sm:$0xff]
        %v961 = vld [vmem:[%s730 + $0x350] sm:$0xff]
        %v962 = vld [vmem:[%s730 + $0x358] sm:$0xff]
        %v963 = vld [vmem:[%s730 + $0x360] sm:$0xff]
        %v964 = vld [vmem:[%s730 + $0x368] sm:$0xff]
        %v965 = vld [vmem:[%s730 + $0x370] sm:$0xff]
        %v966 = vld [vmem:[%s730 + $0x378] sm:$0xff]
        %v967 = vld [vmem:[%s730 + $0x380] sm:$0xff]
        %v968 = vld [vmem:[%s730 + $0x388] sm:$0xff]
        %v969 = vld [vmem:[%s730 + $0x390] sm:$0xff]
        %v970 = vld [vmem:[%s730 + $0x398] sm:$0xff]
        %v971 = vld [vmem:[%s730 + $0x3a0] sm:$0xff]
        %v972 = vld [vmem:[%s730 + $0x3a8] sm:$0xff]
        %v973 = vld [vmem:[%s730 + $0x3b0] sm:$0xff]
        %v974 = vld [vmem:[%s730 + $0x3b8] sm:$0xff]
        %v975 = vld [vmem:[%s730 + $0x3c0] sm:$0xff]
        %v976 = vld [vmem:[%s730 + $0x3c8] sm:$0xff]
        %v977 = vld [vmem:[%s730 + $0x3d0] sm:$0xff]
        %v978 = vld [vmem:[%s730 + $0x3d8] sm:$0xff]
        %v979 = vld [vmem:[%s730 + $0x3e0] sm:$0xff]
        %v980 = vld [vmem:[%s730 + $0x3e8] sm:$0xff]
        %v981 = vld [vmem:[%s730 + $0x3f0] sm:$0xff]
        %v982 = vld [vmem:[%s730 + $0x3f8] sm:$0xff]
        %v985 = vunpack.c.l.s4 1966171168
        %v986 = vunpack.c.0.s8 %v985
        %v987 = vlaneseq
        %v988 = vshrl.u32 %v987, 7
        %v989 = vsub.s32 %v986, %v988
        %v990 = vrot.slane %v854, %v989
        %v991 = vcombine.high %v990, %v990
        %v993 = vunpack.c.l.s4 1966171168
        %v994 = vunpack.c.0.s8 %v993
        %v995 = vlaneseq
        %v996 = vshrl.u32 %v995, 7
        %v997 = vsub.s32 %v994, %v996
        %v998 = vrot.slane %v990, %v997
        %v1000 = vunpack.c.l.s4 1966171168
        %v1001 = vunpack.c.0.s8 %v1000
        %v1002 = vlaneseq
        %v1003 = vshrl.u32 %v1002, 7
        %v1004 = vsub.s32 %v1001, %v1003
        %v1005 = vrot.slane %v991, %v1004
        %v1006 = vcombine.high %v998, %v998
        %v1007 = vcombine.high %v1005, %v1005
        %v1140 = vunpack.c.l.b16 %v855
        %v1141 = vunpack.c.h.b16 %v855
        %v1142 = vunpack.c.l.b16 %v856
        %v1143 = vunpack.c.h.b16 %v856
        %v1144 = vunpack.c.l.b16 %v857
        %v1145 = vunpack.c.h.b16 %v857
        %v1146 = vunpack.c.l.b16 %v858
        %v1147 = vunpack.c.h.b16 %v858
        %v1148 = vunpack.c.l.b16 %v859
        %v1149 = vunpack.c.h.b16 %v859
        %v1150 = vunpack.c.l.b16 %v860
        %v1151 = vunpack.c.h.b16 %v860
        %v1152 = vunpack.c.l.b16 %v861
        %v1153 = vunpack.c.h.b16 %v861
        %v1154 = vunpack.c.l.b16 %v862
        %v1155 = vunpack.c.h.b16 %v862
        %v1156 = vunpack.c.l.b16 %v863
        %v1157 = vunpack.c.h.b16 %v863
        %v1158 = vunpack.c.l.b16 %v864
        %v1159 = vunpack.c.h.b16 %v864
        %v1160 = vunpack.c.l.b16 %v865
        %v1161 = vunpack.c.h.b16 %v865
        %v1162 = vunpack.c.l.b16 %v866
        %v1163 = vunpack.c.h.b16 %v866
        %v1164 = vunpack.c.l.b16 %v867
        %v1165 = vunpack.c.h.b16 %v867
        %v1166 = vunpack.c.l.b16 %v868
        %v1167 = vunpack.c.h.b16 %v868
        %v1168 = vunpack.c.l.b16 %v869
        %v1169 = vunpack.c.h.b16 %v869
        %v1170 = vunpack.c.l.b16 %v870
        %v1171 = vunpack.c.h.b16 %v870
        %v1172 = vunpack.c.l.b16 %v871
        %v1173 = vunpack.c.h.b16 %v871
        %v1174 = vunpack.c.l.b16 %v872
        %v1175 = vunpack.c.h.b16 %v872
        %v1176 = vunpack.c.l.b16 %v873
        %v1177 = vunpack.c.h.b16 %v873
        %v1178 = vunpack.c.l.b16 %v874
        %v1179 = vunpack.c.h.b16 %v874
        %v1180 = vunpack.c.l.b16 %v875
        %v1181 = vunpack.c.h.b16 %v875
        %v1182 = vunpack.c.l.b16 %v876
        %v1183 = vunpack.c.h.b16 %v876
        %v1184 = vunpack.c.l.b16 %v877
        %v1185 = vunpack.c.h.b16 %v877
        %v1186 = vunpack.c.l.b16 %v878
        %v1187 = vunpack.c.h.b16 %v878
        %v1188 = vunpack.c.l.b16 %v879
        %v1189 = vunpack.c.h.b16 %v879
        %v1190 = vunpack.c.l.b16 %v880
        %v1191 = vunpack.c.h.b16 %v880
        %v1192 = vunpack.c.l.b16 %v881
        %v1193 = vunpack.c.h.b16 %v881
        %v1194 = vunpack.c.l.b16 %v882
        %v1195 = vunpack.c.h.b16 %v882
        %v1196 = vunpack.c.l.b16 %v883
        %v1197 = vunpack.c.h.b16 %v883
        %v1198 = vunpack.c.l.b16 %v884
        %v1199 = vunpack.c.h.b16 %v884
        %v1200 = vunpack.c.l.b16 %v885
        %v1201 = vunpack.c.h.b16 %v885
        %v1202 = vunpack.c.l.b16 %v886
        %v1203 = vunpack.c.h.b16 %v886
        %v1204 = vunpack.c.l.b16 %v887
        %v1205 = vunpack.c.h.b16 %v887
        %v1206 = vunpack.c.l.b16 %v888
        %v1207 = vunpack.c.h.b16 %v888
        %v1208 = vunpack.c.l.b16 %v889
        %v1209 = vunpack.c.h.b16 %v889
        %v1210 = vunpack.c.l.b16 %v890
        %v1211 = vunpack.c.h.b16 %v890
        %v1212 = vunpack.c.l.b16 %v891
        %v1213 = vunpack.c.h.b16 %v891
        %v1214 = vunpack.c.l.b16 %v892
        %v1215 = vunpack.c.h.b16 %v892
        %v1216 = vunpack.c.l.b16 %v893
        %v1217 = vunpack.c.h.b16 %v893
        %v1218 = vunpack.c.l.b16 %v894
        %v1219 = vunpack.c.h.b16 %v894
        %v1220 = vunpack.c.l.b16 %v895
        %v1221 = vunpack.c.h.b16 %v895
        %v1222 = vunpack.c.l.b16 %v896
        %v1223 = vunpack.c.h.b16 %v896
        %v1224 = vunpack.c.l.b16 %v897
        %v1225 = vunpack.c.h.b16 %v897
        %v1226 = vunpack.c.l.b16 %v898
        %v1227 = vunpack.c.h.b16 %v898
        %v1228 = vunpack.c.l.b16 %v899
        %v1229 = vunpack.c.h.b16 %v899
        %v1230 = vunpack.c.l.b16 %v900
        %v1231 = vunpack.c.h.b16 %v900
        %v1232 = vunpack.c.l.b16 %v901
        %v1233 = vunpack.c.h.b16 %v901
        %v1234 = vunpack.c.l.b16 %v902
        %v1235 = vunpack.c.h.b16 %v902
        %v1236 = vunpack.c.l.b16 %v903
        %v1237 = vunpack.c.h.b16 %v903
        %v1238 = vunpack.c.l.b16 %v904
        %v1239 = vunpack.c.h.b16 %v904
        %v1240 = vunpack.c.l.b16 %v905
        %v1241 = vunpack.c.h.b16 %v905
        %v1242 = vunpack.c.l.b16 %v906
        %v1243 = vunpack.c.h.b16 %v906
        %v1244 = vunpack.c.l.b16 %v907
        %v1245 = vunpack.c.h.b16 %v907
        %v1246 = vunpack.c.l.b16 %v908
        %v1247 = vunpack.c.h.b16 %v908
        %v1248 = vunpack.c.l.b16 %v909
        %v1249 = vunpack.c.h.b16 %v909
        %v1250 = vunpack.c.l.b16 %v910
        %v1251 = vunpack.c.h.b16 %v910
        %v1252 = vunpack.c.l.b16 %v911
        %v1253 = vunpack.c.h.b16 %v911
        %v1254 = vunpack.c.l.b16 %v912
        %v1255 = vunpack.c.h.b16 %v912
        %v1256 = vunpack.c.l.b16 %v913
        %v1257 = vunpack.c.h.b16 %v913
        %v1258 = vunpack.c.l.b16 %v914
        %v1259 = vunpack.c.h.b16 %v914
        %v1260 = vunpack.c.l.b16 %v915
        %v1261 = vunpack.c.h.b16 %v915
        %v1262 = vunpack.c.l.b16 %v916
        %v1263 = vunpack.c.h.b16 %v916
        %v1264 = vunpack.c.l.b16 %v917
        %v1265 = vunpack.c.h.b16 %v917
        %v1266 = vunpack.c.l.b16 %v918
        %v1267 = vunpack.c.h.b16 %v918
        %v1268 = vunpack.c.l.b16 %v919
        %v1269 = vunpack.c.h.b16 %v919
        %v1270 = vunpack.c.l.b16 %v920
        %v1271 = vunpack.c.h.b16 %v920
        %v1272 = vunpack.c.l.b16 %v921
        %v1273 = vunpack.c.h.b16 %v921
        %v1274 = vunpack.c.l.b16 %v922
        %v1275 = vunpack.c.h.b16 %v922
        %v1276 = vunpack.c.l.b16 %v923
        %v1277 = vunpack.c.h.b16 %v923
        %v1278 = vunpack.c.l.b16 %v924
        %v1279 = vunpack.c.h.b16 %v924
        %v1280 = vunpack.c.l.b16 %v925
        %v1281 = vunpack.c.h.b16 %v925
        %v1282 = vunpack.c.l.b16 %v926
        %v1283 = vunpack.c.h.b16 %v926
        %v1284 = vunpack.c.l.b16 %v927
        %v1285 = vunpack.c.h.b16 %v927
        %v1286 = vunpack.c.l.b16 %v928
        %v1287 = vunpack.c.h.b16 %v928
        %v1288 = vunpack.c.l.b16 %v929
        %v1289 = vunpack.c.h.b16 %v929
        %v1290 = vunpack.c.l.b16 %v930
        %v1291 = vunpack.c.h.b16 %v930
        %v1292 = vunpack.c.l.b16 %v931
        %v1293 = vunpack.c.h.b16 %v931
        %v1294 = vunpack.c.l.b16 %v932
        %v1295 = vunpack.c.h.b16 %v932
        %v1296 = vunpack.c.l.b16 %v933
        %v1297 = vunpack.c.h.b16 %v933
        %v1298 = vunpack.c.l.b16 %v934
        %v1299 = vunpack.c.h.b16 %v934
        %v1300 = vunpack.c.l.b16 %v935
        %v1301 = vunpack.c.h.b16 %v935
        %v1302 = vunpack.c.l.b16 %v936
        %v1303 = vunpack.c.h.b16 %v936
        %v1304 = vunpack.c.l.b16 %v937
        %v1305 = vunpack.c.h.b16 %v937
        %v1306 = vunpack.c.l.b16 %v938
        %v1307 = vunpack.c.h.b16 %v938
        %v1308 = vunpack.c.l.b16 %v939
        %v1309 = vunpack.c.h.b16 %v939
        %v1310 = vunpack.c.l.b16 %v940
        %v1311 = vunpack.c.h.b16 %v940
        %v1312 = vunpack.c.l.b16 %v941
        %v1313 = vunpack.c.h.b16 %v941
        %v1314 = vunpack.c.l.b16 %v942
        %v1315 = vunpack.c.h.b16 %v942
        %v1316 = vunpack.c.l.b16 %v943
        %v1317 = vunpack.c.h.b16 %v943
        %v1318 = vunpack.c.l.b16 %v944
        %v1319 = vunpack.c.h.b16 %v944
        %v1320 = vunpack.c.l.b16 %v945
        %v1321 = vunpack.c.h.b16 %v945
        %v1322 = vunpack.c.l.b16 %v946
        %v1323 = vunpack.c.h.b16 %v946
        %v1324 = vunpack.c.l.b16 %v947
        %v1325 = vunpack.c.h.b16 %v947
        %v1326 = vunpack.c.l.b16 %v948
        %v1327 = vunpack.c.h.b16 %v948
        %v1328 = vunpack.c.l.b16 %v949
        %v1329 = vunpack.c.h.b16 %v949
        %v1330 = vunpack.c.l.b16 %v950
        %v1331 = vunpack.c.h.b16 %v950
        %v1332 = vunpack.c.l.b16 %v951
        %v1333 = vunpack.c.h.b16 %v951
        %v1334 = vunpack.c.l.b16 %v952
        %v1335 = vunpack.c.h.b16 %v952
        %v1336 = vunpack.c.l.b16 %v953
        %v1337 = vunpack.c.h.b16 %v953
        %v1338 = vunpack.c.l.b16 %v954
        %v1339 = vunpack.c.h.b16 %v954
        %v1340 = vunpack.c.l.b16 %v955
        %v1341 = vunpack.c.h.b16 %v955
        %v1342 = vunpack.c.l.b16 %v956
        %v1343 = vunpack.c.h.b16 %v956
        %v1344 = vunpack.c.l.b16 %v957
        %v1345 = vunpack.c.h.b16 %v957
        %v1346 = vunpack.c.l.b16 %v958
        %v1347 = vunpack.c.h.b16 %v958
        %v1348 = vunpack.c.l.b16 %v959
        %v1349 = vunpack.c.h.b16 %v959
        %v1350 = vunpack.c.l.b16 %v960
        %v1351 = vunpack.c.h.b16 %v960
        %v1352 = vunpack.c.l.b16 %v961
        %v1353 = vunpack.c.h.b16 %v961
        %v1354 = vunpack.c.l.b16 %v962
        %v1355 = vunpack.c.h.b16 %v962
        %v1356 = vunpack.c.l.b16 %v963
        %v1357 = vunpack.c.h.b16 %v963
        %v1358 = vunpack.c.l.b16 %v964
        %v1359 = vunpack.c.h.b16 %v964
        %v1360 = vunpack.c.l.b16 %v965
        %v1361 = vunpack.c.h.b16 %v965
        %v1362 = vunpack.c.l.b16 %v966
        %v1363 = vunpack.c.h.b16 %v966
        %v1364 = vunpack.c.l.b16 %v967
        %v1365 = vunpack.c.h.b16 %v967
        %v1366 = vunpack.c.l.b16 %v968
        %v1367 = vunpack.c.h.b16 %v968
        %v1368 = vunpack.c.l.b16 %v969
        %v1369 = vunpack.c.h.b16 %v969
        %v1370 = vunpack.c.l.b16 %v970
        %v1371 = vunpack.c.h.b16 %v970
        %v1372 = vunpack.c.l.b16 %v971
        %v1373 = vunpack.c.h.b16 %v971
        %v1374 = vunpack.c.l.b16 %v972
        %v1375 = vunpack.c.h.b16 %v972
        %v1376 = vunpack.c.l.b16 %v973
        %v1377 = vunpack.c.h.b16 %v973
        %v1378 = vunpack.c.l.b16 %v974
        %v1379 = vunpack.c.h.b16 %v974
        %v1380 = vunpack.c.l.b16 %v975
        %v1381 = vunpack.c.h.b16 %v975
        %v1382 = vunpack.c.l.b16 %v976
        %v1383 = vunpack.c.h.b16 %v976
        %v1384 = vunpack.c.l.b16 %v977
        %v1385 = vunpack.c.h.b16 %v977
        %v1386 = vunpack.c.l.b16 %v978
        %v1387 = vunpack.c.h.b16 %v978
        %v1388 = vunpack.c.l.b16 %v979
        %v1389 = vunpack.c.h.b16 %v979
        %v1390 = vunpack.c.l.b16 %v980
        %v1391 = vunpack.c.h.b16 %v980
        %v1392 = vunpack.c.l.b16 %v981
        %v1393 = vunpack.c.h.b16 %v981
        %v1394 = vunpack.c.l.b16 %v982
        %v1395 = vunpack.c.h.b16 %v982
        %v1396 = vpack.c.b16 %v1144, %v1140
        %v1397 = vpack.c.b16 %v1145, %v1141
        %v1398 = vpack.c.b16 %v1146, %v1142
        %v1399 = vpack.c.b16 %v1147, %v1143
        %v1400 = vpack.c.b16 %v1152, %v1148
        %v1401 = vpack.c.b16 %v1153, %v1149
        %v1402 = vpack.c.b16 %v1154, %v1150
        %v1403 = vpack.c.b16 %v1155, %v1151
        %v1404 = vpack.c.b16 %v1160, %v1156
        %v1405 = vpack.c.b16 %v1161, %v1157
        %v1406 = vpack.c.b16 %v1162, %v1158
        %v1407 = vpack.c.b16 %v1163, %v1159
        %v1408 = vpack.c.b16 %v1168, %v1164
        %v1409 = vpack.c.b16 %v1169, %v1165
        %v1410 = vpack.c.b16 %v1170, %v1166
        %v1411 = vpack.c.b16 %v1171, %v1167
        %v1412 = vpack.c.b16 %v1176, %v1172
        %v1413 = vpack.c.b16 %v1177, %v1173
        %v1414 = vpack.c.b16 %v1178, %v1174
        %v1415 = vpack.c.b16 %v1179, %v1175
        %v1416 = vpack.c.b16 %v1184, %v1180
        %v1417 = vpack.c.b16 %v1185, %v1181
        %v1418 = vpack.c.b16 %v1186, %v1182
        %v1419 = vpack.c.b16 %v1187, %v1183
        %v1420 = vpack.c.b16 %v1192, %v1188
        %v1421 = vpack.c.b16 %v1193, %v1189
        %v1422 = vpack.c.b16 %v1194, %v1190
        %v1423 = vpack.c.b16 %v1195, %v1191
        %v1424 = vpack.c.b16 %v1200, %v1196
        %v1425 = vpack.c.b16 %v1201, %v1197
        %v1426 = vpack.c.b16 %v1202, %v1198
        %v1427 = vpack.c.b16 %v1203, %v1199
        %v1428 = vpack.c.b16 %v1208, %v1204
        %v1429 = vpack.c.b16 %v1209, %v1205
        %v1430 = vpack.c.b16 %v1210, %v1206
        %v1431 = vpack.c.b16 %v1211, %v1207
        %v1432 = vpack.c.b16 %v1216, %v1212
        %v1433 = vpack.c.b16 %v1217, %v1213
        %v1434 = vpack.c.b16 %v1218, %v1214
        %v1435 = vpack.c.b16 %v1219, %v1215
        %v1436 = vpack.c.b16 %v1224, %v1220
        %v1437 = vpack.c.b16 %v1225, %v1221
        %v1438 = vpack.c.b16 %v1226, %v1222
        %v1439 = vpack.c.b16 %v1227, %v1223
        %v1440 = vpack.c.b16 %v1232, %v1228
        %v1441 = vpack.c.b16 %v1233, %v1229
        %v1442 = vpack.c.b16 %v1234, %v1230
        %v1443 = vpack.c.b16 %v1235, %v1231
        %v1444 = vpack.c.b16 %v1240, %v1236
        %v1445 = vpack.c.b16 %v1241, %v1237
        %v1446 = vpack.c.b16 %v1242, %v1238
        %v1447 = vpack.c.b16 %v1243, %v1239
        %v1448 = vpack.c.b16 %v1248, %v1244
        %v1449 = vpack.c.b16 %v1249, %v1245
        %v1450 = vpack.c.b16 %v1250, %v1246
        %v1451 = vpack.c.b16 %v1251, %v1247
        %v1452 = vpack.c.b16 %v1256, %v1252
        %v1453 = vpack.c.b16 %v1257, %v1253
        %v1454 = vpack.c.b16 %v1258, %v1254
        %v1455 = vpack.c.b16 %v1259, %v1255
        %v1456 = vpack.c.b16 %v1264, %v1260
        %v1457 = vpack.c.b16 %v1265, %v1261
        %v1458 = vpack.c.b16 %v1266, %v1262
        %v1459 = vpack.c.b16 %v1267, %v1263
        %v1460 = vpack.c.b16 %v1272, %v1268
        %v1461 = vpack.c.b16 %v1273, %v1269
        %v1462 = vpack.c.b16 %v1274, %v1270
        %v1463 = vpack.c.b16 %v1275, %v1271
        %v1464 = vpack.c.b16 %v1280, %v1276
        %v1465 = vpack.c.b16 %v1281, %v1277
        %v1466 = vpack.c.b16 %v1282, %v1278
        %v1467 = vpack.c.b16 %v1283, %v1279
        %v1468 = vpack.c.b16 %v1288, %v1284
        %v1469 = vpack.c.b16 %v1289, %v1285
        %v1470 = vpack.c.b16 %v1290, %v1286
        %v1471 = vpack.c.b16 %v1291, %v1287
        %v1472 = vpack.c.b16 %v1296, %v1292
        %v1473 = vpack.c.b16 %v1297, %v1293
        %v1474 = vpack.c.b16 %v1298, %v1294
        %v1475 = vpack.c.b16 %v1299, %v1295
        %v1476 = vpack.c.b16 %v1304, %v1300
        %v1477 = vpack.c.b16 %v1305, %v1301
        %v1478 = vpack.c.b16 %v1306, %v1302
        %v1479 = vpack.c.b16 %v1307, %v1303
        %v1480 = vpack.c.b16 %v1312, %v1308
        %v1481 = vpack.c.b16 %v1313, %v1309
        %v1482 = vpack.c.b16 %v1314, %v1310
        %v1483 = vpack.c.b16 %v1315, %v1311
        %v1484 = vpack.c.b16 %v1320, %v1316
        %v1485 = vpack.c.b16 %v1321, %v1317
        %v1486 = vpack.c.b16 %v1322, %v1318
        %v1487 = vpack.c.b16 %v1323, %v1319
        %v1488 = vpack.c.b16 %v1328, %v1324
        %v1489 = vpack.c.b16 %v1329, %v1325
        %v1490 = vpack.c.b16 %v1330, %v1326
        %v1491 = vpack.c.b16 %v1331, %v1327
        %v1492 = vpack.c.b16 %v1336, %v1332
        %v1493 = vpack.c.b16 %v1337, %v1333
        %v1494 = vpack.c.b16 %v1338, %v1334
        %v1495 = vpack.c.b16 %v1339, %v1335
        %v1496 = vpack.c.b16 %v1344, %v1340
        %v1497 = vpack.c.b16 %v1345, %v1341
        %v1498 = vpack.c.b16 %v1346, %v1342
        %v1499 = vpack.c.b16 %v1347, %v1343
        %v1500 = vpack.c.b16 %v1352, %v1348
        %v1501 = vpack.c.b16 %v1353, %v1349
        %v1502 = vpack.c.b16 %v1354, %v1350
        %v1503 = vpack.c.b16 %v1355, %v1351
        %v1504 = vpack.c.b16 %v1360, %v1356
        %v1505 = vpack.c.b16 %v1361, %v1357
        %v1506 = vpack.c.b16 %v1362, %v1358
        %v1507 = vpack.c.b16 %v1363, %v1359
        %v1508 = vpack.c.b16 %v1368, %v1364
        %v1509 = vpack.c.b16 %v1369, %v1365
        %v1510 = vpack.c.b16 %v1370, %v1366
        %v1511 = vpack.c.b16 %v1371, %v1367
        %v1512 = vpack.c.b16 %v1376, %v1372
        %v1513 = vpack.c.b16 %v1377, %v1373
        %v1514 = vpack.c.b16 %v1378, %v1374
        %v1515 = vpack.c.b16 %v1379, %v1375
        %v1516 = vpack.c.b16 %v1384, %v1380
        %v1517 = vpack.c.b16 %v1385, %v1381
        %v1518 = vpack.c.b16 %v1386, %v1382
        %v1519 = vpack.c.b16 %v1387, %v1383
        %v1520 = vpack.c.b16 %v1392, %v1388
        %v1521 = vpack.c.b16 %v1393, %v1389
        %v1522 = vpack.c.b16 %v1394, %v1390
        %v1523 = vpack.c.b16 %v1395, %v1391
        %1652 = vmatprep.subr.bf16.mxu0 %v1425
        %1653 = vmatpush1.bf16.msra.mxu0 %v1424
        %1654 = vmatprep.subr.bf16.mxu0 %v1421
        %1655 = vmatpush1.bf16.msra.mxu0 %v1420
        %1656 = vmatprep.subr.bf16.mxu0 %v1417
        %1657 = vmatpush1.bf16.msra.mxu0 %v1416
        %1658 = vmatprep.subr.bf16.mxu0 %v1413
        %1659 = vmatpush1.bf16.msra.mxu0 %v1412
        %1660 = vmatprep.subr.bf16.mxu0 %v1409
        %1661 = vmatpush1.bf16.msra.mxu0 %v1408
        %1662 = vmatprep.subr.bf16.mxu0 %v1405
        %1663 = vmatpush1.bf16.msra.mxu0 %v1404
        %1664 = vmatprep.subr.bf16.mxu0 %v1401
        %1665 = vmatpush1.bf16.msra.mxu0 %v1400
        %1666 = vmatprep.subr.bf16.mxu0 %v1397
        %1667 = vmatpush1.bf16.msra.mxu0 %v1396
        %1668 = vmatprep.subr.bf16.mxu0 %v1457
        %1669 = vmatpush2.bf16.msra.mxu0 %v1456
        %1670 = vmatprep.subr.bf16.mxu0 %v1453
        %1671 = vmatpush2.bf16.msra.mxu0 %v1452
        %1672 = vmatprep.subr.bf16.mxu0 %v1449
        %1673 = vmatpush2.bf16.msra.mxu0 %v1448
        %1674 = vmatprep.subr.bf16.mxu0 %v1445
        %1675 = vmatpush2.bf16.msra.mxu0 %v1444
        %1676 = vmatprep.subr.bf16.mxu0 %v1441
        %1677 = vmatpush2.bf16.msra.mxu0 %v1440
        %1678 = vmatprep.subr.bf16.mxu0 %v1437
        %1679 = vmatpush2.bf16.msra.mxu0 %v1436
        %1680 = vmatprep.subr.bf16.mxu0 %v1433
        %1681 = vmatpush2.bf16.msra.mxu0 %v1432
        %1682 = vmatprep.subr.bf16.mxu0 %v1429
        %1683 = vmatpush2.bf16.msra.mxu0 %v1428
        %1684 = vmatprep.mubr.bf16.mxu0 %v1005
        %1685 = vmatmul.mubr.bf16.gmra.mxu0 %v998
        %v1686 = vpop.f32.mrf.mxu0
        %v1687 = vadd.f32 0.0, %v1686
        %v1688 = vpop.f32.mrf.mxu0
        %v1689 = vadd.f32 0.0, %v1688
        %v1690 = vpop.f32.mrf.mxu0
        %v1691 = vpop.f32.mrf.mxu0
        %1692 = vdwg.mxu0
        %1693 = vmatprep.subr.bf16.mxu0 %v1489
        %1694 = vmatpush1.bf16.msra.mxu0 %v1488
        %1695 = vmatprep.subr.bf16.mxu0 %v1485
        %1696 = vmatpush1.bf16.msra.mxu0 %v1484
        %1697 = vmatprep.subr.bf16.mxu0 %v1481
        %1698 = vmatpush1.bf16.msra.mxu0 %v1480
        %1699 = vmatprep.subr.bf16.mxu0 %v1477
        %1700 = vmatpush1.bf16.msra.mxu0 %v1476
        %1701 = vmatprep.subr.bf16.mxu0 %v1473
        %1702 = vmatpush1.bf16.msra.mxu0 %v1472
        %1703 = vmatprep.subr.bf16.mxu0 %v1469
        %1704 = vmatpush1.bf16.msra.mxu0 %v1468
        %1705 = vmatprep.subr.bf16.mxu0 %v1465
        %1706 = vmatpush1.bf16.msra.mxu0 %v1464
        %1707 = vmatprep.subr.bf16.mxu0 %v1461
        %1708 = vmatpush1.bf16.msra.mxu0 %v1460
        %1709 = vmatprep.subr.bf16.mxu0 %v1521
        %1710 = vmatpush2.bf16.msra.mxu0 %v1520
        %1711 = vmatprep.subr.bf16.mxu0 %v1517
        %1712 = vmatpush2.bf16.msra.mxu0 %v1516
        %1713 = vmatprep.subr.bf16.mxu0 %v1513
        %1714 = vmatpush2.bf16.msra.mxu0 %v1512
        %1715 = vmatprep.subr.bf16.mxu0 %v1509
        %1716 = vmatpush2.bf16.msra.mxu0 %v1508
        %1717 = vmatprep.subr.bf16.mxu0 %v1505
        %1718 = vmatpush2.bf16.msra.mxu0 %v1504
        %1719 = vmatprep.subr.bf16.mxu0 %v1501
        %1720 = vmatpush2.bf16.msra.mxu0 %v1500
        %1721 = vmatprep.subr.bf16.mxu0 %v1497
        %1722 = vmatpush2.bf16.msra.mxu0 %v1496
        %1723 = vmatprep.subr.bf16.mxu0 %v1493
        %1724 = vmatpush2.bf16.msra.mxu0 %v1492
        %1725 = vmatprep.mubr.bf16.mxu0 %v1007
        %1726 = vmatmul.mubr.bf16.gmra.mxu0 %v1006
        %v1727 = vpop.f32.mrf.mxu0
        %v1728 = vadd.f32 %v1687, %v1727
        %v1729 = vpop.f32.mrf.mxu0
        %v1730 = vadd.f32 %v1689, %v1729
        %v1731 = vpop.f32.mrf.mxu0
        %v1732 = vpop.f32.mrf.mxu0
        %1733 = vdwg.mxu0
        %1734 = vmatprep.subr.bf16.mxu0 %v1427
        %1735 = vmatpush1.bf16.msra.mxu0 %v1426
        %1736 = vmatprep.subr.bf16.mxu0 %v1423
        %1737 = vmatpush1.bf16.msra.mxu0 %v1422
        %1738 = vmatprep.subr.bf16.mxu0 %v1419
        %1739 = vmatpush1.bf16.msra.mxu0 %v1418
        %1740 = vmatprep.subr.bf16.mxu0 %v1415
        %1741 = vmatpush1.bf16.msra.mxu0 %v1414
        %1742 = vmatprep.subr.bf16.mxu0 %v1411
        %1743 = vmatpush1.bf16.msra.mxu0 %v1410
        %1744 = vmatprep.subr.bf16.mxu0 %v1407
        %1745 = vmatpush1.bf16.msra.mxu0 %v1406
        %1746 = vmatprep.subr.bf16.mxu0 %v1403
        %1747 = vmatpush1.bf16.msra.mxu0 %v1402
        %1748 = vmatprep.subr.bf16.mxu0 %v1399
        %1749 = vmatpush1.bf16.msra.mxu0 %v1398
        %1750 = vmatprep.subr.bf16.mxu0 %v1459
        %1751 = vmatpush2.bf16.msra.mxu0 %v1458
        %1752 = vmatprep.subr.bf16.mxu0 %v1455
        %1753 = vmatpush2.bf16.msra.mxu0 %v1454
        %1754 = vmatprep.subr.bf16.mxu0 %v1451
        %1755 = vmatpush2.bf16.msra.mxu0 %v1450
        %1756 = vmatprep.subr.bf16.mxu0 %v1447
        %1757 = vmatpush2.bf16.msra.mxu0 %v1446
        %1758 = vmatprep.subr.bf16.mxu0 %v1443
        %1759 = vmatpush2.bf16.msra.mxu0 %v1442
        %1760 = vmatprep.subr.bf16.mxu0 %v1439
        %1761 = vmatpush2.bf16.msra.mxu0 %v1438
        %1762 = vmatprep.subr.bf16.mxu0 %v1435
        %1763 = vmatpush2.bf16.msra.mxu0 %v1434
        %1764 = vmatprep.subr.bf16.mxu0 %v1431
        %1765 = vmatpush2.bf16.msra.mxu0 %v1430
        %1766 = vmatprep.mubr.bf16.mxu0 %v1005
        %1767 = vmatmul.mubr.bf16.gmra.mxu0 %v998
        %v1768 = vpop.f32.mrf.mxu0
        %v1769 = vadd.f32 0.0, %v1768
        %v1770 = vpop.f32.mrf.mxu0
        %v1771 = vadd.f32 0.0, %v1770
        %v1772 = vpop.f32.mrf.mxu0
        %v1773 = vpop.f32.mrf.mxu0
        %1774 = vdwg.mxu0
        %1775 = vmatprep.subr.bf16.mxu0 %v1491
        %1776 = vmatpush1.bf16.msra.mxu0 %v1490
        %1777 = vmatprep.subr.bf16.mxu0 %v1487
        %1778 = vmatpush1.bf16.msra.mxu0 %v1486
        %1779 = vmatprep.subr.bf16.mxu0 %v1483
        %1780 = vmatpush1.bf16.msra.mxu0 %v1482
        %1781 = vmatprep.subr.bf16.mxu0 %v1479
        %1782 = vmatpush1.bf16.msra.mxu0 %v1478
        %1783 = vmatprep.subr.bf16.mxu0 %v1475
        %1784 = vmatpush1.bf16.msra.mxu0 %v1474
        %1785 = vmatprep.subr.bf16.mxu0 %v1471
        %1786 = vmatpush1.bf16.msra.mxu0 %v1470
        %1787 = vmatprep.subr.bf16.mxu0 %v1467
        %1788 = vmatpush1.bf16.msra.mxu0 %v1466
        %1789 = vmatprep.subr.bf16.mxu0 %v1463
        %1790 = vmatpush1.bf16.msra.mxu0 %v1462
        %1791 = vmatprep.subr.bf16.mxu0 %v1523
        %1792 = vmatpush2.bf16.msra.mxu0 %v1522
        %1793 = vmatprep.subr.bf16.mxu0 %v1519
        %1794 = vmatpush2.bf16.msra.mxu0 %v1518
        %1795 = vmatprep.subr.bf16.mxu0 %v1515
        %1796 = vmatpush2.bf16.msra.mxu0 %v1514
        %1797 = vmatprep.subr.bf16.mxu0 %v1511
        %1798 = vmatpush2.bf16.msra.mxu0 %v1510
        %1799 = vmatprep.subr.bf16.mxu0 %v1507
        %1800 = vmatpush2.bf16.msra.mxu0 %v1506
        %1801 = vmatprep.subr.bf16.mxu0 %v1503
        %1802 = vmatpush2.bf16.msra.mxu0 %v1502
        %1803 = vmatprep.subr.bf16.mxu0 %v1499
        %1804 = vmatpush2.bf16.msra.mxu0 %v1498
        %1805 = vmatprep.subr.bf16.mxu0 %v1495
        %1806 = vmatpush2.bf16.msra.mxu0 %v1494
        %1807 = vmatprep.mubr.bf16.mxu0 %v1007
        %1808 = vmatmul.mubr.bf16.gmra.mxu0 %v1006
        %v1809 = vpop.f32.mrf.mxu0
        %v1810 = vadd.f32 %v1769, %v1809
        %v1811 = vpop.f32.mrf.mxu0
        %v1812 = vadd.f32 %v1771, %v1811
        %v1813 = vpop.f32.mrf.mxu0
        %v1814 = vpop.f32.mrf.mxu0
        %1815 = vdwg.mxu0
        %v1820 = vcombine.low %v1728, %v1730
        %v1821 = vcombine.low %v1810, %v1812
        %v1823 = vunpack.c.l.s4 1983009808
        %v1824 = vunpack.c.0.s8 %v1823
        %v1825 = vlaneseq
        %v1826 = vshrl.u32 %v1825, 7
        %v1827 = vsub.s32 %v1824, %v1826
        %v1828 = vrot.slane %v1820, %v1827
        %v1830 = vunpack.c.l.s4 1983009808
        %v1831 = vunpack.c.0.s8 %v1830
        %v1832 = vlaneseq
        %v1833 = vshrl.u32 %v1832, 7
        %v1834 = vsub.s32 %v1831, %v1833
        %v1835 = vrot.slane %v1821, %v1834
        %v1836 = vcombine.low %v1828, %v1835
        %v1838 = vadd.f32 %v853, %v1836
        %1839 = vst [vmem:[#allocation2] sm:$0xff] %v1838
        %p1840 = scmp.eq.s32.totalorder %s44, 3
        // Predicated region
        $region165: #{hybrid_forest_forward.3} parent=103 // pred_check
          %p1841 = pneg %p1840
        $region166: #{hybrid_forest_forward.3} parent=103 // pred_check_branch
          %1843 = sbr.rel (%p1841) target = $region168
        $region167: #{hybrid_forest_forward.3} parent=103 // pred_region
          %v1844 = vld [vmem:[%s3] sm:$0x77]
          %v1845 = vld [vmem:[%s3 + $0x8] sm:$0x77]
          %s1846 = sld [smem:[#allocation7]]
          %v1847 = vstv %s1846
          %v1848 = vmul.f32 %v1844, %v1847
          %v1849 = vmul.f32 %v1845, %v1847
          %s1850 = sld [smem:[#allocation7 + $0x80]]
          %v1851 = vstv %s1850
          %v1852 = vmul.f32 %v1844, %v1851
          %v1853 = vmul.f32 %v1845, %v1851
          %v1856 = vrot.slane %v1852, 5
          %v1857 = vrot.slane %v1856, 4
          %v1858 = vrot.slane %v1853, 5
          %v1859 = vrot.slane %v1858, 4
          %v1862 = vadd.f32 %v1848, %v1857
          %v1863 = vadd.f32 %v1849, %v1859
          %s1864 = sld [smem:[#allocation7 + $0x100]]
          %v1865 = vstv %s1864
          %v1866 = vmul.f32 %v1844, %v1865
          %v1867 = vmul.f32 %v1845, %v1865
          %v1870 = vrot.slane %v1866, 6
          %v1871 = vrot.slane %v1870, 4
          %v1872 = vrot.slane %v1867, 6
          %v1873 = vrot.slane %v1872, 4
          %v1876 = vadd.f32 %v1862, %v1871
          %v1877 = vadd.f32 %v1863, %v1873
          %s1878 = sld [smem:[#allocation8]]
          %v1879 = vstv %s1878
          %v1880 = vadd.f32 %v1876, %v1879
          %v1881 = vadd.f32 %v1877, %v1879
          %v1882 = vmax.f32 %v1880, 0.0
          %v1883 = vmax.f32 %v1881, 0.0
          %v1886 = vlaneseq
          %v1887 = vshrl.u32 %v1886, 7
          %v1888 = vsub.s32 0, %v1887
          %v1889 = vrot.slane %v1882, %v1888
          %v1890 = vlaneseq
          %v1891 = vshrl.u32 %v1890, 7
          %v1892 = vsub.s32 4, %v1891
          %v1893 = vrot.slane %v1882, %v1892
          %v1894 = vlaneseq
          %v1895 = vshrl.u32 %v1894, 7
          %v1896 = vsub.s32 0, %v1895
          %v1897 = vrot.slane %v1883, %v1896
          %v1898 = vlaneseq
          %v1899 = vshrl.u32 %v1898, 7
          %v1900 = vsub.s32 4, %v1899
          %v1901 = vrot.slane %v1883, %v1900
          %vm1902 = vcmask 1041409
          %v1903 = vsel %vm1902, %v1897, %v1889
          %v1904 = vsel %vm1902, %v1901, %v1893
          %vm1907 = vcmask 1041408
          %v1908 = vsel %vm1907, %v1903, 0.0
          %v1909 = vsel %vm1907, %v1904, 0.0
          %v1910 = vadd.f32 %v1908, %v1909
          %1911 = vadd.xlane.f32.xlu0 %v1910
          %v1912 = vpop.xlane.xlu0 %1911
          %v1913 = vrcp.pop 256.0
          %v1914 = vmul.f32 %v1912, %v1913
          %s1915 = sld [smem:[#allocation7 + $0x1]]
          %v1916 = vstv %s1915
          %v1917 = vmul.f32 %v1844, %v1916
          %v1918 = vmul.f32 %v1845, %v1916
          %s1919 = sld [smem:[#allocation7 + $0x81]]
          %v1920 = vstv %s1919
          %v1921 = vmul.f32 %v1844, %v1920
          %v1922 = vmul.f32 %v1845, %v1920
          %v1925 = vrot.slane %v1921, 5
          %v1926 = vrot.slane %v1925, 4
          %v1927 = vrot.slane %v1922, 5
          %v1928 = vrot.slane %v1927, 4
          %v1931 = vadd.f32 %v1917, %v1926
          %v1932 = vadd.f32 %v1918, %v1928
          %s1933 = sld [smem:[#allocation7 + $0x101]]
          %v1934 = vstv %s1933
          %v1935 = vmul.f32 %v1844, %v1934
          %v1936 = vmul.f32 %v1845, %v1934
          %v1939 = vrot.slane %v1935, 6
          %v1940 = vrot.slane %v1939, 4
          %v1941 = vrot.slane %v1936, 6
          %v1942 = vrot.slane %v1941, 4
          %v1945 = vadd.f32 %v1931, %v1940
          %v1946 = vadd.f32 %v1932, %v1942
          %s1947 = sld [smem:[#allocation8 + $0x1]]
          %v1948 = vstv %s1947
          %v1949 = vadd.f32 %v1945, %v1948
          %v1950 = vadd.f32 %v1946, %v1948
          %v1951 = vmax.f32 %v1949, 0.0
          %v1952 = vmax.f32 %v1950, 0.0
          %v1955 = vlaneseq
          %v1956 = vshrl.u32 %v1955, 7
          %v1957 = vsub.s32 0, %v1956
          %v1958 = vrot.slane %v1951, %v1957
          %v1959 = vlaneseq
          %v1960 = vshrl.u32 %v1959, 7
          %v1961 = vsub.s32 4, %v1960
          %v1962 = vrot.slane %v1951, %v1961
          %v1963 = vlaneseq
          %v1964 = vshrl.u32 %v1963, 7
          %v1965 = vsub.s32 0, %v1964
          %v1966 = vrot.slane %v1952, %v1965
          %v1967 = vlaneseq
          %v1968 = vshrl.u32 %v1967, 7
          %v1969 = vsub.s32 4, %v1968
          %v1970 = vrot.slane %v1952, %v1969
          %v1971 = vsel %vm1902, %v1966, %v1958
          %v1972 = vsel %vm1902, %v1970, %v1962
          %v1975 = vsel %vm1907, %v1971, 0.0
          %v1976 = vsel %vm1907, %v1972, 0.0
          %v1977 = vadd.f32 %v1975, %v1976
          %1978 = vadd.xlane.f32.xlu0 %v1977
          %v1979 = vpop.xlane.xlu0 %1978
          %v1980 = vmul.f32 %v1979, %v1913
          %s1981 = sld [smem:[#allocation7 + $0x2]]
          %v1982 = vstv %s1981
          %v1983 = vmul.f32 %v1844, %v1982
          %v1984 = vmul.f32 %v1845, %v1982
          %s1985 = sld [smem:[#allocation7 + $0x82]]
          %v1986 = vstv %s1985
          %v1987 = vmul.f32 %v1844, %v1986
          %v1988 = vmul.f32 %v1845, %v1986
          %v1991 = vrot.slane %v1987, 5
          %v1992 = vrot.slane %v1991, 4
          %v1993 = vrot.slane %v1988, 5
          %v1994 = vrot.slane %v1993, 4
          %v1997 = vadd.f32 %v1983, %v1992
          %v1998 = vadd.f32 %v1984, %v1994
          %s1999 = sld [smem:[#allocation7 + $0x102]]
          %v2000 = vstv %s1999
          %v2001 = vmul.f32 %v1844, %v2000
          %v2002 = vmul.f32 %v1845, %v2000
          %v2005 = vrot.slane %v2001, 6
          %v2006 = vrot.slane %v2005, 4
          %v2007 = vrot.slane %v2002, 6
          %v2008 = vrot.slane %v2007, 4
          %v2011 = vadd.f32 %v1997, %v2006
          %v2012 = vadd.f32 %v1998, %v2008
          %s2013 = sld [smem:[#allocation8 + $0x2]]
          %v2014 = vstv %s2013
          %v2015 = vadd.f32 %v2011, %v2014
          %v2016 = vadd.f32 %v2012, %v2014
          %v2017 = vmax.f32 %v2015, 0.0
          %v2018 = vmax.f32 %v2016, 0.0
          %v2021 = vlaneseq
          %v2022 = vshrl.u32 %v2021, 7
          %v2023 = vsub.s32 0, %v2022
          %v2024 = vrot.slane %v2017, %v2023
          %v2025 = vlaneseq
          %v2026 = vshrl.u32 %v2025, 7
          %v2027 = vsub.s32 4, %v2026
          %v2028 = vrot.slane %v2017, %v2027
          %v2029 = vlaneseq
          %v2030 = vshrl.u32 %v2029, 7
          %v2031 = vsub.s32 0, %v2030
          %v2032 = vrot.slane %v2018, %v2031
          %v2033 = vlaneseq
          %v2034 = vshrl.u32 %v2033, 7
          %v2035 = vsub.s32 4, %v2034
          %v2036 = vrot.slane %v2018, %v2035
          %v2037 = vsel %vm1902, %v2032, %v2024
          %v2038 = vsel %vm1902, %v2036, %v2028
          %v2041 = vsel %vm1907, %v2037, 0.0
          %v2042 = vsel %vm1907, %v2038, 0.0
          %v2043 = vadd.f32 %v2041, %v2042
          %2044 = vadd.xlane.f32.xlu0 %v2043
          %v2045 = vpop.xlane.xlu0 %2044
          %v2046 = vmul.f32 %v2045, %v1913
          %s2047 = sld [smem:[#allocation7 + $0x3]]
          %v2048 = vstv %s2047
          %v2049 = vmul.f32 %v1844, %v2048
          %v2050 = vmul.f32 %v1845, %v2048
          %s2051 = sld [smem:[#allocation7 + $0x83]]
          %v2052 = vstv %s2051
          %v2053 = vmul.f32 %v1844, %v2052
          %v2054 = vmul.f32 %v1845, %v2052
          %v2057 = vrot.slane %v2053, 5
          %v2058 = vrot.slane %v2057, 4
          %v2059 = vrot.slane %v2054, 5
          %v2060 = vrot.slane %v2059, 4
          %v2063 = vadd.f32 %v2049, %v2058
          %v2064 = vadd.f32 %v2050, %v2060
          %s2065 = sld [smem:[#allocation7 + $0x103]]
          %v2066 = vstv %s2065
          %v2067 = vmul.f32 %v1844, %v2066
          %v2068 = vmul.f32 %v1845, %v2066
          %v2071 = vrot.slane %v2067, 6
          %v2072 = vrot.slane %v2071, 4
          %v2073 = vrot.slane %v2068, 6
          %v2074 = vrot.slane %v2073, 4
          %v2077 = vadd.f32 %v2063, %v2072
          %v2078 = vadd.f32 %v2064, %v2074
          %s2079 = sld [smem:[#allocation8 + $0x3]]
          %v2080 = vstv %s2079
          %v2081 = vadd.f32 %v2077, %v2080
          %v2082 = vadd.f32 %v2078, %v2080
          %v2083 = vmax.f32 %v2081, 0.0
          %v2084 = vmax.f32 %v2082, 0.0
          %v2087 = vlaneseq
          %v2088 = vshrl.u32 %v2087, 7
          %v2089 = vsub.s32 0, %v2088
          %v2090 = vrot.slane %v2083, %v2089
          %v2091 = vlaneseq
          %v2092 = vshrl.u32 %v2091, 7
          %v2093 = vsub.s32 4, %v2092
          %v2094 = vrot.slane %v2083, %v2093
          %v2095 = vlaneseq
          %v2096 = vshrl.u32 %v2095, 7
          %v2097 = vsub.s32 0, %v2096
          %v2098 = vrot.slane %v2084, %v2097
          %v2099 = vlaneseq
          %v2100 = vshrl.u32 %v2099, 7
          %v2101 = vsub.s32 4, %v2100
          %v2102 = vrot.slane %v2084, %v2101
          %v2103 = vsel %vm1902, %v2098, %v2090
          %v2104 = vsel %vm1902, %v2102, %v2094
          %v2107 = vsel %vm1907, %v2103, 0.0
          %v2108 = vsel %vm1907, %v2104, 0.0
          %v2109 = vadd.f32 %v2107, %v2108
          %2110 = vadd.xlane.f32.xlu0 %v2109
          %v2111 = vpop.xlane.xlu0 %2110
          %v2112 = vmul.f32 %v2111, %v1913
          %s2113 = sld [smem:[#allocation7 + $0x4]]
          %v2114 = vstv %s2113
          %v2115 = vmul.f32 %v1844, %v2114
          %v2116 = vmul.f32 %v1845, %v2114
          %s2117 = sld [smem:[#allocation7 + $0x84]]
          %v2118 = vstv %s2117
          %v2119 = vmul.f32 %v1844, %v2118
          %v2120 = vmul.f32 %v1845, %v2118
          %v2123 = vrot.slane %v2119, 5
          %v2124 = vrot.slane %v2123, 4
          %v2125 = vrot.slane %v2120, 5
          %v2126 = vrot.slane %v2125, 4
          %v2129 = vadd.f32 %v2115, %v2124
          %v2130 = vadd.f32 %v2116, %v2126
          %s2131 = sld [smem:[#allocation7 + $0x104]]
          %v2132 = vstv %s2131
          %v2133 = vmul.f32 %v1844, %v2132
          %v2134 = vmul.f32 %v1845, %v2132
          %v2137 = vrot.slane %v2133, 6
          %v2138 = vrot.slane %v2137, 4
          %v2139 = vrot.slane %v2134, 6
          %v2140 = vrot.slane %v2139, 4
          %v2143 = vadd.f32 %v2129, %v2138
          %v2144 = vadd.f32 %v2130, %v2140
          %s2145 = sld [smem:[#allocation8 + $0x4]]
          %v2146 = vstv %s2145
          %v2147 = vadd.f32 %v2143, %v2146
          %v2148 = vadd.f32 %v2144, %v2146
          %v2149 = vmax.f32 %v2147, 0.0
          %v2150 = vmax.f32 %v2148, 0.0
          %v2153 = vlaneseq
          %v2154 = vshrl.u32 %v2153, 7
          %v2155 = vsub.s32 0, %v2154
          %v2156 = vrot.slane %v2149, %v2155
          %v2157 = vlaneseq
          %v2158 = vshrl.u32 %v2157, 7
          %v2159 = vsub.s32 4, %v2158
          %v2160 = vrot.slane %v2149, %v2159
          %v2161 = vlaneseq
          %v2162 = vshrl.u32 %v2161, 7
          %v2163 = vsub.s32 0, %v2162
          %v2164 = vrot.slane %v2150, %v2163
          %v2165 = vlaneseq
          %v2166 = vshrl.u32 %v2165, 7
          %v2167 = vsub.s32 4, %v2166
          %v2168 = vrot.slane %v2150, %v2167
          %v2169 = vsel %vm1902, %v2164, %v2156
          %v2170 = vsel %vm1902, %v2168, %v2160
          %v2173 = vsel %vm1907, %v2169, 0.0
          %v2174 = vsel %vm1907, %v2170, 0.0
          %v2175 = vadd.f32 %v2173, %v2174
          %2176 = vadd.xlane.f32.xlu0 %v2175
          %v2177 = vpop.xlane.xlu0 %2176
          %v2178 = vmul.f32 %v2177, %v1913
          %s2179 = sld [smem:[#allocation7 + $0x5]]
          %v2180 = vstv %s2179
          %v2181 = vmul.f32 %v1844, %v2180
          %v2182 = vmul.f32 %v1845, %v2180
          %s2183 = sld [smem:[#allocation7 + $0x85]]
          %v2184 = vstv %s2183
          %v2185 = vmul.f32 %v1844, %v2184
          %v2186 = vmul.f32 %v1845, %v2184
          %v2189 = vrot.slane %v2185, 5
          %v2190 = vrot.slane %v2189, 4
          %v2191 = vrot.slane %v2186, 5
          %v2192 = vrot.slane %v2191, 4
          %v2195 = vadd.f32 %v2181, %v2190
          %v2196 = vadd.f32 %v2182, %v2192
          %s2197 = sld [smem:[#allocation7 + $0x105]]
          %v2198 = vstv %s2197
          %v2199 = vmul.f32 %v1844, %v2198
          %v2200 = vmul.f32 %v1845, %v2198
          %v2203 = vrot.slane %v2199, 6
          %v2204 = vrot.slane %v2203, 4
          %v2205 = vrot.slane %v2200, 6
          %v2206 = vrot.slane %v2205, 4
          %v2209 = vadd.f32 %v2195, %v2204
          %v2210 = vadd.f32 %v2196, %v2206
          %s2211 = sld [smem:[#allocation8 + $0x5]]
          %v2212 = vstv %s2211
          %v2213 = vadd.f32 %v2209, %v2212
          %v2214 = vadd.f32 %v2210, %v2212
          %v2215 = vmax.f32 %v2213, 0.0
          %v2216 = vmax.f32 %v2214, 0.0
          %v2219 = vlaneseq
          %v2220 = vshrl.u32 %v2219, 7
          %v2221 = vsub.s32 0, %v2220
          %v2222 = vrot.slane %v2215, %v2221
          %v2223 = vlaneseq
          %v2224 = vshrl.u32 %v2223, 7
          %v2225 = vsub.s32 4, %v2224
          %v2226 = vrot.slane %v2215, %v2225
          %v2227 = vlaneseq
          %v2228 = vshrl.u32 %v2227, 7
          %v2229 = vsub.s32 0, %v2228
          %v2230 = vrot.slane %v2216, %v2229
          %v2231 = vlaneseq
          %v2232 = vshrl.u32 %v2231, 7
          %v2233 = vsub.s32 4, %v2232
          %v2234 = vrot.slane %v2216, %v2233
          %v2235 = vsel %vm1902, %v2230, %v2222
          %v2236 = vsel %vm1902, %v2234, %v2226
          %v2239 = vsel %vm1907, %v2235, 0.0
          %v2240 = vsel %vm1907, %v2236, 0.0
          %v2241 = vadd.f32 %v2239, %v2240
          %2242 = vadd.xlane.f32.xlu0 %v2241
          %v2243 = vpop.xlane.xlu0 %2242
          %v2244 = vmul.f32 %v2243, %v1913
          %s2245 = sld [smem:[#allocation7 + $0x6]]
          %v2246 = vstv %s2245
          %v2247 = vmul.f32 %v1844, %v2246
          %v2248 = vmul.f32 %v1845, %v2246
          %s2249 = sld [smem:[#allocation7 + $0x86]]
          %v2250 = vstv %s2249
          %v2251 = vmul.f32 %v1844, %v2250
          %v2252 = vmul.f32 %v1845, %v2250
          %v2255 = vrot.slane %v2251, 5
          %v2256 = vrot.slane %v2255, 4
          %v2257 = vrot.slane %v2252, 5
          %v2258 = vrot.slane %v2257, 4
          %v2261 = vadd.f32 %v2247, %v2256
          %v2262 = vadd.f32 %v2248, %v2258
          %s2263 = sld [smem:[#allocation7 + $0x106]]
          %v2264 = vstv %s2263
          %v2265 = vmul.f32 %v1844, %v2264
          %v2266 = vmul.f32 %v1845, %v2264
          %v2269 = vrot.slane %v2265, 6
          %v2270 = vrot.slane %v2269, 4
          %v2271 = vrot.slane %v2266, 6
          %v2272 = vrot.slane %v2271, 4
          %v2275 = vadd.f32 %v2261, %v2270
          %v2276 = vadd.f32 %v2262, %v2272
          %s2277 = sld [smem:[#allocation8 + $0x6]]
          %v2278 = vstv %s2277
          %v2279 = vadd.f32 %v2275, %v2278
          %v2280 = vadd.f32 %v2276, %v2278
          %v2281 = vmax.f32 %v2279, 0.0
          %v2282 = vmax.f32 %v2280, 0.0
          %v2285 = vlaneseq
          %v2286 = vshrl.u32 %v2285, 7
          %v2287 = vsub.s32 0, %v2286
          %v2288 = vrot.slane %v2281, %v2287
          %v2289 = vlaneseq
          %v2290 = vshrl.u32 %v2289, 7
          %v2291 = vsub.s32 4, %v2290
          %v2292 = vrot.slane %v2281, %v2291
          %v2293 = vlaneseq
          %v2294 = vshrl.u32 %v2293, 7
          %v2295 = vsub.s32 0, %v2294
          %v2296 = vrot.slane %v2282, %v2295
          %v2297 = vlaneseq
          %v2298 = vshrl.u32 %v2297, 7
          %v2299 = vsub.s32 4, %v2298
          %v2300 = vrot.slane %v2282, %v2299
          %v2301 = vsel %vm1902, %v2296, %v2288
          %v2302 = vsel %vm1902, %v2300, %v2292
          %v2305 = vsel %vm1907, %v2301, 0.0
          %v2306 = vsel %vm1907, %v2302, 0.0
          %v2307 = vadd.f32 %v2305, %v2306
          %2308 = vadd.xlane.f32.xlu0 %v2307
          %v2309 = vpop.xlane.xlu0 %2308
          %v2310 = vmul.f32 %v2309, %v1913
          %vm2311 = vcmask 7168
          %v2312 = vsel %vm2311, %v1914, %v1980
          %vm2313 = vcmask 15360
          %v2314 = vsel %vm2313, %v2312, %v2046
          %vm2315 = vcmask 23552
          %v2316 = vsel %vm2315, %v2314, %v2112
          %vm2317 = vcmask 31744
          %v2318 = vsel %vm2317, %v2316, %v2178
          %vm2319 = vcmask 39936
          %v2320 = vsel %vm2319, %v2318, %v2244
          %vm2321 = vcmask 48128
          %v2322 = vsel %vm2321, %v2320, %v2310
          %v2323 = vld [vmem:[#allocation10] sm:$0x7f]
          %v2324 = vld [vmem:[#allocation12] sm:$0x1]
          %v2326 = vlaneseq
          %v2327 = vshrl.u32 %v2326, 7
          %v2328 = vsub.s32 0, %v2327
          %v2329 = vrot.slane %v2324, %v2328
          %vm2331 = vcmask 56320
          %v2333 = vsel %vm2331, %v2322, 0
          %vm2335 = vcmask 1046528
          %v2337 = vsel %vm2335, %v2323, 0
          %2339 = vmatprep.subr.mxu0 0.0
          %2340 = vmatpush1.msra.mxu0 0.0
          %2341 = vmatprep.subr.mxu0 0.0
          %2342 = vmatpush1.msra.mxu0 0.0
          %2343 = vmatprep.subr.mxu0 0.0
          %2344 = vmatpush1.msra.mxu0 0.0
          %2345 = vmatprep.subr.mxu0 0.0
          %2346 = vmatpush1.msra.mxu0 0.0
          %2347 = vmatprep.subr.mxu0 0.0
          %2348 = vmatpush1.msra.mxu0 0.0
          %2349 = vmatprep.subr.mxu0 0.0
          %2350 = vmatpush1.msra.mxu0 0.0
          %2351 = vmatprep.subr.mxu0 0.0
          %2352 = vmatpush1.msra.mxu0 0.0
          %2353 = vmatprep.subr.mxu0 0.0
          %2354 = vmatpush1.msra.mxu0 0.0
          %2355 = vmatprep.subr.mxu0 0.0
          %2356 = vmatpush1.msra.mxu0 0.0
          %2357 = vmatprep.subr.mxu0 0.0
          %2358 = vmatpush1.msra.mxu0 0.0
          %2359 = vmatprep.subr.mxu0 0.0
          %2360 = vmatpush1.msra.mxu0 0.0
          %2361 = vmatprep.subr.mxu0 0.0
          %2362 = vmatpush1.msra.mxu0 0.0
          %2363 = vmatprep.subr.mxu0 0.0
          %2364 = vmatpush1.msra.mxu0 0.0
          %2365 = vmatprep.subr.mxu0 0.0
          %2366 = vmatpush1.msra.mxu0 0.0
          %2367 = vmatprep.subr.mxu0 0.0
          %2368 = vmatpush1.msra.mxu0 0.0
          %2369 = vmatprep.subr.mxu0 0.0
          %2370 = vmatpush1.msra.mxu0 %v2337
          %2371 = vmatprep.subr.mxu0 0.0
          %2372 = vmatpush2.msra.mxu0 0.0
          %2373 = vmatprep.subr.mxu0 0.0
          %2374 = vmatpush2.msra.mxu0 0.0
          %2375 = vmatprep.subr.mxu0 0.0
          %2376 = vmatpush2.msra.mxu0 0.0
          %2377 = vmatprep.subr.mxu0 0.0
          %2378 = vmatpush2.msra.mxu0 0.0
          %2379 = vmatprep.subr.mxu0 0.0
          %2380 = vmatpush2.msra.mxu0 0.0
          %2381 = vmatprep.subr.mxu0 0.0
          %2382 = vmatpush2.msra.mxu0 0.0
          %2383 = vmatprep.subr.mxu0 0.0
          %2384 = vmatpush2.msra.mxu0 0.0
          %2385 = vmatprep.subr.mxu0 0.0
          %2386 = vmatpush2.msra.mxu0 0.0
          %2387 = vmatprep.subr.mxu0 0.0
          %2388 = vmatpush2.msra.mxu0 0.0
          %2389 = vmatprep.subr.mxu0 0.0
          %2390 = vmatpush2.msra.mxu0 0.0
          %2391 = vmatprep.subr.mxu0 0.0
          %2392 = vmatpush2.msra.mxu0 0.0
          %2393 = vmatprep.subr.mxu0 0.0
          %2394 = vmatpush2.msra.mxu0 0.0
          %2395 = vmatprep.subr.mxu0 0.0
          %2396 = vmatpush2.msra.mxu0 0.0
          %2397 = vmatprep.subr.mxu0 0.0
          %2398 = vmatpush2.msra.mxu0 0.0
          %2399 = vmatprep.subr.mxu0 0.0
          %2400 = vmatpush2.msra.mxu0 0.0
          %2401 = vmatprep.subr.mxu0 0.0
          %2402 = vmatpush2.msra.mxu0 0.0
          %2403 = vmatprep.mubr.f32.mxu0 0.0
          %2404 = vmatmul.mubr.f32.gmra.mxu0 %v2333
          %v2405 = vpop.f32.mrf.mxu0
          %v2406 = vadd.f32 %v2329, %v2405
          %v2407 = vpop.f32.mrf.mxu0
          %2408 = vdwg.mxu0
          %v2409 = vmax.f32 %v2406, 0.0
          %v2410 = vld [vmem:[%s8] sm:$0xff]
          %v2411 = vld [vmem:[%s8 + $0x8] sm:$0xff]
          %v2412 = vld [vmem:[#allocation13] sm:$0x1]
          %v2414 = vlaneseq
          %v2415 = vshrl.u32 %v2414, 7
          %v2416 = vsub.s32 0, %v2415
          %v2417 = vrot.slane %v2412, %v2416
          %vm2419 = vcmask 130048
          %v2421 = vsel %vm2419, %v2409, 0
          %2423 = vmatprep.subr.mxu0 0.0
          %2424 = vmatpush1.msra.mxu0 0.0
          %2425 = vmatprep.subr.mxu0 0.0
          %2426 = vmatpush1.msra.mxu0 0.0
          %2427 = vmatprep.subr.mxu0 0.0
          %2428 = vmatpush1.msra.mxu0 0.0
          %2429 = vmatprep.subr.mxu0 0.0
          %2430 = vmatpush1.msra.mxu0 0.0
          %2431 = vmatprep.subr.mxu0 0.0
          %2432 = vmatpush1.msra.mxu0 0.0
          %2433 = vmatprep.subr.mxu0 0.0
          %2434 = vmatpush1.msra.mxu0 0.0
          %2435 = vmatprep.subr.mxu0 0.0
          %2436 = vmatpush1.msra.mxu0 0.0
          %2437 = vmatprep.subr.mxu0 0.0
          %2438 = vmatpush1.msra.mxu0 0.0
          %2439 = vmatprep.subr.mxu0 0.0
          %2440 = vmatpush1.msra.mxu0 0.0
          %2441 = vmatprep.subr.mxu0 0.0
          %2442 = vmatpush1.msra.mxu0 0.0
          %2443 = vmatprep.subr.mxu0 0.0
          %2444 = vmatpush1.msra.mxu0 0.0
          %2445 = vmatprep.subr.mxu0 0.0
          %2446 = vmatpush1.msra.mxu0 0.0
          %2447 = vmatprep.subr.mxu0 0.0
          %2448 = vmatpush1.msra.mxu0 0.0
          %2449 = vmatprep.subr.mxu0 0.0
          %2450 = vmatpush1.msra.mxu0 0.0
          %2451 = vmatprep.subr.mxu0 0.0
          %2452 = vmatpush1.msra.mxu0 %v2411
          %2453 = vmatprep.subr.mxu0 0.0
          %2454 = vmatpush1.msra.mxu0 %v2410
          %2455 = vmatprep.subr.mxu0 0.0
          %2456 = vmatpush2.msra.mxu0 0.0
          %2457 = vmatprep.subr.mxu0 0.0
          %2458 = vmatpush2.msra.mxu0 0.0
          %2459 = vmatprep.subr.mxu0 0.0
          %2460 = vmatpush2.msra.mxu0 0.0
          %2461 = vmatprep.subr.mxu0 0.0
          %2462 = vmatpush2.msra.mxu0 0.0
          %2463 = vmatprep.subr.mxu0 0.0
          %2464 = vmatpush2.msra.mxu0 0.0
          %2465 = vmatprep.subr.mxu0 0.0
          %2466 = vmatpush2.msra.mxu0 0.0
          %2467 = vmatprep.subr.mxu0 0.0
          %2468 = vmatpush2.msra.mxu0 0.0
          %2469 = vmatprep.subr.mxu0 0.0
          %2470 = vmatpush2.msra.mxu0 0.0
          %2471 = vmatprep.subr.mxu0 0.0
          %2472 = vmatpush2.msra.mxu0 0.0
          %2473 = vmatprep.subr.mxu0 0.0
          %2474 = vmatpush2.msra.mxu0 0.0
          %2475 = vmatprep.subr.mxu0 0.0
          %2476 = vmatpush2.msra.mxu0 0.0
          %2477 = vmatprep.subr.mxu0 0.0
          %2478 = vmatpush2.msra.mxu0 0.0
          %2479 = vmatprep.subr.mxu0 0.0
          %2480 = vmatpush2.msra.mxu0 0.0
          %2481 = vmatprep.subr.mxu0 0.0
          %2482 = vmatpush2.msra.mxu0 0.0
          %2483 = vmatprep.subr.mxu0 0.0
          %2484 = vmatpush2.msra.mxu0 0.0
          %2485 = vmatprep.subr.mxu0 0.0
          %2486 = vmatpush2.msra.mxu0 0.0
          %2487 = vmatprep.mubr.f32.mxu0 0.0
          %2488 = vmatmul.mubr.f32.gmra.mxu0 %v2421
          %v2489 = vpop.f32.mrf.mxu0
          %v2490 = vadd.f32 %v2417, %v2489
          %v2491 = vpop.f32.mrf.mxu0
          %2492 = vdwg.mxu0
          %v2493 = vxor.u32 %v2490, 2147483648
          %v2494 = vmul.f32 %v2493, 1.442695
          %v2495 = vpow.pop %v2494
          %v2496 = vadd.f32 %v2495, 1.0
          %v2497 = vrcp.pop %v2496
          %v2498 = vmul.f32 1.0, %v2497
          %v2499 = vmul.f32 %v2322, %v2498
          %v2500 = vld [vmem:[%s2] sm:$0x1]
          %v2501 = vld [vmem:[#allocation15] sm:$0xff]
          %v2502 = vld [vmem:[#allocation15 + $0x8] sm:$0xff]
          %v2503 = vld [vmem:[#allocation15 + $0x10] sm:$0xff]
          %v2504 = vld [vmem:[#allocation15 + $0x18] sm:$0xff]
          %v2505 = vld [vmem:[#allocation15 + $0x20] sm:$0xff]
          %v2506 = vld [vmem:[#allocation15 + $0x28] sm:$0xff]
          %v2507 = vld [vmem:[#allocation15 + $0x30] sm:$0xff]
          %v2508 = vld [vmem:[#allocation15 + $0x38] sm:$0xff]
          %v2509 = vld [vmem:[#allocation15 + $0x40] sm:$0xff]
          %v2510 = vld [vmem:[#allocation15 + $0x48] sm:$0xff]
          %v2511 = vld [vmem:[#allocation15 + $0x50] sm:$0xff]
          %v2512 = vld [vmem:[#allocation15 + $0x58] sm:$0xff]
          %v2513 = vld [vmem:[#allocation15 + $0x60] sm:$0xff]
          %v2514 = vld [vmem:[#allocation15 + $0x68] sm:$0xff]
          %v2515 = vld [vmem:[#allocation15 + $0x70] sm:$0xff]
          %v2516 = vld [vmem:[#allocation15 + $0x78] sm:$0xff]
          %v2517 = vld [vmem:[#allocation15 + $0x80] sm:$0xff]
          %v2518 = vld [vmem:[#allocation15 + $0x88] sm:$0xff]
          %v2519 = vld [vmem:[#allocation16] sm:$0x3f]
          %v2521 = vlaneseq
          %v2522 = vshrl.u32 %v2521, 7
          %v2523 = vsub.s32 0, %v2522
          %v2524 = vrot.slane %v2519, %v2523
          %v2525 = vlaneseq
          %v2526 = vshrl.u32 %v2525, 7
          %v2527 = vsub.s32 1, %v2526
          %v2528 = vrot.slane %v2519, %v2527
          %v2529 = vlaneseq
          %v2530 = vshrl.u32 %v2529, 7
          %v2531 = vsub.s32 2, %v2530
          %v2532 = vrot.slane %v2519, %v2531
          %v2533 = vlaneseq
          %v2534 = vshrl.u32 %v2533, 7
          %v2535 = vsub.s32 3, %v2534
          %v2536 = vrot.slane %v2519, %v2535
          %v2537 = vlaneseq
          %v2538 = vshrl.u32 %v2537, 7
          %v2539 = vsub.s32 4, %v2538
          %v2540 = vrot.slane %v2519, %v2539
          %v2541 = vlaneseq
          %v2542 = vshrl.u32 %v2541, 7
          %v2543 = vsub.s32 5, %v2542
          %v2544 = vrot.slane %v2519, %v2543
          %v2569 = vunpack.c.l.b16 %v2501
          %v2570 = vunpack.c.h.b16 %v2501
          %v2571 = vunpack.c.l.b16 %v2502
          %v2572 = vunpack.c.h.b16 %v2502
          %v2573 = vunpack.c.l.b16 %v2503
          %v2574 = vunpack.c.h.b16 %v2503
          %v2575 = vunpack.c.l.b16 %v2504
          %v2576 = vunpack.c.h.b16 %v2504
          %v2577 = vunpack.c.l.b16 %v2505
          %v2578 = vunpack.c.h.b16 %v2505
          %v2579 = vunpack.c.l.b16 %v2506
          %v2580 = vunpack.c.h.b16 %v2506
          %v2581 = vunpack.c.l.b16 %v2507
          %v2582 = vunpack.c.h.b16 %v2507
          %v2583 = vunpack.c.l.b16 %v2508
          %v2584 = vunpack.c.h.b16 %v2508
          %v2585 = vunpack.c.l.b16 %v2509
          %v2586 = vunpack.c.h.b16 %v2509
          %v2587 = vunpack.c.l.b16 %v2510
          %v2588 = vunpack.c.h.b16 %v2510
          %v2589 = vunpack.c.l.b16 %v2511
          %v2590 = vunpack.c.h.b16 %v2511
          %v2591 = vunpack.c.l.b16 %v2512
          %v2592 = vunpack.c.h.b16 %v2512
          %v2593 = vunpack.c.l.b16 %v2513
          %v2594 = vunpack.c.h.b16 %v2513
          %v2595 = vunpack.c.l.b16 %v2514
          %v2596 = vunpack.c.h.b16 %v2514
          %v2597 = vunpack.c.l.b16 %v2515
          %v2598 = vunpack.c.h.b16 %v2515
          %v2599 = vunpack.c.l.b16 %v2516
          %v2600 = vunpack.c.h.b16 %v2516
          %v2601 = vunpack.c.l.b16 %v2517
          %v2602 = vunpack.c.h.b16 %v2517
          %v2603 = vunpack.c.l.b16 %v2518
          %v2604 = vunpack.c.h.b16 %v2518
          %v2605 = vpack.c.b16 %v2575, %v2569
          %v2606 = vpack.c.b16 %v2576, %v2570
          %v2607 = vpack.c.b16 %v2577, %v2571
          %v2608 = vpack.c.b16 %v2578, %v2572
          %v2609 = vpack.c.b16 %v2579, %v2573
          %v2610 = vpack.c.b16 %v2580, %v2574
          %v2611 = vpack.c.b16 %v2587, %v2581
          %v2612 = vpack.c.b16 %v2588, %v2582
          %v2613 = vpack.c.b16 %v2589, %v2583
          %v2614 = vpack.c.b16 %v2590, %v2584
          %v2615 = vpack.c.b16 %v2591, %v2585
          %v2616 = vpack.c.b16 %v2592, %v2586
          %v2617 = vpack.c.b16 %v2599, %v2593
          %v2618 = vpack.c.b16 %v2600, %v2594
          %v2619 = vpack.c.b16 %v2601, %v2595
          %v2620 = vpack.c.b16 %v2602, %v2596
          %v2621 = vpack.c.b16 %v2603, %v2597
          %v2622 = vpack.c.b16 %v2604, %v2598
          %vm2641 = vcmask 392192
          %v2643 = vsel %vm2641, %v2500, 0
          %2645 = vmatprep.subr.bf16.mxu0 0
          %2646 = vmatpush1.bf16.msra.mxu0 0
          %2647 = vmatprep.subr.bf16.mxu0 0
          %2648 = vmatpush1.bf16.msra.mxu0 0
          %2649 = vmatprep.subr.bf16.mxu0 0
          %2650 = vmatpush1.bf16.msra.mxu0 0
          %2651 = vmatprep.subr.bf16.mxu0 0
          %2652 = vmatpush1.bf16.msra.mxu0 0
          %2653 = vmatprep.subr.bf16.mxu0 0
          %2654 = vmatpush1.bf16.msra.mxu0 0
          %2655 = vmatprep.subr.bf16.mxu0 %v2618
          %2656 = vmatpush1.bf16.msra.mxu0 %v2617
          %2657 = vmatprep.subr.bf16.mxu0 %v2612
          %2658 = vmatpush1.bf16.msra.mxu0 %v2611
          %2659 = vmatprep.subr.bf16.mxu0 %v2606
          %2660 = vmatpush1.bf16.msra.mxu0 %v2605
          %2661 = vmatprep.subr.bf16.mxu0 0
          %2662 = vmatpush2.bf16.msra.mxu0 0
          %2663 = vmatprep.subr.bf16.mxu0 0
          %2664 = vmatpush2.bf16.msra.mxu0 0
          %2665 = vmatprep.subr.bf16.mxu0 0
          %2666 = vmatpush2.bf16.msra.mxu0 0
          %2667 = vmatprep.subr.bf16.mxu0 0
          %2668 = vmatpush2.bf16.msra.mxu0 0
          %2669 = vmatprep.subr.bf16.mxu0 0
          %2670 = vmatpush2.bf16.msra.mxu0 0
          %2671 = vmatprep.subr.bf16.mxu0 0
          %2672 = vmatpush2.bf16.msra.mxu0 0
          %2673 = vmatprep.subr.bf16.mxu0 0
          %2674 = vmatpush2.bf16.msra.mxu0 0
          %2675 = vmatprep.subr.bf16.mxu0 0
          %2676 = vmatpush2.bf16.msra.mxu0 0
          %2677 = vmatprep.mubr.bf16.mxu0 0
          %2678 = vmatmul.mubr.bf16.gmra.mxu0 %v2643
          %v2679 = vpop.f32.mrf.mxu0
          %v2680 = vadd.f32 %v2524, %v2679
          %v2681 = vpop.f32.mrf.mxu0
          %v2682 = vadd.f32 %v2528, %v2681
          %v2683 = vpop.f32.mrf.mxu0
          %v2684 = vpop.f32.mrf.mxu0
          %2685 = vdwg.mxu0
          %2686 = vmatprep.subr.bf16.mxu0 0
          %2687 = vmatpush1.bf16.msra.mxu0 0
          %2688 = vmatprep.subr.bf16.mxu0 0
          %2689 = vmatpush1.bf16.msra.mxu0 0
          %2690 = vmatprep.subr.bf16.mxu0 0
          %2691 = vmatpush1.bf16.msra.mxu0 0
          %2692 = vmatprep.subr.bf16.mxu0 0
          %2693 = vmatpush1.bf16.msra.mxu0 0
          %2694 = vmatprep.subr.bf16.mxu0 0
          %2695 = vmatpush1.bf16.msra.mxu0 0
          %2696 = vmatprep.subr.bf16.mxu0 %v2620
          %2697 = vmatpush1.bf16.msra.mxu0 %v2619
          %2698 = vmatprep.subr.bf16.mxu0 %v2614
          %2699 = vmatpush1.bf16.msra.mxu0 %v2613
          %2700 = vmatprep.subr.bf16.mxu0 %v2608
          %2701 = vmatpush1.bf16.msra.mxu0 %v2607
          %2702 = vmatprep.subr.bf16.mxu0 0
          %2703 = vmatpush2.bf16.msra.mxu0 0
          %2704 = vmatprep.subr.bf16.mxu0 0
          %2705 = vmatpush2.bf16.msra.mxu0 0
          %2706 = vmatprep.subr.bf16.mxu0 0
          %2707 = vmatpush2.bf16.msra.mxu0 0
          %2708 = vmatprep.subr.bf16.mxu0 0
          %2709 = vmatpush2.bf16.msra.mxu0 0
          %2710 = vmatprep.subr.bf16.mxu0 0
          %2711 = vmatpush2.bf16.msra.mxu0 0
          %2712 = vmatprep.subr.bf16.mxu0 0
          %2713 = vmatpush2.bf16.msra.mxu0 0
          %2714 = vmatprep.subr.bf16.mxu0 0
          %2715 = vmatpush2.bf16.msra.mxu0 0
          %2716 = vmatprep.subr.bf16.mxu0 0
          %2717 = vmatpush2.bf16.msra.mxu0 0
          %2718 = vmatprep.mubr.bf16.mxu0 0
          %2719 = vmatmul.mubr.bf16.gmra.mxu0 %v2643
          %v2720 = vpop.f32.mrf.mxu0
          %v2721 = vadd.f32 %v2532, %v2720
          %v2722 = vpop.f32.mrf.mxu0
          %v2723 = vadd.f32 %v2536, %v2722
          %v2724 = vpop.f32.mrf.mxu0
          %v2725 = vpop.f32.mrf.mxu0
          %2726 = vdwg.mxu0
          %2727 = vmatprep.subr.bf16.mxu0 0
          %2728 = vmatpush1.bf16.msra.mxu0 0
          %2729 = vmatprep.subr.bf16.mxu0 0
          %2730 = vmatpush1.bf16.msra.mxu0 0
          %2731 = vmatprep.subr.bf16.mxu0 0
          %2732 = vmatpush1.bf16.msra.mxu0 0
          %2733 = vmatprep.subr.bf16.mxu0 0
          %2734 = vmatpush1.bf16.msra.mxu0 0
          %2735 = vmatprep.subr.bf16.mxu0 0
          %2736 = vmatpush1.bf16.msra.mxu0 0
          %2737 = vmatprep.subr.bf16.mxu0 %v2622
          %2738 = vmatpush1.bf16.msra.mxu0 %v2621
          %2739 = vmatprep.subr.bf16.mxu0 %v2616
          %2740 = vmatpush1.bf16.msra.mxu0 %v2615
          %2741 = vmatprep.subr.bf16.mxu0 %v2610
          %2742 = vmatpush1.bf16.msra.mxu0 %v2609
          %2743 = vmatprep.subr.bf16.mxu0 0
          %2744 = vmatpush2.bf16.msra.mxu0 0
          %2745 = vmatprep.subr.bf16.mxu0 0
          %2746 = vmatpush2.bf16.msra.mxu0 0
          %2747 = vmatprep.subr.bf16.mxu0 0
          %2748 = vmatpush2.bf16.msra.mxu0 0
          %2749 = vmatprep.subr.bf16.mxu0 0
          %2750 = vmatpush2.bf16.msra.mxu0 0
          %2751 = vmatprep.subr.bf16.mxu0 0
          %2752 = vmatpush2.bf16.msra.mxu0 0
          %2753 = vmatprep.subr.bf16.mxu0 0
          %2754 = vmatpush2.bf16.msra.mxu0 0
          %2755 = vmatprep.subr.bf16.mxu0 0
          %2756 = vmatpush2.bf16.msra.mxu0 0
          %2757 = vmatprep.subr.bf16.mxu0 0
          %2758 = vmatpush2.bf16.msra.mxu0 0
          %2759 = vmatprep.mubr.bf16.mxu0 0
          %2760 = vmatmul.mubr.bf16.gmra.mxu0 %v2643
          %v2761 = vpop.f32.mrf.mxu0
          %v2762 = vadd.f32 %v2540, %v2761
          %v2763 = vpop.f32.mrf.mxu0
          %v2764 = vadd.f32 %v2544, %v2763
          %v2765 = vpop.f32.mrf.mxu0
          %v2766 = vpop.f32.mrf.mxu0
          %2767 = vdwg.mxu0
          %v2768 = vld [vmem:[#allocation2] sm:$0xff]
          %v2769 = vpack.c.bf16 %v2680, %v2680
          %v2770 = vpack.c.bf16 %v2682, %v2682
          %v2771 = vpack.c.bf16 %v2721, %v2721
          %v2772 = vpack.c.bf16 %v2723, %v2723
          %v2773 = vpack.c.bf16 %v2762, %v2762
          %v2774 = vpack.c.bf16 %v2764, %v2764
          %v2775 = vld [vmem:[%s12] sm:$0xff]
          %v2776 = vld [vmem:[%s12 + $0x8] sm:$0xff]
          %v2777 = vld [vmem:[%s12 + $0x10] sm:$0xff]
          %v2778 = vld [vmem:[%s12 + $0x18] sm:$0xff]
          %v2779 = vld [vmem:[%s12 + $0x20] sm:$0xff]
          %v2780 = vld [vmem:[%s12 + $0x28] sm:$0xff]
          %v2781 = vld [vmem:[%s12 + $0x30] sm:$0xff]
          %v2782 = vld [vmem:[%s12 + $0x38] sm:$0xff]
          %v2783 = vld [vmem:[%s12 + $0x40] sm:$0xff]
          %v2784 = vld [vmem:[%s12 + $0x48] sm:$0xff]
          %v2785 = vld [vmem:[%s12 + $0x50] sm:$0xff]
          %v2786 = vld [vmem:[%s12 + $0x58] sm:$0xff]
          %v2787 = vld [vmem:[%s12 + $0x60] sm:$0xff]
          %v2788 = vld [vmem:[%s12 + $0x68] sm:$0xff]
          %v2789 = vld [vmem:[%s12 + $0x70] sm:$0xff]
          %v2790 = vld [vmem:[%s12 + $0x78] sm:$0xff]
          %v2791 = vld [vmem:[%s12 + $0x80] sm:$0xff]
          %v2792 = vld [vmem:[%s12 + $0x88] sm:$0xff]
          %v2793 = vld [vmem:[%s12 + $0x90] sm:$0xff]
          %v2794 = vld [vmem:[%s12 + $0x98] sm:$0xff]
          %v2795 = vld [vmem:[%s12 + $0xa0] sm:$0xff]
          %v2796 = vld [vmem:[%s12 + $0xa8] sm:$0xff]
          %v2797 = vld [vmem:[%s12 + $0xb0] sm:$0xff]
          %v2798 = vld [vmem:[%s12 + $0xb8] sm:$0xff]
          %v2799 = vld [vmem:[%s12 + $0xc0] sm:$0xff]
          %v2800 = vld [vmem:[%s12 + $0xc8] sm:$0xff]
          %v2801 = vld [vmem:[%s12 + $0xd0] sm:$0xff]
          %v2802 = vld [vmem:[%s12 + $0xd8] sm:$0xff]
          %v2803 = vld [vmem:[%s12 + $0xe0] sm:$0xff]
          %v2804 = vld [vmem:[%s12 + $0xe8] sm:$0xff]
          %v2805 = vld [vmem:[%s12 + $0xf0] sm:$0xff]
          %v2806 = vld [vmem:[%s12 + $0xf8] sm:$0xff]
          %v2807 = vld [vmem:[%s12 + $0x100] sm:$0xff]
          %v2808 = vld [vmem:[%s12 + $0x108] sm:$0xff]
          %v2809 = vld [vmem:[%s12 + $0x110] sm:$0xff]
          %v2810 = vld [vmem:[%s12 + $0x118] sm:$0xff]
          %v2811 = vld [vmem:[%s12 + $0x120] sm:$0xff]
          %v2812 = vld [vmem:[%s12 + $0x128] sm:$0xff]
          %v2813 = vld [vmem:[%s12 + $0x130] sm:$0xff]
          %v2814 = vld [vmem:[%s12 + $0x138] sm:$0xff]
          %v2815 = vld [vmem:[%s12 + $0x140] sm:$0xff]
          %v2816 = vld [vmem:[%s12 + $0x148] sm:$0xff]
          %v2817 = vld [vmem:[%s12 + $0x150] sm:$0xff]
          %v2818 = vld [vmem:[%s12 + $0x158] sm:$0xff]
          %v2819 = vld [vmem:[%s12 + $0x160] sm:$0xff]
          %v2820 = vld [vmem:[%s12 + $0x168] sm:$0xff]
          %v2821 = vld [vmem:[%s12 + $0x170] sm:$0xff]
          %v2822 = vld [vmem:[%s12 + $0x178] sm:$0xff]
          %v2823 = vld [vmem:[%s12 + $0x180] sm:$0xff]
          %v2824 = vld [vmem:[%s12 + $0x188] sm:$0xff]
          %v2825 = vld [vmem:[%s12 + $0x190] sm:$0xff]
          %v2826 = vld [vmem:[%s12 + $0x198] sm:$0xff]
          %v2827 = vld [vmem:[%s12 + $0x1a0] sm:$0xff]
          %v2828 = vld [vmem:[%s12 + $0x1a8] sm:$0xff]
          %v2829 = vld [vmem:[%s12 + $0x1b0] sm:$0xff]
          %v2830 = vld [vmem:[%s12 + $0x1b8] sm:$0xff]
          %v2831 = vld [vmem:[%s12 + $0x1c0] sm:$0xff]
          %v2832 = vld [vmem:[%s12 + $0x1c8] sm:$0xff]
          %v2833 = vld [vmem:[%s12 + $0x1d0] sm:$0xff]
          %v2834 = vld [vmem:[%s12 + $0x1d8] sm:$0xff]
          %v2835 = vld [vmem:[%s12 + $0x1e0] sm:$0xff]
          %v2836 = vld [vmem:[%s12 + $0x1e8] sm:$0xff]
          %v2837 = vld [vmem:[%s12 + $0x1f0] sm:$0xff]
          %v2838 = vld [vmem:[%s12 + $0x1f8] sm:$0xff]
          %v2839 = vld [vmem:[%s12 + $0x200] sm:$0xff]
          %v2840 = vld [vmem:[%s12 + $0x208] sm:$0xff]
          %v2841 = vld [vmem:[%s12 + $0x210] sm:$0xff]
          %v2842 = vld [vmem:[%s12 + $0x218] sm:$0xff]
          %v2843 = vld [vmem:[%s12 + $0x220] sm:$0xff]
          %v2844 = vld [vmem:[%s12 + $0x228] sm:$0xff]
          %v2845 = vld [vmem:[%s12 + $0x230] sm:$0xff]
          %v2846 = vld [vmem:[%s12 + $0x238] sm:$0xff]
          %v2847 = vld [vmem:[%s12 + $0x240] sm:$0xff]
          %v2848 = vld [vmem:[%s12 + $0x248] sm:$0xff]
          %v2849 = vld [vmem:[%s12 + $0x250] sm:$0xff]
          %v2850 = vld [vmem:[%s12 + $0x258] sm:$0xff]
          %v2851 = vld [vmem:[%s12 + $0x260] sm:$0xff]
          %v2852 = vld [vmem:[%s12 + $0x268] sm:$0xff]
          %v2853 = vld [vmem:[%s12 + $0x270] sm:$0xff]
          %v2854 = vld [vmem:[%s12 + $0x278] sm:$0xff]
          %v2855 = vld [vmem:[%s12 + $0x280] sm:$0xff]
          %v2856 = vld [vmem:[%s12 + $0x288] sm:$0xff]
          %v2857 = vld [vmem:[%s12 + $0x290] sm:$0xff]
          %v2858 = vld [vmem:[%s12 + $0x298] sm:$0xff]
          %v2859 = vld [vmem:[%s12 + $0x2a0] sm:$0xff]
          %v2860 = vld [vmem:[%s12 + $0x2a8] sm:$0xff]
          %v2861 = vld [vmem:[%s12 + $0x2b0] sm:$0xff]
          %v2862 = vld [vmem:[%s12 + $0x2b8] sm:$0xff]
          %v2863 = vld [vmem:[%s12 + $0x2c0] sm:$0xff]
          %v2864 = vld [vmem:[%s12 + $0x2c8] sm:$0xff]
          %v2865 = vld [vmem:[%s12 + $0x2d0] sm:$0xff]
          %v2866 = vld [vmem:[%s12 + $0x2d8] sm:$0xff]
          %v2867 = vld [vmem:[%s12 + $0x2e0] sm:$0xff]
          %v2868 = vld [vmem:[%s12 + $0x2e8] sm:$0xff]
          %v2869 = vld [vmem:[%s12 + $0x2f0] sm:$0xff]
          %v2870 = vld [vmem:[%s12 + $0x2f8] sm:$0xff]
          %v2871 = vld [vmem:[%s12 + $0x300] sm:$0xff]
          %v2872 = vld [vmem:[%s12 + $0x308] sm:$0xff]
          %v2873 = vld [vmem:[%s12 + $0x310] sm:$0xff]
          %v2874 = vld [vmem:[%s12 + $0x318] sm:$0xff]
          %v2875 = vld [vmem:[%s12 + $0x320] sm:$0xff]
          %v2876 = vld [vmem:[%s12 + $0x328] sm:$0xff]
          %v2877 = vld [vmem:[%s12 + $0x330] sm:$0xff]
          %v2878 = vld [vmem:[%s12 + $0x338] sm:$0xff]
          %v2879 = vld [vmem:[%s12 + $0x340] sm:$0xff]
          %v2880 = vld [vmem:[%s12 + $0x348] sm:$0xff]
          %v2881 = vld [vmem:[%s12 + $0x350] sm:$0xff]
          %v2882 = vld [vmem:[%s12 + $0x358] sm:$0xff]
          %v2883 = vld [vmem:[%s12 + $0x360] sm:$0xff]
          %v2884 = vld [vmem:[%s12 + $0x368] sm:$0xff]
          %v2885 = vld [vmem:[%s12 + $0x370] sm:$0xff]
          %v2886 = vld [vmem:[%s12 + $0x378] sm:$0xff]
          %v2887 = vld [vmem:[%s12 + $0x380] sm:$0xff]
          %v2888 = vld [vmem:[%s12 + $0x388] sm:$0xff]
          %v2889 = vld [vmem:[%s12 + $0x390] sm:$0xff]
          %v2890 = vld [vmem:[%s12 + $0x398] sm:$0xff]
          %v2891 = vld [vmem:[%s12 + $0x3a0] sm:$0xff]
          %v2892 = vld [vmem:[%s12 + $0x3a8] sm:$0xff]
          %v2893 = vld [vmem:[%s12 + $0x3b0] sm:$0xff]
          %v2894 = vld [vmem:[%s12 + $0x3b8] sm:$0xff]
          %v2895 = vld [vmem:[%s12 + $0x3c0] sm:$0xff]
          %v2896 = vld [vmem:[%s12 + $0x3c8] sm:$0xff]
          %v2897 = vld [vmem:[%s12 + $0x3d0] sm:$0xff]
          %v2898 = vld [vmem:[%s12 + $0x3d8] sm:$0xff]
          %v2899 = vld [vmem:[%s12 + $0x3e0] sm:$0xff]
          %v2900 = vld [vmem:[%s12 + $0x3e8] sm:$0xff]
          %v2901 = vld [vmem:[%s12 + $0x3f0] sm:$0xff]
          %v2902 = vld [vmem:[%s12 + $0x3f8] sm:$0xff]
          %v2903 = vld [vmem:[%s12 + $0x400] sm:$0xff]
          %v2904 = vld [vmem:[%s12 + $0x408] sm:$0xff]
          %v2905 = vld [vmem:[%s12 + $0x410] sm:$0xff]
          %v2906 = vld [vmem:[%s12 + $0x418] sm:$0xff]
          %v2907 = vld [vmem:[%s12 + $0x420] sm:$0xff]
          %v2908 = vld [vmem:[%s12 + $0x428] sm:$0xff]
          %v2909 = vld [vmem:[%s12 + $0x430] sm:$0xff]
          %v2910 = vld [vmem:[%s12 + $0x438] sm:$0xff]
          %v2911 = vld [vmem:[%s12 + $0x440] sm:$0xff]
          %v2912 = vld [vmem:[%s12 + $0x448] sm:$0xff]
          %v2913 = vld [vmem:[%s12 + $0x450] sm:$0xff]
          %v2914 = vld [vmem:[%s12 + $0x458] sm:$0xff]
          %v2915 = vld [vmem:[%s12 + $0x460] sm:$0xff]
          %v2916 = vld [vmem:[%s12 + $0x468] sm:$0xff]
          %v2917 = vld [vmem:[%s12 + $0x470] sm:$0xff]
          %v2918 = vld [vmem:[%s12 + $0x478] sm:$0xff]
          %v2919 = vld [vmem:[%s12 + $0x480] sm:$0xff]
          %v2920 = vld [vmem:[%s12 + $0x488] sm:$0xff]
          %v2921 = vld [vmem:[%s12 + $0x490] sm:$0xff]
          %v2922 = vld [vmem:[%s12 + $0x498] sm:$0xff]
          %v2923 = vld [vmem:[%s12 + $0x4a0] sm:$0xff]
          %v2924 = vld [vmem:[%s12 + $0x4a8] sm:$0xff]
          %v2925 = vld [vmem:[%s12 + $0x4b0] sm:$0xff]
          %v2926 = vld [vmem:[%s12 + $0x4b8] sm:$0xff]
          %v2927 = vld [vmem:[%s12 + $0x4c0] sm:$0xff]
          %v2928 = vld [vmem:[%s12 + $0x4c8] sm:$0xff]
          %v2929 = vld [vmem:[%s12 + $0x4d0] sm:$0xff]
          %v2930 = vld [vmem:[%s12 + $0x4d8] sm:$0xff]
          %v2931 = vld [vmem:[%s12 + $0x4e0] sm:$0xff]
          %v2932 = vld [vmem:[%s12 + $0x4e8] sm:$0xff]
          %v2933 = vld [vmem:[%s12 + $0x4f0] sm:$0xff]
          %v2934 = vld [vmem:[%s12 + $0x4f8] sm:$0xff]
          %v2935 = vld [vmem:[%s12 + $0x500] sm:$0xff]
          %v2936 = vld [vmem:[%s12 + $0x508] sm:$0xff]
          %v2937 = vld [vmem:[%s12 + $0x510] sm:$0xff]
          %v2938 = vld [vmem:[%s12 + $0x518] sm:$0xff]
          %v2939 = vld [vmem:[%s12 + $0x520] sm:$0xff]
          %v2940 = vld [vmem:[%s12 + $0x528] sm:$0xff]
          %v2941 = vld [vmem:[%s12 + $0x530] sm:$0xff]
          %v2942 = vld [vmem:[%s12 + $0x538] sm:$0xff]
          %v2943 = vld [vmem:[%s12 + $0x540] sm:$0xff]
          %v2944 = vld [vmem:[%s12 + $0x548] sm:$0xff]
          %v2945 = vld [vmem:[%s12 + $0x550] sm:$0xff]
          %v2946 = vld [vmem:[%s12 + $0x558] sm:$0xff]
          %v2947 = vld [vmem:[%s12 + $0x560] sm:$0xff]
          %v2948 = vld [vmem:[%s12 + $0x568] sm:$0xff]
          %v2949 = vld [vmem:[%s12 + $0x570] sm:$0xff]
          %v2950 = vld [vmem:[%s12 + $0x578] sm:$0xff]
          %v2951 = vld [vmem:[%s12 + $0x580] sm:$0xff]
          %v2952 = vld [vmem:[%s12 + $0x588] sm:$0xff]
          %v2953 = vld [vmem:[%s12 + $0x590] sm:$0xff]
          %v2954 = vld [vmem:[%s12 + $0x598] sm:$0xff]
          %v2955 = vld [vmem:[%s12 + $0x5a0] sm:$0xff]
          %v2956 = vld [vmem:[%s12 + $0x5a8] sm:$0xff]
          %v2957 = vld [vmem:[%s12 + $0x5b0] sm:$0xff]
          %v2958 = vld [vmem:[%s12 + $0x5b8] sm:$0xff]
          %v2959 = vld [vmem:[%s12 + $0x5c0] sm:$0xff]
          %v2960 = vld [vmem:[%s12 + $0x5c8] sm:$0xff]
          %v2961 = vld [vmem:[%s12 + $0x5d0] sm:$0xff]
          %v2962 = vld [vmem:[%s12 + $0x5d8] sm:$0xff]
          %v2963 = vld [vmem:[%s12 + $0x5e0] sm:$0xff]
          %v2964 = vld [vmem:[%s12 + $0x5e8] sm:$0xff]
          %v2965 = vld [vmem:[%s12 + $0x5f0] sm:$0xff]
          %v2966 = vld [vmem:[%s12 + $0x5f8] sm:$0xff]
          %v3159 = vunpack.c.l.b16 %v2775
          %v3160 = vunpack.c.h.b16 %v2775
          %v3161 = vunpack.c.l.b16 %v2776
          %v3162 = vunpack.c.h.b16 %v2776
          %v3163 = vunpack.c.l.b16 %v2777
          %v3164 = vunpack.c.h.b16 %v2777
          %v3165 = vunpack.c.l.b16 %v2778
          %v3166 = vunpack.c.h.b16 %v2778
          %v3167 = vunpack.c.l.b16 %v2779
          %v3168 = vunpack.c.h.b16 %v2779
          %v3169 = vunpack.c.l.b16 %v2780
          %v3170 = vunpack.c.h.b16 %v2780
          %v3171 = vunpack.c.l.b16 %v2781
          %v3172 = vunpack.c.h.b16 %v2781
          %v3173 = vunpack.c.l.b16 %v2782
          %v3174 = vunpack.c.h.b16 %v2782
          %v3175 = vunpack.c.l.b16 %v2783
          %v3176 = vunpack.c.h.b16 %v2783
          %v3177 = vunpack.c.l.b16 %v2784
          %v3178 = vunpack.c.h.b16 %v2784
          %v3179 = vunpack.c.l.b16 %v2785
          %v3180 = vunpack.c.h.b16 %v2785
          %v3181 = vunpack.c.l.b16 %v2786
          %v3182 = vunpack.c.h.b16 %v2786
          %v3183 = vunpack.c.l.b16 %v2787
          %v3184 = vunpack.c.h.b16 %v2787
          %v3185 = vunpack.c.l.b16 %v2788
          %v3186 = vunpack.c.h.b16 %v2788
          %v3187 = vunpack.c.l.b16 %v2789
          %v3188 = vunpack.c.h.b16 %v2789
          %v3189 = vunpack.c.l.b16 %v2790
          %v3190 = vunpack.c.h.b16 %v2790
          %v3191 = vunpack.c.l.b16 %v2791
          %v3192 = vunpack.c.h.b16 %v2791
          %v3193 = vunpack.c.l.b16 %v2792
          %v3194 = vunpack.c.h.b16 %v2792
          %v3195 = vunpack.c.l.b16 %v2793
          %v3196 = vunpack.c.h.b16 %v2793
          %v3197 = vunpack.c.l.b16 %v2794
          %v3198 = vunpack.c.h.b16 %v2794
          %v3199 = vunpack.c.l.b16 %v2795
          %v3200 = vunpack.c.h.b16 %v2795
          %v3201 = vunpack.c.l.b16 %v2796
          %v3202 = vunpack.c.h.b16 %v2796
          %v3203 = vunpack.c.l.b16 %v2797
          %v3204 = vunpack.c.h.b16 %v2797
          %v3205 = vunpack.c.l.b16 %v2798
          %v3206 = vunpack.c.h.b16 %v2798
          %v3207 = vunpack.c.l.b16 %v2799
          %v3208 = vunpack.c.h.b16 %v2799
          %v3209 = vunpack.c.l.b16 %v2800
          %v3210 = vunpack.c.h.b16 %v2800
          %v3211 = vunpack.c.l.b16 %v2801
          %v3212 = vunpack.c.h.b16 %v2801
          %v3213 = vunpack.c.l.b16 %v2802
          %v3214 = vunpack.c.h.b16 %v2802
          %v3215 = vunpack.c.l.b16 %v2803
          %v3216 = vunpack.c.h.b16 %v2803
          %v3217 = vunpack.c.l.b16 %v2804
          %v3218 = vunpack.c.h.b16 %v2804
          %v3219 = vunpack.c.l.b16 %v2805
          %v3220 = vunpack.c.h.b16 %v2805
          %v3221 = vunpack.c.l.b16 %v2806
          %v3222 = vunpack.c.h.b16 %v2806
          %v3223 = vunpack.c.l.b16 %v2807
          %v3224 = vunpack.c.h.b16 %v2807
          %v3225 = vunpack.c.l.b16 %v2808
          %v3226 = vunpack.c.h.b16 %v2808
          %v3227 = vunpack.c.l.b16 %v2809
          %v3228 = vunpack.c.h.b16 %v2809
          %v3229 = vunpack.c.l.b16 %v2810
          %v3230 = vunpack.c.h.b16 %v2810
          %v3231 = vunpack.c.l.b16 %v2811
          %v3232 = vunpack.c.h.b16 %v2811
          %v3233 = vunpack.c.l.b16 %v2812
          %v3234 = vunpack.c.h.b16 %v2812
          %v3235 = vunpack.c.l.b16 %v2813
          %v3236 = vunpack.c.h.b16 %v2813
          %v3237 = vunpack.c.l.b16 %v2814
          %v3238 = vunpack.c.h.b16 %v2814
          %v3239 = vunpack.c.l.b16 %v2815
          %v3240 = vunpack.c.h.b16 %v2815
          %v3241 = vunpack.c.l.b16 %v2816
          %v3242 = vunpack.c.h.b16 %v2816
          %v3243 = vunpack.c.l.b16 %v2817
          %v3244 = vunpack.c.h.b16 %v2817
          %v3245 = vunpack.c.l.b16 %v2818
          %v3246 = vunpack.c.h.b16 %v2818
          %v3247 = vunpack.c.l.b16 %v2819
          %v3248 = vunpack.c.h.b16 %v2819
          %v3249 = vunpack.c.l.b16 %v2820
          %v3250 = vunpack.c.h.b16 %v2820
          %v3251 = vunpack.c.l.b16 %v2821
          %v3252 = vunpack.c.h.b16 %v2821
          %v3253 = vunpack.c.l.b16 %v2822
          %v3254 = vunpack.c.h.b16 %v2822
          %v3255 = vunpack.c.l.b16 %v2823
          %v3256 = vunpack.c.h.b16 %v2823
          %v3257 = vunpack.c.l.b16 %v2824
          %v3258 = vunpack.c.h.b16 %v2824
          %v3259 = vunpack.c.l.b16 %v2825
          %v3260 = vunpack.c.h.b16 %v2825
          %v3261 = vunpack.c.l.b16 %v2826
          %v3262 = vunpack.c.h.b16 %v2826
          %v3263 = vunpack.c.l.b16 %v2827
          %v3264 = vunpack.c.h.b16 %v2827
          %v3265 = vunpack.c.l.b16 %v2828
          %v3266 = vunpack.c.h.b16 %v2828
          %v3267 = vunpack.c.l.b16 %v2829
          %v3268 = vunpack.c.h.b16 %v2829
          %v3269 = vunpack.c.l.b16 %v2830
          %v3270 = vunpack.c.h.b16 %v2830
          %v3271 = vunpack.c.l.b16 %v2831
          %v3272 = vunpack.c.h.b16 %v2831
          %v3273 = vunpack.c.l.b16 %v2832
          %v3274 = vunpack.c.h.b16 %v2832
          %v3275 = vunpack.c.l.b16 %v2833
          %v3276 = vunpack.c.h.b16 %v2833
          %v3277 = vunpack.c.l.b16 %v2834
          %v3278 = vunpack.c.h.b16 %v2834
          %v3279 = vunpack.c.l.b16 %v2835
          %v3280 = vunpack.c.h.b16 %v2835
          %v3281 = vunpack.c.l.b16 %v2836
          %v3282 = vunpack.c.h.b16 %v2836
          %v3283 = vunpack.c.l.b16 %v2837
          %v3284 = vunpack.c.h.b16 %v2837
          %v3285 = vunpack.c.l.b16 %v2838
          %v3286 = vunpack.c.h.b16 %v2838
          %v3287 = vunpack.c.l.b16 %v2839
          %v3288 = vunpack.c.h.b16 %v2839
          %v3289 = vunpack.c.l.b16 %v2840
          %v3290 = vunpack.c.h.b16 %v2840
          %v3291 = vunpack.c.l.b16 %v2841
          %v3292 = vunpack.c.h.b16 %v2841
          %v3293 = vunpack.c.l.b16 %v2842
          %v3294 = vunpack.c.h.b16 %v2842
          %v3295 = vunpack.c.l.b16 %v2843
          %v3296 = vunpack.c.h.b16 %v2843
          %v3297 = vunpack.c.l.b16 %v2844
          %v3298 = vunpack.c.h.b16 %v2844
          %v3299 = vunpack.c.l.b16 %v2845
          %v3300 = vunpack.c.h.b16 %v2845
          %v3301 = vunpack.c.l.b16 %v2846
          %v3302 = vunpack.c.h.b16 %v2846
          %v3303 = vunpack.c.l.b16 %v2847
          %v3304 = vunpack.c.h.b16 %v2847
          %v3305 = vunpack.c.l.b16 %v2848
          %v3306 = vunpack.c.h.b16 %v2848
          %v3307 = vunpack.c.l.b16 %v2849
          %v3308 = vunpack.c.h.b16 %v2849
          %v3309 = vunpack.c.l.b16 %v2850
          %v3310 = vunpack.c.h.b16 %v2850
          %v3311 = vunpack.c.l.b16 %v2851
          %v3312 = vunpack.c.h.b16 %v2851
          %v3313 = vunpack.c.l.b16 %v2852
          %v3314 = vunpack.c.h.b16 %v2852
          %v3315 = vunpack.c.l.b16 %v2853
          %v3316 = vunpack.c.h.b16 %v2853
          %v3317 = vunpack.c.l.b16 %v2854
          %v3318 = vunpack.c.h.b16 %v2854
          %v3319 = vunpack.c.l.b16 %v2855
          %v3320 = vunpack.c.h.b16 %v2855
          %v3321 = vunpack.c.l.b16 %v2856
          %v3322 = vunpack.c.h.b16 %v2856
          %v3323 = vunpack.c.l.b16 %v2857
          %v3324 = vunpack.c.h.b16 %v2857
          %v3325 = vunpack.c.l.b16 %v2858
          %v3326 = vunpack.c.h.b16 %v2858
          %v3327 = vunpack.c.l.b16 %v2859
          %v3328 = vunpack.c.h.b16 %v2859
          %v3329 = vunpack.c.l.b16 %v2860
          %v3330 = vunpack.c.h.b16 %v2860
          %v3331 = vunpack.c.l.b16 %v2861
          %v3332 = vunpack.c.h.b16 %v2861
          %v3333 = vunpack.c.l.b16 %v2862
          %v3334 = vunpack.c.h.b16 %v2862
          %v3335 = vunpack.c.l.b16 %v2863
          %v3336 = vunpack.c.h.b16 %v2863
          %v3337 = vunpack.c.l.b16 %v2864
          %v3338 = vunpack.c.h.b16 %v2864
          %v3339 = vunpack.c.l.b16 %v2865
          %v3340 = vunpack.c.h.b16 %v2865
          %v3341 = vunpack.c.l.b16 %v2866
          %v3342 = vunpack.c.h.b16 %v2866
          %v3343 = vunpack.c.l.b16 %v2867
          %v3344 = vunpack.c.h.b16 %v2867
          %v3345 = vunpack.c.l.b16 %v2868
          %v3346 = vunpack.c.h.b16 %v2868
          %v3347 = vunpack.c.l.b16 %v2869
          %v3348 = vunpack.c.h.b16 %v2869
          %v3349 = vunpack.c.l.b16 %v2870
          %v3350 = vunpack.c.h.b16 %v2870
          %v3351 = vunpack.c.l.b16 %v2871
          %v3352 = vunpack.c.h.b16 %v2871
          %v3353 = vunpack.c.l.b16 %v2872
          %v3354 = vunpack.c.h.b16 %v2872
          %v3355 = vunpack.c.l.b16 %v2873
          %v3356 = vunpack.c.h.b16 %v2873
          %v3357 = vunpack.c.l.b16 %v2874
          %v3358 = vunpack.c.h.b16 %v2874
          %v3359 = vunpack.c.l.b16 %v2875
          %v3360 = vunpack.c.h.b16 %v2875
          %v3361 = vunpack.c.l.b16 %v2876
          %v3362 = vunpack.c.h.b16 %v2876
          %v3363 = vunpack.c.l.b16 %v2877
          %v3364 = vunpack.c.h.b16 %v2877
          %v3365 = vunpack.c.l.b16 %v2878
          %v3366 = vunpack.c.h.b16 %v2878
          %v3367 = vunpack.c.l.b16 %v2879
          %v3368 = vunpack.c.h.b16 %v2879
          %v3369 = vunpack.c.l.b16 %v2880
          %v3370 = vunpack.c.h.b16 %v2880
          %v3371 = vunpack.c.l.b16 %v2881
          %v3372 = vunpack.c.h.b16 %v2881
          %v3373 = vunpack.c.l.b16 %v2882
          %v3374 = vunpack.c.h.b16 %v2882
          %v3375 = vunpack.c.l.b16 %v2883
          %v3376 = vunpack.c.h.b16 %v2883
          %v3377 = vunpack.c.l.b16 %v2884
          %v3378 = vunpack.c.h.b16 %v2884
          %v3379 = vunpack.c.l.b16 %v2885
          %v3380 = vunpack.c.h.b16 %v2885
          %v3381 = vunpack.c.l.b16 %v2886
          %v3382 = vunpack.c.h.b16 %v2886
          %v3383 = vunpack.c.l.b16 %v2887
          %v3384 = vunpack.c.h.b16 %v2887
          %v3385 = vunpack.c.l.b16 %v2888
          %v3386 = vunpack.c.h.b16 %v2888
          %v3387 = vunpack.c.l.b16 %v2889
          %v3388 = vunpack.c.h.b16 %v2889
          %v3389 = vunpack.c.l.b16 %v2890
          %v3390 = vunpack.c.h.b16 %v2890
          %v3391 = vunpack.c.l.b16 %v2891
          %v3392 = vunpack.c.h.b16 %v2891
          %v3393 = vunpack.c.l.b16 %v2892
          %v3394 = vunpack.c.h.b16 %v2892
          %v3395 = vunpack.c.l.b16 %v2893
          %v3396 = vunpack.c.h.b16 %v2893
          %v3397 = vunpack.c.l.b16 %v2894
          %v3398 = vunpack.c.h.b16 %v2894
          %v3399 = vunpack.c.l.b16 %v2895
          %v3400 = vunpack.c.h.b16 %v2895
          %v3401 = vunpack.c.l.b16 %v2896
          %v3402 = vunpack.c.h.b16 %v2896
          %v3403 = vunpack.c.l.b16 %v2897
          %v3404 = vunpack.c.h.b16 %v2897
          %v3405 = vunpack.c.l.b16 %v2898
          %v3406 = vunpack.c.h.b16 %v2898
          %v3407 = vunpack.c.l.b16 %v2899
          %v3408 = vunpack.c.h.b16 %v2899
          %v3409 = vunpack.c.l.b16 %v2900
          %v3410 = vunpack.c.h.b16 %v2900
          %v3411 = vunpack.c.l.b16 %v2901
          %v3412 = vunpack.c.h.b16 %v2901
          %v3413 = vunpack.c.l.b16 %v2902
          %v3414 = vunpack.c.h.b16 %v2902
          %v3415 = vunpack.c.l.b16 %v2903
          %v3416 = vunpack.c.h.b16 %v2903
          %v3417 = vunpack.c.l.b16 %v2904
          %v3418 = vunpack.c.h.b16 %v2904
          %v3419 = vunpack.c.l.b16 %v2905
          %v3420 = vunpack.c.h.b16 %v2905
          %v3421 = vunpack.c.l.b16 %v2906
          %v3422 = vunpack.c.h.b16 %v2906
          %v3423 = vunpack.c.l.b16 %v2907
          %v3424 = vunpack.c.h.b16 %v2907
          %v3425 = vunpack.c.l.b16 %v2908
          %v3426 = vunpack.c.h.b16 %v2908
          %v3427 = vunpack.c.l.b16 %v2909
          %v3428 = vunpack.c.h.b16 %v2909
          %v3429 = vunpack.c.l.b16 %v2910
          %v3430 = vunpack.c.h.b16 %v2910
          %v3431 = vunpack.c.l.b16 %v2911
          %v3432 = vunpack.c.h.b16 %v2911
          %v3433 = vunpack.c.l.b16 %v2912
          %v3434 = vunpack.c.h.b16 %v2912
          %v3435 = vunpack.c.l.b16 %v2913
          %v3436 = vunpack.c.h.b16 %v2913
          %v3437 = vunpack.c.l.b16 %v2914
          %v3438 = vunpack.c.h.b16 %v2914
          %v3439 = vunpack.c.l.b16 %v2915
          %v3440 = vunpack.c.h.b16 %v2915
          %v3441 = vunpack.c.l.b16 %v2916
          %v3442 = vunpack.c.h.b16 %v2916
          %v3443 = vunpack.c.l.b16 %v2917
          %v3444 = vunpack.c.h.b16 %v2917
          %v3445 = vunpack.c.l.b16 %v2918
          %v3446 = vunpack.c.h.b16 %v2918
          %v3447 = vunpack.c.l.b16 %v2919
          %v3448 = vunpack.c.h.b16 %v2919
          %v3449 = vunpack.c.l.b16 %v2920
          %v3450 = vunpack.c.h.b16 %v2920
          %v3451 = vunpack.c.l.b16 %v2921
          %v3452 = vunpack.c.h.b16 %v2921
          %v3453 = vunpack.c.l.b16 %v2922
          %v3454 = vunpack.c.h.b16 %v2922
          %v3455 = vunpack.c.l.b16 %v2923
          %v3456 = vunpack.c.h.b16 %v2923
          %v3457 = vunpack.c.l.b16 %v2924
          %v3458 = vunpack.c.h.b16 %v2924
          %v3459 = vunpack.c.l.b16 %v2925
          %v3460 = vunpack.c.h.b16 %v2925
          %v3461 = vunpack.c.l.b16 %v2926
          %v3462 = vunpack.c.h.b16 %v2926
          %v3463 = vunpack.c.l.b16 %v2927
          %v3464 = vunpack.c.h.b16 %v2927
          %v3465 = vunpack.c.l.b16 %v2928
          %v3466 = vunpack.c.h.b16 %v2928
          %v3467 = vunpack.c.l.b16 %v2929
          %v3468 = vunpack.c.h.b16 %v2929
          %v3469 = vunpack.c.l.b16 %v2930
          %v3470 = vunpack.c.h.b16 %v2930
          %v3471 = vunpack.c.l.b16 %v2931
          %v3472 = vunpack.c.h.b16 %v2931
          %v3473 = vunpack.c.l.b16 %v2932
          %v3474 = vunpack.c.h.b16 %v2932
          %v3475 = vunpack.c.l.b16 %v2933
          %v3476 = vunpack.c.h.b16 %v2933
          %v3477 = vunpack.c.l.b16 %v2934
          %v3478 = vunpack.c.h.b16 %v2934
          %v3479 = vunpack.c.l.b16 %v2935
          %v3480 = vunpack.c.h.b16 %v2935
          %v3481 = vunpack.c.l.b16 %v2936
          %v3482 = vunpack.c.h.b16 %v2936
          %v3483 = vunpack.c.l.b16 %v2937
          %v3484 = vunpack.c.h.b16 %v2937
          %v3485 = vunpack.c.l.b16 %v2938
          %v3486 = vunpack.c.h.b16 %v2938
          %v3487 = vunpack.c.l.b16 %v2939
          %v3488 = vunpack.c.h.b16 %v2939
          %v3489 = vunpack.c.l.b16 %v2940
          %v3490 = vunpack.c.h.b16 %v2940
          %v3491 = vunpack.c.l.b16 %v2941
          %v3492 = vunpack.c.h.b16 %v2941
          %v3493 = vunpack.c.l.b16 %v2942
          %v3494 = vunpack.c.h.b16 %v2942
          %v3495 = vunpack.c.l.b16 %v2943
          %v3496 = vunpack.c.h.b16 %v2943
          %v3497 = vunpack.c.l.b16 %v2944
          %v3498 = vunpack.c.h.b16 %v2944
          %v3499 = vunpack.c.l.b16 %v2945
          %v3500 = vunpack.c.h.b16 %v2945
          %v3501 = vunpack.c.l.b16 %v2946
          %v3502 = vunpack.c.h.b16 %v2946
          %v3503 = vunpack.c.l.b16 %v2947
          %v3504 = vunpack.c.h.b16 %v2947
          %v3505 = vunpack.c.l.b16 %v2948
          %v3506 = vunpack.c.h.b16 %v2948
          %v3507 = vunpack.c.l.b16 %v2949
          %v3508 = vunpack.c.h.b16 %v2949
          %v3509 = vunpack.c.l.b16 %v2950
          %v3510 = vunpack.c.h.b16 %v2950
          %v3511 = vunpack.c.l.b16 %v2951
          %v3512 = vunpack.c.h.b16 %v2951
          %v3513 = vunpack.c.l.b16 %v2952
          %v3514 = vunpack.c.h.b16 %v2952
          %v3515 = vunpack.c.l.b16 %v2953
          %v3516 = vunpack.c.h.b16 %v2953
          %v3517 = vunpack.c.l.b16 %v2954
          %v3518 = vunpack.c.h.b16 %v2954
          %v3519 = vunpack.c.l.b16 %v2955
          %v3520 = vunpack.c.h.b16 %v2955
          %v3521 = vunpack.c.l.b16 %v2956
          %v3522 = vunpack.c.h.b16 %v2956
          %v3523 = vunpack.c.l.b16 %v2957
          %v3524 = vunpack.c.h.b16 %v2957
          %v3525 = vunpack.c.l.b16 %v2958
          %v3526 = vunpack.c.h.b16 %v2958
          %v3527 = vunpack.c.l.b16 %v2959
          %v3528 = vunpack.c.h.b16 %v2959
          %v3529 = vunpack.c.l.b16 %v2960
          %v3530 = vunpack.c.h.b16 %v2960
          %v3531 = vunpack.c.l.b16 %v2961
          %v3532 = vunpack.c.h.b16 %v2961
          %v3533 = vunpack.c.l.b16 %v2962
          %v3534 = vunpack.c.h.b16 %v2962
          %v3535 = vunpack.c.l.b16 %v2963
          %v3536 = vunpack.c.h.b16 %v2963
          %v3537 = vunpack.c.l.b16 %v2964
          %v3538 = vunpack.c.h.b16 %v2964
          %v3539 = vunpack.c.l.b16 %v2965
          %v3540 = vunpack.c.h.b16 %v2965
          %v3541 = vunpack.c.l.b16 %v2966
          %v3542 = vunpack.c.h.b16 %v2966
          %v3543 = vpack.c.b16 %v3163, %v3159
          %v3544 = vpack.c.b16 %v3164, %v3160
          %v3545 = vpack.c.b16 %v3165, %v3161
          %v3546 = vpack.c.b16 %v3166, %v3162
          %v3547 = vpack.c.b16 %v3171, %v3167
          %v3548 = vpack.c.b16 %v3172, %v3168
          %v3549 = vpack.c.b16 %v3173, %v3169
          %v3550 = vpack.c.b16 %v3174, %v3170
          %v3551 = vpack.c.b16 %v3179, %v3175
          %v3552 = vpack.c.b16 %v3180, %v3176
          %v3553 = vpack.c.b16 %v3181, %v3177
          %v3554 = vpack.c.b16 %v3182, %v3178
          %v3555 = vpack.c.b16 %v3187, %v3183
          %v3556 = vpack.c.b16 %v3188, %v3184
          %v3557 = vpack.c.b16 %v3189, %v3185
          %v3558 = vpack.c.b16 %v3190, %v3186
          %v3559 = vpack.c.b16 %v3195, %v3191
          %v3560 = vpack.c.b16 %v3196, %v3192
          %v3561 = vpack.c.b16 %v3197, %v3193
          %v3562 = vpack.c.b16 %v3198, %v3194
          %v3563 = vpack.c.b16 %v3203, %v3199
          %v3564 = vpack.c.b16 %v3204, %v3200
          %v3565 = vpack.c.b16 %v3205, %v3201
          %v3566 = vpack.c.b16 %v3206, %v3202
          %v3567 = vpack.c.b16 %v3211, %v3207
          %v3568 = vpack.c.b16 %v3212, %v3208
          %v3569 = vpack.c.b16 %v3213, %v3209
          %v3570 = vpack.c.b16 %v3214, %v3210
          %v3571 = vpack.c.b16 %v3219, %v3215
          %v3572 = vpack.c.b16 %v3220, %v3216
          %v3573 = vpack.c.b16 %v3221, %v3217
          %v3574 = vpack.c.b16 %v3222, %v3218
          %v3575 = vpack.c.b16 %v3227, %v3223
          %v3576 = vpack.c.b16 %v3228, %v3224
          %v3577 = vpack.c.b16 %v3229, %v3225
          %v3578 = vpack.c.b16 %v3230, %v3226
          %v3579 = vpack.c.b16 %v3235, %v3231
          %v3580 = vpack.c.b16 %v3236, %v3232
          %v3581 = vpack.c.b16 %v3237, %v3233
          %v3582 = vpack.c.b16 %v3238, %v3234
          %v3583 = vpack.c.b16 %v3243, %v3239
          %v3584 = vpack.c.b16 %v3244, %v3240
          %v3585 = vpack.c.b16 %v3245, %v3241
          %v3586 = vpack.c.b16 %v3246, %v3242
          %v3587 = vpack.c.b16 %v3251, %v3247
          %v3588 = vpack.c.b16 %v3252, %v3248
          %v3589 = vpack.c.b16 %v3253, %v3249
          %v3590 = vpack.c.b16 %v3254, %v3250
          %v3591 = vpack.c.b16 %v3259, %v3255
          %v3592 = vpack.c.b16 %v3260, %v3256
          %v3593 = vpack.c.b16 %v3261, %v3257
          %v3594 = vpack.c.b16 %v3262, %v3258
          %v3595 = vpack.c.b16 %v3267, %v3263
          %v3596 = vpack.c.b16 %v3268, %v3264
          %v3597 = vpack.c.b16 %v3269, %v3265
          %v3598 = vpack.c.b16 %v3270, %v3266
          %v3599 = vpack.c.b16 %v3275, %v3271
          %v3600 = vpack.c.b16 %v3276, %v3272
          %v3601 = vpack.c.b16 %v3277, %v3273
          %v3602 = vpack.c.b16 %v3278, %v3274
          %v3603 = vpack.c.b16 %v3283, %v3279
          %v3604 = vpack.c.b16 %v3284, %v3280
          %v3605 = vpack.c.b16 %v3285, %v3281
          %v3606 = vpack.c.b16 %v3286, %v3282
          %v3607 = vpack.c.b16 %v3291, %v3287
          %v3608 = vpack.c.b16 %v3292, %v3288
          %v3609 = vpack.c.b16 %v3293, %v3289
          %v3610 = vpack.c.b16 %v3294, %v3290
          %v3611 = vpack.c.b16 %v3299, %v3295
          %v3612 = vpack.c.b16 %v3300, %v3296
          %v3613 = vpack.c.b16 %v3301, %v3297
          %v3614 = vpack.c.b16 %v3302, %v3298
          %v3615 = vpack.c.b16 %v3307, %v3303
          %v3616 = vpack.c.b16 %v3308, %v3304
          %v3617 = vpack.c.b16 %v3309, %v3305
          %v3618 = vpack.c.b16 %v3310, %v3306
          %v3619 = vpack.c.b16 %v3315, %v3311
          %v3620 = vpack.c.b16 %v3316, %v3312
          %v3621 = vpack.c.b16 %v3317, %v3313
          %v3622 = vpack.c.b16 %v3318, %v3314
          %v3623 = vpack.c.b16 %v3323, %v3319
          %v3624 = vpack.c.b16 %v3324, %v3320
          %v3625 = vpack.c.b16 %v3325, %v3321
          %v3626 = vpack.c.b16 %v3326, %v3322
          %v3627 = vpack.c.b16 %v3331, %v3327
          %v3628 = vpack.c.b16 %v3332, %v3328
          %v3629 = vpack.c.b16 %v3333, %v3329
          %v3630 = vpack.c.b16 %v3334, %v3330
          %v3631 = vpack.c.b16 %v3339, %v3335
          %v3632 = vpack.c.b16 %v3340, %v3336
          %v3633 = vpack.c.b16 %v3341, %v3337
          %v3634 = vpack.c.b16 %v3342, %v3338
          %v3635 = vpack.c.b16 %v3347, %v3343
          %v3636 = vpack.c.b16 %v3348, %v3344
          %v3637 = vpack.c.b16 %v3349, %v3345
          %v3638 = vpack.c.b16 %v3350, %v3346
          %v3639 = vpack.c.b16 %v3355, %v3351
          %v3640 = vpack.c.b16 %v3356, %v3352
          %v3641 = vpack.c.b16 %v3357, %v3353
          %v3642 = vpack.c.b16 %v3358, %v3354
          %v3643 = vpack.c.b16 %v3363, %v3359
          %v3644 = vpack.c.b16 %v3364, %v3360
          %v3645 = vpack.c.b16 %v3365, %v3361
          %v3646 = vpack.c.b16 %v3366, %v3362
          %v3647 = vpack.c.b16 %v3371, %v3367
          %v3648 = vpack.c.b16 %v3372, %v3368
          %v3649 = vpack.c.b16 %v3373, %v3369
          %v3650 = vpack.c.b16 %v3374, %v3370
          %v3651 = vpack.c.b16 %v3379, %v3375
          %v3652 = vpack.c.b16 %v3380, %v3376
          %v3653 = vpack.c.b16 %v3381, %v3377
          %v3654 = vpack.c.b16 %v3382, %v3378
          %v3655 = vpack.c.b16 %v3387, %v3383
          %v3656 = vpack.c.b16 %v3388, %v3384
          %v3657 = vpack.c.b16 %v3389, %v3385
          %v3658 = vpack.c.b16 %v3390, %v3386
          %v3659 = vpack.c.b16 %v3395, %v3391
          %v3660 = vpack.c.b16 %v3396, %v3392
          %v3661 = vpack.c.b16 %v3397, %v3393
          %v3662 = vpack.c.b16 %v3398, %v3394
          %v3663 = vpack.c.b16 %v3403, %v3399
          %v3664 = vpack.c.b16 %v3404, %v3400
          %v3665 = vpack.c.b16 %v3405, %v3401
          %v3666 = vpack.c.b16 %v3406, %v3402
          %v3667 = vpack.c.b16 %v3411, %v3407
          %v3668 = vpack.c.b16 %v3412, %v3408
          %v3669 = vpack.c.b16 %v3413, %v3409
          %v3670 = vpack.c.b16 %v3414, %v3410
          %v3671 = vpack.c.b16 %v3419, %v3415
          %v3672 = vpack.c.b16 %v3420, %v3416
          %v3673 = vpack.c.b16 %v3421, %v3417
          %v3674 = vpack.c.b16 %v3422, %v3418
          %v3675 = vpack.c.b16 %v3427, %v3423
          %v3676 = vpack.c.b16 %v3428, %v3424
          %v3677 = vpack.c.b16 %v3429, %v3425
          %v3678 = vpack.c.b16 %v3430, %v3426
          %v3679 = vpack.c.b16 %v3435, %v3431
          %v3680 = vpack.c.b16 %v3436, %v3432
          %v3681 = vpack.c.b16 %v3437, %v3433
          %v3682 = vpack.c.b16 %v3438, %v3434
          %v3683 = vpack.c.b16 %v3443, %v3439
          %v3684 = vpack.c.b16 %v3444, %v3440
          %v3685 = vpack.c.b16 %v3445, %v3441
          %v3686 = vpack.c.b16 %v3446, %v3442
          %v3687 = vpack.c.b16 %v3451, %v3447
          %v3688 = vpack.c.b16 %v3452, %v3448
          %v3689 = vpack.c.b16 %v3453, %v3449
          %v3690 = vpack.c.b16 %v3454, %v3450
          %v3691 = vpack.c.b16 %v3459, %v3455
          %v3692 = vpack.c.b16 %v3460, %v3456
          %v3693 = vpack.c.b16 %v3461, %v3457
          %v3694 = vpack.c.b16 %v3462, %v3458
          %v3695 = vpack.c.b16 %v3467, %v3463
          %v3696 = vpack.c.b16 %v3468, %v3464
          %v3697 = vpack.c.b16 %v3469, %v3465
          %v3698 = vpack.c.b16 %v3470, %v3466
          %v3699 = vpack.c.b16 %v3475, %v3471
          %v3700 = vpack.c.b16 %v3476, %v3472
          %v3701 = vpack.c.b16 %v3477, %v3473
          %v3702 = vpack.c.b16 %v3478, %v3474
          %v3703 = vpack.c.b16 %v3483, %v3479
          %v3704 = vpack.c.b16 %v3484, %v3480
          %v3705 = vpack.c.b16 %v3485, %v3481
          %v3706 = vpack.c.b16 %v3486, %v3482
          %v3707 = vpack.c.b16 %v3491, %v3487
          %v3708 = vpack.c.b16 %v3492, %v3488
          %v3709 = vpack.c.b16 %v3493, %v3489
          %v3710 = vpack.c.b16 %v3494, %v3490
          %v3711 = vpack.c.b16 %v3499, %v3495
          %v3712 = vpack.c.b16 %v3500, %v3496
          %v3713 = vpack.c.b16 %v3501, %v3497
          %v3714 = vpack.c.b16 %v3502, %v3498
          %v3715 = vpack.c.b16 %v3507, %v3503
          %v3716 = vpack.c.b16 %v3508, %v3504
          %v3717 = vpack.c.b16 %v3509, %v3505
          %v3718 = vpack.c.b16 %v3510, %v3506
          %v3719 = vpack.c.b16 %v3515, %v3511
          %v3720 = vpack.c.b16 %v3516, %v3512
          %v3721 = vpack.c.b16 %v3517, %v3513
          %v3722 = vpack.c.b16 %v3518, %v3514
          %v3723 = vpack.c.b16 %v3523, %v3519
          %v3724 = vpack.c.b16 %v3524, %v3520
          %v3725 = vpack.c.b16 %v3525, %v3521
          %v3726 = vpack.c.b16 %v3526, %v3522
          %v3727 = vpack.c.b16 %v3531, %v3527
          %v3728 = vpack.c.b16 %v3532, %v3528
          %v3729 = vpack.c.b16 %v3533, %v3529
          %v3730 = vpack.c.b16 %v3534, %v3530
          %v3731 = vpack.c.b16 %v3539, %v3535
          %v3732 = vpack.c.b16 %v3540, %v3536
          %v3733 = vpack.c.b16 %v3541, %v3537
          %v3734 = vpack.c.b16 %v3542, %v3538
          %3927 = vmatprep.subr.bf16.mxu0 %v3572
          %3928 = vmatpush1.bf16.msra.mxu0 %v3571
          %3929 = vmatprep.subr.bf16.mxu0 %v3568
          %3930 = vmatpush1.bf16.msra.mxu0 %v3567
          %3931 = vmatprep.subr.bf16.mxu0 %v3564
          %3932 = vmatpush1.bf16.msra.mxu0 %v3563
          %3933 = vmatprep.subr.bf16.mxu0 %v3560
          %3934 = vmatpush1.bf16.msra.mxu0 %v3559
          %3935 = vmatprep.subr.bf16.mxu0 %v3556
          %3936 = vmatpush1.bf16.msra.mxu0 %v3555
          %3937 = vmatprep.subr.bf16.mxu0 %v3552
          %3938 = vmatpush1.bf16.msra.mxu0 %v3551
          %3939 = vmatprep.subr.bf16.mxu0 %v3548
          %3940 = vmatpush1.bf16.msra.mxu0 %v3547
          %3941 = vmatprep.subr.bf16.mxu0 %v3544
          %3942 = vmatpush1.bf16.msra.mxu0 %v3543
          %3943 = vmatprep.subr.bf16.mxu0 %v3604
          %3944 = vmatpush2.bf16.msra.mxu0 %v3603
          %3945 = vmatprep.subr.bf16.mxu0 %v3600
          %3946 = vmatpush2.bf16.msra.mxu0 %v3599
          %3947 = vmatprep.subr.bf16.mxu0 %v3596
          %3948 = vmatpush2.bf16.msra.mxu0 %v3595
          %3949 = vmatprep.subr.bf16.mxu0 %v3592
          %3950 = vmatpush2.bf16.msra.mxu0 %v3591
          %3951 = vmatprep.subr.bf16.mxu0 %v3588
          %3952 = vmatpush2.bf16.msra.mxu0 %v3587
          %3953 = vmatprep.subr.bf16.mxu0 %v3584
          %3954 = vmatpush2.bf16.msra.mxu0 %v3583
          %3955 = vmatprep.subr.bf16.mxu0 %v3580
          %3956 = vmatpush2.bf16.msra.mxu0 %v3579
          %3957 = vmatprep.subr.bf16.mxu0 %v3576
          %3958 = vmatpush2.bf16.msra.mxu0 %v3575
          %3959 = vmatprep.mubr.bf16.mxu0 %v2770
          %3960 = vmatmul.mubr.bf16.gmra.mxu0 %v2769
          %v3961 = vpop.f32.mrf.mxu0
          %v3962 = vadd.f32 0.0, %v3961
          %v3963 = vpop.f32.mrf.mxu0
          %v3964 = vadd.f32 0.0, %v3963
          %v3965 = vpop.f32.mrf.mxu0
          %v3966 = vpop.f32.mrf.mxu0
          %3967 = vdwg.mxu0
          %3968 = vmatprep.subr.bf16.mxu0 %v3636
          %3969 = vmatpush1.bf16.msra.mxu0 %v3635
          %3970 = vmatprep.subr.bf16.mxu0 %v3632
          %3971 = vmatpush1.bf16.msra.mxu0 %v3631
          %3972 = vmatprep.subr.bf16.mxu0 %v3628
          %3973 = vmatpush1.bf16.msra.mxu0 %v3627
          %3974 = vmatprep.subr.bf16.mxu0 %v3624
          %3975 = vmatpush1.bf16.msra.mxu0 %v3623
          %3976 = vmatprep.subr.bf16.mxu0 %v3620
          %3977 = vmatpush1.bf16.msra.mxu0 %v3619
          %3978 = vmatprep.subr.bf16.mxu0 %v3616
          %3979 = vmatpush1.bf16.msra.mxu0 %v3615
          %3980 = vmatprep.subr.bf16.mxu0 %v3612
          %3981 = vmatpush1.bf16.msra.mxu0 %v3611
          %3982 = vmatprep.subr.bf16.mxu0 %v3608
          %3983 = vmatpush1.bf16.msra.mxu0 %v3607
          %3984 = vmatprep.subr.bf16.mxu0 %v3668
          %3985 = vmatpush2.bf16.msra.mxu0 %v3667
          %3986 = vmatprep.subr.bf16.mxu0 %v3664
          %3987 = vmatpush2.bf16.msra.mxu0 %v3663
          %3988 = vmatprep.subr.bf16.mxu0 %v3660
          %3989 = vmatpush2.bf16.msra.mxu0 %v3659
          %3990 = vmatprep.subr.bf16.mxu0 %v3656
          %3991 = vmatpush2.bf16.msra.mxu0 %v3655
          %3992 = vmatprep.subr.bf16.mxu0 %v3652
          %3993 = vmatpush2.bf16.msra.mxu0 %v3651
          %3994 = vmatprep.subr.bf16.mxu0 %v3648
          %3995 = vmatpush2.bf16.msra.mxu0 %v3647
          %3996 = vmatprep.subr.bf16.mxu0 %v3644
          %3997 = vmatpush2.bf16.msra.mxu0 %v3643
          %3998 = vmatprep.subr.bf16.mxu0 %v3640
          %3999 = vmatpush2.bf16.msra.mxu0 %v3639
          %4000 = vmatprep.mubr.bf16.mxu0 %v2772
          %4001 = vmatmul.mubr.bf16.gmra.mxu0 %v2771
          %v4002 = vpop.f32.mrf.mxu0
          %v4003 = vadd.f32 %v3962, %v4002
          %v4004 = vpop.f32.mrf.mxu0
          %v4005 = vadd.f32 %v3964, %v4004
          %v4006 = vpop.f32.mrf.mxu0
          %v4007 = vpop.f32.mrf.mxu0
          %4008 = vdwg.mxu0
          %4009 = vmatprep.subr.bf16.mxu0 %v3700
          %4010 = vmatpush1.bf16.msra.mxu0 %v3699
          %4011 = vmatprep.subr.bf16.mxu0 %v3696
          %4012 = vmatpush1.bf16.msra.mxu0 %v3695
          %4013 = vmatprep.subr.bf16.mxu0 %v3692
          %4014 = vmatpush1.bf16.msra.mxu0 %v3691
          %4015 = vmatprep.subr.bf16.mxu0 %v3688
          %4016 = vmatpush1.bf16.msra.mxu0 %v3687
          %4017 = vmatprep.subr.bf16.mxu0 %v3684
          %4018 = vmatpush1.bf16.msra.mxu0 %v3683
          %4019 = vmatprep.subr.bf16.mxu0 %v3680
          %4020 = vmatpush1.bf16.msra.mxu0 %v3679
          %4021 = vmatprep.subr.bf16.mxu0 %v3676
          %4022 = vmatpush1.bf16.msra.mxu0 %v3675
          %4023 = vmatprep.subr.bf16.mxu0 %v3672
          %4024 = vmatpush1.bf16.msra.mxu0 %v3671
          %4025 = vmatprep.subr.bf16.mxu0 %v3732
          %4026 = vmatpush2.bf16.msra.mxu0 %v3731
          %4027 = vmatprep.subr.bf16.mxu0 %v3728
          %4028 = vmatpush2.bf16.msra.mxu0 %v3727
          %4029 = vmatprep.subr.bf16.mxu0 %v3724
          %4030 = vmatpush2.bf16.msra.mxu0 %v3723
          %4031 = vmatprep.subr.bf16.mxu0 %v3720
          %4032 = vmatpush2.bf16.msra.mxu0 %v3719
          %4033 = vmatprep.subr.bf16.mxu0 %v3716
          %4034 = vmatpush2.bf16.msra.mxu0 %v3715
          %4035 = vmatprep.subr.bf16.mxu0 %v3712
          %4036 = vmatpush2.bf16.msra.mxu0 %v3711
          %4037 = vmatprep.subr.bf16.mxu0 %v3708
          %4038 = vmatpush2.bf16.msra.mxu0 %v3707
          %4039 = vmatprep.subr.bf16.mxu0 %v3704
          %4040 = vmatpush2.bf16.msra.mxu0 %v3703
          %4041 = vmatprep.mubr.bf16.mxu0 %v2774
          %4042 = vmatmul.mubr.bf16.gmra.mxu0 %v2773
          %v4043 = vpop.f32.mrf.mxu0
          %v4044 = vadd.f32 %v4003, %v4043
          %v4045 = vpop.f32.mrf.mxu0
          %v4046 = vadd.f32 %v4005, %v4045
          %v4047 = vpop.f32.mrf.mxu0
          %v4048 = vpop.f32.mrf.mxu0
          %4049 = vdwg.mxu0
          %4050 = vmatprep.subr.bf16.mxu0 %v3574
          %4051 = vmatpush1.bf16.msra.mxu0 %v3573
          %4052 = vmatprep.subr.bf16.mxu0 %v3570
          %4053 = vmatpush1.bf16.msra.mxu0 %v3569
          %4054 = vmatprep.subr.bf16.mxu0 %v3566
          %4055 = vmatpush1.bf16.msra.mxu0 %v3565
          %4056 = vmatprep.subr.bf16.mxu0 %v3562
          %4057 = vmatpush1.bf16.msra.mxu0 %v3561
          %4058 = vmatprep.subr.bf16.mxu0 %v3558
          %4059 = vmatpush1.bf16.msra.mxu0 %v3557
          %4060 = vmatprep.subr.bf16.mxu0 %v3554
          %4061 = vmatpush1.bf16.msra.mxu0 %v3553
          %4062 = vmatprep.subr.bf16.mxu0 %v3550
          %4063 = vmatpush1.bf16.msra.mxu0 %v3549
          %4064 = vmatprep.subr.bf16.mxu0 %v3546
          %4065 = vmatpush1.bf16.msra.mxu0 %v3545
          %4066 = vmatprep.subr.bf16.mxu0 %v3606
          %4067 = vmatpush2.bf16.msra.mxu0 %v3605
          %4068 = vmatprep.subr.bf16.mxu0 %v3602
          %4069 = vmatpush2.bf16.msra.mxu0 %v3601
          %4070 = vmatprep.subr.bf16.mxu0 %v3598
          %4071 = vmatpush2.bf16.msra.mxu0 %v3597
          %4072 = vmatprep.subr.bf16.mxu0 %v3594
          %4073 = vmatpush2.bf16.msra.mxu0 %v3593
          %4074 = vmatprep.subr.bf16.mxu0 %v3590
          %4075 = vmatpush2.bf16.msra.mxu0 %v3589
          %4076 = vmatprep.subr.bf16.mxu0 %v3586
          %4077 = vmatpush2.bf16.msra.mxu0 %v3585
          %4078 = vmatprep.subr.bf16.mxu0 %v3582
          %4079 = vmatpush2.bf16.msra.mxu0 %v3581
          %4080 = vmatprep.subr.bf16.mxu0 %v3578
          %4081 = vmatpush2.bf16.msra.mxu0 %v3577
          %4082 = vmatprep.mubr.bf16.mxu0 %v2770
          %4083 = vmatmul.mubr.bf16.gmra.mxu0 %v2769
          %v4084 = vpop.f32.mrf.mxu0
          %v4085 = vadd.f32 0.0, %v4084
          %v4086 = vpop.f32.mrf.mxu0
          %v4087 = vadd.f32 0.0, %v4086
          %v4088 = vpop.f32.mrf.mxu0
          %v4089 = vpop.f32.mrf.mxu0
          %4090 = vdwg.mxu0
          %4091 = vmatprep.subr.bf16.mxu0 %v3638
          %4092 = vmatpush1.bf16.msra.mxu0 %v3637
          %4093 = vmatprep.subr.bf16.mxu0 %v3634
          %4094 = vmatpush1.bf16.msra.mxu0 %v3633
          %4095 = vmatprep.subr.bf16.mxu0 %v3630
          %4096 = vmatpush1.bf16.msra.mxu0 %v3629
          %4097 = vmatprep.subr.bf16.mxu0 %v3626
          %4098 = vmatpush1.bf16.msra.mxu0 %v3625
          %4099 = vmatprep.subr.bf16.mxu0 %v3622
          %4100 = vmatpush1.bf16.msra.mxu0 %v3621
          %4101 = vmatprep.subr.bf16.mxu0 %v3618
          %4102 = vmatpush1.bf16.msra.mxu0 %v3617
          %4103 = vmatprep.subr.bf16.mxu0 %v3614
          %4104 = vmatpush1.bf16.msra.mxu0 %v3613
          %4105 = vmatprep.subr.bf16.mxu0 %v3610
          %4106 = vmatpush1.bf16.msra.mxu0 %v3609
          %4107 = vmatprep.subr.bf16.mxu0 %v3670
          %4108 = vmatpush2.bf16.msra.mxu0 %v3669
          %4109 = vmatprep.subr.bf16.mxu0 %v3666
          %4110 = vmatpush2.bf16.msra.mxu0 %v3665
          %4111 = vmatprep.subr.bf16.mxu0 %v3662
          %4112 = vmatpush2.bf16.msra.mxu0 %v3661
          %4113 = vmatprep.subr.bf16.mxu0 %v3658
          %4114 = vmatpush2.bf16.msra.mxu0 %v3657
          %4115 = vmatprep.subr.bf16.mxu0 %v3654
          %4116 = vmatpush2.bf16.msra.mxu0 %v3653
          %4117 = vmatprep.subr.bf16.mxu0 %v3650
          %4118 = vmatpush2.bf16.msra.mxu0 %v3649
          %4119 = vmatprep.subr.bf16.mxu0 %v3646
          %4120 = vmatpush2.bf16.msra.mxu0 %v3645
          %4121 = vmatprep.subr.bf16.mxu0 %v3642
          %4122 = vmatpush2.bf16.msra.mxu0 %v3641
          %4123 = vmatprep.mubr.bf16.mxu0 %v2772
          %4124 = vmatmul.mubr.bf16.gmra.mxu0 %v2771
          %v4125 = vpop.f32.mrf.mxu0
          %v4126 = vadd.f32 %v4085, %v4125
          %v4127 = vpop.f32.mrf.mxu0
          %v4128 = vadd.f32 %v4087, %v4127
          %v4129 = vpop.f32.mrf.mxu0
          %v4130 = vpop.f32.mrf.mxu0
          %4131 = vdwg.mxu0
          %4132 = vmatprep.subr.bf16.mxu0 %v3702
          %4133 = vmatpush1.bf16.msra.mxu0 %v3701
          %4134 = vmatprep.subr.bf16.mxu0 %v3698
          %4135 = vmatpush1.bf16.msra.mxu0 %v3697
          %4136 = vmatprep.subr.bf16.mxu0 %v3694
          %4137 = vmatpush1.bf16.msra.mxu0 %v3693
          %4138 = vmatprep.subr.bf16.mxu0 %v3690
          %4139 = vmatpush1.bf16.msra.mxu0 %v3689
          %4140 = vmatprep.subr.bf16.mxu0 %v3686
          %4141 = vmatpush1.bf16.msra.mxu0 %v3685
          %4142 = vmatprep.subr.bf16.mxu0 %v3682
          %4143 = vmatpush1.bf16.msra.mxu0 %v3681
          %4144 = vmatprep.subr.bf16.mxu0 %v3678
          %4145 = vmatpush1.bf16.msra.mxu0 %v3677
          %4146 = vmatprep.subr.bf16.mxu0 %v3674
          %4147 = vmatpush1.bf16.msra.mxu0 %v3673
          %4148 = vmatprep.subr.bf16.mxu0 %v3734
          %4149 = vmatpush2.bf16.msra.mxu0 %v3733
          %4150 = vmatprep.subr.bf16.mxu0 %v3730
          %4151 = vmatpush2.bf16.msra.mxu0 %v3729
          %4152 = vmatprep.subr.bf16.mxu0 %v3726
          %4153 = vmatpush2.bf16.msra.mxu0 %v3725
          %4154 = vmatprep.subr.bf16.mxu0 %v3722
          %4155 = vmatpush2.bf16.msra.mxu0 %v3721
          %4156 = vmatprep.subr.bf16.mxu0 %v3718
          %4157 = vmatpush2.bf16.msra.mxu0 %v3717
          %4158 = vmatprep.subr.bf16.mxu0 %v3714
          %4159 = vmatpush2.bf16.msra.mxu0 %v3713
          %4160 = vmatprep.subr.bf16.mxu0 %v3710
          %4161 = vmatpush2.bf16.msra.mxu0 %v3709
          %4162 = vmatprep.subr.bf16.mxu0 %v3706
          %4163 = vmatpush2.bf16.msra.mxu0 %v3705
          %4164 = vmatprep.mubr.bf16.mxu0 %v2774
          %4165 = vmatmul.mubr.bf16.gmra.mxu0 %v2773
          %v4166 = vpop.f32.mrf.mxu0
          %v4167 = vadd.f32 %v4126, %v4166
          %v4168 = vpop.f32.mrf.mxu0
          %v4169 = vadd.f32 %v4128, %v4168
          %v4170 = vpop.f32.mrf.mxu0
          %v4171 = vpop.f32.mrf.mxu0
          %4172 = vdwg.mxu0
          %v4177 = vcombine.low %v4044, %v4046
          %v4178 = vcombine.low %v4167, %v4169
          %v4180 = vunpack.c.l.s4 1983009808
          %v4181 = vunpack.c.0.s8 %v4180
          %v4182 = vlaneseq
          %v4183 = vshrl.u32 %v4182, 7
          %v4184 = vsub.s32 %v4181, %v4183
          %v4185 = vrot.slane %v4177, %v4184
          %v4187 = vunpack.c.l.s4 1983009808
          %v4188 = vunpack.c.0.s8 %v4187
          %v4189 = vlaneseq
          %v4190 = vshrl.u32 %v4189, 7
          %v4191 = vsub.s32 %v4188, %v4190
          %v4192 = vrot.slane %v4178, %v4191
          %v4193 = vcombine.low %v4185, %v4192
          %v4195 = vadd.f32 %v2768, %v4193
          %v4196 = vpack.c.bf16 %v2499, %v2499
          %v4197 = vld [vmem:[#allocation18] sm:$0xff]
          %v4198 = vld [vmem:[#allocation18 + $0x8] sm:$0xff]
          %v4201 = vunpack.c.l.b16 %v4197
          %v4202 = vunpack.c.h.b16 %v4197
          %v4203 = vunpack.c.l.b16 %v4198
          %v4204 = vunpack.c.h.b16 %v4198
          %v4205 = vpack.c.b16 %v4201, %v4201
          %v4206 = vpack.c.b16 %v4202, %v4202
          %v4207 = vpack.c.b16 %v4203, %v4203
          %v4208 = vpack.c.b16 %v4204, %v4204
          %v4210 = vsel %vm2331, %v4196, 0
          %vm4212 = vcmask 1042432
          %vm4213 = vcmask 1043456
          %v4214 = vsel %vm4212, 4294967295, 65535
          %v4215 = vsel %vm4213, %v4214, 0
          %v4217 = vand.u32 %v4205, %v4215
          %v4220 = vand.u32 %v4206, %v4215
          %v4223 = vand.u32 %v4207, %v4215
          %v4226 = vand.u32 %v4208, %v4215
          %4228 = vmatprep.subr.bf16.mxu0 0
          %4229 = vmatpush1.bf16.msra.mxu0 0
          %4230 = vmatprep.subr.bf16.mxu0 0
          %4231 = vmatpush1.bf16.msra.mxu0 0
          %4232 = vmatprep.subr.bf16.mxu0 0
          %4233 = vmatpush1.bf16.msra.mxu0 0
          %4234 = vmatprep.subr.bf16.mxu0 0
          %4235 = vmatpush1.bf16.msra.mxu0 0
          %4236 = vmatprep.subr.bf16.mxu0 0
          %4237 = vmatpush1.bf16.msra.mxu0 0
          %4238 = vmatprep.subr.bf16.mxu0 0
          %4239 = vmatpush1.bf16.msra.mxu0 0
          %4240 = vmatprep.subr.bf16.mxu0 0
          %4241 = vmatpush1.bf16.msra.mxu0 0
          %4242 = vmatprep.subr.bf16.mxu0 %v4220
          %4243 = vmatpush1.bf16.msra.mxu0 %v4217
          %4244 = vmatprep.subr.bf16.mxu0 0
          %4245 = vmatpush2.bf16.msra.mxu0 0
          %4246 = vmatprep.subr.bf16.mxu0 0
          %4247 = vmatpush2.bf16.msra.mxu0 0
          %4248 = vmatprep.subr.bf16.mxu0 0
          %4249 = vmatpush2.bf16.msra.mxu0 0
          %4250 = vmatprep.subr.bf16.mxu0 0
          %4251 = vmatpush2.bf16.msra.mxu0 0
          %4252 = vmatprep.subr.bf16.mxu0 0
          %4253 = vmatpush2.bf16.msra.mxu0 0
          %4254 = vmatprep.subr.bf16.mxu0 0
          %4255 = vmatpush2.bf16.msra.mxu0 0
          %4256 = vmatprep.subr.bf16.mxu0 0
          %4257 = vmatpush2.bf16.msra.mxu0 0
          %4258 = vmatprep.subr.bf16.mxu0 0
          %4259 = vmatpush2.bf16.msra.mxu0 0
          %4260 = vmatprep.mubr.bf16.mxu0 0
          %4261 = vmatmul.mubr.bf16.gmra.mxu0 %v4210
          %v4262 = vpop.f32.mrf.mxu0
          %v4263 = vadd.f32 0.0, %v4262
          %v4264 = vpop.f32.mrf.mxu0
          %v4265 = vadd.f32 0.0, %v4264
          %v4266 = vpop.f32.mrf.mxu0
          %v4267 = vpop.f32.mrf.mxu0
          %4268 = vdwg.mxu0
          %4269 = vmatprep.subr.bf16.mxu0 0
          %4270 = vmatpush1.bf16.msra.mxu0 0
          %4271 = vmatprep.subr.bf16.mxu0 0
          %4272 = vmatpush1.bf16.msra.mxu0 0
          %4273 = vmatprep.subr.bf16.mxu0 0
          %4274 = vmatpush1.bf16.msra.mxu0 0
          %4275 = vmatprep.subr.bf16.mxu0 0
          %4276 = vmatpush1.bf16.msra.mxu0 0
          %4277 = vmatprep.subr.bf16.mxu0 0
          %4278 = vmatpush1.bf16.msra.mxu0 0
          %4279 = vmatprep.subr.bf16.mxu0 0
          %4280 = vmatpush1.bf16.msra.mxu0 0
          %4281 = vmatprep.subr.bf16.mxu0 0
          %4282 = vmatpush1.bf16.msra.mxu0 0
          %4283 = vmatprep.subr.bf16.mxu0 %v4226
          %4284 = vmatpush1.bf16.msra.mxu0 %v4223
          %4285 = vmatprep.subr.bf16.mxu0 0
          %4286 = vmatpush2.bf16.msra.mxu0 0
          %4287 = vmatprep.subr.bf16.mxu0 0
          %4288 = vmatpush2.bf16.msra.mxu0 0
          %4289 = vmatprep.subr.bf16.mxu0 0
          %4290 = vmatpush2.bf16.msra.mxu0 0
          %4291 = vmatprep.subr.bf16.mxu0 0
          %4292 = vmatpush2.bf16.msra.mxu0 0
          %4293 = vmatprep.subr.bf16.mxu0 0
          %4294 = vmatpush2.bf16.msra.mxu0 0
          %4295 = vmatprep.subr.bf16.mxu0 0
          %4296 = vmatpush2.bf16.msra.mxu0 0
          %4297 = vmatprep.subr.bf16.mxu0 0
          %4298 = vmatpush2.bf16.msra.mxu0 0
          %4299 = vmatprep.subr.bf16.mxu0 0
          %4300 = vmatpush2.bf16.msra.mxu0 0
          %4301 = vmatprep.mubr.bf16.mxu0 0
          %4302 = vmatmul.mubr.bf16.gmra.mxu0 %v4210
          %v4303 = vpop.f32.mrf.mxu0
          %v4304 = vadd.f32 0.0, %v4303
          %v4305 = vpop.f32.mrf.mxu0
          %v4306 = vadd.f32 0.0, %v4305
          %v4307 = vpop.f32.mrf.mxu0
          %v4308 = vpop.f32.mrf.mxu0
          %4309 = vdwg.mxu0
          %v4314 = vcombine.low %v4263, %v4265
          %v4315 = vcombine.low %v4304, %v4306
          %v4317 = vunpack.c.l.s4 1983009808
          %v4318 = vunpack.c.0.s8 %v4317
          %v4319 = vlaneseq
          %v4320 = vshrl.u32 %v4319, 7
          %v4321 = vsub.s32 %v4318, %v4320
          %v4322 = vrot.slane %v4314, %v4321
          %v4324 = vunpack.c.l.s4 1983009808
          %v4325 = vunpack.c.0.s8 %v4324
          %v4326 = vlaneseq
          %v4327 = vshrl.u32 %v4326, 7
          %v4328 = vsub.s32 %v4325, %v4327
          %v4329 = vrot.slane %v4315, %v4328
          %v4330 = vcombine.low %v4322, %v4329
          %v4332 = vadd.f32 %v4195, %v4330
          %v4333 = vld [vmem:[#allocation19] sm:$0xf]
          %v4335 = vlaneseq
          %v4336 = vshrl.u32 %v4335, 7
          %v4337 = vsub.s32 0, %v4336
          %v4338 = vrot.slane %v4333, %v4337
          %v4339 = vlaneseq
          %v4340 = vshrl.u32 %v4339, 7
          %v4341 = vsub.s32 1, %v4340
          %v4342 = vrot.slane %v4333, %v4341
          %v4343 = vlaneseq
          %v4344 = vshrl.u32 %v4343, 7
          %v4345 = vsub.s32 2, %v4344
          %v4346 = vrot.slane %v4333, %v4345
          %v4347 = vlaneseq
          %v4348 = vshrl.u32 %v4347, 7
          %v4349 = vsub.s32 3, %v4348
          %v4350 = vrot.slane %v4333, %v4349
          %v4351 = vcombine.low %v4338, %v4342
          %v4352 = vcombine.low %v4346, %v4350
          %v4354 = vunpack.c.l.s4 1983009808
          %v4355 = vunpack.c.0.s8 %v4354
          %v4356 = vlaneseq
          %v4357 = vshrl.u32 %v4356, 7
          %v4358 = vsub.s32 %v4355, %v4357
          %v4359 = vrot.slane %v4351, %v4358
          %v4361 = vunpack.c.l.s4 1983009808
          %v4362 = vunpack.c.0.s8 %v4361
          %v4363 = vlaneseq
          %v4364 = vshrl.u32 %v4363, 7
          %v4365 = vsub.s32 %v4362, %v4364
          %v4366 = vrot.slane %v4352, %v4365
          %v4367 = vcombine.low %v4359, %v4366
          %v4369 = vmul.f32 %v4332, %v4367
          %v4370 = vld [vmem:[#allocation21] sm:$0xf]
          %v4372 = vlaneseq
          %v4373 = vshrl.u32 %v4372, 7
          %v4374 = vsub.s32 0, %v4373
          %v4375 = vrot.slane %v4370, %v4374
          %v4376 = vlaneseq
          %v4377 = vshrl.u32 %v4376, 7
          %v4378 = vsub.s32 1, %v4377
          %v4379 = vrot.slane %v4370, %v4378
          %v4380 = vlaneseq
          %v4381 = vshrl.u32 %v4380, 7
          %v4382 = vsub.s32 2, %v4381
          %v4383 = vrot.slane %v4370, %v4382
          %v4384 = vlaneseq
          %v4385 = vshrl.u32 %v4384, 7
          %v4386 = vsub.s32 3, %v4385
          %v4387 = vrot.slane %v4370, %v4386
          %v4388 = vcombine.low %v4375, %v4379
          %v4389 = vcombine.low %v4383, %v4387
          %v4391 = vunpack.c.l.s4 1983009808
          %v4392 = vunpack.c.0.s8 %v4391
          %v4393 = vlaneseq
          %v4394 = vshrl.u32 %v4393, 7
          %v4395 = vsub.s32 %v4392, %v4394
          %v4396 = vrot.slane %v4388, %v4395
          %v4398 = vunpack.c.l.s4 1983009808
          %v4399 = vunpack.c.0.s8 %v4398
          %v4400 = vlaneseq
          %v4401 = vshrl.u32 %v4400, 7
          %v4402 = vsub.s32 %v4399, %v4401
          %v4403 = vrot.slane %v4389, %v4402
          %v4404 = vcombine.low %v4396, %v4403
          %v4406 = vadd.f32 %v4369, %v4404
          %v4407 = vmax.f32 %v4406, 0.0
          %v4409 = vcombine.high %v4407, %v4407
          %v4411 = vunpack.c.l.s4 1983009808
          %v4412 = vunpack.c.0.s8 %v4411
          %v4413 = vlaneseq
          %v4414 = vshrl.u32 %v4413, 7
          %v4415 = vsub.s32 %v4412, %v4414
          %v4416 = vrot.slane %v4407, %v4415
          %v4418 = vunpack.c.l.s4 1983009808
          %v4419 = vunpack.c.0.s8 %v4418
          %v4420 = vlaneseq
          %v4421 = vshrl.u32 %v4420, 7
          %v4422 = vsub.s32 %v4419, %v4421
          %v4423 = vrot.slane %v4409, %v4422
          %v4424 = vcombine.high %v4416, %v4416
          %v4425 = vcombine.high %v4423, %v4423
          %v4430 = vpack.c.bf16 %v4416, %v4416
          %v4431 = vpack.c.bf16 %v4424, %v4424
          %v4432 = vpack.c.bf16 %v4423, %v4423
          %v4433 = vpack.c.bf16 %v4425, %v4425
          %v4434 = vld [vmem:[%s16] sm:$0xff]
          %v4435 = vld [vmem:[%s16 + $0x8] sm:$0xff]
          %v4436 = vld [vmem:[%s16 + $0x10] sm:$0xff]
          %v4437 = vld [vmem:[%s16 + $0x18] sm:$0xff]
          %v4438 = vld [vmem:[%s16 + $0x20] sm:$0xff]
          %v4439 = vld [vmem:[%s16 + $0x28] sm:$0xff]
          %v4440 = vld [vmem:[%s16 + $0x30] sm:$0xff]
          %v4441 = vld [vmem:[%s16 + $0x38] sm:$0xff]
          %v4442 = vld [vmem:[%s16 + $0x40] sm:$0xff]
          %v4443 = vld [vmem:[%s16 + $0x48] sm:$0xff]
          %v4444 = vld [vmem:[%s16 + $0x50] sm:$0xff]
          %v4445 = vld [vmem:[%s16 + $0x58] sm:$0xff]
          %v4446 = vld [vmem:[%s16 + $0x60] sm:$0xff]
          %v4447 = vld [vmem:[%s16 + $0x68] sm:$0xff]
          %v4448 = vld [vmem:[%s16 + $0x70] sm:$0xff]
          %v4449 = vld [vmem:[%s16 + $0x78] sm:$0xff]
          %v4450 = vld [vmem:[%s16 + $0x80] sm:$0xff]
          %v4451 = vld [vmem:[%s16 + $0x88] sm:$0xff]
          %v4452 = vld [vmem:[%s16 + $0x90] sm:$0xff]
          %v4453 = vld [vmem:[%s16 + $0x98] sm:$0xff]
          %v4454 = vld [vmem:[%s16 + $0xa0] sm:$0xff]
          %v4455 = vld [vmem:[%s16 + $0xa8] sm:$0xff]
          %v4456 = vld [vmem:[%s16 + $0xb0] sm:$0xff]
          %v4457 = vld [vmem:[%s16 + $0xb8] sm:$0xff]
          %v4458 = vld [vmem:[%s16 + $0xc0] sm:$0xff]
          %v4459 = vld [vmem:[%s16 + $0xc8] sm:$0xff]
          %v4460 = vld [vmem:[%s16 + $0xd0] sm:$0xff]
          %v4461 = vld [vmem:[%s16 + $0xd8] sm:$0xff]
          %v4462 = vld [vmem:[%s16 + $0xe0] sm:$0xff]
          %v4463 = vld [vmem:[%s16 + $0xe8] sm:$0xff]
          %v4464 = vld [vmem:[%s16 + $0xf0] sm:$0xff]
          %v4465 = vld [vmem:[%s16 + $0xf8] sm:$0xff]
          %v4466 = vld [vmem:[%s16 + $0x100] sm:$0xff]
          %v4467 = vld [vmem:[%s16 + $0x108] sm:$0xff]
          %v4468 = vld [vmem:[%s16 + $0x110] sm:$0xff]
          %v4469 = vld [vmem:[%s16 + $0x118] sm:$0xff]
          %v4470 = vld [vmem:[%s16 + $0x120] sm:$0xff]
          %v4471 = vld [vmem:[%s16 + $0x128] sm:$0xff]
          %v4472 = vld [vmem:[%s16 + $0x130] sm:$0xff]
          %v4473 = vld [vmem:[%s16 + $0x138] sm:$0xff]
          %v4474 = vld [vmem:[%s16 + $0x140] sm:$0xff]
          %v4475 = vld [vmem:[%s16 + $0x148] sm:$0xff]
          %v4476 = vld [vmem:[%s16 + $0x150] sm:$0xff]
          %v4477 = vld [vmem:[%s16 + $0x158] sm:$0xff]
          %v4478 = vld [vmem:[%s16 + $0x160] sm:$0xff]
          %v4479 = vld [vmem:[%s16 + $0x168] sm:$0xff]
          %v4480 = vld [vmem:[%s16 + $0x170] sm:$0xff]
          %v4481 = vld [vmem:[%s16 + $0x178] sm:$0xff]
          %v4482 = vld [vmem:[%s16 + $0x180] sm:$0xff]
          %v4483 = vld [vmem:[%s16 + $0x188] sm:$0xff]
          %v4484 = vld [vmem:[%s16 + $0x190] sm:$0xff]
          %v4485 = vld [vmem:[%s16 + $0x198] sm:$0xff]
          %v4486 = vld [vmem:[%s16 + $0x1a0] sm:$0xff]
          %v4487 = vld [vmem:[%s16 + $0x1a8] sm:$0xff]
          %v4488 = vld [vmem:[%s16 + $0x1b0] sm:$0xff]
          %v4489 = vld [vmem:[%s16 + $0x1b8] sm:$0xff]
          %v4490 = vld [vmem:[%s16 + $0x1c0] sm:$0xff]
          %v4491 = vld [vmem:[%s16 + $0x1c8] sm:$0xff]
          %v4492 = vld [vmem:[%s16 + $0x1d0] sm:$0xff]
          %v4493 = vld [vmem:[%s16 + $0x1d8] sm:$0xff]
          %v4494 = vld [vmem:[%s16 + $0x1e0] sm:$0xff]
          %v4495 = vld [vmem:[%s16 + $0x1e8] sm:$0xff]
          %v4496 = vld [vmem:[%s16 + $0x1f0] sm:$0xff]
          %v4497 = vld [vmem:[%s16 + $0x1f8] sm:$0xff]
          %v4562 = vunpack.c.l.b16 %v4434
          %v4563 = vunpack.c.h.b16 %v4434
          %v4564 = vunpack.c.l.b16 %v4435
          %v4565 = vunpack.c.h.b16 %v4435
          %v4566 = vunpack.c.l.b16 %v4436
          %v4567 = vunpack.c.h.b16 %v4436
          %v4568 = vunpack.c.l.b16 %v4437
          %v4569 = vunpack.c.h.b16 %v4437
          %v4570 = vunpack.c.l.b16 %v4438
          %v4571 = vunpack.c.h.b16 %v4438
          %v4572 = vunpack.c.l.b16 %v4439
          %v4573 = vunpack.c.h.b16 %v4439
          %v4574 = vunpack.c.l.b16 %v4440
          %v4575 = vunpack.c.h.b16 %v4440
          %v4576 = vunpack.c.l.b16 %v4441
          %v4577 = vunpack.c.h.b16 %v4441
          %v4578 = vunpack.c.l.b16 %v4442
          %v4579 = vunpack.c.h.b16 %v4442
          %v4580 = vunpack.c.l.b16 %v4443
          %v4581 = vunpack.c.h.b16 %v4443
          %v4582 = vunpack.c.l.b16 %v4444
          %v4583 = vunpack.c.h.b16 %v4444
          %v4584 = vunpack.c.l.b16 %v4445
          %v4585 = vunpack.c.h.b16 %v4445
          %v4586 = vunpack.c.l.b16 %v4446
          %v4587 = vunpack.c.h.b16 %v4446
          %v4588 = vunpack.c.l.b16 %v4447
          %v4589 = vunpack.c.h.b16 %v4447
          %v4590 = vunpack.c.l.b16 %v4448
          %v4591 = vunpack.c.h.b16 %v4448
          %v4592 = vunpack.c.l.b16 %v4449
          %v4593 = vunpack.c.h.b16 %v4449
          %v4594 = vunpack.c.l.b16 %v4450
          %v4595 = vunpack.c.h.b16 %v4450
          %v4596 = vunpack.c.l.b16 %v4451
          %v4597 = vunpack.c.h.b16 %v4451
          %v4598 = vunpack.c.l.b16 %v4452
          %v4599 = vunpack.c.h.b16 %v4452
          %v4600 = vunpack.c.l.b16 %v4453
          %v4601 = vunpack.c.h.b16 %v4453
          %v4602 = vunpack.c.l.b16 %v4454
          %v4603 = vunpack.c.h.b16 %v4454
          %v4604 = vunpack.c.l.b16 %v4455
          %v4605 = vunpack.c.h.b16 %v4455
          %v4606 = vunpack.c.l.b16 %v4456
          %v4607 = vunpack.c.h.b16 %v4456
          %v4608 = vunpack.c.l.b16 %v4457
          %v4609 = vunpack.c.h.b16 %v4457
          %v4610 = vunpack.c.l.b16 %v4458
          %v4611 = vunpack.c.h.b16 %v4458
          %v4612 = vunpack.c.l.b16 %v4459
          %v4613 = vunpack.c.h.b16 %v4459
          %v4614 = vunpack.c.l.b16 %v4460
          %v4615 = vunpack.c.h.b16 %v4460
          %v4616 = vunpack.c.l.b16 %v4461
          %v4617 = vunpack.c.h.b16 %v4461
          %v4618 = vunpack.c.l.b16 %v4462
          %v4619 = vunpack.c.h.b16 %v4462
          %v4620 = vunpack.c.l.b16 %v4463
          %v4621 = vunpack.c.h.b16 %v4463
          %v4622 = vunpack.c.l.b16 %v4464
          %v4623 = vunpack.c.h.b16 %v4464
          %v4624 = vunpack.c.l.b16 %v4465
          %v4625 = vunpack.c.h.b16 %v4465
          %v4626 = vunpack.c.l.b16 %v4466
          %v4627 = vunpack.c.h.b16 %v4466
          %v4628 = vunpack.c.l.b16 %v4467
          %v4629 = vunpack.c.h.b16 %v4467
          %v4630 = vunpack.c.l.b16 %v4468
          %v4631 = vunpack.c.h.b16 %v4468
          %v4632 = vunpack.c.l.b16 %v4469
          %v4633 = vunpack.c.h.b16 %v4469
          %v4634 = vunpack.c.l.b16 %v4470
          %v4635 = vunpack.c.h.b16 %v4470
          %v4636 = vunpack.c.l.b16 %v4471
          %v4637 = vunpack.c.h.b16 %v4471
          %v4638 = vunpack.c.l.b16 %v4472
          %v4639 = vunpack.c.h.b16 %v4472
          %v4640 = vunpack.c.l.b16 %v4473
          %v4641 = vunpack.c.h.b16 %v4473
          %v4642 = vunpack.c.l.b16 %v4474
          %v4643 = vunpack.c.h.b16 %v4474
          %v4644 = vunpack.c.l.b16 %v4475
          %v4645 = vunpack.c.h.b16 %v4475
          %v4646 = vunpack.c.l.b16 %v4476
          %v4647 = vunpack.c.h.b16 %v4476
          %v4648 = vunpack.c.l.b16 %v4477
          %v4649 = vunpack.c.h.b16 %v4477
          %v4650 = vunpack.c.l.b16 %v4478
          %v4651 = vunpack.c.h.b16 %v4478
          %v4652 = vunpack.c.l.b16 %v4479
          %v4653 = vunpack.c.h.b16 %v4479
          %v4654 = vunpack.c.l.b16 %v4480
          %v4655 = vunpack.c.h.b16 %v4480
          %v4656 = vunpack.c.l.b16 %v4481
          %v4657 = vunpack.c.h.b16 %v4481
          %v4658 = vunpack.c.l.b16 %v4482
          %v4659 = vunpack.c.h.b16 %v4482
          %v4660 = vunpack.c.l.b16 %v4483
          %v4661 = vunpack.c.h.b16 %v4483
          %v4662 = vunpack.c.l.b16 %v4484
          %v4663 = vunpack.c.h.b16 %v4484
          %v4664 = vunpack.c.l.b16 %v4485
          %v4665 = vunpack.c.h.b16 %v4485
          %v4666 = vunpack.c.l.b16 %v4486
          %v4667 = vunpack.c.h.b16 %v4486
          %v4668 = vunpack.c.l.b16 %v4487
          %v4669 = vunpack.c.h.b16 %v4487
          %v4670 = vunpack.c.l.b16 %v4488
          %v4671 = vunpack.c.h.b16 %v4488
          %v4672 = vunpack.c.l.b16 %v4489
          %v4673 = vunpack.c.h.b16 %v4489
          %v4674 = vunpack.c.l.b16 %v4490
          %v4675 = vunpack.c.h.b16 %v4490
          %v4676 = vunpack.c.l.b16 %v4491
          %v4677 = vunpack.c.h.b16 %v4491
          %v4678 = vunpack.c.l.b16 %v4492
          %v4679 = vunpack.c.h.b16 %v4492
          %v4680 = vunpack.c.l.b16 %v4493
          %v4681 = vunpack.c.h.b16 %v4493
          %v4682 = vunpack.c.l.b16 %v4494
          %v4683 = vunpack.c.h.b16 %v4494
          %v4684 = vunpack.c.l.b16 %v4495
          %v4685 = vunpack.c.h.b16 %v4495
          %v4686 = vunpack.c.l.b16 %v4496
          %v4687 = vunpack.c.h.b16 %v4496
          %v4688 = vunpack.c.l.b16 %v4497
          %v4689 = vunpack.c.h.b16 %v4497
          %v4690 = vpack.c.b16 %v4564, %v4562
          %v4691 = vpack.c.b16 %v4565, %v4563
          %v4692 = vpack.c.b16 %v4568, %v4566
          %v4693 = vpack.c.b16 %v4569, %v4567
          %v4694 = vpack.c.b16 %v4572, %v4570
          %v4695 = vpack.c.b16 %v4573, %v4571
          %v4696 = vpack.c.b16 %v4576, %v4574
          %v4697 = vpack.c.b16 %v4577, %v4575
          %v4698 = vpack.c.b16 %v4580, %v4578
          %v4699 = vpack.c.b16 %v4581, %v4579
          %v4700 = vpack.c.b16 %v4584, %v4582
          %v4701 = vpack.c.b16 %v4585, %v4583
          %v4702 = vpack.c.b16 %v4588, %v4586
          %v4703 = vpack.c.b16 %v4589, %v4587
          %v4704 = vpack.c.b16 %v4592, %v4590
          %v4705 = vpack.c.b16 %v4593, %v4591
          %v4706 = vpack.c.b16 %v4596, %v4594
          %v4707 = vpack.c.b16 %v4597, %v4595
          %v4708 = vpack.c.b16 %v4600, %v4598
          %v4709 = vpack.c.b16 %v4601, %v4599
          %v4710 = vpack.c.b16 %v4604, %v4602
          %v4711 = vpack.c.b16 %v4605, %v4603
          %v4712 = vpack.c.b16 %v4608, %v4606
          %v4713 = vpack.c.b16 %v4609, %v4607
          %v4714 = vpack.c.b16 %v4612, %v4610
          %v4715 = vpack.c.b16 %v4613, %v4611
          %v4716 = vpack.c.b16 %v4616, %v4614
          %v4717 = vpack.c.b16 %v4617, %v4615
          %v4718 = vpack.c.b16 %v4620, %v4618
          %v4719 = vpack.c.b16 %v4621, %v4619
          %v4720 = vpack.c.b16 %v4624, %v4622
          %v4721 = vpack.c.b16 %v4625, %v4623
          %v4722 = vpack.c.b16 %v4628, %v4626
          %v4723 = vpack.c.b16 %v4629, %v4627
          %v4724 = vpack.c.b16 %v4632, %v4630
          %v4725 = vpack.c.b16 %v4633, %v4631
          %v4726 = vpack.c.b16 %v4636, %v4634
          %v4727 = vpack.c.b16 %v4637, %v4635
          %v4728 = vpack.c.b16 %v4640, %v4638
          %v4729 = vpack.c.b16 %v4641, %v4639
          %v4730 = vpack.c.b16 %v4644, %v4642
          %v4731 = vpack.c.b16 %v4645, %v4643
          %v4732 = vpack.c.b16 %v4648, %v4646
          %v4733 = vpack.c.b16 %v4649, %v4647
          %v4734 = vpack.c.b16 %v4652, %v4650
          %v4735 = vpack.c.b16 %v4653, %v4651
          %v4736 = vpack.c.b16 %v4656, %v4654
          %v4737 = vpack.c.b16 %v4657, %v4655
          %v4738 = vpack.c.b16 %v4660, %v4658
          %v4739 = vpack.c.b16 %v4661, %v4659
          %v4740 = vpack.c.b16 %v4664, %v4662
          %v4741 = vpack.c.b16 %v4665, %v4663
          %v4742 = vpack.c.b16 %v4668, %v4666
          %v4743 = vpack.c.b16 %v4669, %v4667
          %v4744 = vpack.c.b16 %v4672, %v4670
          %v4745 = vpack.c.b16 %v4673, %v4671
          %v4746 = vpack.c.b16 %v4676, %v4674
          %v4747 = vpack.c.b16 %v4677, %v4675
          %v4748 = vpack.c.b16 %v4680, %v4678
          %v4749 = vpack.c.b16 %v4681, %v4679
          %v4750 = vpack.c.b16 %v4684, %v4682
          %v4751 = vpack.c.b16 %v4685, %v4683
          %v4752 = vpack.c.b16 %v4688, %v4686
          %v4753 = vpack.c.b16 %v4689, %v4687
          %4818 = vmatprep.subr.bf16.mxu0 %v4705
          %4819 = vmatpush1.bf16.msra.mxu0 %v4704
          %4820 = vmatprep.subr.bf16.mxu0 %v4703
          %4821 = vmatpush1.bf16.msra.mxu0 %v4702
          %4822 = vmatprep.subr.bf16.mxu0 %v4701
          %4823 = vmatpush1.bf16.msra.mxu0 %v4700
          %4824 = vmatprep.subr.bf16.mxu0 %v4699
          %4825 = vmatpush1.bf16.msra.mxu0 %v4698
          %4826 = vmatprep.subr.bf16.mxu0 %v4697
          %4827 = vmatpush1.bf16.msra.mxu0 %v4696
          %4828 = vmatprep.subr.bf16.mxu0 %v4695
          %4829 = vmatpush1.bf16.msra.mxu0 %v4694
          %4830 = vmatprep.subr.bf16.mxu0 %v4693
          %4831 = vmatpush1.bf16.msra.mxu0 %v4692
          %4832 = vmatprep.subr.bf16.mxu0 %v4691
          %4833 = vmatpush1.bf16.msra.mxu0 %v4690
          %4834 = vmatprep.subr.bf16.mxu0 %v4721
          %4835 = vmatpush2.bf16.msra.mxu0 %v4720
          %4836 = vmatprep.subr.bf16.mxu0 %v4719
          %4837 = vmatpush2.bf16.msra.mxu0 %v4718
          %4838 = vmatprep.subr.bf16.mxu0 %v4717
          %4839 = vmatpush2.bf16.msra.mxu0 %v4716
          %4840 = vmatprep.subr.bf16.mxu0 %v4715
          %4841 = vmatpush2.bf16.msra.mxu0 %v4714
          %4842 = vmatprep.subr.bf16.mxu0 %v4713
          %4843 = vmatpush2.bf16.msra.mxu0 %v4712
          %4844 = vmatprep.subr.bf16.mxu0 %v4711
          %4845 = vmatpush2.bf16.msra.mxu0 %v4710
          %4846 = vmatprep.subr.bf16.mxu0 %v4709
          %4847 = vmatpush2.bf16.msra.mxu0 %v4708
          %4848 = vmatprep.subr.bf16.mxu0 %v4707
          %4849 = vmatpush2.bf16.msra.mxu0 %v4706
          %4850 = vmatprep.mubr.bf16.mxu0 %v4431
          %4851 = vmatmul.mubr.bf16.gmra.mxu0 %v4430
          %v4852 = vpop.f32.mrf.mxu0
          %v4853 = vadd.f32 0.0, %v4852
          %v4854 = vpop.f32.mrf.mxu0
          %v4855 = vadd.f32 0.0, %v4854
          %v4856 = vpop.f32.mrf.mxu0
          %v4857 = vpop.f32.mrf.mxu0
          %4858 = vdwg.mxu0
          %4859 = vmatprep.subr.bf16.mxu0 %v4737
          %4860 = vmatpush1.bf16.msra.mxu0 %v4736
          %4861 = vmatprep.subr.bf16.mxu0 %v4735
          %4862 = vmatpush1.bf16.msra.mxu0 %v4734
          %4863 = vmatprep.subr.bf16.mxu0 %v4733
          %4864 = vmatpush1.bf16.msra.mxu0 %v4732
          %4865 = vmatprep.subr.bf16.mxu0 %v4731
          %4866 = vmatpush1.bf16.msra.mxu0 %v4730
          %4867 = vmatprep.subr.bf16.mxu0 %v4729
          %4868 = vmatpush1.bf16.msra.mxu0 %v4728
          %4869 = vmatprep.subr.bf16.mxu0 %v4727
          %4870 = vmatpush1.bf16.msra.mxu0 %v4726
          %4871 = vmatprep.subr.bf16.mxu0 %v4725
          %4872 = vmatpush1.bf16.msra.mxu0 %v4724
          %4873 = vmatprep.subr.bf16.mxu0 %v4723
          %4874 = vmatpush1.bf16.msra.mxu0 %v4722
          %4875 = vmatprep.subr.bf16.mxu0 %v4753
          %4876 = vmatpush2.bf16.msra.mxu0 %v4752
          %4877 = vmatprep.subr.bf16.mxu0 %v4751
          %4878 = vmatpush2.bf16.msra.mxu0 %v4750
          %4879 = vmatprep.subr.bf16.mxu0 %v4749
          %4880 = vmatpush2.bf16.msra.mxu0 %v4748
          %4881 = vmatprep.subr.bf16.mxu0 %v4747
          %4882 = vmatpush2.bf16.msra.mxu0 %v4746
          %4883 = vmatprep.subr.bf16.mxu0 %v4745
          %4884 = vmatpush2.bf16.msra.mxu0 %v4744
          %4885 = vmatprep.subr.bf16.mxu0 %v4743
          %4886 = vmatpush2.bf16.msra.mxu0 %v4742
          %4887 = vmatprep.subr.bf16.mxu0 %v4741
          %4888 = vmatpush2.bf16.msra.mxu0 %v4740
          %4889 = vmatprep.subr.bf16.mxu0 %v4739
          %4890 = vmatpush2.bf16.msra.mxu0 %v4738
          %4891 = vmatprep.mubr.bf16.mxu0 %v4433
          %4892 = vmatmul.mubr.bf16.gmra.mxu0 %v4432
          %v4893 = vpop.f32.mrf.mxu0
          %v4894 = vadd.f32 %v4853, %v4893
          %v4895 = vpop.f32.mrf.mxu0
          %v4896 = vadd.f32 %v4855, %v4895
          %v4897 = vpop.f32.mrf.mxu0
          %v4898 = vpop.f32.mrf.mxu0
          %4899 = vdwg.mxu0
          %v4900 = vld [vmem:[#allocation22] sm:$0x3]
          %v4902 = vlaneseq
          %v4903 = vshrl.u32 %v4902, 7
          %v4904 = vsub.s32 0, %v4903
          %v4905 = vrot.slane %v4900, %v4904
          %v4906 = vlaneseq
          %v4907 = vshrl.u32 %v4906, 7
          %v4908 = vsub.s32 1, %v4907
          %v4909 = vrot.slane %v4900, %v4908
          %v4912 = vmul.f32 %v4894, %v4905
          %v4913 = vmul.f32 %v4896, %v4909
          %v4914 = vld [vmem:[#allocation24] sm:$0x3]
          %v4916 = vlaneseq
          %v4917 = vshrl.u32 %v4916, 7
          %v4918 = vsub.s32 0, %v4917
          %v4919 = vrot.slane %v4914, %v4918
          %v4920 = vlaneseq
          %v4921 = vshrl.u32 %v4920, 7
          %v4922 = vsub.s32 1, %v4921
          %v4923 = vrot.slane %v4914, %v4922
          %v4926 = vadd.f32 %v4912, %v4919
          %v4927 = vadd.f32 %v4913, %v4923
          %v4928 = vmax.f32 %v4926, 0.0
          %v4929 = vmax.f32 %v4927, 0.0
          %v4930 = vpack.c.bf16 %v4928, %v4928
          %v4931 = vpack.c.bf16 %v4929, %v4929
          %v4932 = vld [vmem:[%s19] sm:$0xf]
          %v4933 = vld [vmem:[%s19 + $0x4] sm:$0xf]
          %v4934 = vld [vmem:[%s19 + $0x8] sm:$0xf]
          %v4935 = vld [vmem:[%s19 + $0xc] sm:$0xf]
          %v4936 = vld [vmem:[%s19 + $0x10] sm:$0xf]
          %v4937 = vld [vmem:[%s19 + $0x14] sm:$0xf]
          %v4938 = vld [vmem:[%s19 + $0x18] sm:$0xf]
          %v4939 = vld [vmem:[%s19 + $0x1c] sm:$0xf]
          %v4940 = vld [vmem:[%s19 + $0x20] sm:$0xf]
          %v4941 = vld [vmem:[%s19 + $0x24] sm:$0xf]
          %v4942 = vld [vmem:[%s19 + $0x28] sm:$0xf]
          %v4943 = vld [vmem:[%s19 + $0x2c] sm:$0xf]
          %v4944 = vld [vmem:[%s19 + $0x30] sm:$0xf]
          %v4945 = vld [vmem:[%s19 + $0x34] sm:$0xf]
          %v4946 = vld [vmem:[%s19 + $0x38] sm:$0xf]
          %v4947 = vld [vmem:[%s19 + $0x3c] sm:$0xf]
          %v4948 = vld [vmem:[%s19 + $0x40] sm:$0xf]
          %v4949 = vld [vmem:[%s19 + $0x44] sm:$0xf]
          %v4950 = vld [vmem:[%s19 + $0x48] sm:$0xf]
          %v4951 = vld [vmem:[%s19 + $0x4c] sm:$0xf]
          %v4952 = vld [vmem:[%s19 + $0x50] sm:$0xf]
          %v4953 = vld [vmem:[%s19 + $0x54] sm:$0xf]
          %v4954 = vld [vmem:[%s19 + $0x58] sm:$0xf]
          %v4955 = vld [vmem:[%s19 + $0x5c] sm:$0xf]
          %v4956 = vld [vmem:[%s19 + $0x60] sm:$0xf]
          %v4957 = vld [vmem:[%s19 + $0x64] sm:$0xf]
          %v4958 = vld [vmem:[%s19 + $0x68] sm:$0xf]
          %v4959 = vld [vmem:[%s19 + $0x6c] sm:$0xf]
          %v4960 = vld [vmem:[%s19 + $0x70] sm:$0xf]
          %v4961 = vld [vmem:[%s19 + $0x74] sm:$0xf]
          %v4962 = vld [vmem:[%s19 + $0x78] sm:$0xf]
          %v4963 = vld [vmem:[%s19 + $0x7c] sm:$0xf]
          %v4964 = vld [vmem:[#allocation25] sm:$0x1]
          %v4966 = vlaneseq
          %v4967 = vshrl.u32 %v4966, 7
          %v4968 = vsub.s32 0, %v4967
          %v4969 = vrot.slane %v4964, %v4968
          %v5003 = vunpack.c.l.b16 %v4932
          %v5004 = vunpack.c.l.b16 %v4933
          %v5005 = vunpack.c.l.b16 %v4934
          %v5006 = vunpack.c.l.b16 %v4935
          %v5007 = vunpack.c.l.b16 %v4936
          %v5008 = vunpack.c.l.b16 %v4937
          %v5009 = vunpack.c.l.b16 %v4938
          %v5010 = vunpack.c.l.b16 %v4939
          %v5011 = vunpack.c.l.b16 %v4940
          %v5012 = vunpack.c.l.b16 %v4941
          %v5013 = vunpack.c.l.b16 %v4942
          %v5014 = vunpack.c.l.b16 %v4943
          %v5015 = vunpack.c.l.b16 %v4944
          %v5016 = vunpack.c.l.b16 %v4945
          %v5017 = vunpack.c.l.b16 %v4946
          %v5018 = vunpack.c.l.b16 %v4947
          %v5019 = vunpack.c.l.b16 %v4948
          %v5020 = vunpack.c.l.b16 %v4949
          %v5021 = vunpack.c.l.b16 %v4950
          %v5022 = vunpack.c.l.b16 %v4951
          %v5023 = vunpack.c.l.b16 %v4952
          %v5024 = vunpack.c.l.b16 %v4953
          %v5025 = vunpack.c.l.b16 %v4954
          %v5026 = vunpack.c.l.b16 %v4955
          %v5027 = vunpack.c.l.b16 %v4956
          %v5028 = vunpack.c.l.b16 %v4957
          %v5029 = vunpack.c.l.b16 %v4958
          %v5030 = vunpack.c.l.b16 %v4959
          %v5031 = vunpack.c.l.b16 %v4960
          %v5032 = vunpack.c.l.b16 %v4961
          %v5033 = vunpack.c.l.b16 %v4962
          %v5034 = vunpack.c.l.b16 %v4963
          %v5035 = vpack.c.b16 %v5004, %v5003
          %v5036 = vpack.c.b16 %v5006, %v5005
          %v5037 = vpack.c.b16 %v5008, %v5007
          %v5038 = vpack.c.b16 %v5010, %v5009
          %v5039 = vpack.c.b16 %v5012, %v5011
          %v5040 = vpack.c.b16 %v5014, %v5013
          %v5041 = vpack.c.b16 %v5016, %v5015
          %v5042 = vpack.c.b16 %v5018, %v5017
          %v5043 = vpack.c.b16 %v5020, %v5019
          %v5044 = vpack.c.b16 %v5022, %v5021
          %v5045 = vpack.c.b16 %v5024, %v5023
          %v5046 = vpack.c.b16 %v5026, %v5025
          %v5047 = vpack.c.b16 %v5028, %v5027
          %v5048 = vpack.c.b16 %v5030, %v5029
          %v5049 = vpack.c.b16 %v5032, %v5031
          %v5050 = vpack.c.b16 %v5034, %v5033
          %5067 = vmatprep.subr.bf16.mxu0 0
          %5068 = vmatpush1.bf16.msra.mxu0 %v5042
          %5069 = vmatprep.subr.bf16.mxu0 0
          %5070 = vmatpush1.bf16.msra.mxu0 %v5041
          %5071 = vmatprep.subr.bf16.mxu0 0
          %5072 = vmatpush1.bf16.msra.mxu0 %v5040
          %5073 = vmatprep.subr.bf16.mxu0 0
          %5074 = vmatpush1.bf16.msra.mxu0 %v5039
          %5075 = vmatprep.subr.bf16.mxu0 0
          %5076 = vmatpush1.bf16.msra.mxu0 %v5038
          %5077 = vmatprep.subr.bf16.mxu0 0
          %5078 = vmatpush1.bf16.msra.mxu0 %v5037
          %5079 = vmatprep.subr.bf16.mxu0 0
          %5080 = vmatpush1.bf16.msra.mxu0 %v5036
          %5081 = vmatprep.subr.bf16.mxu0 0
          %5082 = vmatpush1.bf16.msra.mxu0 %v5035
          %5083 = vmatprep.subr.bf16.mxu0 0
          %5084 = vmatpush2.bf16.msra.mxu0 %v5050
          %5085 = vmatprep.subr.bf16.mxu0 0
          %5086 = vmatpush2.bf16.msra.mxu0 %v5049
          %5087 = vmatprep.subr.bf16.mxu0 0
          %5088 = vmatpush2.bf16.msra.mxu0 %v5048
          %5089 = vmatprep.subr.bf16.mxu0 0
          %5090 = vmatpush2.bf16.msra.mxu0 %v5047
          %5091 = vmatprep.subr.bf16.mxu0 0
          %5092 = vmatpush2.bf16.msra.mxu0 %v5046
          %5093 = vmatprep.subr.bf16.mxu0 0
          %5094 = vmatpush2.bf16.msra.mxu0 %v5045
          %5095 = vmatprep.subr.bf16.mxu0 0
          %5096 = vmatpush2.bf16.msra.mxu0 %v5044
          %5097 = vmatprep.subr.bf16.mxu0 0
          %5098 = vmatpush2.bf16.msra.mxu0 %v5043
          %5099 = vmatprep.mubr.bf16.mxu0 %v4931
          %5100 = vmatmul.mubr.bf16.gmra.mxu0 %v4930
          %v5101 = vpop.f32.mrf.mxu0
          %v5102 = vadd.f32 %v4969, %v5101
          %v5103 = vpop.f32.mrf.mxu0
          %v5104 = vpop.f32.mrf.mxu0
          %v5105 = vpop.f32.mrf.mxu0
          %5106 = vdwg.mxu0
          %vm5107 = vcmask 25600
          %5108 = vst.msk [vmem:[#allocation27] sm:$0x3] %vm5107, %v5102
        $region168: #{hybrid_forest_forward.3} parent=103 // pred_fallthru
          _
        // Predicated region
        $region169: #{hybrid_forest_forward.3} parent=103 // pred_check
          %p5109 = pneg %p508
        $region170: #{hybrid_forest_forward.3} parent=103 // pred_check_branch
          %5111 = sbr.rel (%p5109) target = $region172
        $region171: #{hybrid_forest_forward.3} parent=103 // pred_region
          %s5113 = ssub.s32 32, 32
          %5114 = vsyncadd [#allocation5], %s5113
          %s5116 = sshll.u32 [#allocation27], 4
          %s5117 = int_to_ptr.vmem [resolvable:$true] %s5116
          %5119 = dma.vmem_to_hbm [thread:$0]  %s5117, 32, %s21, [#allocation5]
        $region172: #{hybrid_forest_forward.3} parent=103 // pred_fallthru
          _
        // Predicated region
        $region173: #{hybrid_forest_forward.3} parent=103 // pred_check
          %p5120 = pneg %p508
        $region174: #{hybrid_forest_forward.3} parent=103 // pred_check_branch
          %5122 = sbr.rel (%p5120) target = $region176
        $region175: #{hybrid_forest_forward.3} parent=103 // pred_region
          %5123 = dma.done [#allocation5], 32
        $region176: #{hybrid_forest_forward.3} parent=103 // pred_fallthru
          _
      $region104: #{hybrid_forest_forward.3} parent=5 // pred_fallthru
        _
      %p5124 = scmp.le.s32.totalorder 2, %s39
      // Predicated region
      $region177: #{hybrid_forest_forward.3} parent=5 // pred_check
        %p5125 = pneg %p5124
      $region178: #{hybrid_forest_forward.3} parent=5 // pred_check_branch
        %5127 = sbr.rel (%p5125) target = $region180
      $region179: #{hybrid_forest_forward.3} parent=5 // pred_region
        %s5128 = ssub.s32 %s39, 2
      $region180: #{hybrid_forest_forward.3} parent=5 // pred_fallthru
        _
    $region6: #{hybrid_forest_forward.3} parent=1 // loop_footer
      %s43 = sadd.s32 1, %s39
    $region7: #{hybrid_forest_forward.3} parent=1 // loop_footer_branch
      %38 = sbr.rel target = $region3
    $region8: #{hybrid_forest_forward.3} parent=1 // loop_exit
      _
    %5129 = vsyncpa [#allocation4], 1
    %s5130 = scalar_lea.sflag [#allocation4], 1
    %5131 = vsyncpa %s5130, 1
    %5132 = vsyncpa [#allocation11], 1
    %5133 = vsyncpa [#allocation14], 1
    %5134 = vsyncpa [#allocation17], 1
    %5135 = vsyncpa [#allocation20], 1
    %5136 = vsyncpa [#allocation23], 1
    %5137 = vsyncpa [#allocation26], 1
    %5138 = vsyncpa [#allocation5], 1
    %s5139 = scalar_lea.sflag [#allocation5], 1
    %5140 = vsyncpa %s5139, 1
    %5141 = vsyncpa [#allocation6], 1
    %s5142 = scalar_lea.sflag [#allocation6], 1
    %5143 = vsyncpa %s5142, 1
    %5144 = vsyncpa [#allocation9], 1

</llo_original>
